<compile_context>
chip_gen: v6e
topology: v6e:2x2x1
jax: 0.10.0
libtpu: 0.0.40
codegen_flags: <defaults>
</compile_context>

<pallas_src>
import functools

import jax
import jax.numpy as jnp
from jax import lax
from jax.experimental import pallas as pl
from jax.experimental.pallas import tpu as pltpu


def convlstm_kernel(x_ref, w_ref, gamma_ref, beta_ref, o_ref,
                    pad_ref, acc_ref, cx_ref,
                    *, B, H, W, C, F, RH, eps):
    Cin = C + F
    HW = H * W
    M = B * HW
    M_TILE = RH * W
    TPI = H // RH                     # row tiles per batch image
    n_tiles = B * TPI
    t = pl.program_id(0)

    # t == 0: zero the cell state and the padded staging buffer.  The conv halo
    # (border rows / cols of each image) is never written again, so the 3x3
    # "same" zero padding stays correct for the whole sequence, and the h
    # channels start at zero exactly like the torch module's hx init.
    @pl.when(t == 0)
    def _():
        pad_ref[...] = jnp.zeros_like(pad_ref)
        cx_ref[...] = jnp.zeros_like(cx_ref)

    # Stage x_t into the interior channels [0:C] of the padded [x|h] buffer.
    # h_{t-1} already lives in channels [C:Cin]: it was written there by the
    # previous step's gate pass (no concat, no separate hx buffer).
    xv = x_ref[0]                                          # (B, H, W, C) f32
    for b in range(B):
        r0 = b * (H + 2) + 1
        pad_ref[r0:r0 + H, 1:W + 1, 0:C] = xv[b]

    # ---- Pass 1: 3x3 conv as 9 accumulating tap matmuls per row tile --------
    # Each tap reads a statically shifted (RH, W, Cin) window straight out of
    # pad_ref (no im2col buffer), casts once to bf16, and issues a
    # (M_TILE, Cin) @ (Cin, 4F) MXU matmul accumulated in f32.  BatchNorm
    # sum / sum-of-squares are fused into the same pass.  All tile/tap indices
    # are static Python ints (fully unrolled) so the scheduler sees every MXU
    # push and XLU column reduction.
    s = jnp.zeros((1, 4 * F), jnp.float32)
    ss = jnp.zeros((1, 4 * F), jnp.float32)
    for i in range(n_tiles):
        b, rt = divmod(i, TPI)
        base = b * (H + 2) + rt * RH      # pad row just above the tile's first output row
        m0 = i * M_TILE
        acc = jnp.zeros((M_TILE, 4 * F), jnp.float32)
        for kh in range(3):
            for kw in range(3):
                lhs = pad_ref[base + kh:base + kh + RH, kw:kw + W, :]
                lhs = lhs.reshape(M_TILE, Cin).astype(jnp.bfloat16)
                acc = acc + jnp.dot(lhs, w_ref[kh * 3 + kw],
                                    preferred_element_type=jnp.float32)
        acc_ref[m0:m0 + M_TILE, :] = acc
        s = s + jnp.sum(acc, axis=0, keepdims=True)
        ss = ss + jnp.sum(acc * acc, axis=0, keepdims=True)

    # BatchNorm2d (training mode): per-channel biased statistics over (B, H, W)
    # of this timestep.  One-pass moments in f32; clamp the variance at zero
    # against E[x^2] - E[x]^2 cancellation.
    mean = s * (1.0 / M)
    var = jnp.maximum(ss * (1.0 / M) - mean * mean, 0.0)
    scale = gamma_ref[...] * lax.rsqrt(var + eps)          # (1, 4F)
    shift = beta_ref[...] - mean * scale                   # (1, 4F)

    # ---- Pass 2: normalize + gate nonlinearities + LSTM state update --------
    # h_t is written directly to the output block and (for step t+1) into
    # pad_ref's h channels; c_t is carried in cx_ref.
    for i in range(n_tiles):
        b, rt = divmod(i, TPI)
        base = b * (H + 2) + rt * RH
        m0 = i * M_TILE
        gates = acc_ref[m0:m0 + M_TILE, :] * scale + shift        # (M_TILE, 4F)
        sg = jax.nn.sigmoid(gates)        # one full-width sigmoid, sliced after
        ingate = sg[:, 0:F]
        forgetgate = sg[:, F:2 * F]
        outgate = sg[:, 3 * F:4 * F]
        cellgate = gates[:, 2 * F:3 * F]  # NOT tanh'd (matches the torch module)
        cy = forgetgate * cx_ref[m0:m0 + M_TILE, :] + ingate * cellgate
        hy = outgate * jnp.tanh(cy)
        cx_ref[m0:m0 + M_TILE, :] = cy
        o_ref[0, m0:m0 + M_TILE, :] = hy
        pad_ref[base + 1:base + 1 + RH, 1:W + 1, C:Cin] = hy.reshape(RH, W, F)


def conv_lstm_block(x, w, gamma, beta, *, num_features, eps=1e-5, rows_per_tile=8):
    """x: (T, B, H, W, C) f32; w: (3, 3, C+F, 4F) HWIO; gamma/beta: (4F,).

    rows_per_tile=8 gives M_TILE = 8*W = 128 matmul rows (matches v5e's
    128-wide MXU at W=16, low vreg pressure); use 16 on v6e/v7x to fill the
    256-wide MXU.
    """
    T, B, H, W, C = x.shape
    F = num_features
    Cin = C + F
    assert H % rows_per_tile == 0, "rows_per_tile must divide H"
    assert (rows_per_tile * W) % 8 == 0, "row tile (rows_per_tile*W) must be a multiple of 8"
    M = B * H * W

    # Per-tap weight blocks: HWIO (3, 3, Cin, 4F) -> (9, Cin, 4F), bf16 once.
    w_taps = w.reshape(9, Cin, 4 * F).astype(jnp.bfloat16)
    g2 = gamma.reshape(1, 4 * F).astype(jnp.float32)
    b2 = beta.reshape(1, 4 * F).astype(jnp.float32)

    kernel = functools.partial(convlstm_kernel, B=B, H=H, W=W, C=C, F=F,
                               RH=rows_per_tile, eps=eps)

    out = pl.pallas_call(
        kernel,
        out_shape=jax.ShapeDtypeStruct((T, M, F), jnp.float32),
        grid_spec=pltpu.PrefetchScalarGridSpec(
            num_scalar_prefetch=0,
            grid=(T,),
            in_specs=[
                pl.BlockSpec((1, B, H, W, C), lambda t: (t, 0, 0, 0, 0)),
                pl.BlockSpec((9, Cin, 4 * F), lambda t: (0, 0, 0)),   # resident weights
                pl.BlockSpec((1, 4 * F), lambda t: (0, 0)),           # gamma
                pl.BlockSpec((1, 4 * F), lambda t: (0, 0)),           # beta
            ],
            out_specs=pl.BlockSpec((1, M, F), lambda t: (t, 0, 0)),
            scratch_shapes=[
                pltpu.VMEM((B * (H + 2), W + 2, Cin), jnp.float32),   # padded [x|h] staging
                pltpu.VMEM((M, 4 * F), jnp.float32),                  # conv result / gates
                pltpu.VMEM((M, F), jnp.float32),                      # cx carry
            ],
        ),
        compiler_params=pltpu.CompilerParams(
            dimension_semantics=("arbitrary",),    # recurrence over T: keep in order
            vmem_limit_bytes=32 * 1024 * 1024),
    )(x, w_taps, g2, b2)
    return out.reshape(T, B, H, W, F)


def conv_lstm_ref(x, w, gamma, beta, *, num_features, eps=1e-5):
    """Pure-JAX reference (same NHWC layout).  Conv operands are cast to bf16
    with f32 accumulation to match the kernel's MXU precision choice."""
    T, B, H, W, C = x.shape
    F = num_features
    hx = jnp.zeros((B, H, W, F), jnp.float32)
    cx = jnp.zeros((B, H, W, F), jnp.float32)
    wb = w.astype(jnp.bfloat16)
    outs = []
    for t in range(T):
        combined = jnp.concatenate([x[t], hx], axis=-1)
        gates = lax.conv_general_dilated(
            combined.astype(jnp.bfloat16), wb,
            window_strides=(1, 1), padding=((1, 1), (1, 1)),
            dimension_numbers=("NHWC", "HWIO", "NHWC"),
            preferred_element_type=jnp.float32)
        mean = jnp.mean(gates, axis=(0, 1, 2), keepdims=True)
        var = jnp.mean((gates - mean) ** 2, axis=(0, 1, 2), keepdims=True)
        gates = (gates - mean) * lax.rsqrt(var + eps) * gamma + beta
        i_g = jax.nn.sigmoid(gates[..., :F])
        f_g = jax.nn.sigmoid(gates[..., F:2 * F])
        c_g = gates[..., 2 * F:3 * F]              # no tanh, as in the torch module
        o_g = jax.nn.sigmoid(gates[..., 3 * F:])
        cx = f_g * cx + i_g * c_g
        hx = o_g * jnp.tanh(cx)
        outs.append(hx)
    return jnp.stack(outs)


if __name__ == "__main__":
    # Small shapes consistent with the module's forward: torch (T, B, C, H, W).
    T, B, C, H, W = 8, 2, 4, 16, 16
    F = 32                      # num_features
    Cin = C + F                 # conv in_channels
    Cout = 4 * F                # conv out_channels

    key = jax.random.PRNGKey(0)
    kx, kw, kg, kb = jax.random.split(key, 4)

    # Kernel-layout inputs (NHWC): (T, B, H, W, C).
    x = jax.random.normal(kx, (T, B, H, W, C), dtype=jnp.float32)
    # Conv weight in HWIO, deterministic init scaled by fan-in (no bias).
    fan_in = Cin * 3 * 3
    w = jax.random.normal(kw, (3, 3, Cin, Cout), dtype=jnp.float32) / jnp.sqrt(fan_in)
    # BatchNorm affine params (torch inits gamma=1, beta=0; perturb deterministically).
    gamma = 1.0 + 0.1 * jax.random.normal(kg, (Cout,), dtype=jnp.float32)
    beta = 0.1 * jax.random.normal(kb, (Cout,), dtype=jnp.float32)

    out = jax.block_until_ready(conv_lstm_block(x, w, gamma, beta, num_features=F))
    ref = jax.block_until_ready(conv_lstm_ref(x, w, gamma, beta, num_features=F))

    assert out.shape == (T, B, H, W, F)
    err = float(jnp.max(jnp.abs(out - ref)))
    assert jnp.allclose(out, ref, atol=1e-2, rtol=1e-2), err

    print("KERNEL_OK")
</pallas_src>

<mosaic_0001>
module attributes {stable_mosaic.version = 11 : i64} {
  func.func @convlstm_kernel(%arg0: i32, %arg1: memref<1x2x16x16x4xf32, #tpu.memory_space<vmem>>, %arg2: memref<9x36x128xbf16, #tpu.memory_space<vmem>>, %arg3: memref<1x128xf32, #tpu.memory_space<vmem>>, %arg4: memref<1x128xf32, #tpu.memory_space<vmem>>, %arg5: memref<1x512x32xf32, #tpu.memory_space<vmem>>, %arg6: memref<36x18x36xf32, #tpu.memory_space<vmem>>, %arg7: memref<512x128xf32, #tpu.memory_space<vmem>>, %arg8: memref<512x32xf32, #tpu.memory_space<vmem>>) attributes {dimension_semantics = [#tpu.dimension_semantics<arbitrary>], iteration_bounds = array<i64: 8>, scalar_prefetch = 0 : i64, scratch_operands = 3 : i64, tpu.core_type = #tpu.core_type<tc>, window_params = [{transform_indices = @transform_0, window_bounds = array<i64: 1, 2, 16, 16, 4>}, {pipeline_mode = #tpu.pipeline_mode<synchronous>, transform_indices = @transform_1, window_bounds = array<i64: 9, 36, 128>}, {pipeline_mode = #tpu.pipeline_mode<synchronous>, transform_indices = @transform_2, window_bounds = array<i64: 1, 128>}, {pipeline_mode = #tpu.pipeline_mode<synchronous>, transform_indices = @transform_3, window_bounds = array<i64: 1, 128>}, {transform_indices = @transform_4, window_bounds = array<i64: 1, 512, 32>}]} {
    %c0_i32 = arith.constant 0 : i32
    %0 = arith.cmpi eq, %arg0, %c0_i32 : i32
    %1 = arith.extui %0 : i1 to i32
    %c0_i32_0 = arith.constant 0 : i32
    %2 = arith.cmpi ne, %1, %c0_i32_0 : i32
    scf.if %2 {
      %cst_325 = arith.constant 0.000000e+00 : f32
      %421 = vector.broadcast %cst_325 : f32 to vector<36x18x36xf32>
      %c0_326 = arith.constant 0 : index
      %c0_327 = arith.constant 0 : index
      %c0_328 = arith.constant 0 : index
      %422 = vector.load %arg6[%c0_326, %c0_327, %c0_328] : memref<36x18x36xf32, #tpu.memory_space<vmem>>, vector<36x18x36xf32>
      tpu.vector_store %arg6[%c0_326, %c0_327, %c0_328], %421 {strides = array<i32>} : memref<36x18x36xf32, #tpu.memory_space<vmem>>, vector<36x18x36xf32>,
      %cst_329 = arith.constant 0.000000e+00 : f32
      %423 = vector.broadcast %cst_329 : f32 to vector<512x32xf32>
      %c0_330 = arith.constant 0 : index
      %c0_331 = arith.constant 0 : index
      %424 = vector.load %arg8[%c0_330, %c0_331] : memref<512x32xf32, #tpu.memory_space<vmem>>, vector<512x32xf32>
      tpu.vector_store %arg8[%c0_330, %c0_331], %423 {strides = array<i32>} : memref<512x32xf32, #tpu.memory_space<vmem>>, vector<512x32xf32>,
    } else {
    }
    %c0 = arith.constant 0 : index
    %c0_1 = arith.constant 0 : index
    %c0_2 = arith.constant 0 : index
    %c0_3 = arith.constant 0 : index
    %c0_4 = arith.constant 0 : index
    %3 = vector.load %arg1[%c0, %c0_1, %c0_2, %c0_3, %c0_4] : memref<1x2x16x16x4xf32, #tpu.memory_space<vmem>>, vector<1x2x16x16x4xf32>
    %4 = vector.shape_cast %3 : vector<1x2x16x16x4xf32> to vector<2x16x16x4xf32>
    %5 = vector.extract_strided_slice %4 {offsets = [0, 0, 0, 0], sizes = [1, 16, 16, 4], strides = [1, 1, 1, 1]} : vector<2x16x16x4xf32> to vector<1x16x16x4xf32>
    %6 = vector.shape_cast %5 : vector<1x16x16x4xf32> to vector<16x16x4xf32>
    %c1 = arith.constant 1 : index
    %c1_5 = arith.constant 1 : index
    %c0_6 = arith.constant 0 : index
    %7 = vector.load %arg6[%c1, %c1_5, %c0_6] : memref<36x18x36xf32, #tpu.memory_space<vmem>>, vector<16x16x4xf32>
    tpu.vector_store %arg6[%c1, %c1_5, %c0_6], %6 {strides = array<i32>} : memref<36x18x36xf32, #tpu.memory_space<vmem>>, vector<16x16x4xf32>,
    %8 = vector.extract_strided_slice %4 {offsets = [1, 0, 0, 0], sizes = [1, 16, 16, 4], strides = [1, 1, 1, 1]} : vector<2x16x16x4xf32> to vector<1x16x16x4xf32>
    %9 = vector.shape_cast %8 : vector<1x16x16x4xf32> to vector<16x16x4xf32>
    %c19 = arith.constant 19 : index
    %c1_7 = arith.constant 1 : index
    %c0_8 = arith.constant 0 : index
    %10 = vector.load %arg6[%c19, %c1_7, %c0_8] : memref<36x18x36xf32, #tpu.memory_space<vmem>>, vector<16x16x4xf32>
    tpu.vector_store %arg6[%c19, %c1_7, %c0_8], %9 {strides = array<i32>} : memref<36x18x36xf32, #tpu.memory_space<vmem>>, vector<16x16x4xf32>,
    %cst = arith.constant 0.000000e+00 : f32
    %11 = vector.broadcast %cst : f32 to vector<1x128xf32>
    %cst_9 = arith.constant 0.000000e+00 : f32
    %12 = vector.broadcast %cst_9 : f32 to vector<1x128xf32>
    %cst_10 = arith.constant 0.000000e+00 : f32
    %13 = vector.broadcast %cst_10 : f32 to vector<128x128xf32>
    %c0_11 = arith.constant 0 : index
    %c0_12 = arith.constant 0 : index
    %c0_13 = arith.constant 0 : index
    %14 = vector.load %arg6[%c0_11, %c0_12, %c0_13] : memref<36x18x36xf32, #tpu.memory_space<vmem>>, vector<8x16x36xf32>
    %15 = vector.shape_cast %14 : vector<8x16x36xf32> to vector<128x36xf32>
    %16 = arith.truncf %15 : vector<128x36xf32> to vector<128x36xbf16>
    %c0_14 = arith.constant 0 : index
    %c0_15 = arith.constant 0 : index
    %c0_16 = arith.constant 0 : index
    %17 = vector.load %arg2[%c0_14, %c0_15, %c0_16] : memref<9x36x128xbf16, #tpu.memory_space<vmem>>, vector<1x36x128xbf16>
    %18 = vector.shape_cast %17 : vector<1x36x128xbf16> to vector<36x128xbf16>
    %cst_17 = arith.constant dense<0.000000e+00> : vector<128x128xf32>
    %19 = tpu.matmul %16, %18, %cst_17 {dimension_numbers = #tpu.dot_dimension_numbers<[1], [0], [0], [1], [0, 0, 1, 1], [], []>} : vector<128x36xbf16>, vector<36x128xbf16>, vector<128x128xf32> -> vector<128x128xf32>
    %20 = arith.addf %13, %19 : vector<128x128xf32>
    %c0_18 = arith.constant 0 : index
    %c1_19 = arith.constant 1 : index
    %c0_20 = arith.constant 0 : index
    %21 = vector.load %arg6[%c0_18, %c1_19, %c0_20] : memref<36x18x36xf32, #tpu.memory_space<vmem>>, vector<8x16x36xf32>
    %22 = vector.shape_cast %21 : vector<8x16x36xf32> to vector<128x36xf32>
    %23 = arith.truncf %22 : vector<128x36xf32> to vector<128x36xbf16>
    %c1_21 = arith.constant 1 : index
    %c0_22 = arith.constant 0 : index
    %c0_23 = arith.constant 0 : index
    %24 = vector.load %arg2[%c1_21, %c0_22, %c0_23] : memref<9x36x128xbf16, #tpu.memory_space<vmem>>, vector<1x36x128xbf16>
    %25 = vector.shape_cast %24 : vector<1x36x128xbf16> to vector<36x128xbf16>
    %cst_24 = arith.constant dense<0.000000e+00> : vector<128x128xf32>
    %26 = tpu.matmul %23, %25, %cst_24 {dimension_numbers = #tpu.dot_dimension_numbers<[1], [0], [0], [1], [0, 0, 1, 1], [], []>} : vector<128x36xbf16>, vector<36x128xbf16>, vector<128x128xf32> -> vector<128x128xf32>
    %27 = arith.addf %20, %26 : vector<128x128xf32>
    %c0_25 = arith.constant 0 : index
    %c2 = arith.constant 2 : index
    %c0_26 = arith.constant 0 : index
    %28 = vector.load %arg6[%c0_25, %c2, %c0_26] : memref<36x18x36xf32, #tpu.memory_space<vmem>>, vector<8x16x36xf32>
    %29 = vector.shape_cast %28 : vector<8x16x36xf32> to vector<128x36xf32>
    %30 = arith.truncf %29 : vector<128x36xf32> to vector<128x36xbf16>
    %c2_27 = arith.constant 2 : index
    %c0_28 = arith.constant 0 : index
    %c0_29 = arith.constant 0 : index
    %31 = vector.load %arg2[%c2_27, %c0_28, %c0_29] : memref<9x36x128xbf16, #tpu.memory_space<vmem>>, vector<1x36x128xbf16>
    %32 = vector.shape_cast %31 : vector<1x36x128xbf16> to vector<36x128xbf16>
    %cst_30 = arith.constant dense<0.000000e+00> : vector<128x128xf32>
    %33 = tpu.matmul %30, %32, %cst_30 {dimension_numbers = #tpu.dot_dimension_numbers<[1], [0], [0], [1], [0, 0, 1, 1], [], []>} : vector<128x36xbf16>, vector<36x128xbf16>, vector<128x128xf32> -> vector<128x128xf32>
    %34 = arith.addf %27, %33 : vector<128x128xf32>
    %c1_31 = arith.constant 1 : index
    %c0_32 = arith.constant 0 : index
    %c0_33 = arith.constant 0 : index
    %35 = vector.load %arg6[%c1_31, %c0_32, %c0_33] : memref<36x18x36xf32, #tpu.memory_space<vmem>>, vector<8x16x36xf32>
    %36 = vector.shape_cast %35 : vector<8x16x36xf32> to vector<128x36xf32>
    %37 = arith.truncf %36 : vector<128x36xf32> to vector<128x36xbf16>
    %c3 = arith.constant 3 : index
    %c0_34 = arith.constant 0 : index
    %c0_35 = arith.constant 0 : index
    %38 = vector.load %arg2[%c3, %c0_34, %c0_35] : memref<9x36x128xbf16, #tpu.memory_space<vmem>>, vector<1x36x128xbf16>
    %39 = vector.shape_cast %38 : vector<1x36x128xbf16> to vector<36x128xbf16>
    %cst_36 = arith.constant dense<0.000000e+00> : vector<128x128xf32>
    %40 = tpu.matmul %37, %39, %cst_36 {dimension_numbers = #tpu.dot_dimension_numbers<[1], [0], [0], [1], [0, 0, 1, 1], [], []>} : vector<128x36xbf16>, vector<36x128xbf16>, vector<128x128xf32> -> vector<128x128xf32>
    %41 = arith.addf %34, %40 : vector<128x128xf32>
    %c1_37 = arith.constant 1 : index
    %c1_38 = arith.constant 1 : index
    %c0_39 = arith.constant 0 : index
    %42 = vector.load %arg6[%c1_37, %c1_38, %c0_39] : memref<36x18x36xf32, #tpu.memory_space<vmem>>, vector<8x16x36xf32>
    %43 = vector.shape_cast %42 : vector<8x16x36xf32> to vector<128x36xf32>
    %44 = arith.truncf %43 : vector<128x36xf32> to vector<128x36xbf16>
    %c4 = arith.constant 4 : index
    %c0_40 = arith.constant 0 : index
    %c0_41 = arith.constant 0 : index
    %45 = vector.load %arg2[%c4, %c0_40, %c0_41] : memref<9x36x128xbf16, #tpu.memory_space<vmem>>, vector<1x36x128xbf16>
    %46 = vector.shape_cast %45 : vector<1x36x128xbf16> to vector<36x128xbf16>
    %cst_42 = arith.constant dense<0.000000e+00> : vector<128x128xf32>
    %47 = tpu.matmul %44, %46, %cst_42 {dimension_numbers = #tpu.dot_dimension_numbers<[1], [0], [0], [1], [0, 0, 1, 1], [], []>} : vector<128x36xbf16>, vector<36x128xbf16>, vector<128x128xf32> -> vector<128x128xf32>
    %48 = arith.addf %41, %47 : vector<128x128xf32>
    %c1_43 = arith.constant 1 : index
    %c2_44 = arith.constant 2 : index
    %c0_45 = arith.constant 0 : index
    %49 = vector.load %arg6[%c1_43, %c2_44, %c0_45] : memref<36x18x36xf32, #tpu.memory_space<vmem>>, vector<8x16x36xf32>
    %50 = vector.shape_cast %49 : vector<8x16x36xf32> to vector<128x36xf32>
    %51 = arith.truncf %50 : vector<128x36xf32> to vector<128x36xbf16>
    %c5 = arith.constant 5 : index
    %c0_46 = arith.constant 0 : index
    %c0_47 = arith.constant 0 : index
    %52 = vector.load %arg2[%c5, %c0_46, %c0_47] : memref<9x36x128xbf16, #tpu.memory_space<vmem>>, vector<1x36x128xbf16>
    %53 = vector.shape_cast %52 : vector<1x36x128xbf16> to vector<36x128xbf16>
    %cst_48 = arith.constant dense<0.000000e+00> : vector<128x128xf32>
    %54 = tpu.matmul %51, %53, %cst_48 {dimension_numbers = #tpu.dot_dimension_numbers<[1], [0], [0], [1], [0, 0, 1, 1], [], []>} : vector<128x36xbf16>, vector<36x128xbf16>, vector<128x128xf32> -> vector<128x128xf32>
    %55 = arith.addf %48, %54 : vector<128x128xf32>
    %c2_49 = arith.constant 2 : index
    %c0_50 = arith.constant 0 : index
    %c0_51 = arith.constant 0 : index
    %56 = vector.load %arg6[%c2_49, %c0_50, %c0_51] : memref<36x18x36xf32, #tpu.memory_space<vmem>>, vector<8x16x36xf32>
    %57 = vector.shape_cast %56 : vector<8x16x36xf32> to vector<128x36xf32>
    %58 = arith.truncf %57 : vector<128x36xf32> to vector<128x36xbf16>
    %c6 = arith.constant 6 : index
    %c0_52 = arith.constant 0 : index
    %c0_53 = arith.constant 0 : index
    %59 = vector.load %arg2[%c6, %c0_52, %c0_53] : memref<9x36x128xbf16, #tpu.memory_space<vmem>>, vector<1x36x128xbf16>
    %60 = vector.shape_cast %59 : vector<1x36x128xbf16> to vector<36x128xbf16>
    %cst_54 = arith.constant dense<0.000000e+00> : vector<128x128xf32>
    %61 = tpu.matmul %58, %60, %cst_54 {dimension_numbers = #tpu.dot_dimension_numbers<[1], [0], [0], [1], [0, 0, 1, 1], [], []>} : vector<128x36xbf16>, vector<36x128xbf16>, vector<128x128xf32> -> vector<128x128xf32>
    %62 = arith.addf %55, %61 : vector<128x128xf32>
    %c2_55 = arith.constant 2 : index
    %c1_56 = arith.constant 1 : index
    %c0_57 = arith.constant 0 : index
    %63 = vector.load %arg6[%c2_55, %c1_56, %c0_57] : memref<36x18x36xf32, #tpu.memory_space<vmem>>, vector<8x16x36xf32>
    %64 = vector.shape_cast %63 : vector<8x16x36xf32> to vector<128x36xf32>
    %65 = arith.truncf %64 : vector<128x36xf32> to vector<128x36xbf16>
    %c7 = arith.constant 7 : index
    %c0_58 = arith.constant 0 : index
    %c0_59 = arith.constant 0 : index
    %66 = vector.load %arg2[%c7, %c0_58, %c0_59] : memref<9x36x128xbf16, #tpu.memory_space<vmem>>, vector<1x36x128xbf16>
    %67 = vector.shape_cast %66 : vector<1x36x128xbf16> to vector<36x128xbf16>
    %cst_60 = arith.constant dense<0.000000e+00> : vector<128x128xf32>
    %68 = tpu.matmul %65, %67, %cst_60 {dimension_numbers = #tpu.dot_dimension_numbers<[1], [0], [0], [1], [0, 0, 1, 1], [], []>} : vector<128x36xbf16>, vector<36x128xbf16>, vector<128x128xf32> -> vector<128x128xf32>
    %69 = arith.addf %62, %68 : vector<128x128xf32>
    %c2_61 = arith.constant 2 : index
    %c2_62 = arith.constant 2 : index
    %c0_63 = arith.constant 0 : index
    %70 = vector.load %arg6[%c2_61, %c2_62, %c0_63] : memref<36x18x36xf32, #tpu.memory_space<vmem>>, vector<8x16x36xf32>
    %71 = vector.shape_cast %70 : vector<8x16x36xf32> to vector<128x36xf32>
    %72 = arith.truncf %71 : vector<128x36xf32> to vector<128x36xbf16>
    %c8 = arith.constant 8 : index
    %c0_64 = arith.constant 0 : index
    %c0_65 = arith.constant 0 : index
    %73 = vector.load %arg2[%c8, %c0_64, %c0_65] : memref<9x36x128xbf16, #tpu.memory_space<vmem>>, vector<1x36x128xbf16>
    %74 = vector.shape_cast %73 : vector<1x36x128xbf16> to vector<36x128xbf16>
    %cst_66 = arith.constant dense<0.000000e+00> : vector<128x128xf32>
    %75 = tpu.matmul %72, %74, %cst_66 {dimension_numbers = #tpu.dot_dimension_numbers<[1], [0], [0], [1], [0, 0, 1, 1], [], []>} : vector<128x36xbf16>, vector<36x128xbf16>, vector<128x128xf32> -> vector<128x128xf32>
    %76 = arith.addf %69, %75 : vector<128x128xf32>
    %c0_67 = arith.constant 0 : index
    %c0_68 = arith.constant 0 : index
    %77 = vector.load %arg7[%c0_67, %c0_68] : memref<512x128xf32, #tpu.memory_space<vmem>>, vector<128x128xf32>
    tpu.vector_store %arg7[%c0_67, %c0_68], %76 {strides = array<i32>} : memref<512x128xf32, #tpu.memory_space<vmem>>, vector<128x128xf32>,
    %cst_69 = arith.constant dense<0.000000e+00> : vector<128xf32>
    %78 = vector.multi_reduction <add>, %76, %cst_69 [0] : vector<128x128xf32> to vector<128xf32>
    %79 = vector.shape_cast %78 : vector<128xf32> to vector<1x128xf32>
    %80 = arith.addf %11, %79 : vector<1x128xf32>
    %81 = arith.mulf %76, %76 : vector<128x128xf32>
    %cst_70 = arith.constant dense<0.000000e+00> : vector<128xf32>
    %82 = vector.multi_reduction <add>, %81, %cst_70 [0] : vector<128x128xf32> to vector<128xf32>
    %83 = vector.shape_cast %82 : vector<128xf32> to vector<1x128xf32>
    %84 = arith.addf %12, %83 : vector<1x128xf32>
    %cst_71 = arith.constant 0.000000e+00 : f32
    %85 = vector.broadcast %cst_71 : f32 to vector<128x128xf32>
    %c8_72 = arith.constant 8 : index
    %c0_73 = arith.constant 0 : index
    %c0_74 = arith.constant 0 : index
    %86 = vector.load %arg6[%c8_72, %c0_73, %c0_74] : memref<36x18x36xf32, #tpu.memory_space<vmem>>, vector<8x16x36xf32>
    %87 = vector.shape_cast %86 : vector<8x16x36xf32> to vector<128x36xf32>
    %88 = arith.truncf %87 : vector<128x36xf32> to vector<128x36xbf16>
    %c0_75 = arith.constant 0 : index
    %c0_76 = arith.constant 0 : index
    %c0_77 = arith.constant 0 : index
    %89 = vector.load %arg2[%c0_75, %c0_76, %c0_77] : memref<9x36x128xbf16, #tpu.memory_space<vmem>>, vector<1x36x128xbf16>
    %90 = vector.shape_cast %89 : vector<1x36x128xbf16> to vector<36x128xbf16>
    %cst_78 = arith.constant dense<0.000000e+00> : vector<128x128xf32>
    %91 = tpu.matmul %88, %90, %cst_78 {dimension_numbers = #tpu.dot_dimension_numbers<[1], [0], [0], [1], [0, 0, 1, 1], [], []>} : vector<128x36xbf16>, vector<36x128xbf16>, vector<128x128xf32> -> vector<128x128xf32>
    %92 = arith.addf %85, %91 : vector<128x128xf32>
    %c8_79 = arith.constant 8 : index
    %c1_80 = arith.constant 1 : index
    %c0_81 = arith.constant 0 : index
    %93 = vector.load %arg6[%c8_79, %c1_80, %c0_81] : memref<36x18x36xf32, #tpu.memory_space<vmem>>, vector<8x16x36xf32>
    %94 = vector.shape_cast %93 : vector<8x16x36xf32> to vector<128x36xf32>
    %95 = arith.truncf %94 : vector<128x36xf32> to vector<128x36xbf16>
    %c1_82 = arith.constant 1 : index
    %c0_83 = arith.constant 0 : index
    %c0_84 = arith.constant 0 : index
    %96 = vector.load %arg2[%c1_82, %c0_83, %c0_84] : memref<9x36x128xbf16, #tpu.memory_space<vmem>>, vector<1x36x128xbf16>
    %97 = vector.shape_cast %96 : vector<1x36x128xbf16> to vector<36x128xbf16>
    %cst_85 = arith.constant dense<0.000000e+00> : vector<128x128xf32>
    %98 = tpu.matmul %95, %97, %cst_85 {dimension_numbers = #tpu.dot_dimension_numbers<[1], [0], [0], [1], [0, 0, 1, 1], [], []>} : vector<128x36xbf16>, vector<36x128xbf16>, vector<128x128xf32> -> vector<128x128xf32>
    %99 = arith.addf %92, %98 : vector<128x128xf32>
    %c8_86 = arith.constant 8 : index
    %c2_87 = arith.constant 2 : index
    %c0_88 = arith.constant 0 : index
    %100 = vector.load %arg6[%c8_86, %c2_87, %c0_88] : memref<36x18x36xf32, #tpu.memory_space<vmem>>, vector<8x16x36xf32>
    %101 = vector.shape_cast %100 : vector<8x16x36xf32> to vector<128x36xf32>
    %102 = arith.truncf %101 : vector<128x36xf32> to vector<128x36xbf16>
    %c2_89 = arith.constant 2 : index
    %c0_90 = arith.constant 0 : index
    %c0_91 = arith.constant 0 : index
    %103 = vector.load %arg2[%c2_89, %c0_90, %c0_91] : memref<9x36x128xbf16, #tpu.memory_space<vmem>>, vector<1x36x128xbf16>
    %104 = vector.shape_cast %103 : vector<1x36x128xbf16> to vector<36x128xbf16>
    %cst_92 = arith.constant dense<0.000000e+00> : vector<128x128xf32>
    %105 = tpu.matmul %102, %104, %cst_92 {dimension_numbers = #tpu.dot_dimension_numbers<[1], [0], [0], [1], [0, 0, 1, 1], [], []>} : vector<128x36xbf16>, vector<36x128xbf16>, vector<128x128xf32> -> vector<128x128xf32>
    %106 = arith.addf %99, %105 : vector<128x128xf32>
    %c9 = arith.constant 9 : index
    %c0_93 = arith.constant 0 : index
    %c0_94 = arith.constant 0 : index
    %107 = vector.load %arg6[%c9, %c0_93, %c0_94] : memref<36x18x36xf32, #tpu.memory_space<vmem>>, vector<8x16x36xf32>
    %108 = vector.shape_cast %107 : vector<8x16x36xf32> to vector<128x36xf32>
    %109 = arith.truncf %108 : vector<128x36xf32> to vector<128x36xbf16>
    %c3_95 = arith.constant 3 : index
    %c0_96 = arith.constant 0 : index
    %c0_97 = arith.constant 0 : index
    %110 = vector.load %arg2[%c3_95, %c0_96, %c0_97] : memref<9x36x128xbf16, #tpu.memory_space<vmem>>, vector<1x36x128xbf16>
    %111 = vector.shape_cast %110 : vector<1x36x128xbf16> to vector<36x128xbf16>
    %cst_98 = arith.constant dense<0.000000e+00> : vector<128x128xf32>
    %112 = tpu.matmul %109, %111, %cst_98 {dimension_numbers = #tpu.dot_dimension_numbers<[1], [0], [0], [1], [0, 0, 1, 1], [], []>} : vector<128x36xbf16>, vector<36x128xbf16>, vector<128x128xf32> -> vector<128x128xf32>
    %113 = arith.addf %106, %112 : vector<128x128xf32>
    %c9_99 = arith.constant 9 : index
    %c1_100 = arith.constant 1 : index
    %c0_101 = arith.constant 0 : index
    %114 = vector.load %arg6[%c9_99, %c1_100, %c0_101] : memref<36x18x36xf32, #tpu.memory_space<vmem>>, vector<8x16x36xf32>
    %115 = vector.shape_cast %114 : vector<8x16x36xf32> to vector<128x36xf32>
    %116 = arith.truncf %115 : vector<128x36xf32> to vector<128x36xbf16>
    %c4_102 = arith.constant 4 : index
    %c0_103 = arith.constant 0 : index
    %c0_104 = arith.constant 0 : index
    %117 = vector.load %arg2[%c4_102, %c0_103, %c0_104] : memref<9x36x128xbf16, #tpu.memory_space<vmem>>, vector<1x36x128xbf16>
    %118 = vector.shape_cast %117 : vector<1x36x128xbf16> to vector<36x128xbf16>
    %cst_105 = arith.constant dense<0.000000e+00> : vector<128x128xf32>
    %119 = tpu.matmul %116, %118, %cst_105 {dimension_numbers = #tpu.dot_dimension_numbers<[1], [0], [0], [1], [0, 0, 1, 1], [], []>} : vector<128x36xbf16>, vector<36x128xbf16>, vector<128x128xf32> -> vector<128x128xf32>
    %120 = arith.addf %113, %119 : vector<128x128xf32>
    %c9_106 = arith.constant 9 : index
    %c2_107 = arith.constant 2 : index
    %c0_108 = arith.constant 0 : index
    %121 = vector.load %arg6[%c9_106, %c2_107, %c0_108] : memref<36x18x36xf32, #tpu.memory_space<vmem>>, vector<8x16x36xf32>
    %122 = vector.shape_cast %121 : vector<8x16x36xf32> to vector<128x36xf32>
    %123 = arith.truncf %122 : vector<128x36xf32> to vector<128x36xbf16>
    %c5_109 = arith.constant 5 : index
    %c0_110 = arith.constant 0 : index
    %c0_111 = arith.constant 0 : index
    %124 = vector.load %arg2[%c5_109, %c0_110, %c0_111] : memref<9x36x128xbf16, #tpu.memory_space<vmem>>, vector<1x36x128xbf16>
    %125 = vector.shape_cast %124 : vector<1x36x128xbf16> to vector<36x128xbf16>
    %cst_112 = arith.constant dense<0.000000e+00> : vector<128x128xf32>
    %126 = tpu.matmul %123, %125, %cst_112 {dimension_numbers = #tpu.dot_dimension_numbers<[1], [0], [0], [1], [0, 0, 1, 1], [], []>} : vector<128x36xbf16>, vector<36x128xbf16>, vector<128x128xf32> -> vector<128x128xf32>
    %127 = arith.addf %120, %126 : vector<128x128xf32>
    %c10 = arith.constant 10 : index
    %c0_113 = arith.constant 0 : index
    %c0_114 = arith.constant 0 : index
    %128 = vector.load %arg6[%c10, %c0_113, %c0_114] : memref<36x18x36xf32, #tpu.memory_space<vmem>>, vector<8x16x36xf32>
    %129 = vector.shape_cast %128 : vector<8x16x36xf32> to vector<128x36xf32>
    %130 = arith.truncf %129 : vector<128x36xf32> to vector<128x36xbf16>
    %c6_115 = arith.constant 6 : index
    %c0_116 = arith.constant 0 : index
    %c0_117 = arith.constant 0 : index
    %131 = vector.load %arg2[%c6_115, %c0_116, %c0_117] : memref<9x36x128xbf16, #tpu.memory_space<vmem>>, vector<1x36x128xbf16>
    %132 = vector.shape_cast %131 : vector<1x36x128xbf16> to vector<36x128xbf16>
    %cst_118 = arith.constant dense<0.000000e+00> : vector<128x128xf32>
    %133 = tpu.matmul %130, %132, %cst_118 {dimension_numbers = #tpu.dot_dimension_numbers<[1], [0], [0], [1], [0, 0, 1, 1], [], []>} : vector<128x36xbf16>, vector<36x128xbf16>, vector<128x128xf32> -> vector<128x128xf32>
    %134 = arith.addf %127, %133 : vector<128x128xf32>
    %c10_119 = arith.constant 10 : index
    %c1_120 = arith.constant 1 : index
    %c0_121 = arith.constant 0 : index
    %135 = vector.load %arg6[%c10_119, %c1_120, %c0_121] : memref<36x18x36xf32, #tpu.memory_space<vmem>>, vector<8x16x36xf32>
    %136 = vector.shape_cast %135 : vector<8x16x36xf32> to vector<128x36xf32>
    %137 = arith.truncf %136 : vector<128x36xf32> to vector<128x36xbf16>
    %c7_122 = arith.constant 7 : index
    %c0_123 = arith.constant 0 : index
    %c0_124 = arith.constant 0 : index
    %138 = vector.load %arg2[%c7_122, %c0_123, %c0_124] : memref<9x36x128xbf16, #tpu.memory_space<vmem>>, vector<1x36x128xbf16>
    %139 = vector.shape_cast %138 : vector<1x36x128xbf16> to vector<36x128xbf16>
    %cst_125 = arith.constant dense<0.000000e+00> : vector<128x128xf32>
    %140 = tpu.matmul %137, %139, %cst_125 {dimension_numbers = #tpu.dot_dimension_numbers<[1], [0], [0], [1], [0, 0, 1, 1], [], []>} : vector<128x36xbf16>, vector<36x128xbf16>, vector<128x128xf32> -> vector<128x128xf32>
    %141 = arith.addf %134, %140 : vector<128x128xf32>
    %c10_126 = arith.constant 10 : index
    %c2_127 = arith.constant 2 : index
    %c0_128 = arith.constant 0 : index
    %142 = vector.load %arg6[%c10_126, %c2_127, %c0_128] : memref<36x18x36xf32, #tpu.memory_space<vmem>>, vector<8x16x36xf32>
    %143 = vector.shape_cast %142 : vector<8x16x36xf32> to vector<128x36xf32>
    %144 = arith.truncf %143 : vector<128x36xf32> to vector<128x36xbf16>
    %c8_129 = arith.constant 8 : index
    %c0_130 = arith.constant 0 : index
    %c0_131 = arith.constant 0 : index
    %145 = vector.load %arg2[%c8_129, %c0_130, %c0_131] : memref<9x36x128xbf16, #tpu.memory_space<vmem>>, vector<1x36x128xbf16>
    %146 = vector.shape_cast %145 : vector<1x36x128xbf16> to vector<36x128xbf16>
    %cst_132 = arith.constant dense<0.000000e+00> : vector<128x128xf32>
    %147 = tpu.matmul %144, %146, %cst_132 {dimension_numbers = #tpu.dot_dimension_numbers<[1], [0], [0], [1], [0, 0, 1, 1], [], []>} : vector<128x36xbf16>, vector<36x128xbf16>, vector<128x128xf32> -> vector<128x128xf32>
    %148 = arith.addf %141, %147 : vector<128x128xf32>
    %c128 = arith.constant 128 : index
    %c0_133 = arith.constant 0 : index
    %149 = vector.load %arg7[%c128, %c0_133] : memref<512x128xf32, #tpu.memory_space<vmem>>, vector<128x128xf32>
    tpu.vector_store %arg7[%c128, %c0_133], %148 {strides = array<i32>} : memref<512x128xf32, #tpu.memory_space<vmem>>, vector<128x128xf32>,
    %cst_134 = arith.constant dense<0.000000e+00> : vector<128xf32>
    %150 = vector.multi_reduction <add>, %148, %cst_134 [0] : vector<128x128xf32> to vector<128xf32>
    %151 = vector.shape_cast %150 : vector<128xf32> to vector<1x128xf32>
    %152 = arith.addf %80, %151 : vector<1x128xf32>
    %153 = arith.mulf %148, %148 : vector<128x128xf32>
    %cst_135 = arith.constant dense<0.000000e+00> : vector<128xf32>
    %154 = vector.multi_reduction <add>, %153, %cst_135 [0] : vector<128x128xf32> to vector<128xf32>
    %155 = vector.shape_cast %154 : vector<128xf32> to vector<1x128xf32>
    %156 = arith.addf %84, %155 : vector<1x128xf32>
    %cst_136 = arith.constant 0.000000e+00 : f32
    %157 = vector.broadcast %cst_136 : f32 to vector<128x128xf32>
    %c18 = arith.constant 18 : index
    %c0_137 = arith.constant 0 : index
    %c0_138 = arith.constant 0 : index
    %158 = vector.load %arg6[%c18, %c0_137, %c0_138] : memref<36x18x36xf32, #tpu.memory_space<vmem>>, vector<8x16x36xf32>
    %159 = vector.shape_cast %158 : vector<8x16x36xf32> to vector<128x36xf32>
    %160 = arith.truncf %159 : vector<128x36xf32> to vector<128x36xbf16>
    %c0_139 = arith.constant 0 : index
    %c0_140 = arith.constant 0 : index
    %c0_141 = arith.constant 0 : index
    %161 = vector.load %arg2[%c0_139, %c0_140, %c0_141] : memref<9x36x128xbf16, #tpu.memory_space<vmem>>, vector<1x36x128xbf16>
    %162 = vector.shape_cast %161 : vector<1x36x128xbf16> to vector<36x128xbf16>
    %cst_142 = arith.constant dense<0.000000e+00> : vector<128x128xf32>
    %163 = tpu.matmul %160, %162, %cst_142 {dimension_numbers = #tpu.dot_dimension_numbers<[1], [0], [0], [1], [0, 0, 1, 1], [], []>} : vector<128x36xbf16>, vector<36x128xbf16>, vector<128x128xf32> -> vector<128x128xf32>
    %164 = arith.addf %157, %163 : vector<128x128xf32>
    %c18_143 = arith.constant 18 : index
    %c1_144 = arith.constant 1 : index
    %c0_145 = arith.constant 0 : index
    %165 = vector.load %arg6[%c18_143, %c1_144, %c0_145] : memref<36x18x36xf32, #tpu.memory_space<vmem>>, vector<8x16x36xf32>
    %166 = vector.shape_cast %165 : vector<8x16x36xf32> to vector<128x36xf32>
    %167 = arith.truncf %166 : vector<128x36xf32> to vector<128x36xbf16>
    %c1_146 = arith.constant 1 : index
    %c0_147 = arith.constant 0 : index
    %c0_148 = arith.constant 0 : index
    %168 = vector.load %arg2[%c1_146, %c0_147, %c0_148] : memref<9x36x128xbf16, #tpu.memory_space<vmem>>, vector<1x36x128xbf16>
    %169 = vector.shape_cast %168 : vector<1x36x128xbf16> to vector<36x128xbf16>
    %cst_149 = arith.constant dense<0.000000e+00> : vector<128x128xf32>
    %170 = tpu.matmul %167, %169, %cst_149 {dimension_numbers = #tpu.dot_dimension_numbers<[1], [0], [0], [1], [0, 0, 1, 1], [], []>} : vector<128x36xbf16>, vector<36x128xbf16>, vector<128x128xf32> -> vector<128x128xf32>
    %171 = arith.addf %164, %170 : vector<128x128xf32>
    %c18_150 = arith.constant 18 : index
    %c2_151 = arith.constant 2 : index
    %c0_152 = arith.constant 0 : index
    %172 = vector.load %arg6[%c18_150, %c2_151, %c0_152] : memref<36x18x36xf32, #tpu.memory_space<vmem>>, vector<8x16x36xf32>
    %173 = vector.shape_cast %172 : vector<8x16x36xf32> to vector<128x36xf32>
    %174 = arith.truncf %173 : vector<128x36xf32> to vector<128x36xbf16>
    %c2_153 = arith.constant 2 : index
    %c0_154 = arith.constant 0 : index
    %c0_155 = arith.constant 0 : index
    %175 = vector.load %arg2[%c2_153, %c0_154, %c0_155] : memref<9x36x128xbf16, #tpu.memory_space<vmem>>, vector<1x36x128xbf16>
    %176 = vector.shape_cast %175 : vector<1x36x128xbf16> to vector<36x128xbf16>
    %cst_156 = arith.constant dense<0.000000e+00> : vector<128x128xf32>
    %177 = tpu.matmul %174, %176, %cst_156 {dimension_numbers = #tpu.dot_dimension_numbers<[1], [0], [0], [1], [0, 0, 1, 1], [], []>} : vector<128x36xbf16>, vector<36x128xbf16>, vector<128x128xf32> -> vector<128x128xf32>
    %178 = arith.addf %171, %177 : vector<128x128xf32>
    %c19_157 = arith.constant 19 : index
    %c0_158 = arith.constant 0 : index
    %c0_159 = arith.constant 0 : index
    %179 = vector.load %arg6[%c19_157, %c0_158, %c0_159] : memref<36x18x36xf32, #tpu.memory_space<vmem>>, vector<8x16x36xf32>
    %180 = vector.shape_cast %179 : vector<8x16x36xf32> to vector<128x36xf32>
    %181 = arith.truncf %180 : vector<128x36xf32> to vector<128x36xbf16>
    %c3_160 = arith.constant 3 : index
    %c0_161 = arith.constant 0 : index
    %c0_162 = arith.constant 0 : index
    %182 = vector.load %arg2[%c3_160, %c0_161, %c0_162] : memref<9x36x128xbf16, #tpu.memory_space<vmem>>, vector<1x36x128xbf16>
    %183 = vector.shape_cast %182 : vector<1x36x128xbf16> to vector<36x128xbf16>
    %cst_163 = arith.constant dense<0.000000e+00> : vector<128x128xf32>
    %184 = tpu.matmul %181, %183, %cst_163 {dimension_numbers = #tpu.dot_dimension_numbers<[1], [0], [0], [1], [0, 0, 1, 1], [], []>} : vector<128x36xbf16>, vector<36x128xbf16>, vector<128x128xf32> -> vector<128x128xf32>
    %185 = arith.addf %178, %184 : vector<128x128xf32>
    %c19_164 = arith.constant 19 : index
    %c1_165 = arith.constant 1 : index
    %c0_166 = arith.constant 0 : index
    %186 = vector.load %arg6[%c19_164, %c1_165, %c0_166] : memref<36x18x36xf32, #tpu.memory_space<vmem>>, vector<8x16x36xf32>
    %187 = vector.shape_cast %186 : vector<8x16x36xf32> to vector<128x36xf32>
    %188 = arith.truncf %187 : vector<128x36xf32> to vector<128x36xbf16>
    %c4_167 = arith.constant 4 : index
    %c0_168 = arith.constant 0 : index
    %c0_169 = arith.constant 0 : index
    %189 = vector.load %arg2[%c4_167, %c0_168, %c0_169] : memref<9x36x128xbf16, #tpu.memory_space<vmem>>, vector<1x36x128xbf16>
    %190 = vector.shape_cast %189 : vector<1x36x128xbf16> to vector<36x128xbf16>
    %cst_170 = arith.constant dense<0.000000e+00> : vector<128x128xf32>
    %191 = tpu.matmul %188, %190, %cst_170 {dimension_numbers = #tpu.dot_dimension_numbers<[1], [0], [0], [1], [0, 0, 1, 1], [], []>} : vector<128x36xbf16>, vector<36x128xbf16>, vector<128x128xf32> -> vector<128x128xf32>
    %192 = arith.addf %185, %191 : vector<128x128xf32>
    %c19_171 = arith.constant 19 : index
    %c2_172 = arith.constant 2 : index
    %c0_173 = arith.constant 0 : index
    %193 = vector.load %arg6[%c19_171, %c2_172, %c0_173] : memref<36x18x36xf32, #tpu.memory_space<vmem>>, vector<8x16x36xf32>
    %194 = vector.shape_cast %193 : vector<8x16x36xf32> to vector<128x36xf32>
    %195 = arith.truncf %194 : vector<128x36xf32> to vector<128x36xbf16>
    %c5_174 = arith.constant 5 : index
    %c0_175 = arith.constant 0 : index
    %c0_176 = arith.constant 0 : index
    %196 = vector.load %arg2[%c5_174, %c0_175, %c0_176] : memref<9x36x128xbf16, #tpu.memory_space<vmem>>, vector<1x36x128xbf16>
    %197 = vector.shape_cast %196 : vector<1x36x128xbf16> to vector<36x128xbf16>
    %cst_177 = arith.constant dense<0.000000e+00> : vector<128x128xf32>
    %198 = tpu.matmul %195, %197, %cst_177 {dimension_numbers = #tpu.dot_dimension_numbers<[1], [0], [0], [1], [0, 0, 1, 1], [], []>} : vector<128x36xbf16>, vector<36x128xbf16>, vector<128x128xf32> -> vector<128x128xf32>
    %199 = arith.addf %192, %198 : vector<128x128xf32>
    %c20 = arith.constant 20 : index
    %c0_178 = arith.constant 0 : index
    %c0_179 = arith.constant 0 : index
    %200 = vector.load %arg6[%c20, %c0_178, %c0_179] : memref<36x18x36xf32, #tpu.memory_space<vmem>>, vector<8x16x36xf32>
    %201 = vector.shape_cast %200 : vector<8x16x36xf32> to vector<128x36xf32>
    %202 = arith.truncf %201 : vector<128x36xf32> to vector<128x36xbf16>
    %c6_180 = arith.constant 6 : index
    %c0_181 = arith.constant 0 : index
    %c0_182 = arith.constant 0 : index
    %203 = vector.load %arg2[%c6_180, %c0_181, %c0_182] : memref<9x36x128xbf16, #tpu.memory_space<vmem>>, vector<1x36x128xbf16>
    %204 = vector.shape_cast %203 : vector<1x36x128xbf16> to vector<36x128xbf16>
    %cst_183 = arith.constant dense<0.000000e+00> : vector<128x128xf32>
    %205 = tpu.matmul %202, %204, %cst_183 {dimension_numbers = #tpu.dot_dimension_numbers<[1], [0], [0], [1], [0, 0, 1, 1], [], []>} : vector<128x36xbf16>, vector<36x128xbf16>, vector<128x128xf32> -> vector<128x128xf32>
    %206 = arith.addf %199, %205 : vector<128x128xf32>
    %c20_184 = arith.constant 20 : index
    %c1_185 = arith.constant 1 : index
    %c0_186 = arith.constant 0 : index
    %207 = vector.load %arg6[%c20_184, %c1_185, %c0_186] : memref<36x18x36xf32, #tpu.memory_space<vmem>>, vector<8x16x36xf32>
    %208 = vector.shape_cast %207 : vector<8x16x36xf32> to vector<128x36xf32>
    %209 = arith.truncf %208 : vector<128x36xf32> to vector<128x36xbf16>
    %c7_187 = arith.constant 7 : index
    %c0_188 = arith.constant 0 : index
    %c0_189 = arith.constant 0 : index
    %210 = vector.load %arg2[%c7_187, %c0_188, %c0_189] : memref<9x36x128xbf16, #tpu.memory_space<vmem>>, vector<1x36x128xbf16>
    %211 = vector.shape_cast %210 : vector<1x36x128xbf16> to vector<36x128xbf16>
    %cst_190 = arith.constant dense<0.000000e+00> : vector<128x128xf32>
    %212 = tpu.matmul %209, %211, %cst_190 {dimension_numbers = #tpu.dot_dimension_numbers<[1], [0], [0], [1], [0, 0, 1, 1], [], []>} : vector<128x36xbf16>, vector<36x128xbf16>, vector<128x128xf32> -> vector<128x128xf32>
    %213 = arith.addf %206, %212 : vector<128x128xf32>
    %c20_191 = arith.constant 20 : index
    %c2_192 = arith.constant 2 : index
    %c0_193 = arith.constant 0 : index
    %214 = vector.load %arg6[%c20_191, %c2_192, %c0_193] : memref<36x18x36xf32, #tpu.memory_space<vmem>>, vector<8x16x36xf32>
    %215 = vector.shape_cast %214 : vector<8x16x36xf32> to vector<128x36xf32>
    %216 = arith.truncf %215 : vector<128x36xf32> to vector<128x36xbf16>
    %c8_194 = arith.constant 8 : index
    %c0_195 = arith.constant 0 : index
    %c0_196 = arith.constant 0 : index
    %217 = vector.load %arg2[%c8_194, %c0_195, %c0_196] : memref<9x36x128xbf16, #tpu.memory_space<vmem>>, vector<1x36x128xbf16>
    %218 = vector.shape_cast %217 : vector<1x36x128xbf16> to vector<36x128xbf16>
    %cst_197 = arith.constant dense<0.000000e+00> : vector<128x128xf32>
    %219 = tpu.matmul %216, %218, %cst_197 {dimension_numbers = #tpu.dot_dimension_numbers<[1], [0], [0], [1], [0, 0, 1, 1], [], []>} : vector<128x36xbf16>, vector<36x128xbf16>, vector<128x128xf32> -> vector<128x128xf32>
    %220 = arith.addf %213, %219 : vector<128x128xf32>
    %c256 = arith.constant 256 : index
    %c0_198 = arith.constant 0 : index
    %221 = vector.load %arg7[%c256, %c0_198] : memref<512x128xf32, #tpu.memory_space<vmem>>, vector<128x128xf32>
    tpu.vector_store %arg7[%c256, %c0_198], %220 {strides = array<i32>} : memref<512x128xf32, #tpu.memory_space<vmem>>, vector<128x128xf32>,
    %cst_199 = arith.constant dense<0.000000e+00> : vector<128xf32>
    %222 = vector.multi_reduction <add>, %220, %cst_199 [0] : vector<128x128xf32> to vector<128xf32>
    %223 = vector.shape_cast %222 : vector<128xf32> to vector<1x128xf32>
    %224 = arith.addf %152, %223 : vector<1x128xf32>
    %225 = arith.mulf %220, %220 : vector<128x128xf32>
    %cst_200 = arith.constant dense<0.000000e+00> : vector<128xf32>
    %226 = vector.multi_reduction <add>, %225, %cst_200 [0] : vector<128x128xf32> to vector<128xf32>
    %227 = vector.shape_cast %226 : vector<128xf32> to vector<1x128xf32>
    %228 = arith.addf %156, %227 : vector<1x128xf32>
    %cst_201 = arith.constant 0.000000e+00 : f32
    %229 = vector.broadcast %cst_201 : f32 to vector<128x128xf32>
    %c26 = arith.constant 26 : index
    %c0_202 = arith.constant 0 : index
    %c0_203 = arith.constant 0 : index
    %230 = vector.load %arg6[%c26, %c0_202, %c0_203] : memref<36x18x36xf32, #tpu.memory_space<vmem>>, vector<8x16x36xf32>
    %231 = vector.shape_cast %230 : vector<8x16x36xf32> to vector<128x36xf32>
    %232 = arith.truncf %231 : vector<128x36xf32> to vector<128x36xbf16>
    %c0_204 = arith.constant 0 : index
    %c0_205 = arith.constant 0 : index
    %c0_206 = arith.constant 0 : index
    %233 = vector.load %arg2[%c0_204, %c0_205, %c0_206] : memref<9x36x128xbf16, #tpu.memory_space<vmem>>, vector<1x36x128xbf16>
    %234 = vector.shape_cast %233 : vector<1x36x128xbf16> to vector<36x128xbf16>
    %cst_207 = arith.constant dense<0.000000e+00> : vector<128x128xf32>
    %235 = tpu.matmul %232, %234, %cst_207 {dimension_numbers = #tpu.dot_dimension_numbers<[1], [0], [0], [1], [0, 0, 1, 1], [], []>} : vector<128x36xbf16>, vector<36x128xbf16>, vector<128x128xf32> -> vector<128x128xf32>
    %236 = arith.addf %229, %235 : vector<128x128xf32>
    %c26_208 = arith.constant 26 : index
    %c1_209 = arith.constant 1 : index
    %c0_210 = arith.constant 0 : index
    %237 = vector.load %arg6[%c26_208, %c1_209, %c0_210] : memref<36x18x36xf32, #tpu.memory_space<vmem>>, vector<8x16x36xf32>
    %238 = vector.shape_cast %237 : vector<8x16x36xf32> to vector<128x36xf32>
    %239 = arith.truncf %238 : vector<128x36xf32> to vector<128x36xbf16>
    %c1_211 = arith.constant 1 : index
    %c0_212 = arith.constant 0 : index
    %c0_213 = arith.constant 0 : index
    %240 = vector.load %arg2[%c1_211, %c0_212, %c0_213] : memref<9x36x128xbf16, #tpu.memory_space<vmem>>, vector<1x36x128xbf16>
    %241 = vector.shape_cast %240 : vector<1x36x128xbf16> to vector<36x128xbf16>
    %cst_214 = arith.constant dense<0.000000e+00> : vector<128x128xf32>
    %242 = tpu.matmul %239, %241, %cst_214 {dimension_numbers = #tpu.dot_dimension_numbers<[1], [0], [0], [1], [0, 0, 1, 1], [], []>} : vector<128x36xbf16>, vector<36x128xbf16>, vector<128x128xf32> -> vector<128x128xf32>
    %243 = arith.addf %236, %242 : vector<128x128xf32>
    %c26_215 = arith.constant 26 : index
    %c2_216 = arith.constant 2 : index
    %c0_217 = arith.constant 0 : index
    %244 = vector.load %arg6[%c26_215, %c2_216, %c0_217] : memref<36x18x36xf32, #tpu.memory_space<vmem>>, vector<8x16x36xf32>
    %245 = vector.shape_cast %244 : vector<8x16x36xf32> to vector<128x36xf32>
    %246 = arith.truncf %245 : vector<128x36xf32> to vector<128x36xbf16>
    %c2_218 = arith.constant 2 : index
    %c0_219 = arith.constant 0 : index
    %c0_220 = arith.constant 0 : index
    %247 = vector.load %arg2[%c2_218, %c0_219, %c0_220] : memref<9x36x128xbf16, #tpu.memory_space<vmem>>, vector<1x36x128xbf16>
    %248 = vector.shape_cast %247 : vector<1x36x128xbf16> to vector<36x128xbf16>
    %cst_221 = arith.constant dense<0.000000e+00> : vector<128x128xf32>
    %249 = tpu.matmul %246, %248, %cst_221 {dimension_numbers = #tpu.dot_dimension_numbers<[1], [0], [0], [1], [0, 0, 1, 1], [], []>} : vector<128x36xbf16>, vector<36x128xbf16>, vector<128x128xf32> -> vector<128x128xf32>
    %250 = arith.addf %243, %249 : vector<128x128xf32>
    %c27 = arith.constant 27 : index
    %c0_222 = arith.constant 0 : index
    %c0_223 = arith.constant 0 : index
    %251 = vector.load %arg6[%c27, %c0_222, %c0_223] : memref<36x18x36xf32, #tpu.memory_space<vmem>>, vector<8x16x36xf32>
    %252 = vector.shape_cast %251 : vector<8x16x36xf32> to vector<128x36xf32>
    %253 = arith.truncf %252 : vector<128x36xf32> to vector<128x36xbf16>
    %c3_224 = arith.constant 3 : index
    %c0_225 = arith.constant 0 : index
    %c0_226 = arith.constant 0 : index
    %254 = vector.load %arg2[%c3_224, %c0_225, %c0_226] : memref<9x36x128xbf16, #tpu.memory_space<vmem>>, vector<1x36x128xbf16>
    %255 = vector.shape_cast %254 : vector<1x36x128xbf16> to vector<36x128xbf16>
    %cst_227 = arith.constant dense<0.000000e+00> : vector<128x128xf32>
    %256 = tpu.matmul %253, %255, %cst_227 {dimension_numbers = #tpu.dot_dimension_numbers<[1], [0], [0], [1], [0, 0, 1, 1], [], []>} : vector<128x36xbf16>, vector<36x128xbf16>, vector<128x128xf32> -> vector<128x128xf32>
    %257 = arith.addf %250, %256 : vector<128x128xf32>
    %c27_228 = arith.constant 27 : index
    %c1_229 = arith.constant 1 : index
    %c0_230 = arith.constant 0 : index
    %258 = vector.load %arg6[%c27_228, %c1_229, %c0_230] : memref<36x18x36xf32, #tpu.memory_space<vmem>>, vector<8x16x36xf32>
    %259 = vector.shape_cast %258 : vector<8x16x36xf32> to vector<128x36xf32>
    %260 = arith.truncf %259 : vector<128x36xf32> to vector<128x36xbf16>
    %c4_231 = arith.constant 4 : index
    %c0_232 = arith.constant 0 : index
    %c0_233 = arith.constant 0 : index
    %261 = vector.load %arg2[%c4_231, %c0_232, %c0_233] : memref<9x36x128xbf16, #tpu.memory_space<vmem>>, vector<1x36x128xbf16>
    %262 = vector.shape_cast %261 : vector<1x36x128xbf16> to vector<36x128xbf16>
    %cst_234 = arith.constant dense<0.000000e+00> : vector<128x128xf32>
    %263 = tpu.matmul %260, %262, %cst_234 {dimension_numbers = #tpu.dot_dimension_numbers<[1], [0], [0], [1], [0, 0, 1, 1], [], []>} : vector<128x36xbf16>, vector<36x128xbf16>, vector<128x128xf32> -> vector<128x128xf32>
    %264 = arith.addf %257, %263 : vector<128x128xf32>
    %c27_235 = arith.constant 27 : index
    %c2_236 = arith.constant 2 : index
    %c0_237 = arith.constant 0 : index
    %265 = vector.load %arg6[%c27_235, %c2_236, %c0_237] : memref<36x18x36xf32, #tpu.memory_space<vmem>>, vector<8x16x36xf32>
    %266 = vector.shape_cast %265 : vector<8x16x36xf32> to vector<128x36xf32>
    %267 = arith.truncf %266 : vector<128x36xf32> to vector<128x36xbf16>
    %c5_238 = arith.constant 5 : index
    %c0_239 = arith.constant 0 : index
    %c0_240 = arith.constant 0 : index
    %268 = vector.load %arg2[%c5_238, %c0_239, %c0_240] : memref<9x36x128xbf16, #tpu.memory_space<vmem>>, vector<1x36x128xbf16>
    %269 = vector.shape_cast %268 : vector<1x36x128xbf16> to vector<36x128xbf16>
    %cst_241 = arith.constant dense<0.000000e+00> : vector<128x128xf32>
    %270 = tpu.matmul %267, %269, %cst_241 {dimension_numbers = #tpu.dot_dimension_numbers<[1], [0], [0], [1], [0, 0, 1, 1], [], []>} : vector<128x36xbf16>, vector<36x128xbf16>, vector<128x128xf32> -> vector<128x128xf32>
    %271 = arith.addf %264, %270 : vector<128x128xf32>
    %c28 = arith.constant 28 : index
    %c0_242 = arith.constant 0 : index
    %c0_243 = arith.constant 0 : index
    %272 = vector.load %arg6[%c28, %c0_242, %c0_243] : memref<36x18x36xf32, #tpu.memory_space<vmem>>, vector<8x16x36xf32>
    %273 = vector.shape_cast %272 : vector<8x16x36xf32> to vector<128x36xf32>
    %274 = arith.truncf %273 : vector<128x36xf32> to vector<128x36xbf16>
    %c6_244 = arith.constant 6 : index
    %c0_245 = arith.constant 0 : index
    %c0_246 = arith.constant 0 : index
    %275 = vector.load %arg2[%c6_244, %c0_245, %c0_246] : memref<9x36x128xbf16, #tpu.memory_space<vmem>>, vector<1x36x128xbf16>
    %276 = vector.shape_cast %275 : vector<1x36x128xbf16> to vector<36x128xbf16>
    %cst_247 = arith.constant dense<0.000000e+00> : vector<128x128xf32>
    %277 = tpu.matmul %274, %276, %cst_247 {dimension_numbers = #tpu.dot_dimension_numbers<[1], [0], [0], [1], [0, 0, 1, 1], [], []>} : vector<128x36xbf16>, vector<36x128xbf16>, vector<128x128xf32> -> vector<128x128xf32>
    %278 = arith.addf %271, %277 : vector<128x128xf32>
    %c28_248 = arith.constant 28 : index
    %c1_249 = arith.constant 1 : index
    %c0_250 = arith.constant 0 : index
    %279 = vector.load %arg6[%c28_248, %c1_249, %c0_250] : memref<36x18x36xf32, #tpu.memory_space<vmem>>, vector<8x16x36xf32>
    %280 = vector.shape_cast %279 : vector<8x16x36xf32> to vector<128x36xf32>
    %281 = arith.truncf %280 : vector<128x36xf32> to vector<128x36xbf16>
    %c7_251 = arith.constant 7 : index
    %c0_252 = arith.constant 0 : index
    %c0_253 = arith.constant 0 : index
    %282 = vector.load %arg2[%c7_251, %c0_252, %c0_253] : memref<9x36x128xbf16, #tpu.memory_space<vmem>>, vector<1x36x128xbf16>
    %283 = vector.shape_cast %282 : vector<1x36x128xbf16> to vector<36x128xbf16>
    %cst_254 = arith.constant dense<0.000000e+00> : vector<128x128xf32>
    %284 = tpu.matmul %281, %283, %cst_254 {dimension_numbers = #tpu.dot_dimension_numbers<[1], [0], [0], [1], [0, 0, 1, 1], [], []>} : vector<128x36xbf16>, vector<36x128xbf16>, vector<128x128xf32> -> vector<128x128xf32>
    %285 = arith.addf %278, %284 : vector<128x128xf32>
    %c28_255 = arith.constant 28 : index
    %c2_256 = arith.constant 2 : index
    %c0_257 = arith.constant 0 : index
    %286 = vector.load %arg6[%c28_255, %c2_256, %c0_257] : memref<36x18x36xf32, #tpu.memory_space<vmem>>, vector<8x16x36xf32>
    %287 = vector.shape_cast %286 : vector<8x16x36xf32> to vector<128x36xf32>
    %288 = arith.truncf %287 : vector<128x36xf32> to vector<128x36xbf16>
    %c8_258 = arith.constant 8 : index
    %c0_259 = arith.constant 0 : index
    %c0_260 = arith.constant 0 : index
    %289 = vector.load %arg2[%c8_258, %c0_259, %c0_260] : memref<9x36x128xbf16, #tpu.memory_space<vmem>>, vector<1x36x128xbf16>
    %290 = vector.shape_cast %289 : vector<1x36x128xbf16> to vector<36x128xbf16>
    %cst_261 = arith.constant dense<0.000000e+00> : vector<128x128xf32>
    %291 = tpu.matmul %288, %290, %cst_261 {dimension_numbers = #tpu.dot_dimension_numbers<[1], [0], [0], [1], [0, 0, 1, 1], [], []>} : vector<128x36xbf16>, vector<36x128xbf16>, vector<128x128xf32> -> vector<128x128xf32>
    %292 = arith.addf %285, %291 : vector<128x128xf32>
    %c384 = arith.constant 384 : index
    %c0_262 = arith.constant 0 : index
    %293 = vector.load %arg7[%c384, %c0_262] : memref<512x128xf32, #tpu.memory_space<vmem>>, vector<128x128xf32>
    tpu.vector_store %arg7[%c384, %c0_262], %292 {strides = array<i32>} : memref<512x128xf32, #tpu.memory_space<vmem>>, vector<128x128xf32>,
    %cst_263 = arith.constant dense<0.000000e+00> : vector<128xf32>
    %294 = vector.multi_reduction <add>, %292, %cst_263 [0] : vector<128x128xf32> to vector<128xf32>
    %295 = vector.shape_cast %294 : vector<128xf32> to vector<1x128xf32>
    %296 = arith.addf %224, %295 : vector<1x128xf32>
    %297 = arith.mulf %292, %292 : vector<128x128xf32>
    %cst_264 = arith.constant dense<0.000000e+00> : vector<128xf32>
    %298 = vector.multi_reduction <add>, %297, %cst_264 [0] : vector<128x128xf32> to vector<128xf32>
    %299 = vector.shape_cast %298 : vector<128xf32> to vector<1x128xf32>
    %300 = arith.addf %228, %299 : vector<1x128xf32>
    %cst_265 = arith.constant 0.001953125 : f32
    %301 = vector.broadcast %cst_265 : f32 to vector<1x128xf32>
    %302 = arith.mulf %296, %301 : vector<1x128xf32>
    %cst_266 = arith.constant 0.001953125 : f32
    %303 = vector.broadcast %cst_266 : f32 to vector<1x128xf32>
    %304 = arith.mulf %300, %303 : vector<1x128xf32>
    %305 = arith.mulf %302, %302 : vector<1x128xf32>
    %306 = arith.subf %304, %305 : vector<1x128xf32>
    %cst_267 = arith.constant 0.000000e+00 : f32
    %307 = vector.broadcast %cst_267 : f32 to vector<1x128xf32>
    %308 = arith.maximumf %306, %307 : vector<1x128xf32>
    %c0_268 = arith.constant 0 : index
    %c0_269 = arith.constant 0 : index
    %309 = vector.load %arg3[%c0_268, %c0_269] : memref<1x128xf32, #tpu.memory_space<vmem>>, vector<1x128xf32>
    %cst_270 = arith.constant 9.99999974E-6 : f32
    %310 = vector.broadcast %cst_270 : f32 to vector<1x128xf32>
    %311 = arith.addf %308, %310 : vector<1x128xf32>
    %312 = math.rsqrt %311 : vector<1x128xf32>
    %313 = arith.mulf %309, %312 : vector<1x128xf32>
    %c0_271 = arith.constant 0 : index
    %c0_272 = arith.constant 0 : index
    %314 = vector.load %arg4[%c0_271, %c0_272] : memref<1x128xf32, #tpu.memory_space<vmem>>, vector<1x128xf32>
    %315 = arith.mulf %302, %313 : vector<1x128xf32>
    %316 = arith.subf %314, %315 : vector<1x128xf32>
    %c0_273 = arith.constant 0 : index
    %c0_274 = arith.constant 0 : index
    %317 = vector.load %arg7[%c0_273, %c0_274] : memref<512x128xf32, #tpu.memory_space<vmem>>, vector<128x128xf32>
    %318 = vector.broadcast %313 : vector<1x128xf32> to vector<128x128xf32>
    %319 = arith.mulf %317, %318 : vector<128x128xf32>
    %320 = vector.broadcast %316 : vector<1x128xf32> to vector<128x128xf32>
    %321 = arith.addf %319, %320 : vector<128x128xf32>
    %322 = arith.negf %321 : vector<128x128xf32>
    %323 = math.exp %322 : vector<128x128xf32>
    %cst_275 = arith.constant 1.000000e+00 : f32
    %324 = vector.broadcast %cst_275 : f32 to vector<128x128xf32>
    %325 = arith.addf %324, %323 : vector<128x128xf32>
    %326 = arith.divf %324, %325 : vector<128x128xf32>
    %327 = vector.extract_strided_slice %326 {offsets = [0, 0], sizes = [128, 32], strides = [1, 1]} : vector<128x128xf32> to vector<128x32xf32>
    %328 = vector.extract_strided_slice %326 {offsets = [0, 32], sizes = [128, 32], strides = [1, 1]} : vector<128x128xf32> to vector<128x32xf32>
    %329 = vector.extract_strided_slice %326 {offsets = [0, 96], sizes = [128, 32], strides = [1, 1]} : vector<128x128xf32> to vector<128x32xf32>
    %330 = vector.extract_strided_slice %321 {offsets = [0, 64], sizes = [128, 32], strides = [1, 1]} : vector<128x128xf32> to vector<128x32xf32>
    %c0_276 = arith.constant 0 : index
    %c0_277 = arith.constant 0 : index
    %331 = vector.load %arg8[%c0_276, %c0_277] : memref<512x32xf32, #tpu.memory_space<vmem>>, vector<128x32xf32>
    %332 = arith.mulf %328, %331 : vector<128x32xf32>
    %333 = arith.mulf %327, %330 : vector<128x32xf32>
    %334 = arith.addf %332, %333 : vector<128x32xf32>
    %335 = math.tanh %334 : vector<128x32xf32>
    %336 = arith.mulf %329, %335 : vector<128x32xf32>
    %c0_278 = arith.constant 0 : index
    %c0_279 = arith.constant 0 : index
    %337 = vector.load %arg8[%c0_278, %c0_279] : memref<512x32xf32, #tpu.memory_space<vmem>>, vector<128x32xf32>
    tpu.vector_store %arg8[%c0_278, %c0_279], %334 {strides = array<i32>} : memref<512x32xf32, #tpu.memory_space<vmem>>, vector<128x32xf32>,
    %c0_280 = arith.constant 0 : index
    %c0_281 = arith.constant 0 : index
    %c0_282 = arith.constant 0 : index
    %338 = vector.load %arg5[%c0_280, %c0_281, %c0_282] : memref<1x512x32xf32, #tpu.memory_space<vmem>>, vector<1x128x32xf32>
    %339 = vector.shape_cast %338 : vector<1x128x32xf32> to vector<128x32xf32>
    %340 = vector.shape_cast %336 : vector<128x32xf32> to vector<1x128x32xf32>
    tpu.vector_store %arg5[%c0_280, %c0_281, %c0_282], %340 {strides = array<i32>} : memref<1x512x32xf32, #tpu.memory_space<vmem>>, vector<1x128x32xf32>,
    %341 = vector.shape_cast %336 : vector<128x32xf32> to vector<8x16x32xf32>
    %c1_283 = arith.constant 1 : index
    %c1_284 = arith.constant 1 : index
    %c4_285 = arith.constant 4 : index
    %342 = vector.load %arg6[%c1_283, %c1_284, %c4_285] : memref<36x18x36xf32, #tpu.memory_space<vmem>>, vector<8x16x32xf32>
    tpu.vector_store %arg6[%c1_283, %c1_284, %c4_285], %341 {strides = array<i32>} : memref<36x18x36xf32, #tpu.memory_space<vmem>>, vector<8x16x32xf32>,
    %c128_286 = arith.constant 128 : index
    %c0_287 = arith.constant 0 : index
    %343 = vector.load %arg7[%c128_286, %c0_287] : memref<512x128xf32, #tpu.memory_space<vmem>>, vector<128x128xf32>
    %344 = vector.broadcast %313 : vector<1x128xf32> to vector<128x128xf32>
    %345 = arith.mulf %343, %344 : vector<128x128xf32>
    %346 = vector.broadcast %316 : vector<1x128xf32> to vector<128x128xf32>
    %347 = arith.addf %345, %346 : vector<128x128xf32>
    %348 = arith.negf %347 : vector<128x128xf32>
    %349 = math.exp %348 : vector<128x128xf32>
    %cst_288 = arith.constant 1.000000e+00 : f32
    %350 = vector.broadcast %cst_288 : f32 to vector<128x128xf32>
    %351 = arith.addf %350, %349 : vector<128x128xf32>
    %352 = arith.divf %350, %351 : vector<128x128xf32>
    %353 = vector.extract_strided_slice %352 {offsets = [0, 0], sizes = [128, 32], strides = [1, 1]} : vector<128x128xf32> to vector<128x32xf32>
    %354 = vector.extract_strided_slice %352 {offsets = [0, 32], sizes = [128, 32], strides = [1, 1]} : vector<128x128xf32> to vector<128x32xf32>
    %355 = vector.extract_strided_slice %352 {offsets = [0, 96], sizes = [128, 32], strides = [1, 1]} : vector<128x128xf32> to vector<128x32xf32>
    %356 = vector.extract_strided_slice %347 {offsets = [0, 64], sizes = [128, 32], strides = [1, 1]} : vector<128x128xf32> to vector<128x32xf32>
    %c128_289 = arith.constant 128 : index
    %c0_290 = arith.constant 0 : index
    %357 = vector.load %arg8[%c128_289, %c0_290] : memref<512x32xf32, #tpu.memory_space<vmem>>, vector<128x32xf32>
    %358 = arith.mulf %354, %357 : vector<128x32xf32>
    %359 = arith.mulf %353, %356 : vector<128x32xf32>
    %360 = arith.addf %358, %359 : vector<128x32xf32>
    %361 = math.tanh %360 : vector<128x32xf32>
    %362 = arith.mulf %355, %361 : vector<128x32xf32>
    %c128_291 = arith.constant 128 : index
    %c0_292 = arith.constant 0 : index
    %363 = vector.load %arg8[%c128_291, %c0_292] : memref<512x32xf32, #tpu.memory_space<vmem>>, vector<128x32xf32>
    tpu.vector_store %arg8[%c128_291, %c0_292], %360 {strides = array<i32>} : memref<512x32xf32, #tpu.memory_space<vmem>>, vector<128x32xf32>,
    %c0_293 = arith.constant 0 : index
    %c128_294 = arith.constant 128 : index
    %c0_295 = arith.constant 0 : index
    %364 = vector.load %arg5[%c0_293, %c128_294, %c0_295] : memref<1x512x32xf32, #tpu.memory_space<vmem>>, vector<1x128x32xf32>
    %365 = vector.shape_cast %364 : vector<1x128x32xf32> to vector<128x32xf32>
    %366 = vector.shape_cast %362 : vector<128x32xf32> to vector<1x128x32xf32>
    tpu.vector_store %arg5[%c0_293, %c128_294, %c0_295], %366 {strides = array<i32>} : memref<1x512x32xf32, #tpu.memory_space<vmem>>, vector<1x128x32xf32>,
    %367 = vector.shape_cast %362 : vector<128x32xf32> to vector<8x16x32xf32>
    %c9_296 = arith.constant 9 : index
    %c1_297 = arith.constant 1 : index
    %c4_298 = arith.constant 4 : index
    %368 = vector.load %arg6[%c9_296, %c1_297, %c4_298] : memref<36x18x36xf32, #tpu.memory_space<vmem>>, vector<8x16x32xf32>
    tpu.vector_store %arg6[%c9_296, %c1_297, %c4_298], %367 {strides = array<i32>} : memref<36x18x36xf32, #tpu.memory_space<vmem>>, vector<8x16x32xf32>,
    %c256_299 = arith.constant 256 : index
    %c0_300 = arith.constant 0 : index
    %369 = vector.load %arg7[%c256_299, %c0_300] : memref<512x128xf32, #tpu.memory_space<vmem>>, vector<128x128xf32>
    %370 = vector.broadcast %313 : vector<1x128xf32> to vector<128x128xf32>
    %371 = arith.mulf %369, %370 : vector<128x128xf32>
    %372 = vector.broadcast %316 : vector<1x128xf32> to vector<128x128xf32>
    %373 = arith.addf %371, %372 : vector<128x128xf32>
    %374 = arith.negf %373 : vector<128x128xf32>
    %375 = math.exp %374 : vector<128x128xf32>
    %cst_301 = arith.constant 1.000000e+00 : f32
    %376 = vector.broadcast %cst_301 : f32 to vector<128x128xf32>
    %377 = arith.addf %376, %375 : vector<128x128xf32>
    %378 = arith.divf %376, %377 : vector<128x128xf32>
    %379 = vector.extract_strided_slice %378 {offsets = [0, 0], sizes = [128, 32], strides = [1, 1]} : vector<128x128xf32> to vector<128x32xf32>
    %380 = vector.extract_strided_slice %378 {offsets = [0, 32], sizes = [128, 32], strides = [1, 1]} : vector<128x128xf32> to vector<128x32xf32>
    %381 = vector.extract_strided_slice %378 {offsets = [0, 96], sizes = [128, 32], strides = [1, 1]} : vector<128x128xf32> to vector<128x32xf32>
    %382 = vector.extract_strided_slice %373 {offsets = [0, 64], sizes = [128, 32], strides = [1, 1]} : vector<128x128xf32> to vector<128x32xf32>
    %c256_302 = arith.constant 256 : index
    %c0_303 = arith.constant 0 : index
    %383 = vector.load %arg8[%c256_302, %c0_303] : memref<512x32xf32, #tpu.memory_space<vmem>>, vector<128x32xf32>
    %384 = arith.mulf %380, %383 : vector<128x32xf32>
    %385 = arith.mulf %379, %382 : vector<128x32xf32>
    %386 = arith.addf %384, %385 : vector<128x32xf32>
    %387 = math.tanh %386 : vector<128x32xf32>
    %388 = arith.mulf %381, %387 : vector<128x32xf32>
    %c256_304 = arith.constant 256 : index
    %c0_305 = arith.constant 0 : index
    %389 = vector.load %arg8[%c256_304, %c0_305] : memref<512x32xf32, #tpu.memory_space<vmem>>, vector<128x32xf32>
    tpu.vector_store %arg8[%c256_304, %c0_305], %386 {strides = array<i32>} : memref<512x32xf32, #tpu.memory_space<vmem>>, vector<128x32xf32>,
    %c0_306 = arith.constant 0 : index
    %c256_307 = arith.constant 256 : index
    %c0_308 = arith.constant 0 : index
    %390 = vector.load %arg5[%c0_306, %c256_307, %c0_308] : memref<1x512x32xf32, #tpu.memory_space<vmem>>, vector<1x128x32xf32>
    %391 = vector.shape_cast %390 : vector<1x128x32xf32> to vector<128x32xf32>
    %392 = vector.shape_cast %388 : vector<128x32xf32> to vector<1x128x32xf32>
    tpu.vector_store %arg5[%c0_306, %c256_307, %c0_308], %392 {strides = array<i32>} : memref<1x512x32xf32, #tpu.memory_space<vmem>>, vector<1x128x32xf32>,
    %393 = vector.shape_cast %388 : vector<128x32xf32> to vector<8x16x32xf32>
    %c19_309 = arith.constant 19 : index
    %c1_310 = arith.constant 1 : index
    %c4_311 = arith.constant 4 : index
    %394 = vector.load %arg6[%c19_309, %c1_310, %c4_311] : memref<36x18x36xf32, #tpu.memory_space<vmem>>, vector<8x16x32xf32>
    tpu.vector_store %arg6[%c19_309, %c1_310, %c4_311], %393 {strides = array<i32>} : memref<36x18x36xf32, #tpu.memory_space<vmem>>, vector<8x16x32xf32>,
    %c384_312 = arith.constant 384 : index
    %c0_313 = arith.constant 0 : index
    %395 = vector.load %arg7[%c384_312, %c0_313] : memref<512x128xf32, #tpu.memory_space<vmem>>, vector<128x128xf32>
    %396 = vector.broadcast %313 : vector<1x128xf32> to vector<128x128xf32>
    %397 = arith.mulf %395, %396 : vector<128x128xf32>
    %398 = vector.broadcast %316 : vector<1x128xf32> to vector<128x128xf32>
    %399 = arith.addf %397, %398 : vector<128x128xf32>
    %400 = arith.negf %399 : vector<128x128xf32>
    %401 = math.exp %400 : vector<128x128xf32>
    %cst_314 = arith.constant 1.000000e+00 : f32
    %402 = vector.broadcast %cst_314 : f32 to vector<128x128xf32>
    %403 = arith.addf %402, %401 : vector<128x128xf32>
    %404 = arith.divf %402, %403 : vector<128x128xf32>
    %405 = vector.extract_strided_slice %404 {offsets = [0, 0], sizes = [128, 32], strides = [1, 1]} : vector<128x128xf32> to vector<128x32xf32>
    %406 = vector.extract_strided_slice %404 {offsets = [0, 32], sizes = [128, 32], strides = [1, 1]} : vector<128x128xf32> to vector<128x32xf32>
    %407 = vector.extract_strided_slice %404 {offsets = [0, 96], sizes = [128, 32], strides = [1, 1]} : vector<128x128xf32> to vector<128x32xf32>
    %408 = vector.extract_strided_slice %399 {offsets = [0, 64], sizes = [128, 32], strides = [1, 1]} : vector<128x128xf32> to vector<128x32xf32>
    %c384_315 = arith.constant 384 : index
    %c0_316 = arith.constant 0 : index
    %409 = vector.load %arg8[%c384_315, %c0_316] : memref<512x32xf32, #tpu.memory_space<vmem>>, vector<128x32xf32>
    %410 = arith.mulf %406, %409 : vector<128x32xf32>
    %411 = arith.mulf %405, %408 : vector<128x32xf32>
    %412 = arith.addf %410, %411 : vector<128x32xf32>
    %413 = math.tanh %412 : vector<128x32xf32>
    %414 = arith.mulf %407, %413 : vector<128x32xf32>
    %c384_317 = arith.constant 384 : index
    %c0_318 = arith.constant 0 : index
    %415 = vector.load %arg8[%c384_317, %c0_318] : memref<512x32xf32, #tpu.memory_space<vmem>>, vector<128x32xf32>
    tpu.vector_store %arg8[%c384_317, %c0_318], %412 {strides = array<i32>} : memref<512x32xf32, #tpu.memory_space<vmem>>, vector<128x32xf32>,
    %c0_319 = arith.constant 0 : index
    %c384_320 = arith.constant 384 : index
    %c0_321 = arith.constant 0 : index
    %416 = vector.load %arg5[%c0_319, %c384_320, %c0_321] : memref<1x512x32xf32, #tpu.memory_space<vmem>>, vector<1x128x32xf32>
    %417 = vector.shape_cast %416 : vector<1x128x32xf32> to vector<128x32xf32>
    %418 = vector.shape_cast %414 : vector<128x32xf32> to vector<1x128x32xf32>
    tpu.vector_store %arg5[%c0_319, %c384_320, %c0_321], %418 {strides = array<i32>} : memref<1x512x32xf32, #tpu.memory_space<vmem>>, vector<1x128x32xf32>,
    %419 = vector.shape_cast %414 : vector<128x32xf32> to vector<8x16x32xf32>
    %c27_322 = arith.constant 27 : index
    %c1_323 = arith.constant 1 : index
    %c4_324 = arith.constant 4 : index
    %420 = vector.load %arg6[%c27_322, %c1_323, %c4_324] : memref<36x18x36xf32, #tpu.memory_space<vmem>>, vector<8x16x32xf32>
    tpu.vector_store %arg6[%c27_322, %c1_323, %c4_324], %419 {strides = array<i32>} : memref<36x18x36xf32, #tpu.memory_space<vmem>>, vector<8x16x32xf32>,
    return
  }
  func.func @transform_0(%arg0: i32) -> (i32, i32, i32, i32, i32) {
    %c0_i32 = arith.constant 0 : i32
    %c0_i32_0 = arith.constant 0 : i32
    %c0_i32_1 = arith.constant 0 : i32
    %c0_i32_2 = arith.constant 0 : i32
    %c0_i32_3 = arith.constant 0 : i32
    return %arg0, %c0_i32, %c0_i32_0, %c0_i32_1, %c0_i32_2 : i32, i32, i32, i32, i32
  }
  func.func @transform_1(%arg0: i32) -> (i32, i32, i32) {
    %c0_i32 = arith.constant 0 : i32
    %c0_i32_0 = arith.constant 0 : i32
    %c0_i32_1 = arith.constant 0 : i32
    %c0_i32_2 = arith.constant 0 : i32
    return %c0_i32, %c0_i32_0, %c0_i32_1 : i32, i32, i32
  }
  func.func @transform_2(%arg0: i32) -> (i32, i32) {
    %c0_i32 = arith.constant 0 : i32
    %c0_i32_0 = arith.constant 0 : i32
    %c0_i32_1 = arith.constant 0 : i32
    return %c0_i32, %c0_i32_0 : i32, i32
  }
  func.func @transform_3(%arg0: i32) -> (i32, i32) {
    %c0_i32 = arith.constant 0 : i32
    %c0_i32_0 = arith.constant 0 : i32
    %c0_i32_1 = arith.constant 0 : i32
    return %c0_i32, %c0_i32_0 : i32, i32
  }
  func.func @transform_4(%arg0: i32) -> (i32, i32, i32) {
    %c0_i32 = arith.constant 0 : i32
    %c0_i32_0 = arith.constant 0 : i32
    %c0_i32_1 = arith.constant 0 : i32
    return %arg0, %c0_i32, %c0_i32_0 : i32, i32, i32
  }
}

</mosaic_0001>

<llo_original>
// kernel: tpu_custom_call.1
$region0: #{tpu_custom_call.1}
  #allocation0 [shape = 'u32[]', space=smem, size = 0x4, offset = 0x4, fixed_abs, tag = 'smem constant byte address 0x4 - core index']
  #allocation1 [shape = 'u32[144,128]{1,0:T(1,128)}', space=vmem, size = 0x12000, scoped, tag = 'internal scratch']
  #allocation2 [shape = 'f32[36,18,36]{2,1,0:T(8,128)}', space=vmem, size = 0x6c000, scoped, tag = 'scratch operand']
  #allocation3 [shape = 'f32[512,128]{1,0:T(8,128)}', space=vmem, size = 0x40000, scoped, tag = 'scratch operand']
  #allocation4 [shape = 'f32[512,32]{1,0:T(8,128)}', space=vmem, size = 0x40000, scoped, tag = 'scratch operand']
  %s0 = inlined_call_operand.vmem [shape: f32[8,2,16,16,4], index: 0, kind: input, shape index: {}]
  %s1 = inlined_call_operand.vmem [shape: bf16[9,36,128], index: 1, kind: input, shape index: {}]
  %s2 = inlined_call_operand.vmem [shape: f32[1,128], index: 2, kind: input, shape index: {}]
  %s3 = inlined_call_operand.vmem [shape: f32[1,128], index: 3, kind: input, shape index: {}]
  %s4 = inlined_call_operand.vmem [shape: f32[8,512,32], index: 4, kind: output, shape index: {}]
  %s5 = sld [smem:[#allocation0]]
  $region53: #{tpu_custom_call.1} parent=0
    _
  %s7 = ssub.s32 1, %s5
  %s8 = scalar_select 0, %s7, %s5
  loop: start=0, step=1, limit=10
  $region2: #{tpu_custom_call.1} parent=0 // loop_pre_header
    _
  $region3: #{tpu_custom_call.1} parent=0 // loop_header
    %s10 = sphi 0, %s14
    %p11 = scmp.ge.s32.totalorder %s10, 10
    %s20 = sphi 0, %s22
    %s23 = sphi 0, %s20
    %s24 = sphi 0, %s23
    %s40 = sphi 0, %s24
    %s44 = sphi 0, %s44
    %s46 = sphi 0, %s44
    %s47 = sphi 0, %s46
    %s61 = sphi 0, %s47
    %s65 = sphi 0, %s65
    %s67 = sphi 0, %s65
    %s68 = sphi 0, %s67
    %s82 = sphi 0, %s68
    %s86 = sphi 0, %s86
    %s88 = sphi 0, %s86
    %s89 = sphi 0, %s88
    %s103 = sphi 0, %s89
    %s109 = sphi 0, %s111
    %s112 = sphi 0, %s109
    %s113 = sphi 0, %s112
    %s129 = sphi 0, %s113
  $region4: #{tpu_custom_call.1} parent=0 // loop_header_branch
    %13 = sbr.rel (%p11) target = $region8
  $region5: #{tpu_custom_call.1} parent=0 // loop_body
    %s15 = ssub.s32 %s10, 1
    %s16 = ssub.s32 %s10, 2
    %s17 = sadd.s32 %s10, 1
    %s18 = ssub.s32 %s10, %s17
    %p19 = scmp.eq.s32.totalorder %s18, 0
    %s21 = sadd.s32 %s20, 1
    %s22 = scalar_select %p19, %s20, %s21
    %p25 = pneg %p19
    %p26 = scmp.eq.s32.totalorder %s10, 7
    %p27 = por %p25, %p26
    %p28 = scmp.ne.s32.totalorder %s20, %s23
    %p29 = scmp.eq.s32.totalorder %s10, 0
    %p30 = por %p28, %p29
    %p31 = scmp.ne.s32.totalorder %s20, %s23
    %p32 = scmp.eq.s32.totalorder %s15, 7
    %p33 = por %p31, %p32
    %p34 = scmp.ne.s32.totalorder %s23, %s24
    %p35 = scmp.eq.s32.totalorder %s15, 0
    %p36 = por %p34, %p35
    %p37 = scmp.ne.s32.totalorder %s23, %s24
    %p38 = scmp.eq.s32.totalorder %s16, 7
    %p39 = por %p37, %p38
    %p41 = scmp.ne.s32.totalorder %s24, %s40
    %p42 = scmp.eq.s32.totalorder %s16, 0
    %p43 = por %p41, %p42
    %s45 = sadd.s32 %s44, 1
    %p48 = scmp.eq.s32.totalorder %s10, 7
    %p49 = scmp.ne.s32.totalorder %s44, %s46
    %p50 = scmp.eq.s32.totalorder %s10, 0
    %p51 = por %p49, %p50
    %p52 = scmp.ne.s32.totalorder %s44, %s46
    %p53 = scmp.eq.s32.totalorder %s15, 7
    %p54 = por %p52, %p53
    %p55 = scmp.ne.s32.totalorder %s46, %s47
    %p56 = scmp.eq.s32.totalorder %s15, 0
    %p57 = por %p55, %p56
    %p58 = scmp.ne.s32.totalorder %s46, %s47
    %p59 = scmp.eq.s32.totalorder %s16, 7
    %p60 = por %p58, %p59
    %p62 = scmp.ne.s32.totalorder %s47, %s61
    %p63 = scmp.eq.s32.totalorder %s16, 0
    %p64 = por %p62, %p63
    %s66 = sadd.s32 %s65, 1
    %p69 = scmp.eq.s32.totalorder %s10, 7
    %p70 = scmp.ne.s32.totalorder %s65, %s67
    %p71 = scmp.eq.s32.totalorder %s10, 0
    %p72 = por %p70, %p71
    %p73 = scmp.ne.s32.totalorder %s65, %s67
    %p74 = scmp.eq.s32.totalorder %s15, 7
    %p75 = por %p73, %p74
    %p76 = scmp.ne.s32.totalorder %s67, %s68
    %p77 = scmp.eq.s32.totalorder %s15, 0
    %p78 = por %p76, %p77
    %p79 = scmp.ne.s32.totalorder %s67, %s68
    %p80 = scmp.eq.s32.totalorder %s16, 7
    %p81 = por %p79, %p80
    %p83 = scmp.ne.s32.totalorder %s68, %s82
    %p84 = scmp.eq.s32.totalorder %s16, 0
    %p85 = por %p83, %p84
    %s87 = sadd.s32 %s86, 1
    %p90 = scmp.eq.s32.totalorder %s10, 7
    %p91 = scmp.ne.s32.totalorder %s86, %s88
    %p92 = scmp.eq.s32.totalorder %s10, 0
    %p93 = por %p91, %p92
    %p94 = scmp.ne.s32.totalorder %s86, %s88
    %p95 = scmp.eq.s32.totalorder %s15, 7
    %p96 = por %p94, %p95
    %p97 = scmp.ne.s32.totalorder %s88, %s89
    %p98 = scmp.eq.s32.totalorder %s15, 0
    %p99 = por %p97, %p98
    %p100 = scmp.ne.s32.totalorder %s88, %s89
    %p101 = scmp.eq.s32.totalorder %s16, 7
    %p102 = por %p100, %p101
    %p104 = scmp.ne.s32.totalorder %s89, %s103
    %p105 = scmp.eq.s32.totalorder %s16, 0
    %p106 = por %p104, %p105
    %s107 = ssub.s32 %s10, %s17
    %p108 = scmp.eq.s32.totalorder %s107, 0
    %s110 = sadd.s32 %s109, 1
    %s111 = scalar_select %p108, %s109, %s110
    %p114 = pneg %p108
    %p115 = scmp.eq.s32.totalorder %s10, 7
    %p116 = por %p114, %p115
    %p117 = scmp.ne.s32.totalorder %s109, %s112
    %p118 = scmp.eq.s32.totalorder %s10, 0
    %p119 = por %p117, %p118
    %p120 = scmp.ne.s32.totalorder %s109, %s112
    %p121 = scmp.eq.s32.totalorder %s15, 7
    %p122 = por %p120, %p121
    %p123 = scmp.ne.s32.totalorder %s112, %s113
    %p124 = scmp.eq.s32.totalorder %s15, 0
    %p125 = por %p123, %p124
    %p126 = scmp.ne.s32.totalorder %s112, %s113
    %p127 = scmp.eq.s32.totalorder %s16, 7
    %p128 = por %p126, %p127
    %p130 = scmp.ne.s32.totalorder %s113, %s129
    %p131 = scmp.eq.s32.totalorder %s16, 0
    %p132 = por %p130, %p131
    %p133 = scmp.le.s32.totalorder 1, %s10
    %p134 = scmp.lt.s32.totalorder %s10, 9
    %p135 = pnand %p133, %p134
    %p136 = pneg %p135
    // Predicated region
    $region9: #{tpu_custom_call.1} parent=5 // pred_check
      _
    $region10: #{tpu_custom_call.1} parent=5 // pred_check_branch
      %138 = sbr.rel (%p135) target = $region12
    $region11: #{tpu_custom_call.1} parent=5 // pred_region
      %s139 = ssub.s32 %s10, 1
      // Predicated region
      $region13: #{tpu_custom_call.1} parent=11 // pred_check
        %p140 = pneg %p57
      $region14: #{tpu_custom_call.1} parent=11 // pred_check_branch
        %142 = sbr.rel (%p140) target = $region16
      $region15: #{tpu_custom_call.1} parent=11 // pred_region
        _
      $region16: #{tpu_custom_call.1} parent=11 // pred_fallthru
        _
      // Predicated region
      $region17: #{tpu_custom_call.1} parent=11 // pred_check
        %p143 = pneg %p78
      $region18: #{tpu_custom_call.1} parent=11 // pred_check_branch
        %145 = sbr.rel (%p143) target = $region20
      $region19: #{tpu_custom_call.1} parent=11 // pred_region
        _
      $region20: #{tpu_custom_call.1} parent=11 // pred_fallthru
        _
      // Predicated region
      $region21: #{tpu_custom_call.1} parent=11 // pred_check
        %p146 = pneg %p99
      $region22: #{tpu_custom_call.1} parent=11 // pred_check_branch
        %148 = sbr.rel (%p146) target = $region24
      $region23: #{tpu_custom_call.1} parent=11 // pred_region
        _
      $region24: #{tpu_custom_call.1} parent=11 // pred_fallthru
        _
    $region12: #{tpu_custom_call.1} parent=5 // pred_fallthru
      _
    %p149 = scmp.lt.s32.totalorder %s10, 8
    // Predicated region
    $region25: #{tpu_custom_call.1} parent=5 // pred_check
      %p150 = pneg %p149
    $region26: #{tpu_custom_call.1} parent=5 // pred_check_branch
      %152 = sbr.rel (%p150) target = $region28
    $region27: #{tpu_custom_call.1} parent=5 // pred_region
      // Predicated region
      $region29: #{tpu_custom_call.1} parent=27 // pred_check
        %p153 = pneg %p30
      $region30: #{tpu_custom_call.1} parent=27 // pred_check_branch
        %155 = sbr.rel (%p153) target = $region32
      $region31: #{tpu_custom_call.1} parent=27 // pred_region
        %p156 = scmp.lt.s32.totalorder %s10, 7
        %s157 = scalar_select %p156, %s10, 7
        %s158 = smul.addr %s157, 64
        %s159 = smul.addr %s158, 8
        %s160 = scalar_lea.vmem %s0, %s159
      $region32: #{tpu_custom_call.1} parent=27 // pred_fallthru
        _
    $region28: #{tpu_custom_call.1} parent=5 // pred_fallthru
      _
    %p161 = scmp.le.s32.totalorder 1, %s10
    %p162 = scmp.lt.s32.totalorder %s10, 9
    %p163 = pnand %p161, %p162
    %p164 = pneg %p163
    // Predicated region
    $region33: #{tpu_custom_call.1} parent=5 // pred_check
      _
    $region34: #{tpu_custom_call.1} parent=5 // pred_check_branch
      %166 = sbr.rel (%p163) target = $region36
    $region35: #{tpu_custom_call.1} parent=5 // pred_region
      %s167 = ssub.s32 %s10, 1
      %p168 = scmp.lt.s32.totalorder %s15, 7
      %s169 = scalar_select %p168, %s15, 7
      %s170 = smul.addr %s169, 64
      %s171 = smul.addr %s170, 8
      %s172 = scalar_lea.vmem %s0, %s171
      %p173 = pneg %p36
      %p174 = pneg %p33
      %p175 = pneg %p57
      %p176 = pneg %p54
      %p177 = pneg %p78
      %p178 = pneg %p75
      %p179 = pneg %p99
      %p180 = pneg %p96
      %p181 = pneg %p125
      %p182 = pneg %p122
      %p183 = scmp.lt.s32.totalorder %s15, 7
      %s184 = scalar_select %p183, %s15, 7
      %s185 = smul.addr %s184, 64
      %s186 = smul.addr %s185, 8
      %s187 = scalar_lea.vmem %s4, %s186
      %p188 = scmp.lt.s32.totalorder %s15, 7
      %s189 = scalar_select %p188, %s15, 7
      %s190 = smul.addr %s189, 64
      %s191 = smul.addr %s190, 8
      %s192 = scalar_lea.vmem %s0, %s191
      %p193 = scmp.lt.s32.totalorder %s15, 7
      %s194 = scalar_select %p193, %s15, 7
      %s195 = smul.addr %s194, 64
      %s196 = smul.addr %s195, 8
      %s197 = scalar_lea.vmem %s4, %s196
      %p199 = scmp.eq.s32.totalorder %s15, 0
      // Predicated region
      $region37: #{tpu_custom_call.1} parent=35 // pred_check
        %p200 = pneg %p199
      $region38: #{tpu_custom_call.1} parent=35 // pred_check_branch
        %202 = sbr.rel (%p200) target = $region40
      $region39: #{tpu_custom_call.1} parent=35 // pred_region
        %vm203 = vcmask 293888
        %204 = vst.msk [vmem:[#allocation2] sm:$0xff] %vm203, 0.0
        %205 = vst.msk [vmem:[#allocation2 + $0x8] sm:$0xff] %vm203, 0.0
        %vm206 = vcmask 287744
        %207 = vst.msk [vmem:[#allocation2 + $0x10] sm:$0x3] %vm206, 0.0
        %208 = vst.msk [vmem:[#allocation2 + $0x18] sm:$0xff] %vm203, 0.0
        %209 = vst.msk [vmem:[#allocation2 + $0x20] sm:$0xff] %vm203, 0.0
        %210 = vst.msk [vmem:[#allocation2 + $0x28] sm:$0x3] %vm206, 0.0
        %211 = vst.msk [vmem:[#allocation2 + $0x30] sm:$0xff] %vm203, 0.0
        %212 = vst.msk [vmem:[#allocation2 + $0x38] sm:$0xff] %vm203, 0.0
        %213 = vst.msk [vmem:[#allocation2 + $0x40] sm:$0x3] %vm206, 0.0
        %214 = vst.msk [vmem:[#allocation2 + $0x48] sm:$0xff] %vm203, 0.0
        %215 = vst.msk [vmem:[#allocation2 + $0x50] sm:$0xff] %vm203, 0.0
        %216 = vst.msk [vmem:[#allocation2 + $0x58] sm:$0x3] %vm206, 0.0
        %217 = vst.msk [vmem:[#allocation2 + $0x60] sm:$0xff] %vm203, 0.0
        %218 = vst.msk [vmem:[#allocation2 + $0x68] sm:$0xff] %vm203, 0.0
        %219 = vst.msk [vmem:[#allocation2 + $0x70] sm:$0x3] %vm206, 0.0
        %220 = vst.msk [vmem:[#allocation2 + $0x78] sm:$0xff] %vm203, 0.0
        %221 = vst.msk [vmem:[#allocation2 + $0x80] sm:$0xff] %vm203, 0.0
        %222 = vst.msk [vmem:[#allocation2 + $0x88] sm:$0x3] %vm206, 0.0
        %223 = vst.msk [vmem:[#allocation2 + $0x90] sm:$0xff] %vm203, 0.0
        %224 = vst.msk [vmem:[#allocation2 + $0x98] sm:$0xff] %vm203, 0.0
        %225 = vst.msk [vmem:[#allocation2 + $0xa0] sm:$0x3] %vm206, 0.0
        %226 = vst.msk [vmem:[#allocation2 + $0xa8] sm:$0xff] %vm203, 0.0
        %227 = vst.msk [vmem:[#allocation2 + $0xb0] sm:$0xff] %vm203, 0.0
        %228 = vst.msk [vmem:[#allocation2 + $0xb8] sm:$0x3] %vm206, 0.0
        %229 = vst.msk [vmem:[#allocation2 + $0xc0] sm:$0xff] %vm203, 0.0
        %230 = vst.msk [vmem:[#allocation2 + $0xc8] sm:$0xff] %vm203, 0.0
        %231 = vst.msk [vmem:[#allocation2 + $0xd0] sm:$0x3] %vm206, 0.0
        %232 = vst.msk [vmem:[#allocation2 + $0xd8] sm:$0xff] %vm203, 0.0
        %233 = vst.msk [vmem:[#allocation2 + $0xe0] sm:$0xff] %vm203, 0.0
        %234 = vst.msk [vmem:[#allocation2 + $0xe8] sm:$0x3] %vm206, 0.0
        %235 = vst.msk [vmem:[#allocation2 + $0xf0] sm:$0xff] %vm203, 0.0
        %236 = vst.msk [vmem:[#allocation2 + $0xf8] sm:$0xff] %vm203, 0.0
        %237 = vst.msk [vmem:[#allocation2 + $0x100] sm:$0x3] %vm206, 0.0
        %238 = vst.msk [vmem:[#allocation2 + $0x108] sm:$0xff] %vm203, 0.0
        %239 = vst.msk [vmem:[#allocation2 + $0x110] sm:$0xff] %vm203, 0.0
        %240 = vst.msk [vmem:[#allocation2 + $0x118] sm:$0x3] %vm206, 0.0
        %241 = vst.msk [vmem:[#allocation2 + $0x120] sm:$0xff] %vm203, 0.0
        %242 = vst.msk [vmem:[#allocation2 + $0x128] sm:$0xff] %vm203, 0.0
        %243 = vst.msk [vmem:[#allocation2 + $0x130] sm:$0x3] %vm206, 0.0
        %244 = vst.msk [vmem:[#allocation2 + $0x138] sm:$0xff] %vm203, 0.0
        %245 = vst.msk [vmem:[#allocation2 + $0x140] sm:$0xff] %vm203, 0.0
        %246 = vst.msk [vmem:[#allocation2 + $0x148] sm:$0x3] %vm206, 0.0
        %247 = vst.msk [vmem:[#allocation2 + $0x150] sm:$0xff] %vm203, 0.0
        %248 = vst.msk [vmem:[#allocation2 + $0x158] sm:$0xff] %vm203, 0.0
        %249 = vst.msk [vmem:[#allocation2 + $0x160] sm:$0x3] %vm206, 0.0
        %250 = vst.msk [vmem:[#allocation2 + $0x168] sm:$0xff] %vm203, 0.0
        %251 = vst.msk [vmem:[#allocation2 + $0x170] sm:$0xff] %vm203, 0.0
        %252 = vst.msk [vmem:[#allocation2 + $0x178] sm:$0x3] %vm206, 0.0
        %253 = vst.msk [vmem:[#allocation2 + $0x180] sm:$0xff] %vm203, 0.0
        %254 = vst.msk [vmem:[#allocation2 + $0x188] sm:$0xff] %vm203, 0.0
        %255 = vst.msk [vmem:[#allocation2 + $0x190] sm:$0x3] %vm206, 0.0
        %256 = vst.msk [vmem:[#allocation2 + $0x198] sm:$0xff] %vm203, 0.0
        %257 = vst.msk [vmem:[#allocation2 + $0x1a0] sm:$0xff] %vm203, 0.0
        %258 = vst.msk [vmem:[#allocation2 + $0x1a8] sm:$0x3] %vm206, 0.0
        %259 = vst.msk [vmem:[#allocation2 + $0x1b0] sm:$0xff] %vm203, 0.0
        %260 = vst.msk [vmem:[#allocation2 + $0x1b8] sm:$0xff] %vm203, 0.0
        %261 = vst.msk [vmem:[#allocation2 + $0x1c0] sm:$0x3] %vm206, 0.0
        %262 = vst.msk [vmem:[#allocation2 + $0x1c8] sm:$0xff] %vm203, 0.0
        %263 = vst.msk [vmem:[#allocation2 + $0x1d0] sm:$0xff] %vm203, 0.0
        %264 = vst.msk [vmem:[#allocation2 + $0x1d8] sm:$0x3] %vm206, 0.0
        %265 = vst.msk [vmem:[#allocation2 + $0x1e0] sm:$0xff] %vm203, 0.0
        %266 = vst.msk [vmem:[#allocation2 + $0x1e8] sm:$0xff] %vm203, 0.0
        %267 = vst.msk [vmem:[#allocation2 + $0x1f0] sm:$0x3] %vm206, 0.0
        %268 = vst.msk [vmem:[#allocation2 + $0x1f8] sm:$0xff] %vm203, 0.0
        %269 = vst.msk [vmem:[#allocation2 + $0x200] sm:$0xff] %vm203, 0.0
        %270 = vst.msk [vmem:[#allocation2 + $0x208] sm:$0x3] %vm206, 0.0
        %271 = vst.msk [vmem:[#allocation2 + $0x210] sm:$0xff] %vm203, 0.0
        %272 = vst.msk [vmem:[#allocation2 + $0x218] sm:$0xff] %vm203, 0.0
        %273 = vst.msk [vmem:[#allocation2 + $0x220] sm:$0x3] %vm206, 0.0
        %274 = vst.msk [vmem:[#allocation2 + $0x228] sm:$0xff] %vm203, 0.0
        %275 = vst.msk [vmem:[#allocation2 + $0x230] sm:$0xff] %vm203, 0.0
        %276 = vst.msk [vmem:[#allocation2 + $0x238] sm:$0x3] %vm206, 0.0
        %277 = vst.msk [vmem:[#allocation2 + $0x240] sm:$0xff] %vm203, 0.0
        %278 = vst.msk [vmem:[#allocation2 + $0x248] sm:$0xff] %vm203, 0.0
        %279 = vst.msk [vmem:[#allocation2 + $0x250] sm:$0x3] %vm206, 0.0
        %280 = vst.msk [vmem:[#allocation2 + $0x258] sm:$0xff] %vm203, 0.0
        %281 = vst.msk [vmem:[#allocation2 + $0x260] sm:$0xff] %vm203, 0.0
        %282 = vst.msk [vmem:[#allocation2 + $0x268] sm:$0x3] %vm206, 0.0
        %283 = vst.msk [vmem:[#allocation2 + $0x270] sm:$0xff] %vm203, 0.0
        %284 = vst.msk [vmem:[#allocation2 + $0x278] sm:$0xff] %vm203, 0.0
        %285 = vst.msk [vmem:[#allocation2 + $0x280] sm:$0x3] %vm206, 0.0
        %286 = vst.msk [vmem:[#allocation2 + $0x288] sm:$0xff] %vm203, 0.0
        %287 = vst.msk [vmem:[#allocation2 + $0x290] sm:$0xff] %vm203, 0.0
        %288 = vst.msk [vmem:[#allocation2 + $0x298] sm:$0x3] %vm206, 0.0
        %289 = vst.msk [vmem:[#allocation2 + $0x2a0] sm:$0xff] %vm203, 0.0
        %290 = vst.msk [vmem:[#allocation2 + $0x2a8] sm:$0xff] %vm203, 0.0
        %291 = vst.msk [vmem:[#allocation2 + $0x2b0] sm:$0x3] %vm206, 0.0
        %292 = vst.msk [vmem:[#allocation2 + $0x2b8] sm:$0xff] %vm203, 0.0
        %293 = vst.msk [vmem:[#allocation2 + $0x2c0] sm:$0xff] %vm203, 0.0
        %294 = vst.msk [vmem:[#allocation2 + $0x2c8] sm:$0x3] %vm206, 0.0
        %295 = vst.msk [vmem:[#allocation2 + $0x2d0] sm:$0xff] %vm203, 0.0
        %296 = vst.msk [vmem:[#allocation2 + $0x2d8] sm:$0xff] %vm203, 0.0
        %297 = vst.msk [vmem:[#allocation2 + $0x2e0] sm:$0x3] %vm206, 0.0
        %298 = vst.msk [vmem:[#allocation2 + $0x2e8] sm:$0xff] %vm203, 0.0
        %299 = vst.msk [vmem:[#allocation2 + $0x2f0] sm:$0xff] %vm203, 0.0
        %300 = vst.msk [vmem:[#allocation2 + $0x2f8] sm:$0x3] %vm206, 0.0
        %301 = vst.msk [vmem:[#allocation2 + $0x300] sm:$0xff] %vm203, 0.0
        %302 = vst.msk [vmem:[#allocation2 + $0x308] sm:$0xff] %vm203, 0.0
        %303 = vst.msk [vmem:[#allocation2 + $0x310] sm:$0x3] %vm206, 0.0
        %304 = vst.msk [vmem:[#allocation2 + $0x318] sm:$0xff] %vm203, 0.0
        %305 = vst.msk [vmem:[#allocation2 + $0x320] sm:$0xff] %vm203, 0.0
        %306 = vst.msk [vmem:[#allocation2 + $0x328] sm:$0x3] %vm206, 0.0
        %307 = vst.msk [vmem:[#allocation2 + $0x330] sm:$0xff] %vm203, 0.0
        %308 = vst.msk [vmem:[#allocation2 + $0x338] sm:$0xff] %vm203, 0.0
        %309 = vst.msk [vmem:[#allocation2 + $0x340] sm:$0x3] %vm206, 0.0
        %310 = vst.msk [vmem:[#allocation2 + $0x348] sm:$0xff] %vm203, 0.0
        %311 = vst.msk [vmem:[#allocation2 + $0x350] sm:$0xff] %vm203, 0.0
        %312 = vst.msk [vmem:[#allocation2 + $0x358] sm:$0x3] %vm206, 0.0
        %vm313 = vcmask 261120
        %314 = vst.msk [vmem:[#allocation4] sm:$0xff] %vm313, 0.0
        %315 = vst.msk [vmem:[#allocation4 + $0x8] sm:$0xff] %vm313, 0.0
        %316 = vst.msk [vmem:[#allocation4 + $0x10] sm:$0xff] %vm313, 0.0
        %317 = vst.msk [vmem:[#allocation4 + $0x18] sm:$0xff] %vm313, 0.0
        %318 = vst.msk [vmem:[#allocation4 + $0x20] sm:$0xff] %vm313, 0.0
        %319 = vst.msk [vmem:[#allocation4 + $0x28] sm:$0xff] %vm313, 0.0
        %320 = vst.msk [vmem:[#allocation4 + $0x30] sm:$0xff] %vm313, 0.0
        %321 = vst.msk [vmem:[#allocation4 + $0x38] sm:$0xff] %vm313, 0.0
        %322 = vst.msk [vmem:[#allocation4 + $0x40] sm:$0xff] %vm313, 0.0
        %323 = vst.msk [vmem:[#allocation4 + $0x48] sm:$0xff] %vm313, 0.0
        %324 = vst.msk [vmem:[#allocation4 + $0x50] sm:$0xff] %vm313, 0.0
        %325 = vst.msk [vmem:[#allocation4 + $0x58] sm:$0xff] %vm313, 0.0
        %326 = vst.msk [vmem:[#allocation4 + $0x60] sm:$0xff] %vm313, 0.0
        %327 = vst.msk [vmem:[#allocation4 + $0x68] sm:$0xff] %vm313, 0.0
        %328 = vst.msk [vmem:[#allocation4 + $0x70] sm:$0xff] %vm313, 0.0
        %329 = vst.msk [vmem:[#allocation4 + $0x78] sm:$0xff] %vm313, 0.0
        %330 = vst.msk [vmem:[#allocation4 + $0x80] sm:$0xff] %vm313, 0.0
        %331 = vst.msk [vmem:[#allocation4 + $0x88] sm:$0xff] %vm313, 0.0
        %332 = vst.msk [vmem:[#allocation4 + $0x90] sm:$0xff] %vm313, 0.0
        %333 = vst.msk [vmem:[#allocation4 + $0x98] sm:$0xff] %vm313, 0.0
        %334 = vst.msk [vmem:[#allocation4 + $0xa0] sm:$0xff] %vm313, 0.0
        %335 = vst.msk [vmem:[#allocation4 + $0xa8] sm:$0xff] %vm313, 0.0
        %336 = vst.msk [vmem:[#allocation4 + $0xb0] sm:$0xff] %vm313, 0.0
        %337 = vst.msk [vmem:[#allocation4 + $0xb8] sm:$0xff] %vm313, 0.0
        %338 = vst.msk [vmem:[#allocation4 + $0xc0] sm:$0xff] %vm313, 0.0
        %339 = vst.msk [vmem:[#allocation4 + $0xc8] sm:$0xff] %vm313, 0.0
        %340 = vst.msk [vmem:[#allocation4 + $0xd0] sm:$0xff] %vm313, 0.0
        %341 = vst.msk [vmem:[#allocation4 + $0xd8] sm:$0xff] %vm313, 0.0
        %342 = vst.msk [vmem:[#allocation4 + $0xe0] sm:$0xff] %vm313, 0.0
        %343 = vst.msk [vmem:[#allocation4 + $0xe8] sm:$0xff] %vm313, 0.0
        %344 = vst.msk [vmem:[#allocation4 + $0xf0] sm:$0xff] %vm313, 0.0
        %345 = vst.msk [vmem:[#allocation4 + $0xf8] sm:$0xff] %vm313, 0.0
        %346 = vst.msk [vmem:[#allocation4 + $0x100] sm:$0xff] %vm313, 0.0
        %347 = vst.msk [vmem:[#allocation4 + $0x108] sm:$0xff] %vm313, 0.0
        %348 = vst.msk [vmem:[#allocation4 + $0x110] sm:$0xff] %vm313, 0.0
        %349 = vst.msk [vmem:[#allocation4 + $0x118] sm:$0xff] %vm313, 0.0
        %350 = vst.msk [vmem:[#allocation4 + $0x120] sm:$0xff] %vm313, 0.0
        %351 = vst.msk [vmem:[#allocation4 + $0x128] sm:$0xff] %vm313, 0.0
        %352 = vst.msk [vmem:[#allocation4 + $0x130] sm:$0xff] %vm313, 0.0
        %353 = vst.msk [vmem:[#allocation4 + $0x138] sm:$0xff] %vm313, 0.0
        %354 = vst.msk [vmem:[#allocation4 + $0x140] sm:$0xff] %vm313, 0.0
        %355 = vst.msk [vmem:[#allocation4 + $0x148] sm:$0xff] %vm313, 0.0
        %356 = vst.msk [vmem:[#allocation4 + $0x150] sm:$0xff] %vm313, 0.0
        %357 = vst.msk [vmem:[#allocation4 + $0x158] sm:$0xff] %vm313, 0.0
        %358 = vst.msk [vmem:[#allocation4 + $0x160] sm:$0xff] %vm313, 0.0
        %359 = vst.msk [vmem:[#allocation4 + $0x168] sm:$0xff] %vm313, 0.0
        %360 = vst.msk [vmem:[#allocation4 + $0x170] sm:$0xff] %vm313, 0.0
        %361 = vst.msk [vmem:[#allocation4 + $0x178] sm:$0xff] %vm313, 0.0
        %362 = vst.msk [vmem:[#allocation4 + $0x180] sm:$0xff] %vm313, 0.0
        %363 = vst.msk [vmem:[#allocation4 + $0x188] sm:$0xff] %vm313, 0.0
        %364 = vst.msk [vmem:[#allocation4 + $0x190] sm:$0xff] %vm313, 0.0
        %365 = vst.msk [vmem:[#allocation4 + $0x198] sm:$0xff] %vm313, 0.0
        %366 = vst.msk [vmem:[#allocation4 + $0x1a0] sm:$0xff] %vm313, 0.0
        %367 = vst.msk [vmem:[#allocation4 + $0x1a8] sm:$0xff] %vm313, 0.0
        %368 = vst.msk [vmem:[#allocation4 + $0x1b0] sm:$0xff] %vm313, 0.0
        %369 = vst.msk [vmem:[#allocation4 + $0x1b8] sm:$0xff] %vm313, 0.0
        %370 = vst.msk [vmem:[#allocation4 + $0x1c0] sm:$0xff] %vm313, 0.0
        %371 = vst.msk [vmem:[#allocation4 + $0x1c8] sm:$0xff] %vm313, 0.0
        %372 = vst.msk [vmem:[#allocation4 + $0x1d0] sm:$0xff] %vm313, 0.0
        %373 = vst.msk [vmem:[#allocation4 + $0x1d8] sm:$0xff] %vm313, 0.0
        %374 = vst.msk [vmem:[#allocation4 + $0x1e0] sm:$0xff] %vm313, 0.0
        %375 = vst.msk [vmem:[#allocation4 + $0x1e8] sm:$0xff] %vm313, 0.0
        %376 = vst.msk [vmem:[#allocation4 + $0x1f0] sm:$0xff] %vm313, 0.0
        %377 = vst.msk [vmem:[#allocation4 + $0x1f8] sm:$0xff] %vm313, 0.0
      $region40: #{tpu_custom_call.1} parent=35 // pred_fallthru
        _
      %v378 = vld [vmem:[%s192] sm:$0xff]
      %v379 = vld [vmem:[%s192 + $0x8] sm:$0xff]
      %v380 = vld [vmem:[%s192 + $0x10] sm:$0xff]
      %v381 = vld [vmem:[%s192 + $0x18] sm:$0xff]
      %v382 = vld [vmem:[%s192 + $0x20] sm:$0xff]
      %v383 = vld [vmem:[%s192 + $0x28] sm:$0xff]
      %v384 = vld [vmem:[%s192 + $0x30] sm:$0xff]
      %v385 = vld [vmem:[%s192 + $0x38] sm:$0xff]
      %v386 = vld [vmem:[%s192 + $0x40] sm:$0xff]
      %v387 = vld [vmem:[%s192 + $0x48] sm:$0xff]
      %v388 = vld [vmem:[%s192 + $0x50] sm:$0xff]
      %v389 = vld [vmem:[%s192 + $0x58] sm:$0xff]
      %v390 = vld [vmem:[%s192 + $0x60] sm:$0xff]
      %v391 = vld [vmem:[%s192 + $0x68] sm:$0xff]
      %v392 = vld [vmem:[%s192 + $0x70] sm:$0xff]
      %v393 = vld [vmem:[%s192 + $0x78] sm:$0xff]
      %v394 = vld [vmem:[%s192 + $0x80] sm:$0xff]
      %v395 = vld [vmem:[%s192 + $0x88] sm:$0xff]
      %v396 = vld [vmem:[%s192 + $0x90] sm:$0xff]
      %v397 = vld [vmem:[%s192 + $0x98] sm:$0xff]
      %v398 = vld [vmem:[%s192 + $0xa0] sm:$0xff]
      %v399 = vld [vmem:[%s192 + $0xa8] sm:$0xff]
      %v400 = vld [vmem:[%s192 + $0xb0] sm:$0xff]
      %v401 = vld [vmem:[%s192 + $0xb8] sm:$0xff]
      %v402 = vld [vmem:[%s192 + $0xc0] sm:$0xff]
      %v403 = vld [vmem:[%s192 + $0xc8] sm:$0xff]
      %v404 = vld [vmem:[%s192 + $0xd0] sm:$0xff]
      %v405 = vld [vmem:[%s192 + $0xd8] sm:$0xff]
      %v406 = vld [vmem:[%s192 + $0xe0] sm:$0xff]
      %v407 = vld [vmem:[%s192 + $0xe8] sm:$0xff]
      %v408 = vld [vmem:[%s192 + $0xf0] sm:$0xff]
      %v409 = vld [vmem:[%s192 + $0xf8] sm:$0xff]
      %v410 = vld [vmem:[%s192 + $0x100] sm:$0xff]
      %v411 = vld [vmem:[%s192 + $0x108] sm:$0xff]
      %v412 = vld [vmem:[%s192 + $0x110] sm:$0xff]
      %v413 = vld [vmem:[%s192 + $0x118] sm:$0xff]
      %v414 = vld [vmem:[%s192 + $0x120] sm:$0xff]
      %v415 = vld [vmem:[%s192 + $0x128] sm:$0xff]
      %v416 = vld [vmem:[%s192 + $0x130] sm:$0xff]
      %v417 = vld [vmem:[%s192 + $0x138] sm:$0xff]
      %v418 = vld [vmem:[%s192 + $0x140] sm:$0xff]
      %v419 = vld [vmem:[%s192 + $0x148] sm:$0xff]
      %v420 = vld [vmem:[%s192 + $0x150] sm:$0xff]
      %v421 = vld [vmem:[%s192 + $0x158] sm:$0xff]
      %v422 = vld [vmem:[%s192 + $0x160] sm:$0xff]
      %v423 = vld [vmem:[%s192 + $0x168] sm:$0xff]
      %v424 = vld [vmem:[%s192 + $0x170] sm:$0xff]
      %v425 = vld [vmem:[%s192 + $0x178] sm:$0xff]
      %v426 = vld [vmem:[%s192 + $0x180] sm:$0xff]
      %v427 = vld [vmem:[%s192 + $0x188] sm:$0xff]
      %v428 = vld [vmem:[%s192 + $0x190] sm:$0xff]
      %v429 = vld [vmem:[%s192 + $0x198] sm:$0xff]
      %v430 = vld [vmem:[%s192 + $0x1a0] sm:$0xff]
      %v431 = vld [vmem:[%s192 + $0x1a8] sm:$0xff]
      %v432 = vld [vmem:[%s192 + $0x1b0] sm:$0xff]
      %v433 = vld [vmem:[%s192 + $0x1b8] sm:$0xff]
      %v434 = vld [vmem:[%s192 + $0x1c0] sm:$0xff]
      %v435 = vld [vmem:[%s192 + $0x1c8] sm:$0xff]
      %v436 = vld [vmem:[%s192 + $0x1d0] sm:$0xff]
      %v437 = vld [vmem:[%s192 + $0x1d8] sm:$0xff]
      %v438 = vld [vmem:[%s192 + $0x1e0] sm:$0xff]
      %v439 = vld [vmem:[%s192 + $0x1e8] sm:$0xff]
      %v440 = vld [vmem:[%s192 + $0x1f0] sm:$0xff]
      %v441 = vld [vmem:[%s192 + $0x1f8] sm:$0xff]
      %s442 = scalar_lea.vmem [#allocation2], 24
      %vm443 = vcmask 31744
      %444 = vst.msk [vmem:[%s442 + $0x1] sm:$0xff] %vm443, %v378
      %445 = vst.msk [vmem:[%s442 + $0x9] sm:$0xff] %vm443, %v379
      %446 = vst.msk [vmem:[%s442 + $0x19] sm:$0xff] %vm443, %v380
      %447 = vst.msk [vmem:[%s442 + $0x21] sm:$0xff] %vm443, %v381
      %448 = vst.msk [vmem:[%s442 + $0x31] sm:$0xff] %vm443, %v382
      %449 = vst.msk [vmem:[%s442 + $0x39] sm:$0xff] %vm443, %v383
      %450 = vst.msk [vmem:[%s442 + $0x49] sm:$0xff] %vm443, %v384
      %451 = vst.msk [vmem:[%s442 + $0x51] sm:$0xff] %vm443, %v385
      %452 = vst.msk [vmem:[%s442 + $0x61] sm:$0xff] %vm443, %v386
      %453 = vst.msk [vmem:[%s442 + $0x69] sm:$0xff] %vm443, %v387
      %454 = vst.msk [vmem:[%s442 + $0x79] sm:$0xff] %vm443, %v388
      %455 = vst.msk [vmem:[%s442 + $0x81] sm:$0xff] %vm443, %v389
      %456 = vst.msk [vmem:[%s442 + $0x91] sm:$0xff] %vm443, %v390
      %457 = vst.msk [vmem:[%s442 + $0x99] sm:$0xff] %vm443, %v391
      %458 = vst.msk [vmem:[%s442 + $0xa9] sm:$0xff] %vm443, %v392
      %459 = vst.msk [vmem:[%s442 + $0xb1] sm:$0xff] %vm443, %v393
      %460 = vst.msk [vmem:[%s442 + $0xc1] sm:$0xff] %vm443, %v394
      %461 = vst.msk [vmem:[%s442 + $0xc9] sm:$0xff] %vm443, %v395
      %462 = vst.msk [vmem:[%s442 + $0xd9] sm:$0xff] %vm443, %v396
      %463 = vst.msk [vmem:[%s442 + $0xe1] sm:$0xff] %vm443, %v397
      %464 = vst.msk [vmem:[%s442 + $0xf1] sm:$0xff] %vm443, %v398
      %465 = vst.msk [vmem:[%s442 + $0xf9] sm:$0xff] %vm443, %v399
      %466 = vst.msk [vmem:[%s442 + $0x109] sm:$0xff] %vm443, %v400
      %467 = vst.msk [vmem:[%s442 + $0x111] sm:$0xff] %vm443, %v401
      %468 = vst.msk [vmem:[%s442 + $0x121] sm:$0xff] %vm443, %v402
      %469 = vst.msk [vmem:[%s442 + $0x129] sm:$0xff] %vm443, %v403
      %470 = vst.msk [vmem:[%s442 + $0x139] sm:$0xff] %vm443, %v404
      %471 = vst.msk [vmem:[%s442 + $0x141] sm:$0xff] %vm443, %v405
      %472 = vst.msk [vmem:[%s442 + $0x151] sm:$0xff] %vm443, %v406
      %473 = vst.msk [vmem:[%s442 + $0x159] sm:$0xff] %vm443, %v407
      %474 = vst.msk [vmem:[%s442 + $0x169] sm:$0xff] %vm443, %v408
      %475 = vst.msk [vmem:[%s442 + $0x171] sm:$0xff] %vm443, %v409
      %s476 = scalar_lea.vmem [#allocation2], 456
      %477 = vst.msk [vmem:[%s476 + $0x1] sm:$0xff] %vm443, %v410
      %478 = vst.msk [vmem:[%s476 + $0x9] sm:$0xff] %vm443, %v411
      %479 = vst.msk [vmem:[%s476 + $0x19] sm:$0xff] %vm443, %v412
      %480 = vst.msk [vmem:[%s476 + $0x21] sm:$0xff] %vm443, %v413
      %481 = vst.msk [vmem:[%s476 + $0x31] sm:$0xff] %vm443, %v414
      %482 = vst.msk [vmem:[%s476 + $0x39] sm:$0xff] %vm443, %v415
      %483 = vst.msk [vmem:[%s476 + $0x49] sm:$0xff] %vm443, %v416
      %484 = vst.msk [vmem:[%s476 + $0x51] sm:$0xff] %vm443, %v417
      %485 = vst.msk [vmem:[%s476 + $0x61] sm:$0xff] %vm443, %v418
      %486 = vst.msk [vmem:[%s476 + $0x69] sm:$0xff] %vm443, %v419
      %487 = vst.msk [vmem:[%s476 + $0x79] sm:$0xff] %vm443, %v420
      %488 = vst.msk [vmem:[%s476 + $0x81] sm:$0xff] %vm443, %v421
      %489 = vst.msk [vmem:[%s476 + $0x91] sm:$0xff] %vm443, %v422
      %490 = vst.msk [vmem:[%s476 + $0x99] sm:$0xff] %vm443, %v423
      %491 = vst.msk [vmem:[%s476 + $0xa9] sm:$0xff] %vm443, %v424
      %492 = vst.msk [vmem:[%s476 + $0xb1] sm:$0xff] %vm443, %v425
      %493 = vst.msk [vmem:[%s476 + $0xc1] sm:$0xff] %vm443, %v426
      %494 = vst.msk [vmem:[%s476 + $0xc9] sm:$0xff] %vm443, %v427
      %495 = vst.msk [vmem:[%s476 + $0xd9] sm:$0xff] %vm443, %v428
      %496 = vst.msk [vmem:[%s476 + $0xe1] sm:$0xff] %vm443, %v429
      %497 = vst.msk [vmem:[%s476 + $0xf1] sm:$0xff] %vm443, %v430
      %498 = vst.msk [vmem:[%s476 + $0xf9] sm:$0xff] %vm443, %v431
      %499 = vst.msk [vmem:[%s476 + $0x109] sm:$0xff] %vm443, %v432
      %500 = vst.msk [vmem:[%s476 + $0x111] sm:$0xff] %vm443, %v433
      %501 = vst.msk [vmem:[%s476 + $0x121] sm:$0xff] %vm443, %v434
      %502 = vst.msk [vmem:[%s476 + $0x129] sm:$0xff] %vm443, %v435
      %503 = vst.msk [vmem:[%s476 + $0x139] sm:$0xff] %vm443, %v436
      %504 = vst.msk [vmem:[%s476 + $0x141] sm:$0xff] %vm443, %v437
      %505 = vst.msk [vmem:[%s476 + $0x151] sm:$0xff] %vm443, %v438
      %506 = vst.msk [vmem:[%s476 + $0x159] sm:$0xff] %vm443, %v439
      %507 = vst.msk [vmem:[%s476 + $0x169] sm:$0xff] %vm443, %v440
      %508 = vst.msk [vmem:[%s476 + $0x171] sm:$0xff] %vm443, %v441
      %v509 = vld [vmem:[#allocation2] sm:$0xff]
      %v510 = vld [vmem:[#allocation2 + $0x8] sm:$0xff]
      %v511 = vld [vmem:[#allocation2 + $0x18] sm:$0xff]
      %v512 = vld [vmem:[#allocation2 + $0x20] sm:$0xff]
      %v513 = vld [vmem:[#allocation2 + $0x30] sm:$0xff]
      %v514 = vld [vmem:[#allocation2 + $0x38] sm:$0xff]
      %v515 = vld [vmem:[#allocation2 + $0x48] sm:$0xff]
      %v516 = vld [vmem:[#allocation2 + $0x50] sm:$0xff]
      %v517 = vld [vmem:[#allocation2 + $0x60] sm:$0xff]
      %v518 = vld [vmem:[#allocation2 + $0x68] sm:$0xff]
      %v519 = vld [vmem:[#allocation2 + $0x78] sm:$0xff]
      %v520 = vld [vmem:[#allocation2 + $0x80] sm:$0xff]
      %v521 = vld [vmem:[#allocation2 + $0x90] sm:$0xff]
      %v522 = vld [vmem:[#allocation2 + $0x98] sm:$0xff]
      %v523 = vld [vmem:[#allocation2 + $0xa8] sm:$0xff]
      %v524 = vld [vmem:[#allocation2 + $0xb0] sm:$0xff]
      %v525 = vpack.c.bf16 %v510, %v509
      %v526 = vpack.c.bf16 %v512, %v511
      %v527 = vpack.c.bf16 %v514, %v513
      %v528 = vpack.c.bf16 %v516, %v515
      %v529 = vpack.c.bf16 %v518, %v517
      %v530 = vpack.c.bf16 %v520, %v519
      %v531 = vpack.c.bf16 %v522, %v521
      %v532 = vpack.c.bf16 %v524, %v523
      %v533 = vld [vmem:[%s1] sm:$0xf]
      %v534 = vld [vmem:[%s1 + $0x4] sm:$0xf]
      %v535 = vld [vmem:[%s1 + $0x8] sm:$0xf]
      %v536 = vld [vmem:[%s1 + $0xc] sm:$0xf]
      %v537 = vld [vmem:[%s1 + $0x10] sm:$0x3]
      %v538 = vld [vmem:[#allocation2 + $0x1] sm:$0xff]
      %v539 = vld [vmem:[#allocation2 + $0x9] sm:$0xff]
      %v540 = vld [vmem:[#allocation2 + $0x19] sm:$0xff]
      %v541 = vld [vmem:[#allocation2 + $0x21] sm:$0xff]
      %v542 = vld [vmem:[#allocation2 + $0x31] sm:$0xff]
      %v543 = vld [vmem:[#allocation2 + $0x39] sm:$0xff]
      %v544 = vld [vmem:[#allocation2 + $0x49] sm:$0xff]
      %v545 = vld [vmem:[#allocation2 + $0x51] sm:$0xff]
      %v546 = vld [vmem:[#allocation2 + $0x61] sm:$0xff]
      %v547 = vld [vmem:[#allocation2 + $0x69] sm:$0xff]
      %v548 = vld [vmem:[#allocation2 + $0x79] sm:$0xff]
      %v549 = vld [vmem:[#allocation2 + $0x81] sm:$0xff]
      %v550 = vld [vmem:[#allocation2 + $0x91] sm:$0xff]
      %v551 = vld [vmem:[#allocation2 + $0x99] sm:$0xff]
      %v552 = vld [vmem:[#allocation2 + $0xa9] sm:$0xff]
      %v553 = vld [vmem:[#allocation2 + $0xb1] sm:$0xff]
      %v554 = vpack.c.bf16 %v539, %v538
      %v555 = vpack.c.bf16 %v541, %v540
      %v556 = vpack.c.bf16 %v543, %v542
      %v557 = vpack.c.bf16 %v545, %v544
      %v558 = vpack.c.bf16 %v547, %v546
      %v559 = vpack.c.bf16 %v549, %v548
      %v560 = vpack.c.bf16 %v551, %v550
      %v561 = vpack.c.bf16 %v553, %v552
      %s562 = scalar_lea.vmem %s1, 20
      %v563 = vld [vmem:[%s562] sm:$0xf]
      %v564 = vld [vmem:[%s562 + $0x4] sm:$0xf]
      %v565 = vld [vmem:[%s562 + $0x8] sm:$0xf]
      %v566 = vld [vmem:[%s562 + $0xc] sm:$0xf]
      %v567 = vld [vmem:[%s562 + $0x10] sm:$0x3]
      %v573 = vunpack.c.l.b16 %v563
      %v574 = vunpack.c.l.b16 %v564
      %v575 = vunpack.c.l.b16 %v565
      %v576 = vunpack.c.l.b16 %v566
      %v577 = vunpack.c.l.b16 %v567
      %v578 = vpack.c.b16 %v574, %v573
      %v579 = vpack.c.b16 %v576, %v575
      %v580 = vpack.c.b16 %v577, %v577
      %vm583 = vcmask 293888
      %v585 = vsel %vm583, %v554, 0
      %v588 = vsel %vm583, %v555, 0
      %v591 = vsel %vm583, %v556, 0
      %v594 = vsel %vm583, %v557, 0
      %v597 = vsel %vm583, %v558, 0
      %v600 = vsel %vm583, %v559, 0
      %v603 = vsel %vm583, %v560, 0
      %v606 = vsel %vm583, %v561, 0
      %vm608 = vcmask 1041408
      %v610 = vsel %vm608, %v580, 0
      %612 = vmatprep.subr.bf16.mxu0 0
      %613 = vmatpush1.bf16.msra.mxu0 0
      %614 = vmatprep.subr.bf16.mxu0 0
      %615 = vmatpush1.bf16.msra.mxu0 0
      %616 = vmatprep.subr.bf16.mxu0 0
      %617 = vmatpush1.bf16.msra.mxu0 0
      %618 = vmatprep.subr.bf16.mxu0 0
      %619 = vmatpush1.bf16.msra.mxu0 0
      %620 = vmatprep.subr.bf16.mxu0 0
      %621 = vmatpush1.bf16.msra.mxu0 0
      %622 = vmatprep.subr.bf16.mxu0 0
      %623 = vmatpush1.bf16.msra.mxu0 %v610
      %624 = vmatprep.subr.bf16.mxu0 0
      %625 = vmatpush1.bf16.msra.mxu0 %v579
      %626 = vmatprep.subr.bf16.mxu0 0
      %627 = vmatpush1.bf16.msra.mxu0 %v578
      %628 = vmatprep.subr.bf16.mxu0 0
      %629 = vmatpush2.bf16.msra.mxu0 0
      %630 = vmatprep.subr.bf16.mxu0 0
      %631 = vmatpush2.bf16.msra.mxu0 0
      %632 = vmatprep.subr.bf16.mxu0 0
      %633 = vmatpush2.bf16.msra.mxu0 0
      %634 = vmatprep.subr.bf16.mxu0 0
      %635 = vmatpush2.bf16.msra.mxu0 0
      %636 = vmatprep.subr.bf16.mxu0 0
      %637 = vmatpush2.bf16.msra.mxu0 0
      %638 = vmatprep.subr.bf16.mxu0 0
      %639 = vmatpush2.bf16.msra.mxu0 0
      %640 = vmatprep.subr.bf16.mxu0 0
      %641 = vmatpush2.bf16.msra.mxu0 0
      %642 = vmatprep.subr.bf16.mxu0 0
      %643 = vmatpush2.bf16.msra.mxu0 0
      %644 = vmatprep.mubr.bf16.mxu0 0
      %645 = vmatmul.mubr.bf16.gmra.mxu0 %v585
      %v646 = vpop.f32.mrf.mxu0
      %v647 = vadd.f32 0.0, %v646
      %v648 = vpop.f32.mrf.mxu0
      %v649 = vpop.f32.mrf.mxu0
      %v650 = vadd.f32 0.0, %v649
      %v651 = vpop.f32.mrf.mxu0
      %652 = vmatprep.mubr.bf16.mxu0 0
      %653 = vmatmul.mubr.bf16.gmra.mxu0 %v588
      %v654 = vpop.f32.mrf.mxu0
      %v655 = vadd.f32 0.0, %v654
      %v656 = vpop.f32.mrf.mxu0
      %v657 = vpop.f32.mrf.mxu0
      %v658 = vadd.f32 0.0, %v657
      %v659 = vpop.f32.mrf.mxu0
      %660 = vmatprep.mubr.bf16.mxu0 0
      %661 = vmatmul.mubr.bf16.gmra.mxu0 %v591
      %v662 = vpop.f32.mrf.mxu0
      %v663 = vadd.f32 0.0, %v662
      %v664 = vpop.f32.mrf.mxu0
      %v665 = vpop.f32.mrf.mxu0
      %v666 = vadd.f32 0.0, %v665
      %v667 = vpop.f32.mrf.mxu0
      %668 = vmatprep.mubr.bf16.mxu0 0
      %669 = vmatmul.mubr.bf16.gmra.mxu0 %v594
      %v670 = vpop.f32.mrf.mxu0
      %v671 = vadd.f32 0.0, %v670
      %v672 = vpop.f32.mrf.mxu0
      %v673 = vpop.f32.mrf.mxu0
      %v674 = vadd.f32 0.0, %v673
      %v675 = vpop.f32.mrf.mxu0
      %676 = vmatprep.mubr.bf16.mxu0 0
      %677 = vmatmul.mubr.bf16.gmra.mxu0 %v597
      %v678 = vpop.f32.mrf.mxu0
      %v679 = vadd.f32 0.0, %v678
      %v680 = vpop.f32.mrf.mxu0
      %v681 = vpop.f32.mrf.mxu0
      %v682 = vadd.f32 0.0, %v681
      %v683 = vpop.f32.mrf.mxu0
      %684 = vmatprep.mubr.bf16.mxu0 0
      %685 = vmatmul.mubr.bf16.gmra.mxu0 %v600
      %v686 = vpop.f32.mrf.mxu0
      %v687 = vadd.f32 0.0, %v686
      %v688 = vpop.f32.mrf.mxu0
      %v689 = vpop.f32.mrf.mxu0
      %v690 = vadd.f32 0.0, %v689
      %v691 = vpop.f32.mrf.mxu0
      %692 = vmatprep.mubr.bf16.mxu0 0
      %693 = vmatmul.mubr.bf16.gmra.mxu0 %v603
      %v694 = vpop.f32.mrf.mxu0
      %v695 = vadd.f32 0.0, %v694
      %v696 = vpop.f32.mrf.mxu0
      %v697 = vpop.f32.mrf.mxu0
      %v698 = vadd.f32 0.0, %v697
      %v699 = vpop.f32.mrf.mxu0
      %700 = vmatprep.mubr.bf16.mxu0 0
      %701 = vmatmul.mubr.bf16.gmra.mxu0 %v606
      %v702 = vpop.f32.mrf.mxu0
      %v703 = vadd.f32 0.0, %v702
      %v704 = vpop.f32.mrf.mxu0
      %v705 = vpop.f32.mrf.mxu0
      %v706 = vadd.f32 0.0, %v705
      %v707 = vpop.f32.mrf.mxu0
      %708 = vdwg.mxu0
      %v714 = vunpack.c.l.b16 %v533
      %v715 = vunpack.c.l.b16 %v534
      %v716 = vunpack.c.l.b16 %v535
      %v717 = vunpack.c.l.b16 %v536
      %v718 = vunpack.c.l.b16 %v537
      %v719 = vpack.c.b16 %v715, %v714
      %v720 = vpack.c.b16 %v717, %v716
      %v721 = vpack.c.b16 %v718, %v718
      %v725 = vsel %vm583, %v525, 0
      %v728 = vsel %vm583, %v526, 0
      %v731 = vsel %vm583, %v527, 0
      %v734 = vsel %vm583, %v528, 0
      %v737 = vsel %vm583, %v529, 0
      %v740 = vsel %vm583, %v530, 0
      %v743 = vsel %vm583, %v531, 0
      %v746 = vsel %vm583, %v532, 0
      %v749 = vsel %vm608, %v721, 0
      %751 = vmatprep.subr.bf16.mxu0 0
      %752 = vmatpush1.bf16.msra.mxu0 0
      %753 = vmatprep.subr.bf16.mxu0 0
      %754 = vmatpush1.bf16.msra.mxu0 0
      %755 = vmatprep.subr.bf16.mxu0 0
      %756 = vmatpush1.bf16.msra.mxu0 0
      %757 = vmatprep.subr.bf16.mxu0 0
      %758 = vmatpush1.bf16.msra.mxu0 0
      %759 = vmatprep.subr.bf16.mxu0 0
      %760 = vmatpush1.bf16.msra.mxu0 0
      %761 = vmatprep.subr.bf16.mxu0 0
      %762 = vmatpush1.bf16.msra.mxu0 %v749
      %763 = vmatprep.subr.bf16.mxu0 0
      %764 = vmatpush1.bf16.msra.mxu0 %v720
      %765 = vmatprep.subr.bf16.mxu0 0
      %766 = vmatpush1.bf16.msra.mxu0 %v719
      %767 = vmatprep.subr.bf16.mxu0 0
      %768 = vmatpush2.bf16.msra.mxu0 0
      %769 = vmatprep.subr.bf16.mxu0 0
      %770 = vmatpush2.bf16.msra.mxu0 0
      %771 = vmatprep.subr.bf16.mxu0 0
      %772 = vmatpush2.bf16.msra.mxu0 0
      %773 = vmatprep.subr.bf16.mxu0 0
      %774 = vmatpush2.bf16.msra.mxu0 0
      %775 = vmatprep.subr.bf16.mxu0 0
      %776 = vmatpush2.bf16.msra.mxu0 0
      %777 = vmatprep.subr.bf16.mxu0 0
      %778 = vmatpush2.bf16.msra.mxu0 0
      %779 = vmatprep.subr.bf16.mxu0 0
      %780 = vmatpush2.bf16.msra.mxu0 0
      %781 = vmatprep.subr.bf16.mxu0 0
      %782 = vmatpush2.bf16.msra.mxu0 0
      %783 = vmatprep.mubr.bf16.mxu0 0
      %784 = vmatmul.mubr.bf16.gmra.mxu0 %v725
      %v785 = vpop.f32.mrf.mxu0
      %v786 = vadd.f32 %v647, %v785
      %v787 = vpop.f32.mrf.mxu0
      %v788 = vpop.f32.mrf.mxu0
      %v789 = vadd.f32 %v650, %v788
      %v790 = vpop.f32.mrf.mxu0
      %791 = vmatprep.mubr.bf16.mxu0 0
      %792 = vmatmul.mubr.bf16.gmra.mxu0 %v728
      %v793 = vpop.f32.mrf.mxu0
      %v794 = vadd.f32 %v655, %v793
      %v795 = vpop.f32.mrf.mxu0
      %v796 = vpop.f32.mrf.mxu0
      %v797 = vadd.f32 %v658, %v796
      %v798 = vpop.f32.mrf.mxu0
      %799 = vmatprep.mubr.bf16.mxu0 0
      %800 = vmatmul.mubr.bf16.gmra.mxu0 %v731
      %v801 = vpop.f32.mrf.mxu0
      %v802 = vadd.f32 %v663, %v801
      %v803 = vpop.f32.mrf.mxu0
      %v804 = vpop.f32.mrf.mxu0
      %v805 = vadd.f32 %v666, %v804
      %v806 = vpop.f32.mrf.mxu0
      %807 = vmatprep.mubr.bf16.mxu0 0
      %808 = vmatmul.mubr.bf16.gmra.mxu0 %v734
      %v809 = vpop.f32.mrf.mxu0
      %v810 = vadd.f32 %v671, %v809
      %v811 = vpop.f32.mrf.mxu0
      %v812 = vpop.f32.mrf.mxu0
      %v813 = vadd.f32 %v674, %v812
      %v814 = vpop.f32.mrf.mxu0
      %815 = vmatprep.mubr.bf16.mxu0 0
      %816 = vmatmul.mubr.bf16.gmra.mxu0 %v737
      %v817 = vpop.f32.mrf.mxu0
      %v818 = vadd.f32 %v679, %v817
      %v819 = vpop.f32.mrf.mxu0
      %v820 = vpop.f32.mrf.mxu0
      %v821 = vadd.f32 %v682, %v820
      %v822 = vpop.f32.mrf.mxu0
      %823 = vmatprep.mubr.bf16.mxu0 0
      %824 = vmatmul.mubr.bf16.gmra.mxu0 %v740
      %v825 = vpop.f32.mrf.mxu0
      %v826 = vadd.f32 %v687, %v825
      %v827 = vpop.f32.mrf.mxu0
      %v828 = vpop.f32.mrf.mxu0
      %v829 = vadd.f32 %v690, %v828
      %v830 = vpop.f32.mrf.mxu0
      %831 = vmatprep.mubr.bf16.mxu0 0
      %832 = vmatmul.mubr.bf16.gmra.mxu0 %v743
      %v833 = vpop.f32.mrf.mxu0
      %v834 = vadd.f32 %v695, %v833
      %v835 = vpop.f32.mrf.mxu0
      %v836 = vpop.f32.mrf.mxu0
      %v837 = vadd.f32 %v698, %v836
      %v838 = vpop.f32.mrf.mxu0
      %839 = vmatprep.mubr.bf16.mxu0 0
      %840 = vmatmul.mubr.bf16.gmra.mxu0 %v746
      %v841 = vpop.f32.mrf.mxu0
      %v842 = vadd.f32 %v703, %v841
      %v843 = vpop.f32.mrf.mxu0
      %v844 = vpop.f32.mrf.mxu0
      %v845 = vadd.f32 %v706, %v844
      %v846 = vpop.f32.mrf.mxu0
      %847 = vdwg.mxu0
      %v848 = vld [vmem:[#allocation2 + $0x2] sm:$0xff]
      %v849 = vld [vmem:[#allocation2 + $0xa] sm:$0xff]
      %v850 = vld [vmem:[#allocation2 + $0x1a] sm:$0xff]
      %v851 = vld [vmem:[#allocation2 + $0x22] sm:$0xff]
      %v852 = vld [vmem:[#allocation2 + $0x32] sm:$0xff]
      %v853 = vld [vmem:[#allocation2 + $0x3a] sm:$0xff]
      %v854 = vld [vmem:[#allocation2 + $0x4a] sm:$0xff]
      %v855 = vld [vmem:[#allocation2 + $0x52] sm:$0xff]
      %v856 = vld [vmem:[#allocation2 + $0x62] sm:$0xff]
      %v857 = vld [vmem:[#allocation2 + $0x6a] sm:$0xff]
      %v858 = vld [vmem:[#allocation2 + $0x7a] sm:$0xff]
      %v859 = vld [vmem:[#allocation2 + $0x82] sm:$0xff]
      %v860 = vld [vmem:[#allocation2 + $0x92] sm:$0xff]
      %v861 = vld [vmem:[#allocation2 + $0x9a] sm:$0xff]
      %v862 = vld [vmem:[#allocation2 + $0xaa] sm:$0xff]
      %v863 = vld [vmem:[#allocation2 + $0xb2] sm:$0xff]
      %v864 = vpack.c.bf16 %v849, %v848
      %v865 = vpack.c.bf16 %v851, %v850
      %v866 = vpack.c.bf16 %v853, %v852
      %v867 = vpack.c.bf16 %v855, %v854
      %v868 = vpack.c.bf16 %v857, %v856
      %v869 = vpack.c.bf16 %v859, %v858
      %v870 = vpack.c.bf16 %v861, %v860
      %v871 = vpack.c.bf16 %v863, %v862
      %s872 = scalar_lea.vmem %s1, 40
      %v873 = vld [vmem:[%s872] sm:$0xf]
      %v874 = vld [vmem:[%s872 + $0x4] sm:$0xf]
      %v875 = vld [vmem:[%s872 + $0x8] sm:$0xf]
      %v876 = vld [vmem:[%s872 + $0xc] sm:$0xf]
      %v877 = vld [vmem:[%s872 + $0x10] sm:$0x3]
      %v883 = vunpack.c.l.b16 %v873
      %v884 = vunpack.c.l.b16 %v874
      %v885 = vunpack.c.l.b16 %v875
      %v886 = vunpack.c.l.b16 %v876
      %v887 = vunpack.c.l.b16 %v877
      %v888 = vpack.c.b16 %v884, %v883
      %v889 = vpack.c.b16 %v886, %v885
      %v890 = vpack.c.b16 %v887, %v887
      %v894 = vsel %vm583, %v864, 0
      %v897 = vsel %vm583, %v865, 0
      %v900 = vsel %vm583, %v866, 0
      %v903 = vsel %vm583, %v867, 0
      %v906 = vsel %vm583, %v868, 0
      %v909 = vsel %vm583, %v869, 0
      %v912 = vsel %vm583, %v870, 0
      %v915 = vsel %vm583, %v871, 0
      %v918 = vsel %vm608, %v890, 0
      %920 = vmatprep.subr.bf16.mxu0 0
      %921 = vmatpush1.bf16.msra.mxu0 0
      %922 = vmatprep.subr.bf16.mxu0 0
      %923 = vmatpush1.bf16.msra.mxu0 0
      %924 = vmatprep.subr.bf16.mxu0 0
      %925 = vmatpush1.bf16.msra.mxu0 0
      %926 = vmatprep.subr.bf16.mxu0 0
      %927 = vmatpush1.bf16.msra.mxu0 0
      %928 = vmatprep.subr.bf16.mxu0 0
      %929 = vmatpush1.bf16.msra.mxu0 0
      %930 = vmatprep.subr.bf16.mxu0 0
      %931 = vmatpush1.bf16.msra.mxu0 %v918
      %932 = vmatprep.subr.bf16.mxu0 0
      %933 = vmatpush1.bf16.msra.mxu0 %v889
      %934 = vmatprep.subr.bf16.mxu0 0
      %935 = vmatpush1.bf16.msra.mxu0 %v888
      %936 = vmatprep.subr.bf16.mxu0 0
      %937 = vmatpush2.bf16.msra.mxu0 0
      %938 = vmatprep.subr.bf16.mxu0 0
      %939 = vmatpush2.bf16.msra.mxu0 0
      %940 = vmatprep.subr.bf16.mxu0 0
      %941 = vmatpush2.bf16.msra.mxu0 0
      %942 = vmatprep.subr.bf16.mxu0 0
      %943 = vmatpush2.bf16.msra.mxu0 0
      %944 = vmatprep.subr.bf16.mxu0 0
      %945 = vmatpush2.bf16.msra.mxu0 0
      %946 = vmatprep.subr.bf16.mxu0 0
      %947 = vmatpush2.bf16.msra.mxu0 0
      %948 = vmatprep.subr.bf16.mxu0 0
      %949 = vmatpush2.bf16.msra.mxu0 0
      %950 = vmatprep.subr.bf16.mxu0 0
      %951 = vmatpush2.bf16.msra.mxu0 0
      %952 = vmatprep.mubr.bf16.mxu0 0
      %953 = vmatmul.mubr.bf16.gmra.mxu0 %v894
      %v954 = vpop.f32.mrf.mxu0
      %v955 = vadd.f32 0.0, %v954
      %v956 = vpop.f32.mrf.mxu0
      %v957 = vpop.f32.mrf.mxu0
      %v958 = vadd.f32 0.0, %v957
      %v959 = vpop.f32.mrf.mxu0
      %960 = vmatprep.mubr.bf16.mxu0 0
      %961 = vmatmul.mubr.bf16.gmra.mxu0 %v897
      %v962 = vpop.f32.mrf.mxu0
      %v963 = vadd.f32 0.0, %v962
      %v964 = vpop.f32.mrf.mxu0
      %v965 = vpop.f32.mrf.mxu0
      %v966 = vadd.f32 0.0, %v965
      %v967 = vpop.f32.mrf.mxu0
      %968 = vmatprep.mubr.bf16.mxu0 0
      %969 = vmatmul.mubr.bf16.gmra.mxu0 %v900
      %v970 = vpop.f32.mrf.mxu0
      %v971 = vadd.f32 0.0, %v970
      %v972 = vpop.f32.mrf.mxu0
      %v973 = vpop.f32.mrf.mxu0
      %v974 = vadd.f32 0.0, %v973
      %v975 = vpop.f32.mrf.mxu0
      %976 = vmatprep.mubr.bf16.mxu0 0
      %977 = vmatmul.mubr.bf16.gmra.mxu0 %v903
      %v978 = vpop.f32.mrf.mxu0
      %v979 = vadd.f32 0.0, %v978
      %v980 = vpop.f32.mrf.mxu0
      %v981 = vpop.f32.mrf.mxu0
      %v982 = vadd.f32 0.0, %v981
      %v983 = vpop.f32.mrf.mxu0
      %984 = vmatprep.mubr.bf16.mxu0 0
      %985 = vmatmul.mubr.bf16.gmra.mxu0 %v906
      %v986 = vpop.f32.mrf.mxu0
      %v987 = vadd.f32 0.0, %v986
      %v988 = vpop.f32.mrf.mxu0
      %v989 = vpop.f32.mrf.mxu0
      %v990 = vadd.f32 0.0, %v989
      %v991 = vpop.f32.mrf.mxu0
      %992 = vmatprep.mubr.bf16.mxu0 0
      %993 = vmatmul.mubr.bf16.gmra.mxu0 %v909
      %v994 = vpop.f32.mrf.mxu0
      %v995 = vadd.f32 0.0, %v994
      %v996 = vpop.f32.mrf.mxu0
      %v997 = vpop.f32.mrf.mxu0
      %v998 = vadd.f32 0.0, %v997
      %v999 = vpop.f32.mrf.mxu0
      %1000 = vmatprep.mubr.bf16.mxu0 0
      %1001 = vmatmul.mubr.bf16.gmra.mxu0 %v912
      %v1002 = vpop.f32.mrf.mxu0
      %v1003 = vadd.f32 0.0, %v1002
      %v1004 = vpop.f32.mrf.mxu0
      %v1005 = vpop.f32.mrf.mxu0
      %v1006 = vadd.f32 0.0, %v1005
      %v1007 = vpop.f32.mrf.mxu0
      %1008 = vmatprep.mubr.bf16.mxu0 0
      %1009 = vmatmul.mubr.bf16.gmra.mxu0 %v915
      %v1010 = vpop.f32.mrf.mxu0
      %v1011 = vadd.f32 0.0, %v1010
      %v1012 = vpop.f32.mrf.mxu0
      %v1013 = vpop.f32.mrf.mxu0
      %v1014 = vadd.f32 0.0, %v1013
      %v1015 = vpop.f32.mrf.mxu0
      %1016 = vdwg.mxu0
      %v1017 = vadd.f32 %v786, %v955
      %v1018 = vadd.f32 %v789, %v958
      %v1019 = vadd.f32 %v794, %v963
      %v1020 = vadd.f32 %v797, %v966
      %v1021 = vadd.f32 %v802, %v971
      %v1022 = vadd.f32 %v805, %v974
      %v1023 = vadd.f32 %v810, %v979
      %v1024 = vadd.f32 %v813, %v982
      %v1025 = vadd.f32 %v818, %v987
      %v1026 = vadd.f32 %v821, %v990
      %v1027 = vadd.f32 %v826, %v995
      %v1028 = vadd.f32 %v829, %v998
      %v1029 = vadd.f32 %v834, %v1003
      %v1030 = vadd.f32 %v837, %v1006
      %v1031 = vadd.f32 %v842, %v1011
      %v1032 = vadd.f32 %v845, %v1014
      %v1033 = vld [vmem:[%s442] sm:$0xff]
      %v1034 = vld [vmem:[%s442 + $0x8] sm:$0xff]
      %v1035 = vld [vmem:[%s442 + $0x18] sm:$0xff]
      %v1036 = vld [vmem:[%s442 + $0x20] sm:$0xff]
      %v1037 = vld [vmem:[%s442 + $0x30] sm:$0xff]
      %v1038 = vld [vmem:[%s442 + $0x38] sm:$0xff]
      %v1039 = vld [vmem:[%s442 + $0x48] sm:$0xff]
      %v1040 = vld [vmem:[%s442 + $0x50] sm:$0xff]
      %v1041 = vld [vmem:[%s442 + $0x60] sm:$0xff]
      %v1042 = vld [vmem:[%s442 + $0x68] sm:$0xff]
      %v1043 = vld [vmem:[%s442 + $0x78] sm:$0xff]
      %v1044 = vld [vmem:[%s442 + $0x80] sm:$0xff]
      %v1045 = vld [vmem:[%s442 + $0x90] sm:$0xff]
      %v1046 = vld [vmem:[%s442 + $0x98] sm:$0xff]
      %v1047 = vld [vmem:[%s442 + $0xa8] sm:$0xff]
      %v1048 = vld [vmem:[%s442 + $0xb0] sm:$0xff]
      %v1049 = vpack.c.bf16 %v1034, %v1033
      %v1050 = vpack.c.bf16 %v1036, %v1035
      %v1051 = vpack.c.bf16 %v1038, %v1037
      %v1052 = vpack.c.bf16 %v1040, %v1039
      %v1053 = vpack.c.bf16 %v1042, %v1041
      %v1054 = vpack.c.bf16 %v1044, %v1043
      %v1055 = vpack.c.bf16 %v1046, %v1045
      %v1056 = vpack.c.bf16 %v1048, %v1047
      %s1057 = scalar_lea.vmem %s1, 60
      %v1058 = vld [vmem:[%s1057] sm:$0xf]
      %v1059 = vld [vmem:[%s1057 + $0x4] sm:$0xf]
      %v1060 = vld [vmem:[%s1057 + $0x8] sm:$0xf]
      %v1061 = vld [vmem:[%s1057 + $0xc] sm:$0xf]
      %v1062 = vld [vmem:[%s1057 + $0x10] sm:$0x3]
      %v1068 = vunpack.c.l.b16 %v1058
      %v1069 = vunpack.c.l.b16 %v1059
      %v1070 = vunpack.c.l.b16 %v1060
      %v1071 = vunpack.c.l.b16 %v1061
      %v1072 = vunpack.c.l.b16 %v1062
      %v1073 = vpack.c.b16 %v1069, %v1068
      %v1074 = vpack.c.b16 %v1071, %v1070
      %v1075 = vpack.c.b16 %v1072, %v1072
      %v1079 = vsel %vm583, %v1049, 0
      %v1082 = vsel %vm583, %v1050, 0
      %v1085 = vsel %vm583, %v1051, 0
      %v1088 = vsel %vm583, %v1052, 0
      %v1091 = vsel %vm583, %v1053, 0
      %v1094 = vsel %vm583, %v1054, 0
      %v1097 = vsel %vm583, %v1055, 0
      %v1100 = vsel %vm583, %v1056, 0
      %v1103 = vsel %vm608, %v1075, 0
      %1105 = vmatprep.subr.bf16.mxu0 0
      %1106 = vmatpush1.bf16.msra.mxu0 0
      %1107 = vmatprep.subr.bf16.mxu0 0
      %1108 = vmatpush1.bf16.msra.mxu0 0
      %1109 = vmatprep.subr.bf16.mxu0 0
      %1110 = vmatpush1.bf16.msra.mxu0 0
      %1111 = vmatprep.subr.bf16.mxu0 0
      %1112 = vmatpush1.bf16.msra.mxu0 0
      %1113 = vmatprep.subr.bf16.mxu0 0
      %1114 = vmatpush1.bf16.msra.mxu0 0
      %1115 = vmatprep.subr.bf16.mxu0 0
      %1116 = vmatpush1.bf16.msra.mxu0 %v1103
      %1117 = vmatprep.subr.bf16.mxu0 0
      %1118 = vmatpush1.bf16.msra.mxu0 %v1074
      %1119 = vmatprep.subr.bf16.mxu0 0
      %1120 = vmatpush1.bf16.msra.mxu0 %v1073
      %1121 = vmatprep.subr.bf16.mxu0 0
      %1122 = vmatpush2.bf16.msra.mxu0 0
      %1123 = vmatprep.subr.bf16.mxu0 0
      %1124 = vmatpush2.bf16.msra.mxu0 0
      %1125 = vmatprep.subr.bf16.mxu0 0
      %1126 = vmatpush2.bf16.msra.mxu0 0
      %1127 = vmatprep.subr.bf16.mxu0 0
      %1128 = vmatpush2.bf16.msra.mxu0 0
      %1129 = vmatprep.subr.bf16.mxu0 0
      %1130 = vmatpush2.bf16.msra.mxu0 0
      %1131 = vmatprep.subr.bf16.mxu0 0
      %1132 = vmatpush2.bf16.msra.mxu0 0
      %1133 = vmatprep.subr.bf16.mxu0 0
      %1134 = vmatpush2.bf16.msra.mxu0 0
      %1135 = vmatprep.subr.bf16.mxu0 0
      %1136 = vmatpush2.bf16.msra.mxu0 0
      %1137 = vmatprep.mubr.bf16.mxu0 0
      %1138 = vmatmul.mubr.bf16.gmra.mxu0 %v1079
      %v1139 = vpop.f32.mrf.mxu0
      %v1140 = vadd.f32 0.0, %v1139
      %v1141 = vpop.f32.mrf.mxu0
      %v1142 = vpop.f32.mrf.mxu0
      %v1143 = vadd.f32 0.0, %v1142
      %v1144 = vpop.f32.mrf.mxu0
      %1145 = vmatprep.mubr.bf16.mxu0 0
      %1146 = vmatmul.mubr.bf16.gmra.mxu0 %v1082
      %v1147 = vpop.f32.mrf.mxu0
      %v1148 = vadd.f32 0.0, %v1147
      %v1149 = vpop.f32.mrf.mxu0
      %v1150 = vpop.f32.mrf.mxu0
      %v1151 = vadd.f32 0.0, %v1150
      %v1152 = vpop.f32.mrf.mxu0
      %1153 = vmatprep.mubr.bf16.mxu0 0
      %1154 = vmatmul.mubr.bf16.gmra.mxu0 %v1085
      %v1155 = vpop.f32.mrf.mxu0
      %v1156 = vadd.f32 0.0, %v1155
      %v1157 = vpop.f32.mrf.mxu0
      %v1158 = vpop.f32.mrf.mxu0
      %v1159 = vadd.f32 0.0, %v1158
      %v1160 = vpop.f32.mrf.mxu0
      %1161 = vmatprep.mubr.bf16.mxu0 0
      %1162 = vmatmul.mubr.bf16.gmra.mxu0 %v1088
      %v1163 = vpop.f32.mrf.mxu0
      %v1164 = vadd.f32 0.0, %v1163
      %v1165 = vpop.f32.mrf.mxu0
      %v1166 = vpop.f32.mrf.mxu0
      %v1167 = vadd.f32 0.0, %v1166
      %v1168 = vpop.f32.mrf.mxu0
      %1169 = vmatprep.mubr.bf16.mxu0 0
      %1170 = vmatmul.mubr.bf16.gmra.mxu0 %v1091
      %v1171 = vpop.f32.mrf.mxu0
      %v1172 = vadd.f32 0.0, %v1171
      %v1173 = vpop.f32.mrf.mxu0
      %v1174 = vpop.f32.mrf.mxu0
      %v1175 = vadd.f32 0.0, %v1174
      %v1176 = vpop.f32.mrf.mxu0
      %1177 = vmatprep.mubr.bf16.mxu0 0
      %1178 = vmatmul.mubr.bf16.gmra.mxu0 %v1094
      %v1179 = vpop.f32.mrf.mxu0
      %v1180 = vadd.f32 0.0, %v1179
      %v1181 = vpop.f32.mrf.mxu0
      %v1182 = vpop.f32.mrf.mxu0
      %v1183 = vadd.f32 0.0, %v1182
      %v1184 = vpop.f32.mrf.mxu0
      %1185 = vmatprep.mubr.bf16.mxu0 0
      %1186 = vmatmul.mubr.bf16.gmra.mxu0 %v1097
      %v1187 = vpop.f32.mrf.mxu0
      %v1188 = vadd.f32 0.0, %v1187
      %v1189 = vpop.f32.mrf.mxu0
      %v1190 = vpop.f32.mrf.mxu0
      %v1191 = vadd.f32 0.0, %v1190
      %v1192 = vpop.f32.mrf.mxu0
      %1193 = vmatprep.mubr.bf16.mxu0 0
      %1194 = vmatmul.mubr.bf16.gmra.mxu0 %v1100
      %v1195 = vpop.f32.mrf.mxu0
      %v1196 = vadd.f32 0.0, %v1195
      %v1197 = vpop.f32.mrf.mxu0
      %v1198 = vpop.f32.mrf.mxu0
      %v1199 = vadd.f32 0.0, %v1198
      %v1200 = vpop.f32.mrf.mxu0
      %1201 = vdwg.mxu0
      %v1202 = vadd.f32 %v1017, %v1140
      %v1203 = vadd.f32 %v1018, %v1143
      %v1204 = vadd.f32 %v1019, %v1148
      %v1205 = vadd.f32 %v1020, %v1151
      %v1206 = vadd.f32 %v1021, %v1156
      %v1207 = vadd.f32 %v1022, %v1159
      %v1208 = vadd.f32 %v1023, %v1164
      %v1209 = vadd.f32 %v1024, %v1167
      %v1210 = vadd.f32 %v1025, %v1172
      %v1211 = vadd.f32 %v1026, %v1175
      %v1212 = vadd.f32 %v1027, %v1180
      %v1213 = vadd.f32 %v1028, %v1183
      %v1214 = vadd.f32 %v1029, %v1188
      %v1215 = vadd.f32 %v1030, %v1191
      %v1216 = vadd.f32 %v1031, %v1196
      %v1217 = vadd.f32 %v1032, %v1199
      %v1218 = vld [vmem:[%s442 + $0x1] sm:$0xff]
      %v1219 = vld [vmem:[%s442 + $0x9] sm:$0xff]
      %v1220 = vld [vmem:[%s442 + $0x19] sm:$0xff]
      %v1221 = vld [vmem:[%s442 + $0x21] sm:$0xff]
      %v1222 = vld [vmem:[%s442 + $0x31] sm:$0xff]
      %v1223 = vld [vmem:[%s442 + $0x39] sm:$0xff]
      %v1224 = vld [vmem:[%s442 + $0x49] sm:$0xff]
      %v1225 = vld [vmem:[%s442 + $0x51] sm:$0xff]
      %v1226 = vld [vmem:[%s442 + $0x61] sm:$0xff]
      %v1227 = vld [vmem:[%s442 + $0x69] sm:$0xff]
      %v1228 = vld [vmem:[%s442 + $0x79] sm:$0xff]
      %v1229 = vld [vmem:[%s442 + $0x81] sm:$0xff]
      %v1230 = vld [vmem:[%s442 + $0x91] sm:$0xff]
      %v1231 = vld [vmem:[%s442 + $0x99] sm:$0xff]
      %v1232 = vld [vmem:[%s442 + $0xa9] sm:$0xff]
      %v1233 = vld [vmem:[%s442 + $0xb1] sm:$0xff]
      %v1234 = vpack.c.bf16 %v1219, %v1218
      %v1235 = vpack.c.bf16 %v1221, %v1220
      %v1236 = vpack.c.bf16 %v1223, %v1222
      %v1237 = vpack.c.bf16 %v1225, %v1224
      %v1238 = vpack.c.bf16 %v1227, %v1226
      %v1239 = vpack.c.bf16 %v1229, %v1228
      %v1240 = vpack.c.bf16 %v1231, %v1230
      %v1241 = vpack.c.bf16 %v1233, %v1232
      %s1242 = scalar_lea.vmem %s1, 80
      %v1243 = vld [vmem:[%s1242] sm:$0xf]
      %v1244 = vld [vmem:[%s1242 + $0x4] sm:$0xf]
      %v1245 = vld [vmem:[%s1242 + $0x8] sm:$0xf]
      %v1246 = vld [vmem:[%s1242 + $0xc] sm:$0xf]
      %v1247 = vld [vmem:[%s1242 + $0x10] sm:$0x3]
      %v1253 = vunpack.c.l.b16 %v1243
      %v1254 = vunpack.c.l.b16 %v1244
      %v1255 = vunpack.c.l.b16 %v1245
      %v1256 = vunpack.c.l.b16 %v1246
      %v1257 = vunpack.c.l.b16 %v1247
      %v1258 = vpack.c.b16 %v1254, %v1253
      %v1259 = vpack.c.b16 %v1256, %v1255
      %v1260 = vpack.c.b16 %v1257, %v1257
      %v1264 = vsel %vm583, %v1234, 0
      %v1267 = vsel %vm583, %v1235, 0
      %v1270 = vsel %vm583, %v1236, 0
      %v1273 = vsel %vm583, %v1237, 0
      %v1276 = vsel %vm583, %v1238, 0
      %v1279 = vsel %vm583, %v1239, 0
      %v1282 = vsel %vm583, %v1240, 0
      %v1285 = vsel %vm583, %v1241, 0
      %v1288 = vsel %vm608, %v1260, 0
      %1290 = vmatprep.subr.bf16.mxu0 0
      %1291 = vmatpush1.bf16.msra.mxu0 0
      %1292 = vmatprep.subr.bf16.mxu0 0
      %1293 = vmatpush1.bf16.msra.mxu0 0
      %1294 = vmatprep.subr.bf16.mxu0 0
      %1295 = vmatpush1.bf16.msra.mxu0 0
      %1296 = vmatprep.subr.bf16.mxu0 0
      %1297 = vmatpush1.bf16.msra.mxu0 0
      %1298 = vmatprep.subr.bf16.mxu0 0
      %1299 = vmatpush1.bf16.msra.mxu0 0
      %1300 = vmatprep.subr.bf16.mxu0 0
      %1301 = vmatpush1.bf16.msra.mxu0 %v1288
      %1302 = vmatprep.subr.bf16.mxu0 0
      %1303 = vmatpush1.bf16.msra.mxu0 %v1259
      %1304 = vmatprep.subr.bf16.mxu0 0
      %1305 = vmatpush1.bf16.msra.mxu0 %v1258
      %1306 = vmatprep.subr.bf16.mxu0 0
      %1307 = vmatpush2.bf16.msra.mxu0 0
      %1308 = vmatprep.subr.bf16.mxu0 0
      %1309 = vmatpush2.bf16.msra.mxu0 0
      %1310 = vmatprep.subr.bf16.mxu0 0
      %1311 = vmatpush2.bf16.msra.mxu0 0
      %1312 = vmatprep.subr.bf16.mxu0 0
      %1313 = vmatpush2.bf16.msra.mxu0 0
      %1314 = vmatprep.subr.bf16.mxu0 0
      %1315 = vmatpush2.bf16.msra.mxu0 0
      %1316 = vmatprep.subr.bf16.mxu0 0
      %1317 = vmatpush2.bf16.msra.mxu0 0
      %1318 = vmatprep.subr.bf16.mxu0 0
      %1319 = vmatpush2.bf16.msra.mxu0 0
      %1320 = vmatprep.subr.bf16.mxu0 0
      %1321 = vmatpush2.bf16.msra.mxu0 0
      %1322 = vmatprep.mubr.bf16.mxu0 0
      %1323 = vmatmul.mubr.bf16.gmra.mxu0 %v1264
      %v1324 = vpop.f32.mrf.mxu0
      %v1325 = vadd.f32 0.0, %v1324
      %v1326 = vpop.f32.mrf.mxu0
      %v1327 = vpop.f32.mrf.mxu0
      %v1328 = vadd.f32 0.0, %v1327
      %v1329 = vpop.f32.mrf.mxu0
      %1330 = vmatprep.mubr.bf16.mxu0 0
      %1331 = vmatmul.mubr.bf16.gmra.mxu0 %v1267
      %v1332 = vpop.f32.mrf.mxu0
      %v1333 = vadd.f32 0.0, %v1332
      %v1334 = vpop.f32.mrf.mxu0
      %v1335 = vpop.f32.mrf.mxu0
      %v1336 = vadd.f32 0.0, %v1335
      %v1337 = vpop.f32.mrf.mxu0
      %1338 = vmatprep.mubr.bf16.mxu0 0
      %1339 = vmatmul.mubr.bf16.gmra.mxu0 %v1270
      %v1340 = vpop.f32.mrf.mxu0
      %v1341 = vadd.f32 0.0, %v1340
      %v1342 = vpop.f32.mrf.mxu0
      %v1343 = vpop.f32.mrf.mxu0
      %v1344 = vadd.f32 0.0, %v1343
      %v1345 = vpop.f32.mrf.mxu0
      %1346 = vmatprep.mubr.bf16.mxu0 0
      %1347 = vmatmul.mubr.bf16.gmra.mxu0 %v1273
      %v1348 = vpop.f32.mrf.mxu0
      %v1349 = vadd.f32 0.0, %v1348
      %v1350 = vpop.f32.mrf.mxu0
      %v1351 = vpop.f32.mrf.mxu0
      %v1352 = vadd.f32 0.0, %v1351
      %v1353 = vpop.f32.mrf.mxu0
      %1354 = vmatprep.mubr.bf16.mxu0 0
      %1355 = vmatmul.mubr.bf16.gmra.mxu0 %v1276
      %v1356 = vpop.f32.mrf.mxu0
      %v1357 = vadd.f32 0.0, %v1356
      %v1358 = vpop.f32.mrf.mxu0
      %v1359 = vpop.f32.mrf.mxu0
      %v1360 = vadd.f32 0.0, %v1359
      %v1361 = vpop.f32.mrf.mxu0
      %1362 = vmatprep.mubr.bf16.mxu0 0
      %1363 = vmatmul.mubr.bf16.gmra.mxu0 %v1279
      %v1364 = vpop.f32.mrf.mxu0
      %v1365 = vadd.f32 0.0, %v1364
      %v1366 = vpop.f32.mrf.mxu0
      %v1367 = vpop.f32.mrf.mxu0
      %v1368 = vadd.f32 0.0, %v1367
      %v1369 = vpop.f32.mrf.mxu0
      %1370 = vmatprep.mubr.bf16.mxu0 0
      %1371 = vmatmul.mubr.bf16.gmra.mxu0 %v1282
      %v1372 = vpop.f32.mrf.mxu0
      %v1373 = vadd.f32 0.0, %v1372
      %v1374 = vpop.f32.mrf.mxu0
      %v1375 = vpop.f32.mrf.mxu0
      %v1376 = vadd.f32 0.0, %v1375
      %v1377 = vpop.f32.mrf.mxu0
      %1378 = vmatprep.mubr.bf16.mxu0 0
      %1379 = vmatmul.mubr.bf16.gmra.mxu0 %v1285
      %v1380 = vpop.f32.mrf.mxu0
      %v1381 = vadd.f32 0.0, %v1380
      %v1382 = vpop.f32.mrf.mxu0
      %v1383 = vpop.f32.mrf.mxu0
      %v1384 = vadd.f32 0.0, %v1383
      %v1385 = vpop.f32.mrf.mxu0
      %1386 = vdwg.mxu0
      %v1387 = vadd.f32 %v1202, %v1325
      %v1388 = vadd.f32 %v1203, %v1328
      %v1389 = vadd.f32 %v1204, %v1333
      %v1390 = vadd.f32 %v1205, %v1336
      %v1391 = vadd.f32 %v1206, %v1341
      %v1392 = vadd.f32 %v1207, %v1344
      %v1393 = vadd.f32 %v1208, %v1349
      %v1394 = vadd.f32 %v1209, %v1352
      %v1395 = vadd.f32 %v1210, %v1357
      %v1396 = vadd.f32 %v1211, %v1360
      %v1397 = vadd.f32 %v1212, %v1365
      %v1398 = vadd.f32 %v1213, %v1368
      %v1399 = vadd.f32 %v1214, %v1373
      %v1400 = vadd.f32 %v1215, %v1376
      %v1401 = vadd.f32 %v1216, %v1381
      %v1402 = vadd.f32 %v1217, %v1384
      %v1403 = vld [vmem:[%s442 + $0x2] sm:$0xff]
      %v1404 = vld [vmem:[%s442 + $0xa] sm:$0xff]
      %v1405 = vld [vmem:[%s442 + $0x1a] sm:$0xff]
      %v1406 = vld [vmem:[%s442 + $0x22] sm:$0xff]
      %v1407 = vld [vmem:[%s442 + $0x32] sm:$0xff]
      %v1408 = vld [vmem:[%s442 + $0x3a] sm:$0xff]
      %v1409 = vld [vmem:[%s442 + $0x4a] sm:$0xff]
      %v1410 = vld [vmem:[%s442 + $0x52] sm:$0xff]
      %v1411 = vld [vmem:[%s442 + $0x62] sm:$0xff]
      %v1412 = vld [vmem:[%s442 + $0x6a] sm:$0xff]
      %v1413 = vld [vmem:[%s442 + $0x7a] sm:$0xff]
      %v1414 = vld [vmem:[%s442 + $0x82] sm:$0xff]
      %v1415 = vld [vmem:[%s442 + $0x92] sm:$0xff]
      %v1416 = vld [vmem:[%s442 + $0x9a] sm:$0xff]
      %v1417 = vld [vmem:[%s442 + $0xaa] sm:$0xff]
      %v1418 = vld [vmem:[%s442 + $0xb2] sm:$0xff]
      %v1419 = vpack.c.bf16 %v1404, %v1403
      %v1420 = vpack.c.bf16 %v1406, %v1405
      %v1421 = vpack.c.bf16 %v1408, %v1407
      %v1422 = vpack.c.bf16 %v1410, %v1409
      %v1423 = vpack.c.bf16 %v1412, %v1411
      %v1424 = vpack.c.bf16 %v1414, %v1413
      %v1425 = vpack.c.bf16 %v1416, %v1415
      %v1426 = vpack.c.bf16 %v1418, %v1417
      %s1427 = scalar_lea.vmem %s1, 100
      %v1428 = vld [vmem:[%s1427] sm:$0xf]
      %v1429 = vld [vmem:[%s1427 + $0x4] sm:$0xf]
      %v1430 = vld [vmem:[%s1427 + $0x8] sm:$0xf]
      %v1431 = vld [vmem:[%s1427 + $0xc] sm:$0xf]
      %v1432 = vld [vmem:[%s1427 + $0x10] sm:$0x3]
      %v1438 = vunpack.c.l.b16 %v1428
      %v1439 = vunpack.c.l.b16 %v1429
      %v1440 = vunpack.c.l.b16 %v1430
      %v1441 = vunpack.c.l.b16 %v1431
      %v1442 = vunpack.c.l.b16 %v1432
      %v1443 = vpack.c.b16 %v1439, %v1438
      %v1444 = vpack.c.b16 %v1441, %v1440
      %v1445 = vpack.c.b16 %v1442, %v1442
      %v1449 = vsel %vm583, %v1419, 0
      %v1452 = vsel %vm583, %v1420, 0
      %v1455 = vsel %vm583, %v1421, 0
      %v1458 = vsel %vm583, %v1422, 0
      %v1461 = vsel %vm583, %v1423, 0
      %v1464 = vsel %vm583, %v1424, 0
      %v1467 = vsel %vm583, %v1425, 0
      %v1470 = vsel %vm583, %v1426, 0
      %v1473 = vsel %vm608, %v1445, 0
      %1475 = vmatprep.subr.bf16.mxu0 0
      %1476 = vmatpush1.bf16.msra.mxu0 0
      %1477 = vmatprep.subr.bf16.mxu0 0
      %1478 = vmatpush1.bf16.msra.mxu0 0
      %1479 = vmatprep.subr.bf16.mxu0 0
      %1480 = vmatpush1.bf16.msra.mxu0 0
      %1481 = vmatprep.subr.bf16.mxu0 0
      %1482 = vmatpush1.bf16.msra.mxu0 0
      %1483 = vmatprep.subr.bf16.mxu0 0
      %1484 = vmatpush1.bf16.msra.mxu0 0
      %1485 = vmatprep.subr.bf16.mxu0 0
      %1486 = vmatpush1.bf16.msra.mxu0 %v1473
      %1487 = vmatprep.subr.bf16.mxu0 0
      %1488 = vmatpush1.bf16.msra.mxu0 %v1444
      %1489 = vmatprep.subr.bf16.mxu0 0
      %1490 = vmatpush1.bf16.msra.mxu0 %v1443
      %1491 = vmatprep.subr.bf16.mxu0 0
      %1492 = vmatpush2.bf16.msra.mxu0 0
      %1493 = vmatprep.subr.bf16.mxu0 0
      %1494 = vmatpush2.bf16.msra.mxu0 0
      %1495 = vmatprep.subr.bf16.mxu0 0
      %1496 = vmatpush2.bf16.msra.mxu0 0
      %1497 = vmatprep.subr.bf16.mxu0 0
      %1498 = vmatpush2.bf16.msra.mxu0 0
      %1499 = vmatprep.subr.bf16.mxu0 0
      %1500 = vmatpush2.bf16.msra.mxu0 0
      %1501 = vmatprep.subr.bf16.mxu0 0
      %1502 = vmatpush2.bf16.msra.mxu0 0
      %1503 = vmatprep.subr.bf16.mxu0 0
      %1504 = vmatpush2.bf16.msra.mxu0 0
      %1505 = vmatprep.subr.bf16.mxu0 0
      %1506 = vmatpush2.bf16.msra.mxu0 0
      %1507 = vmatprep.mubr.bf16.mxu0 0
      %1508 = vmatmul.mubr.bf16.gmra.mxu0 %v1449
      %v1509 = vpop.f32.mrf.mxu0
      %v1510 = vadd.f32 0.0, %v1509
      %v1511 = vpop.f32.mrf.mxu0
      %v1512 = vpop.f32.mrf.mxu0
      %v1513 = vadd.f32 0.0, %v1512
      %v1514 = vpop.f32.mrf.mxu0
      %1515 = vmatprep.mubr.bf16.mxu0 0
      %1516 = vmatmul.mubr.bf16.gmra.mxu0 %v1452
      %v1517 = vpop.f32.mrf.mxu0
      %v1518 = vadd.f32 0.0, %v1517
      %v1519 = vpop.f32.mrf.mxu0
      %v1520 = vpop.f32.mrf.mxu0
      %v1521 = vadd.f32 0.0, %v1520
      %v1522 = vpop.f32.mrf.mxu0
      %1523 = vmatprep.mubr.bf16.mxu0 0
      %1524 = vmatmul.mubr.bf16.gmra.mxu0 %v1455
      %v1525 = vpop.f32.mrf.mxu0
      %v1526 = vadd.f32 0.0, %v1525
      %v1527 = vpop.f32.mrf.mxu0
      %v1528 = vpop.f32.mrf.mxu0
      %v1529 = vadd.f32 0.0, %v1528
      %v1530 = vpop.f32.mrf.mxu0
      %1531 = vmatprep.mubr.bf16.mxu0 0
      %1532 = vmatmul.mubr.bf16.gmra.mxu0 %v1458
      %v1533 = vpop.f32.mrf.mxu0
      %v1534 = vadd.f32 0.0, %v1533
      %v1535 = vpop.f32.mrf.mxu0
      %v1536 = vpop.f32.mrf.mxu0
      %v1537 = vadd.f32 0.0, %v1536
      %v1538 = vpop.f32.mrf.mxu0
      %1539 = vmatprep.mubr.bf16.mxu0 0
      %1540 = vmatmul.mubr.bf16.gmra.mxu0 %v1461
      %v1541 = vpop.f32.mrf.mxu0
      %v1542 = vadd.f32 0.0, %v1541
      %v1543 = vpop.f32.mrf.mxu0
      %v1544 = vpop.f32.mrf.mxu0
      %v1545 = vadd.f32 0.0, %v1544
      %v1546 = vpop.f32.mrf.mxu0
      %1547 = vmatprep.mubr.bf16.mxu0 0
      %1548 = vmatmul.mubr.bf16.gmra.mxu0 %v1464
      %v1549 = vpop.f32.mrf.mxu0
      %v1550 = vadd.f32 0.0, %v1549
      %v1551 = vpop.f32.mrf.mxu0
      %v1552 = vpop.f32.mrf.mxu0
      %v1553 = vadd.f32 0.0, %v1552
      %v1554 = vpop.f32.mrf.mxu0
      %1555 = vmatprep.mubr.bf16.mxu0 0
      %1556 = vmatmul.mubr.bf16.gmra.mxu0 %v1467
      %v1557 = vpop.f32.mrf.mxu0
      %v1558 = vadd.f32 0.0, %v1557
      %v1559 = vpop.f32.mrf.mxu0
      %v1560 = vpop.f32.mrf.mxu0
      %v1561 = vadd.f32 0.0, %v1560
      %v1562 = vpop.f32.mrf.mxu0
      %1563 = vmatprep.mubr.bf16.mxu0 0
      %1564 = vmatmul.mubr.bf16.gmra.mxu0 %v1470
      %v1565 = vpop.f32.mrf.mxu0
      %v1566 = vadd.f32 0.0, %v1565
      %v1567 = vpop.f32.mrf.mxu0
      %v1568 = vpop.f32.mrf.mxu0
      %v1569 = vadd.f32 0.0, %v1568
      %v1570 = vpop.f32.mrf.mxu0
      %1571 = vdwg.mxu0
      %v1572 = vadd.f32 %v1387, %v1510
      %v1573 = vadd.f32 %v1388, %v1513
      %v1574 = vadd.f32 %v1389, %v1518
      %v1575 = vadd.f32 %v1390, %v1521
      %v1576 = vadd.f32 %v1391, %v1526
      %v1577 = vadd.f32 %v1392, %v1529
      %v1578 = vadd.f32 %v1393, %v1534
      %v1579 = vadd.f32 %v1394, %v1537
      %v1580 = vadd.f32 %v1395, %v1542
      %v1581 = vadd.f32 %v1396, %v1545
      %v1582 = vadd.f32 %v1397, %v1550
      %v1583 = vadd.f32 %v1398, %v1553
      %v1584 = vadd.f32 %v1399, %v1558
      %v1585 = vadd.f32 %v1400, %v1561
      %v1586 = vadd.f32 %v1401, %v1566
      %v1587 = vadd.f32 %v1402, %v1569
      %s1588 = scalar_lea.vmem [#allocation2], 48
      %v1589 = vld [vmem:[%s1588] sm:$0xff]
      %v1590 = vld [vmem:[%s1588 + $0x8] sm:$0xff]
      %v1591 = vld [vmem:[%s1588 + $0x18] sm:$0xff]
      %v1592 = vld [vmem:[%s1588 + $0x20] sm:$0xff]
      %v1593 = vld [vmem:[%s1588 + $0x30] sm:$0xff]
      %v1594 = vld [vmem:[%s1588 + $0x38] sm:$0xff]
      %v1595 = vld [vmem:[%s1588 + $0x48] sm:$0xff]
      %v1596 = vld [vmem:[%s1588 + $0x50] sm:$0xff]
      %v1597 = vld [vmem:[%s1588 + $0x60] sm:$0xff]
      %v1598 = vld [vmem:[%s1588 + $0x68] sm:$0xff]
      %v1599 = vld [vmem:[%s1588 + $0x78] sm:$0xff]
      %v1600 = vld [vmem:[%s1588 + $0x80] sm:$0xff]
      %v1601 = vld [vmem:[%s1588 + $0x90] sm:$0xff]
      %v1602 = vld [vmem:[%s1588 + $0x98] sm:$0xff]
      %v1603 = vld [vmem:[%s1588 + $0xa8] sm:$0xff]
      %v1604 = vld [vmem:[%s1588 + $0xb0] sm:$0xff]
      %v1605 = vpack.c.bf16 %v1590, %v1589
      %v1606 = vpack.c.bf16 %v1592, %v1591
      %v1607 = vpack.c.bf16 %v1594, %v1593
      %v1608 = vpack.c.bf16 %v1596, %v1595
      %v1609 = vpack.c.bf16 %v1598, %v1597
      %v1610 = vpack.c.bf16 %v1600, %v1599
      %v1611 = vpack.c.bf16 %v1602, %v1601
      %v1612 = vpack.c.bf16 %v1604, %v1603
      %s1613 = scalar_lea.vmem %s1, 120
      %v1614 = vld [vmem:[%s1613] sm:$0xf]
      %v1615 = vld [vmem:[%s1613 + $0x4] sm:$0xf]
      %v1616 = vld [vmem:[%s1613 + $0x8] sm:$0xf]
      %v1617 = vld [vmem:[%s1613 + $0xc] sm:$0xf]
      %v1618 = vld [vmem:[%s1613 + $0x10] sm:$0x3]
      %v1624 = vunpack.c.l.b16 %v1614
      %v1625 = vunpack.c.l.b16 %v1615
      %v1626 = vunpack.c.l.b16 %v1616
      %v1627 = vunpack.c.l.b16 %v1617
      %v1628 = vunpack.c.l.b16 %v1618
      %v1629 = vpack.c.b16 %v1625, %v1624
      %v1630 = vpack.c.b16 %v1627, %v1626
      %v1631 = vpack.c.b16 %v1628, %v1628
      %v1635 = vsel %vm583, %v1605, 0
      %v1638 = vsel %vm583, %v1606, 0
      %v1641 = vsel %vm583, %v1607, 0
      %v1644 = vsel %vm583, %v1608, 0
      %v1647 = vsel %vm583, %v1609, 0
      %v1650 = vsel %vm583, %v1610, 0
      %v1653 = vsel %vm583, %v1611, 0
      %v1656 = vsel %vm583, %v1612, 0
      %v1659 = vsel %vm608, %v1631, 0
      %1661 = vmatprep.subr.bf16.mxu0 0
      %1662 = vmatpush1.bf16.msra.mxu0 0
      %1663 = vmatprep.subr.bf16.mxu0 0
      %1664 = vmatpush1.bf16.msra.mxu0 0
      %1665 = vmatprep.subr.bf16.mxu0 0
      %1666 = vmatpush1.bf16.msra.mxu0 0
      %1667 = vmatprep.subr.bf16.mxu0 0
      %1668 = vmatpush1.bf16.msra.mxu0 0
      %1669 = vmatprep.subr.bf16.mxu0 0
      %1670 = vmatpush1.bf16.msra.mxu0 0
      %1671 = vmatprep.subr.bf16.mxu0 0
      %1672 = vmatpush1.bf16.msra.mxu0 %v1659
      %1673 = vmatprep.subr.bf16.mxu0 0
      %1674 = vmatpush1.bf16.msra.mxu0 %v1630
      %1675 = vmatprep.subr.bf16.mxu0 0
      %1676 = vmatpush1.bf16.msra.mxu0 %v1629
      %1677 = vmatprep.subr.bf16.mxu0 0
      %1678 = vmatpush2.bf16.msra.mxu0 0
      %1679 = vmatprep.subr.bf16.mxu0 0
      %1680 = vmatpush2.bf16.msra.mxu0 0
      %1681 = vmatprep.subr.bf16.mxu0 0
      %1682 = vmatpush2.bf16.msra.mxu0 0
      %1683 = vmatprep.subr.bf16.mxu0 0
      %1684 = vmatpush2.bf16.msra.mxu0 0
      %1685 = vmatprep.subr.bf16.mxu0 0
      %1686 = vmatpush2.bf16.msra.mxu0 0
      %1687 = vmatprep.subr.bf16.mxu0 0
      %1688 = vmatpush2.bf16.msra.mxu0 0
      %1689 = vmatprep.subr.bf16.mxu0 0
      %1690 = vmatpush2.bf16.msra.mxu0 0
      %1691 = vmatprep.subr.bf16.mxu0 0
      %1692 = vmatpush2.bf16.msra.mxu0 0
      %1693 = vmatprep.mubr.bf16.mxu0 0
      %1694 = vmatmul.mubr.bf16.gmra.mxu0 %v1635
      %v1695 = vpop.f32.mrf.mxu0
      %v1696 = vadd.f32 0.0, %v1695
      %v1697 = vpop.f32.mrf.mxu0
      %v1698 = vpop.f32.mrf.mxu0
      %v1699 = vadd.f32 0.0, %v1698
      %v1700 = vpop.f32.mrf.mxu0
      %1701 = vmatprep.mubr.bf16.mxu0 0
      %1702 = vmatmul.mubr.bf16.gmra.mxu0 %v1638
      %v1703 = vpop.f32.mrf.mxu0
      %v1704 = vadd.f32 0.0, %v1703
      %v1705 = vpop.f32.mrf.mxu0
      %v1706 = vpop.f32.mrf.mxu0
      %v1707 = vadd.f32 0.0, %v1706
      %v1708 = vpop.f32.mrf.mxu0
      %1709 = vmatprep.mubr.bf16.mxu0 0
      %1710 = vmatmul.mubr.bf16.gmra.mxu0 %v1641
      %v1711 = vpop.f32.mrf.mxu0
      %v1712 = vadd.f32 0.0, %v1711
      %v1713 = vpop.f32.mrf.mxu0
      %v1714 = vpop.f32.mrf.mxu0
      %v1715 = vadd.f32 0.0, %v1714
      %v1716 = vpop.f32.mrf.mxu0
      %1717 = vmatprep.mubr.bf16.mxu0 0
      %1718 = vmatmul.mubr.bf16.gmra.mxu0 %v1644
      %v1719 = vpop.f32.mrf.mxu0
      %v1720 = vadd.f32 0.0, %v1719
      %v1721 = vpop.f32.mrf.mxu0
      %v1722 = vpop.f32.mrf.mxu0
      %v1723 = vadd.f32 0.0, %v1722
      %v1724 = vpop.f32.mrf.mxu0
      %1725 = vmatprep.mubr.bf16.mxu0 0
      %1726 = vmatmul.mubr.bf16.gmra.mxu0 %v1647
      %v1727 = vpop.f32.mrf.mxu0
      %v1728 = vadd.f32 0.0, %v1727
      %v1729 = vpop.f32.mrf.mxu0
      %v1730 = vpop.f32.mrf.mxu0
      %v1731 = vadd.f32 0.0, %v1730
      %v1732 = vpop.f32.mrf.mxu0
      %1733 = vmatprep.mubr.bf16.mxu0 0
      %1734 = vmatmul.mubr.bf16.gmra.mxu0 %v1650
      %v1735 = vpop.f32.mrf.mxu0
      %v1736 = vadd.f32 0.0, %v1735
      %v1737 = vpop.f32.mrf.mxu0
      %v1738 = vpop.f32.mrf.mxu0
      %v1739 = vadd.f32 0.0, %v1738
      %v1740 = vpop.f32.mrf.mxu0
      %1741 = vmatprep.mubr.bf16.mxu0 0
      %1742 = vmatmul.mubr.bf16.gmra.mxu0 %v1653
      %v1743 = vpop.f32.mrf.mxu0
      %v1744 = vadd.f32 0.0, %v1743
      %v1745 = vpop.f32.mrf.mxu0
      %v1746 = vpop.f32.mrf.mxu0
      %v1747 = vadd.f32 0.0, %v1746
      %v1748 = vpop.f32.mrf.mxu0
      %1749 = vmatprep.mubr.bf16.mxu0 0
      %1750 = vmatmul.mubr.bf16.gmra.mxu0 %v1656
      %v1751 = vpop.f32.mrf.mxu0
      %v1752 = vadd.f32 0.0, %v1751
      %v1753 = vpop.f32.mrf.mxu0
      %v1754 = vpop.f32.mrf.mxu0
      %v1755 = vadd.f32 0.0, %v1754
      %v1756 = vpop.f32.mrf.mxu0
      %1757 = vdwg.mxu0
      %v1758 = vadd.f32 %v1572, %v1696
      %v1759 = vadd.f32 %v1573, %v1699
      %v1760 = vadd.f32 %v1574, %v1704
      %v1761 = vadd.f32 %v1575, %v1707
      %v1762 = vadd.f32 %v1576, %v1712
      %v1763 = vadd.f32 %v1577, %v1715
      %v1764 = vadd.f32 %v1578, %v1720
      %v1765 = vadd.f32 %v1579, %v1723
      %v1766 = vadd.f32 %v1580, %v1728
      %v1767 = vadd.f32 %v1581, %v1731
      %v1768 = vadd.f32 %v1582, %v1736
      %v1769 = vadd.f32 %v1583, %v1739
      %v1770 = vadd.f32 %v1584, %v1744
      %v1771 = vadd.f32 %v1585, %v1747
      %v1772 = vadd.f32 %v1586, %v1752
      %v1773 = vadd.f32 %v1587, %v1755
      %v1774 = vld [vmem:[%s1588 + $0x1] sm:$0xff]
      %v1775 = vld [vmem:[%s1588 + $0x9] sm:$0xff]
      %v1776 = vld [vmem:[%s1588 + $0x19] sm:$0xff]
      %v1777 = vld [vmem:[%s1588 + $0x21] sm:$0xff]
      %v1778 = vld [vmem:[%s1588 + $0x31] sm:$0xff]
      %v1779 = vld [vmem:[%s1588 + $0x39] sm:$0xff]
      %v1780 = vld [vmem:[%s1588 + $0x49] sm:$0xff]
      %v1781 = vld [vmem:[%s1588 + $0x51] sm:$0xff]
      %v1782 = vld [vmem:[%s1588 + $0x61] sm:$0xff]
      %v1783 = vld [vmem:[%s1588 + $0x69] sm:$0xff]
      %v1784 = vld [vmem:[%s1588 + $0x79] sm:$0xff]
      %v1785 = vld [vmem:[%s1588 + $0x81] sm:$0xff]
      %v1786 = vld [vmem:[%s1588 + $0x91] sm:$0xff]
      %v1787 = vld [vmem:[%s1588 + $0x99] sm:$0xff]
      %v1788 = vld [vmem:[%s1588 + $0xa9] sm:$0xff]
      %v1789 = vld [vmem:[%s1588 + $0xb1] sm:$0xff]
      %v1790 = vpack.c.bf16 %v1775, %v1774
      %v1791 = vpack.c.bf16 %v1777, %v1776
      %v1792 = vpack.c.bf16 %v1779, %v1778
      %v1793 = vpack.c.bf16 %v1781, %v1780
      %v1794 = vpack.c.bf16 %v1783, %v1782
      %v1795 = vpack.c.bf16 %v1785, %v1784
      %v1796 = vpack.c.bf16 %v1787, %v1786
      %v1797 = vpack.c.bf16 %v1789, %v1788
      %s1798 = scalar_lea.vmem %s1, 140
      %v1799 = vld [vmem:[%s1798] sm:$0xf]
      %v1800 = vld [vmem:[%s1798 + $0x4] sm:$0xf]
      %v1801 = vld [vmem:[%s1798 + $0x8] sm:$0xf]
      %v1802 = vld [vmem:[%s1798 + $0xc] sm:$0xf]
      %v1803 = vld [vmem:[%s1798 + $0x10] sm:$0x3]
      %v1809 = vunpack.c.l.b16 %v1799
      %v1810 = vunpack.c.l.b16 %v1800
      %v1811 = vunpack.c.l.b16 %v1801
      %v1812 = vunpack.c.l.b16 %v1802
      %v1813 = vunpack.c.l.b16 %v1803
      %v1814 = vpack.c.b16 %v1810, %v1809
      %v1815 = vpack.c.b16 %v1812, %v1811
      %v1816 = vpack.c.b16 %v1813, %v1813
      %v1820 = vsel %vm583, %v1790, 0
      %v1823 = vsel %vm583, %v1791, 0
      %v1826 = vsel %vm583, %v1792, 0
      %v1829 = vsel %vm583, %v1793, 0
      %v1832 = vsel %vm583, %v1794, 0
      %v1835 = vsel %vm583, %v1795, 0
      %v1838 = vsel %vm583, %v1796, 0
      %v1841 = vsel %vm583, %v1797, 0
      %v1844 = vsel %vm608, %v1816, 0
      %1846 = vmatprep.subr.bf16.mxu0 0
      %1847 = vmatpush1.bf16.msra.mxu0 0
      %1848 = vmatprep.subr.bf16.mxu0 0
      %1849 = vmatpush1.bf16.msra.mxu0 0
      %1850 = vmatprep.subr.bf16.mxu0 0
      %1851 = vmatpush1.bf16.msra.mxu0 0
      %1852 = vmatprep.subr.bf16.mxu0 0
      %1853 = vmatpush1.bf16.msra.mxu0 0
      %1854 = vmatprep.subr.bf16.mxu0 0
      %1855 = vmatpush1.bf16.msra.mxu0 0
      %1856 = vmatprep.subr.bf16.mxu0 0
      %1857 = vmatpush1.bf16.msra.mxu0 %v1844
      %1858 = vmatprep.subr.bf16.mxu0 0
      %1859 = vmatpush1.bf16.msra.mxu0 %v1815
      %1860 = vmatprep.subr.bf16.mxu0 0
      %1861 = vmatpush1.bf16.msra.mxu0 %v1814
      %1862 = vmatprep.subr.bf16.mxu0 0
      %1863 = vmatpush2.bf16.msra.mxu0 0
      %1864 = vmatprep.subr.bf16.mxu0 0
      %1865 = vmatpush2.bf16.msra.mxu0 0
      %1866 = vmatprep.subr.bf16.mxu0 0
      %1867 = vmatpush2.bf16.msra.mxu0 0
      %1868 = vmatprep.subr.bf16.mxu0 0
      %1869 = vmatpush2.bf16.msra.mxu0 0
      %1870 = vmatprep.subr.bf16.mxu0 0
      %1871 = vmatpush2.bf16.msra.mxu0 0
      %1872 = vmatprep.subr.bf16.mxu0 0
      %1873 = vmatpush2.bf16.msra.mxu0 0
      %1874 = vmatprep.subr.bf16.mxu0 0
      %1875 = vmatpush2.bf16.msra.mxu0 0
      %1876 = vmatprep.subr.bf16.mxu0 0
      %1877 = vmatpush2.bf16.msra.mxu0 0
      %1878 = vmatprep.mubr.bf16.mxu0 0
      %1879 = vmatmul.mubr.bf16.gmra.mxu0 %v1820
      %v1880 = vpop.f32.mrf.mxu0
      %v1881 = vadd.f32 0.0, %v1880
      %v1882 = vpop.f32.mrf.mxu0
      %v1883 = vpop.f32.mrf.mxu0
      %v1884 = vadd.f32 0.0, %v1883
      %v1885 = vpop.f32.mrf.mxu0
      %1886 = vmatprep.mubr.bf16.mxu0 0
      %1887 = vmatmul.mubr.bf16.gmra.mxu0 %v1823
      %v1888 = vpop.f32.mrf.mxu0
      %v1889 = vadd.f32 0.0, %v1888
      %v1890 = vpop.f32.mrf.mxu0
      %v1891 = vpop.f32.mrf.mxu0
      %v1892 = vadd.f32 0.0, %v1891
      %v1893 = vpop.f32.mrf.mxu0
      %1894 = vmatprep.mubr.bf16.mxu0 0
      %1895 = vmatmul.mubr.bf16.gmra.mxu0 %v1826
      %v1896 = vpop.f32.mrf.mxu0
      %v1897 = vadd.f32 0.0, %v1896
      %v1898 = vpop.f32.mrf.mxu0
      %v1899 = vpop.f32.mrf.mxu0
      %v1900 = vadd.f32 0.0, %v1899
      %v1901 = vpop.f32.mrf.mxu0
      %1902 = vmatprep.mubr.bf16.mxu0 0
      %1903 = vmatmul.mubr.bf16.gmra.mxu0 %v1829
      %v1904 = vpop.f32.mrf.mxu0
      %v1905 = vadd.f32 0.0, %v1904
      %v1906 = vpop.f32.mrf.mxu0
      %v1907 = vpop.f32.mrf.mxu0
      %v1908 = vadd.f32 0.0, %v1907
      %v1909 = vpop.f32.mrf.mxu0
      %1910 = vmatprep.mubr.bf16.mxu0 0
      %1911 = vmatmul.mubr.bf16.gmra.mxu0 %v1832
      %v1912 = vpop.f32.mrf.mxu0
      %v1913 = vadd.f32 0.0, %v1912
      %v1914 = vpop.f32.mrf.mxu0
      %v1915 = vpop.f32.mrf.mxu0
      %v1916 = vadd.f32 0.0, %v1915
      %v1917 = vpop.f32.mrf.mxu0
      %1918 = vmatprep.mubr.bf16.mxu0 0
      %1919 = vmatmul.mubr.bf16.gmra.mxu0 %v1835
      %v1920 = vpop.f32.mrf.mxu0
      %v1921 = vadd.f32 0.0, %v1920
      %v1922 = vpop.f32.mrf.mxu0
      %v1923 = vpop.f32.mrf.mxu0
      %v1924 = vadd.f32 0.0, %v1923
      %v1925 = vpop.f32.mrf.mxu0
      %1926 = vmatprep.mubr.bf16.mxu0 0
      %1927 = vmatmul.mubr.bf16.gmra.mxu0 %v1838
      %v1928 = vpop.f32.mrf.mxu0
      %v1929 = vadd.f32 0.0, %v1928
      %v1930 = vpop.f32.mrf.mxu0
      %v1931 = vpop.f32.mrf.mxu0
      %v1932 = vadd.f32 0.0, %v1931
      %v1933 = vpop.f32.mrf.mxu0
      %1934 = vmatprep.mubr.bf16.mxu0 0
      %1935 = vmatmul.mubr.bf16.gmra.mxu0 %v1841
      %v1936 = vpop.f32.mrf.mxu0
      %v1937 = vadd.f32 0.0, %v1936
      %v1938 = vpop.f32.mrf.mxu0
      %v1939 = vpop.f32.mrf.mxu0
      %v1940 = vadd.f32 0.0, %v1939
      %v1941 = vpop.f32.mrf.mxu0
      %1942 = vdwg.mxu0
      %v1943 = vadd.f32 %v1758, %v1881
      %v1944 = vadd.f32 %v1759, %v1884
      %v1945 = vadd.f32 %v1760, %v1889
      %v1946 = vadd.f32 %v1761, %v1892
      %v1947 = vadd.f32 %v1762, %v1897
      %v1948 = vadd.f32 %v1763, %v1900
      %v1949 = vadd.f32 %v1764, %v1905
      %v1950 = vadd.f32 %v1765, %v1908
      %v1951 = vadd.f32 %v1766, %v1913
      %v1952 = vadd.f32 %v1767, %v1916
      %v1953 = vadd.f32 %v1768, %v1921
      %v1954 = vadd.f32 %v1769, %v1924
      %v1955 = vadd.f32 %v1770, %v1929
      %v1956 = vadd.f32 %v1771, %v1932
      %v1957 = vadd.f32 %v1772, %v1937
      %v1958 = vadd.f32 %v1773, %v1940
      %v1959 = vld [vmem:[%s1588 + $0x2] sm:$0xff]
      %v1960 = vld [vmem:[%s1588 + $0xa] sm:$0xff]
      %v1961 = vld [vmem:[%s1588 + $0x1a] sm:$0xff]
      %v1962 = vld [vmem:[%s1588 + $0x22] sm:$0xff]
      %v1963 = vld [vmem:[%s1588 + $0x32] sm:$0xff]
      %v1964 = vld [vmem:[%s1588 + $0x3a] sm:$0xff]
      %v1965 = vld [vmem:[%s1588 + $0x4a] sm:$0xff]
      %v1966 = vld [vmem:[%s1588 + $0x52] sm:$0xff]
      %v1967 = vld [vmem:[%s1588 + $0x62] sm:$0xff]
      %v1968 = vld [vmem:[%s1588 + $0x6a] sm:$0xff]
      %v1969 = vld [vmem:[%s1588 + $0x7a] sm:$0xff]
      %v1970 = vld [vmem:[%s1588 + $0x82] sm:$0xff]
      %v1971 = vld [vmem:[%s1588 + $0x92] sm:$0xff]
      %v1972 = vld [vmem:[%s1588 + $0x9a] sm:$0xff]
      %v1973 = vld [vmem:[%s1588 + $0xaa] sm:$0xff]
      %v1974 = vld [vmem:[%s1588 + $0xb2] sm:$0xff]
      %v1975 = vpack.c.bf16 %v1960, %v1959
      %v1976 = vpack.c.bf16 %v1962, %v1961
      %v1977 = vpack.c.bf16 %v1964, %v1963
      %v1978 = vpack.c.bf16 %v1966, %v1965
      %v1979 = vpack.c.bf16 %v1968, %v1967
      %v1980 = vpack.c.bf16 %v1970, %v1969
      %v1981 = vpack.c.bf16 %v1972, %v1971
      %v1982 = vpack.c.bf16 %v1974, %v1973
      %s1983 = scalar_lea.vmem %s1, 160
      %v1984 = vld [vmem:[%s1983] sm:$0xf]
      %v1985 = vld [vmem:[%s1983 + $0x4] sm:$0xf]
      %v1986 = vld [vmem:[%s1983 + $0x8] sm:$0xf]
      %v1987 = vld [vmem:[%s1983 + $0xc] sm:$0xf]
      %v1988 = vld [vmem:[%s1983 + $0x10] sm:$0x3]
      %v1994 = vunpack.c.l.b16 %v1984
      %v1995 = vunpack.c.l.b16 %v1985
      %v1996 = vunpack.c.l.b16 %v1986
      %v1997 = vunpack.c.l.b16 %v1987
      %v1998 = vunpack.c.l.b16 %v1988
      %v1999 = vpack.c.b16 %v1995, %v1994
      %v2000 = vpack.c.b16 %v1997, %v1996
      %v2001 = vpack.c.b16 %v1998, %v1998
      %v2005 = vsel %vm583, %v1975, 0
      %v2008 = vsel %vm583, %v1976, 0
      %v2011 = vsel %vm583, %v1977, 0
      %v2014 = vsel %vm583, %v1978, 0
      %v2017 = vsel %vm583, %v1979, 0
      %v2020 = vsel %vm583, %v1980, 0
      %v2023 = vsel %vm583, %v1981, 0
      %v2026 = vsel %vm583, %v1982, 0
      %v2029 = vsel %vm608, %v2001, 0
      %2031 = vmatprep.subr.bf16.mxu0 0
      %2032 = vmatpush1.bf16.msra.mxu0 0
      %2033 = vmatprep.subr.bf16.mxu0 0
      %2034 = vmatpush1.bf16.msra.mxu0 0
      %2035 = vmatprep.subr.bf16.mxu0 0
      %2036 = vmatpush1.bf16.msra.mxu0 0
      %2037 = vmatprep.subr.bf16.mxu0 0
      %2038 = vmatpush1.bf16.msra.mxu0 0
      %2039 = vmatprep.subr.bf16.mxu0 0
      %2040 = vmatpush1.bf16.msra.mxu0 0
      %2041 = vmatprep.subr.bf16.mxu0 0
      %2042 = vmatpush1.bf16.msra.mxu0 %v2029
      %2043 = vmatprep.subr.bf16.mxu0 0
      %2044 = vmatpush1.bf16.msra.mxu0 %v2000
      %2045 = vmatprep.subr.bf16.mxu0 0
      %2046 = vmatpush1.bf16.msra.mxu0 %v1999
      %2047 = vmatprep.subr.bf16.mxu0 0
      %2048 = vmatpush2.bf16.msra.mxu0 0
      %2049 = vmatprep.subr.bf16.mxu0 0
      %2050 = vmatpush2.bf16.msra.mxu0 0
      %2051 = vmatprep.subr.bf16.mxu0 0
      %2052 = vmatpush2.bf16.msra.mxu0 0
      %2053 = vmatprep.subr.bf16.mxu0 0
      %2054 = vmatpush2.bf16.msra.mxu0 0
      %2055 = vmatprep.subr.bf16.mxu0 0
      %2056 = vmatpush2.bf16.msra.mxu0 0
      %2057 = vmatprep.subr.bf16.mxu0 0
      %2058 = vmatpush2.bf16.msra.mxu0 0
      %2059 = vmatprep.subr.bf16.mxu0 0
      %2060 = vmatpush2.bf16.msra.mxu0 0
      %2061 = vmatprep.subr.bf16.mxu0 0
      %2062 = vmatpush2.bf16.msra.mxu0 0
      %2063 = vmatprep.mubr.bf16.mxu0 0
      %2064 = vmatmul.mubr.bf16.gmra.mxu0 %v2005
      %v2065 = vpop.f32.mrf.mxu0
      %v2066 = vadd.f32 0.0, %v2065
      %v2067 = vpop.f32.mrf.mxu0
      %v2068 = vpop.f32.mrf.mxu0
      %v2069 = vadd.f32 0.0, %v2068
      %v2070 = vpop.f32.mrf.mxu0
      %2071 = vmatprep.mubr.bf16.mxu0 0
      %2072 = vmatmul.mubr.bf16.gmra.mxu0 %v2008
      %v2073 = vpop.f32.mrf.mxu0
      %v2074 = vadd.f32 0.0, %v2073
      %v2075 = vpop.f32.mrf.mxu0
      %v2076 = vpop.f32.mrf.mxu0
      %v2077 = vadd.f32 0.0, %v2076
      %v2078 = vpop.f32.mrf.mxu0
      %2079 = vmatprep.mubr.bf16.mxu0 0
      %2080 = vmatmul.mubr.bf16.gmra.mxu0 %v2011
      %v2081 = vpop.f32.mrf.mxu0
      %v2082 = vadd.f32 0.0, %v2081
      %v2083 = vpop.f32.mrf.mxu0
      %v2084 = vpop.f32.mrf.mxu0
      %v2085 = vadd.f32 0.0, %v2084
      %v2086 = vpop.f32.mrf.mxu0
      %2087 = vmatprep.mubr.bf16.mxu0 0
      %2088 = vmatmul.mubr.bf16.gmra.mxu0 %v2014
      %v2089 = vpop.f32.mrf.mxu0
      %v2090 = vadd.f32 0.0, %v2089
      %v2091 = vpop.f32.mrf.mxu0
      %v2092 = vpop.f32.mrf.mxu0
      %v2093 = vadd.f32 0.0, %v2092
      %v2094 = vpop.f32.mrf.mxu0
      %2095 = vmatprep.mubr.bf16.mxu0 0
      %2096 = vmatmul.mubr.bf16.gmra.mxu0 %v2017
      %v2097 = vpop.f32.mrf.mxu0
      %v2098 = vadd.f32 0.0, %v2097
      %v2099 = vpop.f32.mrf.mxu0
      %v2100 = vpop.f32.mrf.mxu0
      %v2101 = vadd.f32 0.0, %v2100
      %v2102 = vpop.f32.mrf.mxu0
      %2103 = vmatprep.mubr.bf16.mxu0 0
      %2104 = vmatmul.mubr.bf16.gmra.mxu0 %v2020
      %v2105 = vpop.f32.mrf.mxu0
      %v2106 = vadd.f32 0.0, %v2105
      %v2107 = vpop.f32.mrf.mxu0
      %v2108 = vpop.f32.mrf.mxu0
      %v2109 = vadd.f32 0.0, %v2108
      %v2110 = vpop.f32.mrf.mxu0
      %2111 = vmatprep.mubr.bf16.mxu0 0
      %2112 = vmatmul.mubr.bf16.gmra.mxu0 %v2023
      %v2113 = vpop.f32.mrf.mxu0
      %v2114 = vadd.f32 0.0, %v2113
      %v2115 = vpop.f32.mrf.mxu0
      %v2116 = vpop.f32.mrf.mxu0
      %v2117 = vadd.f32 0.0, %v2116
      %v2118 = vpop.f32.mrf.mxu0
      %2119 = vmatprep.mubr.bf16.mxu0 0
      %2120 = vmatmul.mubr.bf16.gmra.mxu0 %v2026
      %v2121 = vpop.f32.mrf.mxu0
      %v2122 = vadd.f32 0.0, %v2121
      %v2123 = vpop.f32.mrf.mxu0
      %v2124 = vpop.f32.mrf.mxu0
      %v2125 = vadd.f32 0.0, %v2124
      %v2126 = vpop.f32.mrf.mxu0
      %2127 = vdwg.mxu0
      %v2128 = vadd.f32 %v1943, %v2066
      %v2129 = vadd.f32 %v1944, %v2069
      %v2130 = vadd.f32 %v1945, %v2074
      %v2131 = vadd.f32 %v1946, %v2077
      %v2132 = vadd.f32 %v1947, %v2082
      %v2133 = vadd.f32 %v1948, %v2085
      %v2134 = vadd.f32 %v1949, %v2090
      %v2135 = vadd.f32 %v1950, %v2093
      %v2136 = vadd.f32 %v1951, %v2098
      %v2137 = vadd.f32 %v1952, %v2101
      %v2138 = vadd.f32 %v1953, %v2106
      %v2139 = vadd.f32 %v1954, %v2109
      %v2140 = vadd.f32 %v1955, %v2114
      %v2141 = vadd.f32 %v1956, %v2117
      %v2142 = vadd.f32 %v1957, %v2122
      %v2143 = vadd.f32 %v1958, %v2125
      %2144 = vst [vmem:[#allocation3] sm:$0xff] %v2128
      %2145 = vst [vmem:[#allocation3 + $0x8] sm:$0xff] %v2129
      %2146 = vst [vmem:[#allocation3 + $0x10] sm:$0xff] %v2130
      %2147 = vst [vmem:[#allocation3 + $0x18] sm:$0xff] %v2131
      %2148 = vst [vmem:[#allocation3 + $0x20] sm:$0xff] %v2132
      %2149 = vst [vmem:[#allocation3 + $0x28] sm:$0xff] %v2133
      %2150 = vst [vmem:[#allocation3 + $0x30] sm:$0xff] %v2134
      %2151 = vst [vmem:[#allocation3 + $0x38] sm:$0xff] %v2135
      %2152 = vst [vmem:[#allocation3 + $0x40] sm:$0xff] %v2136
      %2153 = vst [vmem:[#allocation3 + $0x48] sm:$0xff] %v2137
      %2154 = vst [vmem:[#allocation3 + $0x50] sm:$0xff] %v2138
      %2155 = vst [vmem:[#allocation3 + $0x58] sm:$0xff] %v2139
      %2156 = vst [vmem:[#allocation3 + $0x60] sm:$0xff] %v2140
      %2157 = vst [vmem:[#allocation3 + $0x68] sm:$0xff] %v2141
      %2158 = vst [vmem:[#allocation3 + $0x70] sm:$0xff] %v2142
      %2159 = vst [vmem:[#allocation3 + $0x78] sm:$0xff] %v2143
      %v2160 = vadd.f32 %v2128, %v2129
      %v2161 = vadd.f32 %v2160, %v2130
      %v2162 = vadd.f32 %v2161, %v2131
      %v2163 = vadd.f32 %v2162, %v2132
      %v2164 = vadd.f32 %v2163, %v2133
      %v2165 = vadd.f32 %v2164, %v2134
      %v2166 = vadd.f32 %v2165, %v2135
      %v2167 = vadd.f32 %v2166, %v2136
      %v2168 = vadd.f32 %v2167, %v2137
      %v2169 = vadd.f32 %v2168, %v2138
      %v2170 = vadd.f32 %v2169, %v2139
      %v2171 = vadd.f32 %v2170, %v2140
      %v2172 = vadd.f32 %v2171, %v2141
      %v2173 = vadd.f32 %v2172, %v2142
      %v2174 = vadd.f32 %v2173, %v2143
      %v2175 = vrot.slane %v2174, 4
      %v2176 = vadd.f32 %v2174, %v2175
      %v2177 = vrot.slane %v2176, 2
      %v2178 = vadd.f32 %v2176, %v2177
      %v2179 = vrot.slane %v2178, 1
      %v2180 = vadd.f32 %v2178, %v2179
      %v2181 = vadd.f32 %v2180, 0.0
      %v2182 = vmul.f32 %v2128, %v2128
      %v2183 = vmul.f32 %v2129, %v2129
      %v2184 = vmul.f32 %v2130, %v2130
      %v2185 = vmul.f32 %v2131, %v2131
      %v2186 = vmul.f32 %v2132, %v2132
      %v2187 = vmul.f32 %v2133, %v2133
      %v2188 = vmul.f32 %v2134, %v2134
      %v2189 = vmul.f32 %v2135, %v2135
      %v2190 = vmul.f32 %v2136, %v2136
      %v2191 = vmul.f32 %v2137, %v2137
      %v2192 = vmul.f32 %v2138, %v2138
      %v2193 = vmul.f32 %v2139, %v2139
      %v2194 = vmul.f32 %v2140, %v2140
      %v2195 = vmul.f32 %v2141, %v2141
      %v2196 = vmul.f32 %v2142, %v2142
      %v2197 = vmul.f32 %v2143, %v2143
      %v2198 = vadd.f32 %v2182, %v2183
      %v2199 = vadd.f32 %v2198, %v2184
      %v2200 = vadd.f32 %v2199, %v2185
      %v2201 = vadd.f32 %v2200, %v2186
      %v2202 = vadd.f32 %v2201, %v2187
      %v2203 = vadd.f32 %v2202, %v2188
      %v2204 = vadd.f32 %v2203, %v2189
      %v2205 = vadd.f32 %v2204, %v2190
      %v2206 = vadd.f32 %v2205, %v2191
      %v2207 = vadd.f32 %v2206, %v2192
      %v2208 = vadd.f32 %v2207, %v2193
      %v2209 = vadd.f32 %v2208, %v2194
      %v2210 = vadd.f32 %v2209, %v2195
      %v2211 = vadd.f32 %v2210, %v2196
      %v2212 = vadd.f32 %v2211, %v2197
      %v2213 = vrot.slane %v2212, 4
      %v2214 = vadd.f32 %v2212, %v2213
      %v2215 = vrot.slane %v2214, 2
      %v2216 = vadd.f32 %v2214, %v2215
      %v2217 = vrot.slane %v2216, 1
      %v2218 = vadd.f32 %v2216, %v2217
      %v2219 = vadd.f32 %v2218, 0.0
      %s2220 = scalar_lea.vmem [#allocation2], 192
      %v2221 = vld [vmem:[%s2220] sm:$0xff]
      %v2222 = vld [vmem:[%s2220 + $0x8] sm:$0xff]
      %v2223 = vld [vmem:[%s2220 + $0x18] sm:$0xff]
      %v2224 = vld [vmem:[%s2220 + $0x20] sm:$0xff]
      %v2225 = vld [vmem:[%s2220 + $0x30] sm:$0xff]
      %v2226 = vld [vmem:[%s2220 + $0x38] sm:$0xff]
      %v2227 = vld [vmem:[%s2220 + $0x48] sm:$0xff]
      %v2228 = vld [vmem:[%s2220 + $0x50] sm:$0xff]
      %v2229 = vld [vmem:[%s2220 + $0x60] sm:$0xff]
      %v2230 = vld [vmem:[%s2220 + $0x68] sm:$0xff]
      %v2231 = vld [vmem:[%s2220 + $0x78] sm:$0xff]
      %v2232 = vld [vmem:[%s2220 + $0x80] sm:$0xff]
      %v2233 = vld [vmem:[%s2220 + $0x90] sm:$0xff]
      %v2234 = vld [vmem:[%s2220 + $0x98] sm:$0xff]
      %v2235 = vld [vmem:[%s2220 + $0xa8] sm:$0xff]
      %v2236 = vld [vmem:[%s2220 + $0xb0] sm:$0xff]
      %v2237 = vpack.c.bf16 %v2222, %v2221
      %v2238 = vpack.c.bf16 %v2224, %v2223
      %v2239 = vpack.c.bf16 %v2226, %v2225
      %v2240 = vpack.c.bf16 %v2228, %v2227
      %v2241 = vpack.c.bf16 %v2230, %v2229
      %v2242 = vpack.c.bf16 %v2232, %v2231
      %v2243 = vpack.c.bf16 %v2234, %v2233
      %v2244 = vpack.c.bf16 %v2236, %v2235
      %v2245 = vld [vmem:[%s1] sm:$0xf]
      %v2246 = vld [vmem:[%s1 + $0x4] sm:$0xf]
      %v2247 = vld [vmem:[%s1 + $0x8] sm:$0xf]
      %v2248 = vld [vmem:[%s1 + $0xc] sm:$0xf]
      %v2249 = vld [vmem:[%s1 + $0x10] sm:$0x3]
      %v2250 = vld [vmem:[%s2220 + $0x1] sm:$0xff]
      %v2251 = vld [vmem:[%s2220 + $0x9] sm:$0xff]
      %v2252 = vld [vmem:[%s2220 + $0x19] sm:$0xff]
      %v2253 = vld [vmem:[%s2220 + $0x21] sm:$0xff]
      %v2254 = vld [vmem:[%s2220 + $0x31] sm:$0xff]
      %v2255 = vld [vmem:[%s2220 + $0x39] sm:$0xff]
      %v2256 = vld [vmem:[%s2220 + $0x49] sm:$0xff]
      %v2257 = vld [vmem:[%s2220 + $0x51] sm:$0xff]
      %v2258 = vld [vmem:[%s2220 + $0x61] sm:$0xff]
      %v2259 = vld [vmem:[%s2220 + $0x69] sm:$0xff]
      %v2260 = vld [vmem:[%s2220 + $0x79] sm:$0xff]
      %v2261 = vld [vmem:[%s2220 + $0x81] sm:$0xff]
      %v2262 = vld [vmem:[%s2220 + $0x91] sm:$0xff]
      %v2263 = vld [vmem:[%s2220 + $0x99] sm:$0xff]
      %v2264 = vld [vmem:[%s2220 + $0xa9] sm:$0xff]
      %v2265 = vld [vmem:[%s2220 + $0xb1] sm:$0xff]
      %v2266 = vpack.c.bf16 %v2251, %v2250
      %v2267 = vpack.c.bf16 %v2253, %v2252
      %v2268 = vpack.c.bf16 %v2255, %v2254
      %v2269 = vpack.c.bf16 %v2257, %v2256
      %v2270 = vpack.c.bf16 %v2259, %v2258
      %v2271 = vpack.c.bf16 %v2261, %v2260
      %v2272 = vpack.c.bf16 %v2263, %v2262
      %v2273 = vpack.c.bf16 %v2265, %v2264
      %v2274 = vld [vmem:[%s562] sm:$0xf]
      %v2275 = vld [vmem:[%s562 + $0x4] sm:$0xf]
      %v2276 = vld [vmem:[%s562 + $0x8] sm:$0xf]
      %v2277 = vld [vmem:[%s562 + $0xc] sm:$0xf]
      %v2278 = vld [vmem:[%s562 + $0x10] sm:$0x3]
      %v2284 = vunpack.c.l.b16 %v2274
      %v2285 = vunpack.c.l.b16 %v2275
      %v2286 = vunpack.c.l.b16 %v2276
      %v2287 = vunpack.c.l.b16 %v2277
      %v2288 = vunpack.c.l.b16 %v2278
      %v2289 = vpack.c.b16 %v2285, %v2284
      %v2290 = vpack.c.b16 %v2287, %v2286
      %v2291 = vpack.c.b16 %v2288, %v2288
      %v2295 = vsel %vm583, %v2266, 0
      %v2298 = vsel %vm583, %v2267, 0
      %v2301 = vsel %vm583, %v2268, 0
      %v2304 = vsel %vm583, %v2269, 0
      %v2307 = vsel %vm583, %v2270, 0
      %v2310 = vsel %vm583, %v2271, 0
      %v2313 = vsel %vm583, %v2272, 0
      %v2316 = vsel %vm583, %v2273, 0
      %v2319 = vsel %vm608, %v2291, 0
      %2321 = vmatprep.subr.bf16.mxu0 0
      %2322 = vmatpush1.bf16.msra.mxu0 0
      %2323 = vmatprep.subr.bf16.mxu0 0
      %2324 = vmatpush1.bf16.msra.mxu0 0
      %2325 = vmatprep.subr.bf16.mxu0 0
      %2326 = vmatpush1.bf16.msra.mxu0 0
      %2327 = vmatprep.subr.bf16.mxu0 0
      %2328 = vmatpush1.bf16.msra.mxu0 0
      %2329 = vmatprep.subr.bf16.mxu0 0
      %2330 = vmatpush1.bf16.msra.mxu0 0
      %2331 = vmatprep.subr.bf16.mxu0 0
      %2332 = vmatpush1.bf16.msra.mxu0 %v2319
      %2333 = vmatprep.subr.bf16.mxu0 0
      %2334 = vmatpush1.bf16.msra.mxu0 %v2290
      %2335 = vmatprep.subr.bf16.mxu0 0
      %2336 = vmatpush1.bf16.msra.mxu0 %v2289
      %2337 = vmatprep.subr.bf16.mxu0 0
      %2338 = vmatpush2.bf16.msra.mxu0 0
      %2339 = vmatprep.subr.bf16.mxu0 0
      %2340 = vmatpush2.bf16.msra.mxu0 0
      %2341 = vmatprep.subr.bf16.mxu0 0
      %2342 = vmatpush2.bf16.msra.mxu0 0
      %2343 = vmatprep.subr.bf16.mxu0 0
      %2344 = vmatpush2.bf16.msra.mxu0 0
      %2345 = vmatprep.subr.bf16.mxu0 0
      %2346 = vmatpush2.bf16.msra.mxu0 0
      %2347 = vmatprep.subr.bf16.mxu0 0
      %2348 = vmatpush2.bf16.msra.mxu0 0
      %2349 = vmatprep.subr.bf16.mxu0 0
      %2350 = vmatpush2.bf16.msra.mxu0 0
      %2351 = vmatprep.subr.bf16.mxu0 0
      %2352 = vmatpush2.bf16.msra.mxu0 0
      %2353 = vmatprep.mubr.bf16.mxu0 0
      %2354 = vmatmul.mubr.bf16.gmra.mxu0 %v2295
      %v2355 = vpop.f32.mrf.mxu0
      %v2356 = vadd.f32 0.0, %v2355
      %v2357 = vpop.f32.mrf.mxu0
      %v2358 = vpop.f32.mrf.mxu0
      %v2359 = vadd.f32 0.0, %v2358
      %v2360 = vpop.f32.mrf.mxu0
      %2361 = vmatprep.mubr.bf16.mxu0 0
      %2362 = vmatmul.mubr.bf16.gmra.mxu0 %v2298
      %v2363 = vpop.f32.mrf.mxu0
      %v2364 = vadd.f32 0.0, %v2363
      %v2365 = vpop.f32.mrf.mxu0
      %v2366 = vpop.f32.mrf.mxu0
      %v2367 = vadd.f32 0.0, %v2366
      %v2368 = vpop.f32.mrf.mxu0
      %2369 = vmatprep.mubr.bf16.mxu0 0
      %2370 = vmatmul.mubr.bf16.gmra.mxu0 %v2301
      %v2371 = vpop.f32.mrf.mxu0
      %v2372 = vadd.f32 0.0, %v2371
      %v2373 = vpop.f32.mrf.mxu0
      %v2374 = vpop.f32.mrf.mxu0
      %v2375 = vadd.f32 0.0, %v2374
      %v2376 = vpop.f32.mrf.mxu0
      %2377 = vmatprep.mubr.bf16.mxu0 0
      %2378 = vmatmul.mubr.bf16.gmra.mxu0 %v2304
      %v2379 = vpop.f32.mrf.mxu0
      %v2380 = vadd.f32 0.0, %v2379
      %v2381 = vpop.f32.mrf.mxu0
      %v2382 = vpop.f32.mrf.mxu0
      %v2383 = vadd.f32 0.0, %v2382
      %v2384 = vpop.f32.mrf.mxu0
      %2385 = vmatprep.mubr.bf16.mxu0 0
      %2386 = vmatmul.mubr.bf16.gmra.mxu0 %v2307
      %v2387 = vpop.f32.mrf.mxu0
      %v2388 = vadd.f32 0.0, %v2387
      %v2389 = vpop.f32.mrf.mxu0
      %v2390 = vpop.f32.mrf.mxu0
      %v2391 = vadd.f32 0.0, %v2390
      %v2392 = vpop.f32.mrf.mxu0
      %2393 = vmatprep.mubr.bf16.mxu0 0
      %2394 = vmatmul.mubr.bf16.gmra.mxu0 %v2310
      %v2395 = vpop.f32.mrf.mxu0
      %v2396 = vadd.f32 0.0, %v2395
      %v2397 = vpop.f32.mrf.mxu0
      %v2398 = vpop.f32.mrf.mxu0
      %v2399 = vadd.f32 0.0, %v2398
      %v2400 = vpop.f32.mrf.mxu0
      %2401 = vmatprep.mubr.bf16.mxu0 0
      %2402 = vmatmul.mubr.bf16.gmra.mxu0 %v2313
      %v2403 = vpop.f32.mrf.mxu0
      %v2404 = vadd.f32 0.0, %v2403
      %v2405 = vpop.f32.mrf.mxu0
      %v2406 = vpop.f32.mrf.mxu0
      %v2407 = vadd.f32 0.0, %v2406
      %v2408 = vpop.f32.mrf.mxu0
      %2409 = vmatprep.mubr.bf16.mxu0 0
      %2410 = vmatmul.mubr.bf16.gmra.mxu0 %v2316
      %v2411 = vpop.f32.mrf.mxu0
      %v2412 = vadd.f32 0.0, %v2411
      %v2413 = vpop.f32.mrf.mxu0
      %v2414 = vpop.f32.mrf.mxu0
      %v2415 = vadd.f32 0.0, %v2414
      %v2416 = vpop.f32.mrf.mxu0
      %2417 = vdwg.mxu0
      %v2423 = vunpack.c.l.b16 %v2245
      %v2424 = vunpack.c.l.b16 %v2246
      %v2425 = vunpack.c.l.b16 %v2247
      %v2426 = vunpack.c.l.b16 %v2248
      %v2427 = vunpack.c.l.b16 %v2249
      %v2428 = vpack.c.b16 %v2424, %v2423
      %v2429 = vpack.c.b16 %v2426, %v2425
      %v2430 = vpack.c.b16 %v2427, %v2427
      %v2434 = vsel %vm583, %v2237, 0
      %v2437 = vsel %vm583, %v2238, 0
      %v2440 = vsel %vm583, %v2239, 0
      %v2443 = vsel %vm583, %v2240, 0
      %v2446 = vsel %vm583, %v2241, 0
      %v2449 = vsel %vm583, %v2242, 0
      %v2452 = vsel %vm583, %v2243, 0
      %v2455 = vsel %vm583, %v2244, 0
      %v2458 = vsel %vm608, %v2430, 0
      %2460 = vmatprep.subr.bf16.mxu0 0
      %2461 = vmatpush1.bf16.msra.mxu0 0
      %2462 = vmatprep.subr.bf16.mxu0 0
      %2463 = vmatpush1.bf16.msra.mxu0 0
      %2464 = vmatprep.subr.bf16.mxu0 0
      %2465 = vmatpush1.bf16.msra.mxu0 0
      %2466 = vmatprep.subr.bf16.mxu0 0
      %2467 = vmatpush1.bf16.msra.mxu0 0
      %2468 = vmatprep.subr.bf16.mxu0 0
      %2469 = vmatpush1.bf16.msra.mxu0 0
      %2470 = vmatprep.subr.bf16.mxu0 0
      %2471 = vmatpush1.bf16.msra.mxu0 %v2458
      %2472 = vmatprep.subr.bf16.mxu0 0
      %2473 = vmatpush1.bf16.msra.mxu0 %v2429
      %2474 = vmatprep.subr.bf16.mxu0 0
      %2475 = vmatpush1.bf16.msra.mxu0 %v2428
      %2476 = vmatprep.subr.bf16.mxu0 0
      %2477 = vmatpush2.bf16.msra.mxu0 0
      %2478 = vmatprep.subr.bf16.mxu0 0
      %2479 = vmatpush2.bf16.msra.mxu0 0
      %2480 = vmatprep.subr.bf16.mxu0 0
      %2481 = vmatpush2.bf16.msra.mxu0 0
      %2482 = vmatprep.subr.bf16.mxu0 0
      %2483 = vmatpush2.bf16.msra.mxu0 0
      %2484 = vmatprep.subr.bf16.mxu0 0
      %2485 = vmatpush2.bf16.msra.mxu0 0
      %2486 = vmatprep.subr.bf16.mxu0 0
      %2487 = vmatpush2.bf16.msra.mxu0 0
      %2488 = vmatprep.subr.bf16.mxu0 0
      %2489 = vmatpush2.bf16.msra.mxu0 0
      %2490 = vmatprep.subr.bf16.mxu0 0
      %2491 = vmatpush2.bf16.msra.mxu0 0
      %2492 = vmatprep.mubr.bf16.mxu0 0
      %2493 = vmatmul.mubr.bf16.gmra.mxu0 %v2434
      %v2494 = vpop.f32.mrf.mxu0
      %v2495 = vadd.f32 %v2356, %v2494
      %v2496 = vpop.f32.mrf.mxu0
      %v2497 = vpop.f32.mrf.mxu0
      %v2498 = vadd.f32 %v2359, %v2497
      %v2499 = vpop.f32.mrf.mxu0
      %2500 = vmatprep.mubr.bf16.mxu0 0
      %2501 = vmatmul.mubr.bf16.gmra.mxu0 %v2437
      %v2502 = vpop.f32.mrf.mxu0
      %v2503 = vadd.f32 %v2364, %v2502
      %v2504 = vpop.f32.mrf.mxu0
      %v2505 = vpop.f32.mrf.mxu0
      %v2506 = vadd.f32 %v2367, %v2505
      %v2507 = vpop.f32.mrf.mxu0
      %2508 = vmatprep.mubr.bf16.mxu0 0
      %2509 = vmatmul.mubr.bf16.gmra.mxu0 %v2440
      %v2510 = vpop.f32.mrf.mxu0
      %v2511 = vadd.f32 %v2372, %v2510
      %v2512 = vpop.f32.mrf.mxu0
      %v2513 = vpop.f32.mrf.mxu0
      %v2514 = vadd.f32 %v2375, %v2513
      %v2515 = vpop.f32.mrf.mxu0
      %2516 = vmatprep.mubr.bf16.mxu0 0
      %2517 = vmatmul.mubr.bf16.gmra.mxu0 %v2443
      %v2518 = vpop.f32.mrf.mxu0
      %v2519 = vadd.f32 %v2380, %v2518
      %v2520 = vpop.f32.mrf.mxu0
      %v2521 = vpop.f32.mrf.mxu0
      %v2522 = vadd.f32 %v2383, %v2521
      %v2523 = vpop.f32.mrf.mxu0
      %2524 = vmatprep.mubr.bf16.mxu0 0
      %2525 = vmatmul.mubr.bf16.gmra.mxu0 %v2446
      %v2526 = vpop.f32.mrf.mxu0
      %v2527 = vadd.f32 %v2388, %v2526
      %v2528 = vpop.f32.mrf.mxu0
      %v2529 = vpop.f32.mrf.mxu0
      %v2530 = vadd.f32 %v2391, %v2529
      %v2531 = vpop.f32.mrf.mxu0
      %2532 = vmatprep.mubr.bf16.mxu0 0
      %2533 = vmatmul.mubr.bf16.gmra.mxu0 %v2449
      %v2534 = vpop.f32.mrf.mxu0
      %v2535 = vadd.f32 %v2396, %v2534
      %v2536 = vpop.f32.mrf.mxu0
      %v2537 = vpop.f32.mrf.mxu0
      %v2538 = vadd.f32 %v2399, %v2537
      %v2539 = vpop.f32.mrf.mxu0
      %2540 = vmatprep.mubr.bf16.mxu0 0
      %2541 = vmatmul.mubr.bf16.gmra.mxu0 %v2452
      %v2542 = vpop.f32.mrf.mxu0
      %v2543 = vadd.f32 %v2404, %v2542
      %v2544 = vpop.f32.mrf.mxu0
      %v2545 = vpop.f32.mrf.mxu0
      %v2546 = vadd.f32 %v2407, %v2545
      %v2547 = vpop.f32.mrf.mxu0
      %2548 = vmatprep.mubr.bf16.mxu0 0
      %2549 = vmatmul.mubr.bf16.gmra.mxu0 %v2455
      %v2550 = vpop.f32.mrf.mxu0
      %v2551 = vadd.f32 %v2412, %v2550
      %v2552 = vpop.f32.mrf.mxu0
      %v2553 = vpop.f32.mrf.mxu0
      %v2554 = vadd.f32 %v2415, %v2553
      %v2555 = vpop.f32.mrf.mxu0
      %2556 = vdwg.mxu0
      %v2557 = vld [vmem:[%s2220 + $0x2] sm:$0xff]
      %v2558 = vld [vmem:[%s2220 + $0xa] sm:$0xff]
      %v2559 = vld [vmem:[%s2220 + $0x1a] sm:$0xff]
      %v2560 = vld [vmem:[%s2220 + $0x22] sm:$0xff]
      %v2561 = vld [vmem:[%s2220 + $0x32] sm:$0xff]
      %v2562 = vld [vmem:[%s2220 + $0x3a] sm:$0xff]
      %v2563 = vld [vmem:[%s2220 + $0x4a] sm:$0xff]
      %v2564 = vld [vmem:[%s2220 + $0x52] sm:$0xff]
      %v2565 = vld [vmem:[%s2220 + $0x62] sm:$0xff]
      %v2566 = vld [vmem:[%s2220 + $0x6a] sm:$0xff]
      %v2567 = vld [vmem:[%s2220 + $0x7a] sm:$0xff]
      %v2568 = vld [vmem:[%s2220 + $0x82] sm:$0xff]
      %v2569 = vld [vmem:[%s2220 + $0x92] sm:$0xff]
      %v2570 = vld [vmem:[%s2220 + $0x9a] sm:$0xff]
      %v2571 = vld [vmem:[%s2220 + $0xaa] sm:$0xff]
      %v2572 = vld [vmem:[%s2220 + $0xb2] sm:$0xff]
      %v2573 = vpack.c.bf16 %v2558, %v2557
      %v2574 = vpack.c.bf16 %v2560, %v2559
      %v2575 = vpack.c.bf16 %v2562, %v2561
      %v2576 = vpack.c.bf16 %v2564, %v2563
      %v2577 = vpack.c.bf16 %v2566, %v2565
      %v2578 = vpack.c.bf16 %v2568, %v2567
      %v2579 = vpack.c.bf16 %v2570, %v2569
      %v2580 = vpack.c.bf16 %v2572, %v2571
      %v2581 = vld [vmem:[%s872] sm:$0xf]
      %v2582 = vld [vmem:[%s872 + $0x4] sm:$0xf]
      %v2583 = vld [vmem:[%s872 + $0x8] sm:$0xf]
      %v2584 = vld [vmem:[%s872 + $0xc] sm:$0xf]
      %v2585 = vld [vmem:[%s872 + $0x10] sm:$0x3]
      %v2591 = vunpack.c.l.b16 %v2581
      %v2592 = vunpack.c.l.b16 %v2582
      %v2593 = vunpack.c.l.b16 %v2583
      %v2594 = vunpack.c.l.b16 %v2584
      %v2595 = vunpack.c.l.b16 %v2585
      %v2596 = vpack.c.b16 %v2592, %v2591
      %v2597 = vpack.c.b16 %v2594, %v2593
      %v2598 = vpack.c.b16 %v2595, %v2595
      %v2602 = vsel %vm583, %v2573, 0
      %v2605 = vsel %vm583, %v2574, 0
      %v2608 = vsel %vm583, %v2575, 0
      %v2611 = vsel %vm583, %v2576, 0
      %v2614 = vsel %vm583, %v2577, 0
      %v2617 = vsel %vm583, %v2578, 0
      %v2620 = vsel %vm583, %v2579, 0
      %v2623 = vsel %vm583, %v2580, 0
      %v2626 = vsel %vm608, %v2598, 0
      %2628 = vmatprep.subr.bf16.mxu0 0
      %2629 = vmatpush1.bf16.msra.mxu0 0
      %2630 = vmatprep.subr.bf16.mxu0 0
      %2631 = vmatpush1.bf16.msra.mxu0 0
      %2632 = vmatprep.subr.bf16.mxu0 0
      %2633 = vmatpush1.bf16.msra.mxu0 0
      %2634 = vmatprep.subr.bf16.mxu0 0
      %2635 = vmatpush1.bf16.msra.mxu0 0
      %2636 = vmatprep.subr.bf16.mxu0 0
      %2637 = vmatpush1.bf16.msra.mxu0 0
      %2638 = vmatprep.subr.bf16.mxu0 0
      %2639 = vmatpush1.bf16.msra.mxu0 %v2626
      %2640 = vmatprep.subr.bf16.mxu0 0
      %2641 = vmatpush1.bf16.msra.mxu0 %v2597
      %2642 = vmatprep.subr.bf16.mxu0 0
      %2643 = vmatpush1.bf16.msra.mxu0 %v2596
      %2644 = vmatprep.subr.bf16.mxu0 0
      %2645 = vmatpush2.bf16.msra.mxu0 0
      %2646 = vmatprep.subr.bf16.mxu0 0
      %2647 = vmatpush2.bf16.msra.mxu0 0
      %2648 = vmatprep.subr.bf16.mxu0 0
      %2649 = vmatpush2.bf16.msra.mxu0 0
      %2650 = vmatprep.subr.bf16.mxu0 0
      %2651 = vmatpush2.bf16.msra.mxu0 0
      %2652 = vmatprep.subr.bf16.mxu0 0
      %2653 = vmatpush2.bf16.msra.mxu0 0
      %2654 = vmatprep.subr.bf16.mxu0 0
      %2655 = vmatpush2.bf16.msra.mxu0 0
      %2656 = vmatprep.subr.bf16.mxu0 0
      %2657 = vmatpush2.bf16.msra.mxu0 0
      %2658 = vmatprep.subr.bf16.mxu0 0
      %2659 = vmatpush2.bf16.msra.mxu0 0
      %2660 = vmatprep.mubr.bf16.mxu0 0
      %2661 = vmatmul.mubr.bf16.gmra.mxu0 %v2602
      %v2662 = vpop.f32.mrf.mxu0
      %v2663 = vadd.f32 0.0, %v2662
      %v2664 = vpop.f32.mrf.mxu0
      %v2665 = vpop.f32.mrf.mxu0
      %v2666 = vadd.f32 0.0, %v2665
      %v2667 = vpop.f32.mrf.mxu0
      %2668 = vmatprep.mubr.bf16.mxu0 0
      %2669 = vmatmul.mubr.bf16.gmra.mxu0 %v2605
      %v2670 = vpop.f32.mrf.mxu0
      %v2671 = vadd.f32 0.0, %v2670
      %v2672 = vpop.f32.mrf.mxu0
      %v2673 = vpop.f32.mrf.mxu0
      %v2674 = vadd.f32 0.0, %v2673
      %v2675 = vpop.f32.mrf.mxu0
      %2676 = vmatprep.mubr.bf16.mxu0 0
      %2677 = vmatmul.mubr.bf16.gmra.mxu0 %v2608
      %v2678 = vpop.f32.mrf.mxu0
      %v2679 = vadd.f32 0.0, %v2678
      %v2680 = vpop.f32.mrf.mxu0
      %v2681 = vpop.f32.mrf.mxu0
      %v2682 = vadd.f32 0.0, %v2681
      %v2683 = vpop.f32.mrf.mxu0
      %2684 = vmatprep.mubr.bf16.mxu0 0
      %2685 = vmatmul.mubr.bf16.gmra.mxu0 %v2611
      %v2686 = vpop.f32.mrf.mxu0
      %v2687 = vadd.f32 0.0, %v2686
      %v2688 = vpop.f32.mrf.mxu0
      %v2689 = vpop.f32.mrf.mxu0
      %v2690 = vadd.f32 0.0, %v2689
      %v2691 = vpop.f32.mrf.mxu0
      %2692 = vmatprep.mubr.bf16.mxu0 0
      %2693 = vmatmul.mubr.bf16.gmra.mxu0 %v2614
      %v2694 = vpop.f32.mrf.mxu0
      %v2695 = vadd.f32 0.0, %v2694
      %v2696 = vpop.f32.mrf.mxu0
      %v2697 = vpop.f32.mrf.mxu0
      %v2698 = vadd.f32 0.0, %v2697
      %v2699 = vpop.f32.mrf.mxu0
      %2700 = vmatprep.mubr.bf16.mxu0 0
      %2701 = vmatmul.mubr.bf16.gmra.mxu0 %v2617
      %v2702 = vpop.f32.mrf.mxu0
      %v2703 = vadd.f32 0.0, %v2702
      %v2704 = vpop.f32.mrf.mxu0
      %v2705 = vpop.f32.mrf.mxu0
      %v2706 = vadd.f32 0.0, %v2705
      %v2707 = vpop.f32.mrf.mxu0
      %2708 = vmatprep.mubr.bf16.mxu0 0
      %2709 = vmatmul.mubr.bf16.gmra.mxu0 %v2620
      %v2710 = vpop.f32.mrf.mxu0
      %v2711 = vadd.f32 0.0, %v2710
      %v2712 = vpop.f32.mrf.mxu0
      %v2713 = vpop.f32.mrf.mxu0
      %v2714 = vadd.f32 0.0, %v2713
      %v2715 = vpop.f32.mrf.mxu0
      %2716 = vmatprep.mubr.bf16.mxu0 0
      %2717 = vmatmul.mubr.bf16.gmra.mxu0 %v2623
      %v2718 = vpop.f32.mrf.mxu0
      %v2719 = vadd.f32 0.0, %v2718
      %v2720 = vpop.f32.mrf.mxu0
      %v2721 = vpop.f32.mrf.mxu0
      %v2722 = vadd.f32 0.0, %v2721
      %v2723 = vpop.f32.mrf.mxu0
      %2724 = vdwg.mxu0
      %v2725 = vadd.f32 %v2495, %v2663
      %v2726 = vadd.f32 %v2498, %v2666
      %v2727 = vadd.f32 %v2503, %v2671
      %v2728 = vadd.f32 %v2506, %v2674
      %v2729 = vadd.f32 %v2511, %v2679
      %v2730 = vadd.f32 %v2514, %v2682
      %v2731 = vadd.f32 %v2519, %v2687
      %v2732 = vadd.f32 %v2522, %v2690
      %v2733 = vadd.f32 %v2527, %v2695
      %v2734 = vadd.f32 %v2530, %v2698
      %v2735 = vadd.f32 %v2535, %v2703
      %v2736 = vadd.f32 %v2538, %v2706
      %v2737 = vadd.f32 %v2543, %v2711
      %v2738 = vadd.f32 %v2546, %v2714
      %v2739 = vadd.f32 %v2551, %v2719
      %v2740 = vadd.f32 %v2554, %v2722
      %s2741 = scalar_lea.vmem [#allocation2], 216
      %v2742 = vld [vmem:[%s2741] sm:$0xff]
      %v2743 = vld [vmem:[%s2741 + $0x8] sm:$0xff]
      %v2744 = vld [vmem:[%s2741 + $0x18] sm:$0xff]
      %v2745 = vld [vmem:[%s2741 + $0x20] sm:$0xff]
      %v2746 = vld [vmem:[%s2741 + $0x30] sm:$0xff]
      %v2747 = vld [vmem:[%s2741 + $0x38] sm:$0xff]
      %v2748 = vld [vmem:[%s2741 + $0x48] sm:$0xff]
      %v2749 = vld [vmem:[%s2741 + $0x50] sm:$0xff]
      %v2750 = vld [vmem:[%s2741 + $0x60] sm:$0xff]
      %v2751 = vld [vmem:[%s2741 + $0x68] sm:$0xff]
      %v2752 = vld [vmem:[%s2741 + $0x78] sm:$0xff]
      %v2753 = vld [vmem:[%s2741 + $0x80] sm:$0xff]
      %v2754 = vld [vmem:[%s2741 + $0x90] sm:$0xff]
      %v2755 = vld [vmem:[%s2741 + $0x98] sm:$0xff]
      %v2756 = vld [vmem:[%s2741 + $0xa8] sm:$0xff]
      %v2757 = vld [vmem:[%s2741 + $0xb0] sm:$0xff]
      %v2758 = vpack.c.bf16 %v2743, %v2742
      %v2759 = vpack.c.bf16 %v2745, %v2744
      %v2760 = vpack.c.bf16 %v2747, %v2746
      %v2761 = vpack.c.bf16 %v2749, %v2748
      %v2762 = vpack.c.bf16 %v2751, %v2750
      %v2763 = vpack.c.bf16 %v2753, %v2752
      %v2764 = vpack.c.bf16 %v2755, %v2754
      %v2765 = vpack.c.bf16 %v2757, %v2756
      %v2766 = vld [vmem:[%s1057] sm:$0xf]
      %v2767 = vld [vmem:[%s1057 + $0x4] sm:$0xf]
      %v2768 = vld [vmem:[%s1057 + $0x8] sm:$0xf]
      %v2769 = vld [vmem:[%s1057 + $0xc] sm:$0xf]
      %v2770 = vld [vmem:[%s1057 + $0x10] sm:$0x3]
      %v2776 = vunpack.c.l.b16 %v2766
      %v2777 = vunpack.c.l.b16 %v2767
      %v2778 = vunpack.c.l.b16 %v2768
      %v2779 = vunpack.c.l.b16 %v2769
      %v2780 = vunpack.c.l.b16 %v2770
      %v2781 = vpack.c.b16 %v2777, %v2776
      %v2782 = vpack.c.b16 %v2779, %v2778
      %v2783 = vpack.c.b16 %v2780, %v2780
      %v2787 = vsel %vm583, %v2758, 0
      %v2790 = vsel %vm583, %v2759, 0
      %v2793 = vsel %vm583, %v2760, 0
      %v2796 = vsel %vm583, %v2761, 0
      %v2799 = vsel %vm583, %v2762, 0
      %v2802 = vsel %vm583, %v2763, 0
      %v2805 = vsel %vm583, %v2764, 0
      %v2808 = vsel %vm583, %v2765, 0
      %v2811 = vsel %vm608, %v2783, 0
      %2813 = vmatprep.subr.bf16.mxu0 0
      %2814 = vmatpush1.bf16.msra.mxu0 0
      %2815 = vmatprep.subr.bf16.mxu0 0
      %2816 = vmatpush1.bf16.msra.mxu0 0
      %2817 = vmatprep.subr.bf16.mxu0 0
      %2818 = vmatpush1.bf16.msra.mxu0 0
      %2819 = vmatprep.subr.bf16.mxu0 0
      %2820 = vmatpush1.bf16.msra.mxu0 0
      %2821 = vmatprep.subr.bf16.mxu0 0
      %2822 = vmatpush1.bf16.msra.mxu0 0
      %2823 = vmatprep.subr.bf16.mxu0 0
      %2824 = vmatpush1.bf16.msra.mxu0 %v2811
      %2825 = vmatprep.subr.bf16.mxu0 0
      %2826 = vmatpush1.bf16.msra.mxu0 %v2782
      %2827 = vmatprep.subr.bf16.mxu0 0
      %2828 = vmatpush1.bf16.msra.mxu0 %v2781
      %2829 = vmatprep.subr.bf16.mxu0 0
      %2830 = vmatpush2.bf16.msra.mxu0 0
      %2831 = vmatprep.subr.bf16.mxu0 0
      %2832 = vmatpush2.bf16.msra.mxu0 0
      %2833 = vmatprep.subr.bf16.mxu0 0
      %2834 = vmatpush2.bf16.msra.mxu0 0
      %2835 = vmatprep.subr.bf16.mxu0 0
      %2836 = vmatpush2.bf16.msra.mxu0 0
      %2837 = vmatprep.subr.bf16.mxu0 0
      %2838 = vmatpush2.bf16.msra.mxu0 0
      %2839 = vmatprep.subr.bf16.mxu0 0
      %2840 = vmatpush2.bf16.msra.mxu0 0
      %2841 = vmatprep.subr.bf16.mxu0 0
      %2842 = vmatpush2.bf16.msra.mxu0 0
      %2843 = vmatprep.subr.bf16.mxu0 0
      %2844 = vmatpush2.bf16.msra.mxu0 0
      %2845 = vmatprep.mubr.bf16.mxu0 0
      %2846 = vmatmul.mubr.bf16.gmra.mxu0 %v2787
      %v2847 = vpop.f32.mrf.mxu0
      %v2848 = vadd.f32 0.0, %v2847
      %v2849 = vpop.f32.mrf.mxu0
      %v2850 = vpop.f32.mrf.mxu0
      %v2851 = vadd.f32 0.0, %v2850
      %v2852 = vpop.f32.mrf.mxu0
      %2853 = vmatprep.mubr.bf16.mxu0 0
      %2854 = vmatmul.mubr.bf16.gmra.mxu0 %v2790
      %v2855 = vpop.f32.mrf.mxu0
      %v2856 = vadd.f32 0.0, %v2855
      %v2857 = vpop.f32.mrf.mxu0
      %v2858 = vpop.f32.mrf.mxu0
      %v2859 = vadd.f32 0.0, %v2858
      %v2860 = vpop.f32.mrf.mxu0
      %2861 = vmatprep.mubr.bf16.mxu0 0
      %2862 = vmatmul.mubr.bf16.gmra.mxu0 %v2793
      %v2863 = vpop.f32.mrf.mxu0
      %v2864 = vadd.f32 0.0, %v2863
      %v2865 = vpop.f32.mrf.mxu0
      %v2866 = vpop.f32.mrf.mxu0
      %v2867 = vadd.f32 0.0, %v2866
      %v2868 = vpop.f32.mrf.mxu0
      %2869 = vmatprep.mubr.bf16.mxu0 0
      %2870 = vmatmul.mubr.bf16.gmra.mxu0 %v2796
      %v2871 = vpop.f32.mrf.mxu0
      %v2872 = vadd.f32 0.0, %v2871
      %v2873 = vpop.f32.mrf.mxu0
      %v2874 = vpop.f32.mrf.mxu0
      %v2875 = vadd.f32 0.0, %v2874
      %v2876 = vpop.f32.mrf.mxu0
      %2877 = vmatprep.mubr.bf16.mxu0 0
      %2878 = vmatmul.mubr.bf16.gmra.mxu0 %v2799
      %v2879 = vpop.f32.mrf.mxu0
      %v2880 = vadd.f32 0.0, %v2879
      %v2881 = vpop.f32.mrf.mxu0
      %v2882 = vpop.f32.mrf.mxu0
      %v2883 = vadd.f32 0.0, %v2882
      %v2884 = vpop.f32.mrf.mxu0
      %2885 = vmatprep.mubr.bf16.mxu0 0
      %2886 = vmatmul.mubr.bf16.gmra.mxu0 %v2802
      %v2887 = vpop.f32.mrf.mxu0
      %v2888 = vadd.f32 0.0, %v2887
      %v2889 = vpop.f32.mrf.mxu0
      %v2890 = vpop.f32.mrf.mxu0
      %v2891 = vadd.f32 0.0, %v2890
      %v2892 = vpop.f32.mrf.mxu0
      %2893 = vmatprep.mubr.bf16.mxu0 0
      %2894 = vmatmul.mubr.bf16.gmra.mxu0 %v2805
      %v2895 = vpop.f32.mrf.mxu0
      %v2896 = vadd.f32 0.0, %v2895
      %v2897 = vpop.f32.mrf.mxu0
      %v2898 = vpop.f32.mrf.mxu0
      %v2899 = vadd.f32 0.0, %v2898
      %v2900 = vpop.f32.mrf.mxu0
      %2901 = vmatprep.mubr.bf16.mxu0 0
      %2902 = vmatmul.mubr.bf16.gmra.mxu0 %v2808
      %v2903 = vpop.f32.mrf.mxu0
      %v2904 = vadd.f32 0.0, %v2903
      %v2905 = vpop.f32.mrf.mxu0
      %v2906 = vpop.f32.mrf.mxu0
      %v2907 = vadd.f32 0.0, %v2906
      %v2908 = vpop.f32.mrf.mxu0
      %2909 = vdwg.mxu0
      %v2910 = vadd.f32 %v2725, %v2848
      %v2911 = vadd.f32 %v2726, %v2851
      %v2912 = vadd.f32 %v2727, %v2856
      %v2913 = vadd.f32 %v2728, %v2859
      %v2914 = vadd.f32 %v2729, %v2864
      %v2915 = vadd.f32 %v2730, %v2867
      %v2916 = vadd.f32 %v2731, %v2872
      %v2917 = vadd.f32 %v2732, %v2875
      %v2918 = vadd.f32 %v2733, %v2880
      %v2919 = vadd.f32 %v2734, %v2883
      %v2920 = vadd.f32 %v2735, %v2888
      %v2921 = vadd.f32 %v2736, %v2891
      %v2922 = vadd.f32 %v2737, %v2896
      %v2923 = vadd.f32 %v2738, %v2899
      %v2924 = vadd.f32 %v2739, %v2904
      %v2925 = vadd.f32 %v2740, %v2907
      %v2926 = vld [vmem:[%s2741 + $0x1] sm:$0xff]
      %v2927 = vld [vmem:[%s2741 + $0x9] sm:$0xff]
      %v2928 = vld [vmem:[%s2741 + $0x19] sm:$0xff]
      %v2929 = vld [vmem:[%s2741 + $0x21] sm:$0xff]
      %v2930 = vld [vmem:[%s2741 + $0x31] sm:$0xff]
      %v2931 = vld [vmem:[%s2741 + $0x39] sm:$0xff]
      %v2932 = vld [vmem:[%s2741 + $0x49] sm:$0xff]
      %v2933 = vld [vmem:[%s2741 + $0x51] sm:$0xff]
      %v2934 = vld [vmem:[%s2741 + $0x61] sm:$0xff]
      %v2935 = vld [vmem:[%s2741 + $0x69] sm:$0xff]
      %v2936 = vld [vmem:[%s2741 + $0x79] sm:$0xff]
      %v2937 = vld [vmem:[%s2741 + $0x81] sm:$0xff]
      %v2938 = vld [vmem:[%s2741 + $0x91] sm:$0xff]
      %v2939 = vld [vmem:[%s2741 + $0x99] sm:$0xff]
      %v2940 = vld [vmem:[%s2741 + $0xa9] sm:$0xff]
      %v2941 = vld [vmem:[%s2741 + $0xb1] sm:$0xff]
      %v2942 = vpack.c.bf16 %v2927, %v2926
      %v2943 = vpack.c.bf16 %v2929, %v2928
      %v2944 = vpack.c.bf16 %v2931, %v2930
      %v2945 = vpack.c.bf16 %v2933, %v2932
      %v2946 = vpack.c.bf16 %v2935, %v2934
      %v2947 = vpack.c.bf16 %v2937, %v2936
      %v2948 = vpack.c.bf16 %v2939, %v2938
      %v2949 = vpack.c.bf16 %v2941, %v2940
      %v2950 = vld [vmem:[%s1242] sm:$0xf]
      %v2951 = vld [vmem:[%s1242 + $0x4] sm:$0xf]
      %v2952 = vld [vmem:[%s1242 + $0x8] sm:$0xf]
      %v2953 = vld [vmem:[%s1242 + $0xc] sm:$0xf]
      %v2954 = vld [vmem:[%s1242 + $0x10] sm:$0x3]
      %v2960 = vunpack.c.l.b16 %v2950
      %v2961 = vunpack.c.l.b16 %v2951
      %v2962 = vunpack.c.l.b16 %v2952
      %v2963 = vunpack.c.l.b16 %v2953
      %v2964 = vunpack.c.l.b16 %v2954
      %v2965 = vpack.c.b16 %v2961, %v2960
      %v2966 = vpack.c.b16 %v2963, %v2962
      %v2967 = vpack.c.b16 %v2964, %v2964
      %v2971 = vsel %vm583, %v2942, 0
      %v2974 = vsel %vm583, %v2943, 0
      %v2977 = vsel %vm583, %v2944, 0
      %v2980 = vsel %vm583, %v2945, 0
      %v2983 = vsel %vm583, %v2946, 0
      %v2986 = vsel %vm583, %v2947, 0
      %v2989 = vsel %vm583, %v2948, 0
      %v2992 = vsel %vm583, %v2949, 0
      %v2995 = vsel %vm608, %v2967, 0
      %2997 = vmatprep.subr.bf16.mxu0 0
      %2998 = vmatpush1.bf16.msra.mxu0 0
      %2999 = vmatprep.subr.bf16.mxu0 0
      %3000 = vmatpush1.bf16.msra.mxu0 0
      %3001 = vmatprep.subr.bf16.mxu0 0
      %3002 = vmatpush1.bf16.msra.mxu0 0
      %3003 = vmatprep.subr.bf16.mxu0 0
      %3004 = vmatpush1.bf16.msra.mxu0 0
      %3005 = vmatprep.subr.bf16.mxu0 0
      %3006 = vmatpush1.bf16.msra.mxu0 0
      %3007 = vmatprep.subr.bf16.mxu0 0
      %3008 = vmatpush1.bf16.msra.mxu0 %v2995
      %3009 = vmatprep.subr.bf16.mxu0 0
      %3010 = vmatpush1.bf16.msra.mxu0 %v2966
      %3011 = vmatprep.subr.bf16.mxu0 0
      %3012 = vmatpush1.bf16.msra.mxu0 %v2965
      %3013 = vmatprep.subr.bf16.mxu0 0
      %3014 = vmatpush2.bf16.msra.mxu0 0
      %3015 = vmatprep.subr.bf16.mxu0 0
      %3016 = vmatpush2.bf16.msra.mxu0 0
      %3017 = vmatprep.subr.bf16.mxu0 0
      %3018 = vmatpush2.bf16.msra.mxu0 0
      %3019 = vmatprep.subr.bf16.mxu0 0
      %3020 = vmatpush2.bf16.msra.mxu0 0
      %3021 = vmatprep.subr.bf16.mxu0 0
      %3022 = vmatpush2.bf16.msra.mxu0 0
      %3023 = vmatprep.subr.bf16.mxu0 0
      %3024 = vmatpush2.bf16.msra.mxu0 0
      %3025 = vmatprep.subr.bf16.mxu0 0
      %3026 = vmatpush2.bf16.msra.mxu0 0
      %3027 = vmatprep.subr.bf16.mxu0 0
      %3028 = vmatpush2.bf16.msra.mxu0 0
      %3029 = vmatprep.mubr.bf16.mxu0 0
      %3030 = vmatmul.mubr.bf16.gmra.mxu0 %v2971
      %v3031 = vpop.f32.mrf.mxu0
      %v3032 = vadd.f32 0.0, %v3031
      %v3033 = vpop.f32.mrf.mxu0
      %v3034 = vpop.f32.mrf.mxu0
      %v3035 = vadd.f32 0.0, %v3034
      %v3036 = vpop.f32.mrf.mxu0
      %3037 = vmatprep.mubr.bf16.mxu0 0
      %3038 = vmatmul.mubr.bf16.gmra.mxu0 %v2974
      %v3039 = vpop.f32.mrf.mxu0
      %v3040 = vadd.f32 0.0, %v3039
      %v3041 = vpop.f32.mrf.mxu0
      %v3042 = vpop.f32.mrf.mxu0
      %v3043 = vadd.f32 0.0, %v3042
      %v3044 = vpop.f32.mrf.mxu0
      %3045 = vmatprep.mubr.bf16.mxu0 0
      %3046 = vmatmul.mubr.bf16.gmra.mxu0 %v2977
      %v3047 = vpop.f32.mrf.mxu0
      %v3048 = vadd.f32 0.0, %v3047
      %v3049 = vpop.f32.mrf.mxu0
      %v3050 = vpop.f32.mrf.mxu0
      %v3051 = vadd.f32 0.0, %v3050
      %v3052 = vpop.f32.mrf.mxu0
      %3053 = vmatprep.mubr.bf16.mxu0 0
      %3054 = vmatmul.mubr.bf16.gmra.mxu0 %v2980
      %v3055 = vpop.f32.mrf.mxu0
      %v3056 = vadd.f32 0.0, %v3055
      %v3057 = vpop.f32.mrf.mxu0
      %v3058 = vpop.f32.mrf.mxu0
      %v3059 = vadd.f32 0.0, %v3058
      %v3060 = vpop.f32.mrf.mxu0
      %3061 = vmatprep.mubr.bf16.mxu0 0
      %3062 = vmatmul.mubr.bf16.gmra.mxu0 %v2983
      %v3063 = vpop.f32.mrf.mxu0
      %v3064 = vadd.f32 0.0, %v3063
      %v3065 = vpop.f32.mrf.mxu0
      %v3066 = vpop.f32.mrf.mxu0
      %v3067 = vadd.f32 0.0, %v3066
      %v3068 = vpop.f32.mrf.mxu0
      %3069 = vmatprep.mubr.bf16.mxu0 0
      %3070 = vmatmul.mubr.bf16.gmra.mxu0 %v2986
      %v3071 = vpop.f32.mrf.mxu0
      %v3072 = vadd.f32 0.0, %v3071
      %v3073 = vpop.f32.mrf.mxu0
      %v3074 = vpop.f32.mrf.mxu0
      %v3075 = vadd.f32 0.0, %v3074
      %v3076 = vpop.f32.mrf.mxu0
      %3077 = vmatprep.mubr.bf16.mxu0 0
      %3078 = vmatmul.mubr.bf16.gmra.mxu0 %v2989
      %v3079 = vpop.f32.mrf.mxu0
      %v3080 = vadd.f32 0.0, %v3079
      %v3081 = vpop.f32.mrf.mxu0
      %v3082 = vpop.f32.mrf.mxu0
      %v3083 = vadd.f32 0.0, %v3082
      %v3084 = vpop.f32.mrf.mxu0
      %3085 = vmatprep.mubr.bf16.mxu0 0
      %3086 = vmatmul.mubr.bf16.gmra.mxu0 %v2992
      %v3087 = vpop.f32.mrf.mxu0
      %v3088 = vadd.f32 0.0, %v3087
      %v3089 = vpop.f32.mrf.mxu0
      %v3090 = vpop.f32.mrf.mxu0
      %v3091 = vadd.f32 0.0, %v3090
      %v3092 = vpop.f32.mrf.mxu0
      %3093 = vdwg.mxu0
      %v3094 = vadd.f32 %v2910, %v3032
      %v3095 = vadd.f32 %v2911, %v3035
      %v3096 = vadd.f32 %v2912, %v3040
      %v3097 = vadd.f32 %v2913, %v3043
      %v3098 = vadd.f32 %v2914, %v3048
      %v3099 = vadd.f32 %v2915, %v3051
      %v3100 = vadd.f32 %v2916, %v3056
      %v3101 = vadd.f32 %v2917, %v3059
      %v3102 = vadd.f32 %v2918, %v3064
      %v3103 = vadd.f32 %v2919, %v3067
      %v3104 = vadd.f32 %v2920, %v3072
      %v3105 = vadd.f32 %v2921, %v3075
      %v3106 = vadd.f32 %v2922, %v3080
      %v3107 = vadd.f32 %v2923, %v3083
      %v3108 = vadd.f32 %v2924, %v3088
      %v3109 = vadd.f32 %v2925, %v3091
      %v3110 = vld [vmem:[%s2741 + $0x2] sm:$0xff]
      %v3111 = vld [vmem:[%s2741 + $0xa] sm:$0xff]
      %v3112 = vld [vmem:[%s2741 + $0x1a] sm:$0xff]
      %v3113 = vld [vmem:[%s2741 + $0x22] sm:$0xff]
      %v3114 = vld [vmem:[%s2741 + $0x32] sm:$0xff]
      %v3115 = vld [vmem:[%s2741 + $0x3a] sm:$0xff]
      %v3116 = vld [vmem:[%s2741 + $0x4a] sm:$0xff]
      %v3117 = vld [vmem:[%s2741 + $0x52] sm:$0xff]
      %v3118 = vld [vmem:[%s2741 + $0x62] sm:$0xff]
      %v3119 = vld [vmem:[%s2741 + $0x6a] sm:$0xff]
      %v3120 = vld [vmem:[%s2741 + $0x7a] sm:$0xff]
      %v3121 = vld [vmem:[%s2741 + $0x82] sm:$0xff]
      %v3122 = vld [vmem:[%s2741 + $0x92] sm:$0xff]
      %v3123 = vld [vmem:[%s2741 + $0x9a] sm:$0xff]
      %v3124 = vld [vmem:[%s2741 + $0xaa] sm:$0xff]
      %v3125 = vld [vmem:[%s2741 + $0xb2] sm:$0xff]
      %v3126 = vpack.c.bf16 %v3111, %v3110
      %v3127 = vpack.c.bf16 %v3113, %v3112
      %v3128 = vpack.c.bf16 %v3115, %v3114
      %v3129 = vpack.c.bf16 %v3117, %v3116
      %v3130 = vpack.c.bf16 %v3119, %v3118
      %v3131 = vpack.c.bf16 %v3121, %v3120
      %v3132 = vpack.c.bf16 %v3123, %v3122
      %v3133 = vpack.c.bf16 %v3125, %v3124
      %v3134 = vld [vmem:[%s1427] sm:$0xf]
      %v3135 = vld [vmem:[%s1427 + $0x4] sm:$0xf]
      %v3136 = vld [vmem:[%s1427 + $0x8] sm:$0xf]
      %v3137 = vld [vmem:[%s1427 + $0xc] sm:$0xf]
      %v3138 = vld [vmem:[%s1427 + $0x10] sm:$0x3]
      %v3144 = vunpack.c.l.b16 %v3134
      %v3145 = vunpack.c.l.b16 %v3135
      %v3146 = vunpack.c.l.b16 %v3136
      %v3147 = vunpack.c.l.b16 %v3137
      %v3148 = vunpack.c.l.b16 %v3138
      %v3149 = vpack.c.b16 %v3145, %v3144
      %v3150 = vpack.c.b16 %v3147, %v3146
      %v3151 = vpack.c.b16 %v3148, %v3148
      %v3155 = vsel %vm583, %v3126, 0
      %v3158 = vsel %vm583, %v3127, 0
      %v3161 = vsel %vm583, %v3128, 0
      %v3164 = vsel %vm583, %v3129, 0
      %v3167 = vsel %vm583, %v3130, 0
      %v3170 = vsel %vm583, %v3131, 0
      %v3173 = vsel %vm583, %v3132, 0
      %v3176 = vsel %vm583, %v3133, 0
      %v3179 = vsel %vm608, %v3151, 0
      %3181 = vmatprep.subr.bf16.mxu0 0
      %3182 = vmatpush1.bf16.msra.mxu0 0
      %3183 = vmatprep.subr.bf16.mxu0 0
      %3184 = vmatpush1.bf16.msra.mxu0 0
      %3185 = vmatprep.subr.bf16.mxu0 0
      %3186 = vmatpush1.bf16.msra.mxu0 0
      %3187 = vmatprep.subr.bf16.mxu0 0
      %3188 = vmatpush1.bf16.msra.mxu0 0
      %3189 = vmatprep.subr.bf16.mxu0 0
      %3190 = vmatpush1.bf16.msra.mxu0 0
      %3191 = vmatprep.subr.bf16.mxu0 0
      %3192 = vmatpush1.bf16.msra.mxu0 %v3179
      %3193 = vmatprep.subr.bf16.mxu0 0
      %3194 = vmatpush1.bf16.msra.mxu0 %v3150
      %3195 = vmatprep.subr.bf16.mxu0 0
      %3196 = vmatpush1.bf16.msra.mxu0 %v3149
      %3197 = vmatprep.subr.bf16.mxu0 0
      %3198 = vmatpush2.bf16.msra.mxu0 0
      %3199 = vmatprep.subr.bf16.mxu0 0
      %3200 = vmatpush2.bf16.msra.mxu0 0
      %3201 = vmatprep.subr.bf16.mxu0 0
      %3202 = vmatpush2.bf16.msra.mxu0 0
      %3203 = vmatprep.subr.bf16.mxu0 0
      %3204 = vmatpush2.bf16.msra.mxu0 0
      %3205 = vmatprep.subr.bf16.mxu0 0
      %3206 = vmatpush2.bf16.msra.mxu0 0
      %3207 = vmatprep.subr.bf16.mxu0 0
      %3208 = vmatpush2.bf16.msra.mxu0 0
      %3209 = vmatprep.subr.bf16.mxu0 0
      %3210 = vmatpush2.bf16.msra.mxu0 0
      %3211 = vmatprep.subr.bf16.mxu0 0
      %3212 = vmatpush2.bf16.msra.mxu0 0
      %3213 = vmatprep.mubr.bf16.mxu0 0
      %3214 = vmatmul.mubr.bf16.gmra.mxu0 %v3155
      %v3215 = vpop.f32.mrf.mxu0
      %v3216 = vadd.f32 0.0, %v3215
      %v3217 = vpop.f32.mrf.mxu0
      %v3218 = vpop.f32.mrf.mxu0
      %v3219 = vadd.f32 0.0, %v3218
      %v3220 = vpop.f32.mrf.mxu0
      %3221 = vmatprep.mubr.bf16.mxu0 0
      %3222 = vmatmul.mubr.bf16.gmra.mxu0 %v3158
      %v3223 = vpop.f32.mrf.mxu0
      %v3224 = vadd.f32 0.0, %v3223
      %v3225 = vpop.f32.mrf.mxu0
      %v3226 = vpop.f32.mrf.mxu0
      %v3227 = vadd.f32 0.0, %v3226
      %v3228 = vpop.f32.mrf.mxu0
      %3229 = vmatprep.mubr.bf16.mxu0 0
      %3230 = vmatmul.mubr.bf16.gmra.mxu0 %v3161
      %v3231 = vpop.f32.mrf.mxu0
      %v3232 = vadd.f32 0.0, %v3231
      %v3233 = vpop.f32.mrf.mxu0
      %v3234 = vpop.f32.mrf.mxu0
      %v3235 = vadd.f32 0.0, %v3234
      %v3236 = vpop.f32.mrf.mxu0
      %3237 = vmatprep.mubr.bf16.mxu0 0
      %3238 = vmatmul.mubr.bf16.gmra.mxu0 %v3164
      %v3239 = vpop.f32.mrf.mxu0
      %v3240 = vadd.f32 0.0, %v3239
      %v3241 = vpop.f32.mrf.mxu0
      %v3242 = vpop.f32.mrf.mxu0
      %v3243 = vadd.f32 0.0, %v3242
      %v3244 = vpop.f32.mrf.mxu0
      %3245 = vmatprep.mubr.bf16.mxu0 0
      %3246 = vmatmul.mubr.bf16.gmra.mxu0 %v3167
      %v3247 = vpop.f32.mrf.mxu0
      %v3248 = vadd.f32 0.0, %v3247
      %v3249 = vpop.f32.mrf.mxu0
      %v3250 = vpop.f32.mrf.mxu0
      %v3251 = vadd.f32 0.0, %v3250
      %v3252 = vpop.f32.mrf.mxu0
      %3253 = vmatprep.mubr.bf16.mxu0 0
      %3254 = vmatmul.mubr.bf16.gmra.mxu0 %v3170
      %v3255 = vpop.f32.mrf.mxu0
      %v3256 = vadd.f32 0.0, %v3255
      %v3257 = vpop.f32.mrf.mxu0
      %v3258 = vpop.f32.mrf.mxu0
      %v3259 = vadd.f32 0.0, %v3258
      %v3260 = vpop.f32.mrf.mxu0
      %3261 = vmatprep.mubr.bf16.mxu0 0
      %3262 = vmatmul.mubr.bf16.gmra.mxu0 %v3173
      %v3263 = vpop.f32.mrf.mxu0
      %v3264 = vadd.f32 0.0, %v3263
      %v3265 = vpop.f32.mrf.mxu0
      %v3266 = vpop.f32.mrf.mxu0
      %v3267 = vadd.f32 0.0, %v3266
      %v3268 = vpop.f32.mrf.mxu0
      %3269 = vmatprep.mubr.bf16.mxu0 0
      %3270 = vmatmul.mubr.bf16.gmra.mxu0 %v3176
      %v3271 = vpop.f32.mrf.mxu0
      %v3272 = vadd.f32 0.0, %v3271
      %v3273 = vpop.f32.mrf.mxu0
      %v3274 = vpop.f32.mrf.mxu0
      %v3275 = vadd.f32 0.0, %v3274
      %v3276 = vpop.f32.mrf.mxu0
      %3277 = vdwg.mxu0
      %v3278 = vadd.f32 %v3094, %v3216
      %v3279 = vadd.f32 %v3095, %v3219
      %v3280 = vadd.f32 %v3096, %v3224
      %v3281 = vadd.f32 %v3097, %v3227
      %v3282 = vadd.f32 %v3098, %v3232
      %v3283 = vadd.f32 %v3099, %v3235
      %v3284 = vadd.f32 %v3100, %v3240
      %v3285 = vadd.f32 %v3101, %v3243
      %v3286 = vadd.f32 %v3102, %v3248
      %v3287 = vadd.f32 %v3103, %v3251
      %v3288 = vadd.f32 %v3104, %v3256
      %v3289 = vadd.f32 %v3105, %v3259
      %v3290 = vadd.f32 %v3106, %v3264
      %v3291 = vadd.f32 %v3107, %v3267
      %v3292 = vadd.f32 %v3108, %v3272
      %v3293 = vadd.f32 %v3109, %v3275
      %s3294 = scalar_lea.vmem [#allocation2], 240
      %v3295 = vld [vmem:[%s3294] sm:$0xff]
      %v3296 = vld [vmem:[%s3294 + $0x8] sm:$0xff]
      %v3297 = vld [vmem:[%s3294 + $0x18] sm:$0xff]
      %v3298 = vld [vmem:[%s3294 + $0x20] sm:$0xff]
      %v3299 = vld [vmem:[%s3294 + $0x30] sm:$0xff]
      %v3300 = vld [vmem:[%s3294 + $0x38] sm:$0xff]
      %v3301 = vld [vmem:[%s3294 + $0x48] sm:$0xff]
      %v3302 = vld [vmem:[%s3294 + $0x50] sm:$0xff]
      %v3303 = vld [vmem:[%s3294 + $0x60] sm:$0xff]
      %v3304 = vld [vmem:[%s3294 + $0x68] sm:$0xff]
      %v3305 = vld [vmem:[%s3294 + $0x78] sm:$0xff]
      %v3306 = vld [vmem:[%s3294 + $0x80] sm:$0xff]
      %v3307 = vld [vmem:[%s3294 + $0x90] sm:$0xff]
      %v3308 = vld [vmem:[%s3294 + $0x98] sm:$0xff]
      %v3309 = vld [vmem:[%s3294 + $0xa8] sm:$0xff]
      %v3310 = vld [vmem:[%s3294 + $0xb0] sm:$0xff]
      %v3311 = vpack.c.bf16 %v3296, %v3295
      %v3312 = vpack.c.bf16 %v3298, %v3297
      %v3313 = vpack.c.bf16 %v3300, %v3299
      %v3314 = vpack.c.bf16 %v3302, %v3301
      %v3315 = vpack.c.bf16 %v3304, %v3303
      %v3316 = vpack.c.bf16 %v3306, %v3305
      %v3317 = vpack.c.bf16 %v3308, %v3307
      %v3318 = vpack.c.bf16 %v3310, %v3309
      %v3319 = vld [vmem:[%s1613] sm:$0xf]
      %v3320 = vld [vmem:[%s1613 + $0x4] sm:$0xf]
      %v3321 = vld [vmem:[%s1613 + $0x8] sm:$0xf]
      %v3322 = vld [vmem:[%s1613 + $0xc] sm:$0xf]
      %v3323 = vld [vmem:[%s1613 + $0x10] sm:$0x3]
      %v3329 = vunpack.c.l.b16 %v3319
      %v3330 = vunpack.c.l.b16 %v3320
      %v3331 = vunpack.c.l.b16 %v3321
      %v3332 = vunpack.c.l.b16 %v3322
      %v3333 = vunpack.c.l.b16 %v3323
      %v3334 = vpack.c.b16 %v3330, %v3329
      %v3335 = vpack.c.b16 %v3332, %v3331
      %v3336 = vpack.c.b16 %v3333, %v3333
      %v3340 = vsel %vm583, %v3311, 0
      %v3343 = vsel %vm583, %v3312, 0
      %v3346 = vsel %vm583, %v3313, 0
      %v3349 = vsel %vm583, %v3314, 0
      %v3352 = vsel %vm583, %v3315, 0
      %v3355 = vsel %vm583, %v3316, 0
      %v3358 = vsel %vm583, %v3317, 0
      %v3361 = vsel %vm583, %v3318, 0
      %v3364 = vsel %vm608, %v3336, 0
      %3366 = vmatprep.subr.bf16.mxu0 0
      %3367 = vmatpush1.bf16.msra.mxu0 0
      %3368 = vmatprep.subr.bf16.mxu0 0
      %3369 = vmatpush1.bf16.msra.mxu0 0
      %3370 = vmatprep.subr.bf16.mxu0 0
      %3371 = vmatpush1.bf16.msra.mxu0 0
      %3372 = vmatprep.subr.bf16.mxu0 0
      %3373 = vmatpush1.bf16.msra.mxu0 0
      %3374 = vmatprep.subr.bf16.mxu0 0
      %3375 = vmatpush1.bf16.msra.mxu0 0
      %3376 = vmatprep.subr.bf16.mxu0 0
      %3377 = vmatpush1.bf16.msra.mxu0 %v3364
      %3378 = vmatprep.subr.bf16.mxu0 0
      %3379 = vmatpush1.bf16.msra.mxu0 %v3335
      %3380 = vmatprep.subr.bf16.mxu0 0
      %3381 = vmatpush1.bf16.msra.mxu0 %v3334
      %3382 = vmatprep.subr.bf16.mxu0 0
      %3383 = vmatpush2.bf16.msra.mxu0 0
      %3384 = vmatprep.subr.bf16.mxu0 0
      %3385 = vmatpush2.bf16.msra.mxu0 0
      %3386 = vmatprep.subr.bf16.mxu0 0
      %3387 = vmatpush2.bf16.msra.mxu0 0
      %3388 = vmatprep.subr.bf16.mxu0 0
      %3389 = vmatpush2.bf16.msra.mxu0 0
      %3390 = vmatprep.subr.bf16.mxu0 0
      %3391 = vmatpush2.bf16.msra.mxu0 0
      %3392 = vmatprep.subr.bf16.mxu0 0
      %3393 = vmatpush2.bf16.msra.mxu0 0
      %3394 = vmatprep.subr.bf16.mxu0 0
      %3395 = vmatpush2.bf16.msra.mxu0 0
      %3396 = vmatprep.subr.bf16.mxu0 0
      %3397 = vmatpush2.bf16.msra.mxu0 0
      %3398 = vmatprep.mubr.bf16.mxu0 0
      %3399 = vmatmul.mubr.bf16.gmra.mxu0 %v3340
      %v3400 = vpop.f32.mrf.mxu0
      %v3401 = vadd.f32 0.0, %v3400
      %v3402 = vpop.f32.mrf.mxu0
      %v3403 = vpop.f32.mrf.mxu0
      %v3404 = vadd.f32 0.0, %v3403
      %v3405 = vpop.f32.mrf.mxu0
      %3406 = vmatprep.mubr.bf16.mxu0 0
      %3407 = vmatmul.mubr.bf16.gmra.mxu0 %v3343
      %v3408 = vpop.f32.mrf.mxu0
      %v3409 = vadd.f32 0.0, %v3408
      %v3410 = vpop.f32.mrf.mxu0
      %v3411 = vpop.f32.mrf.mxu0
      %v3412 = vadd.f32 0.0, %v3411
      %v3413 = vpop.f32.mrf.mxu0
      %3414 = vmatprep.mubr.bf16.mxu0 0
      %3415 = vmatmul.mubr.bf16.gmra.mxu0 %v3346
      %v3416 = vpop.f32.mrf.mxu0
      %v3417 = vadd.f32 0.0, %v3416
      %v3418 = vpop.f32.mrf.mxu0
      %v3419 = vpop.f32.mrf.mxu0
      %v3420 = vadd.f32 0.0, %v3419
      %v3421 = vpop.f32.mrf.mxu0
      %3422 = vmatprep.mubr.bf16.mxu0 0
      %3423 = vmatmul.mubr.bf16.gmra.mxu0 %v3349
      %v3424 = vpop.f32.mrf.mxu0
      %v3425 = vadd.f32 0.0, %v3424
      %v3426 = vpop.f32.mrf.mxu0
      %v3427 = vpop.f32.mrf.mxu0
      %v3428 = vadd.f32 0.0, %v3427
      %v3429 = vpop.f32.mrf.mxu0
      %3430 = vmatprep.mubr.bf16.mxu0 0
      %3431 = vmatmul.mubr.bf16.gmra.mxu0 %v3352
      %v3432 = vpop.f32.mrf.mxu0
      %v3433 = vadd.f32 0.0, %v3432
      %v3434 = vpop.f32.mrf.mxu0
      %v3435 = vpop.f32.mrf.mxu0
      %v3436 = vadd.f32 0.0, %v3435
      %v3437 = vpop.f32.mrf.mxu0
      %3438 = vmatprep.mubr.bf16.mxu0 0
      %3439 = vmatmul.mubr.bf16.gmra.mxu0 %v3355
      %v3440 = vpop.f32.mrf.mxu0
      %v3441 = vadd.f32 0.0, %v3440
      %v3442 = vpop.f32.mrf.mxu0
      %v3443 = vpop.f32.mrf.mxu0
      %v3444 = vadd.f32 0.0, %v3443
      %v3445 = vpop.f32.mrf.mxu0
      %3446 = vmatprep.mubr.bf16.mxu0 0
      %3447 = vmatmul.mubr.bf16.gmra.mxu0 %v3358
      %v3448 = vpop.f32.mrf.mxu0
      %v3449 = vadd.f32 0.0, %v3448
      %v3450 = vpop.f32.mrf.mxu0
      %v3451 = vpop.f32.mrf.mxu0
      %v3452 = vadd.f32 0.0, %v3451
      %v3453 = vpop.f32.mrf.mxu0
      %3454 = vmatprep.mubr.bf16.mxu0 0
      %3455 = vmatmul.mubr.bf16.gmra.mxu0 %v3361
      %v3456 = vpop.f32.mrf.mxu0
      %v3457 = vadd.f32 0.0, %v3456
      %v3458 = vpop.f32.mrf.mxu0
      %v3459 = vpop.f32.mrf.mxu0
      %v3460 = vadd.f32 0.0, %v3459
      %v3461 = vpop.f32.mrf.mxu0
      %3462 = vdwg.mxu0
      %v3463 = vadd.f32 %v3278, %v3401
      %v3464 = vadd.f32 %v3279, %v3404
      %v3465 = vadd.f32 %v3280, %v3409
      %v3466 = vadd.f32 %v3281, %v3412
      %v3467 = vadd.f32 %v3282, %v3417
      %v3468 = vadd.f32 %v3283, %v3420
      %v3469 = vadd.f32 %v3284, %v3425
      %v3470 = vadd.f32 %v3285, %v3428
      %v3471 = vadd.f32 %v3286, %v3433
      %v3472 = vadd.f32 %v3287, %v3436
      %v3473 = vadd.f32 %v3288, %v3441
      %v3474 = vadd.f32 %v3289, %v3444
      %v3475 = vadd.f32 %v3290, %v3449
      %v3476 = vadd.f32 %v3291, %v3452
      %v3477 = vadd.f32 %v3292, %v3457
      %v3478 = vadd.f32 %v3293, %v3460
      %v3479 = vld [vmem:[%s3294 + $0x1] sm:$0xff]
      %v3480 = vld [vmem:[%s3294 + $0x9] sm:$0xff]
      %v3481 = vld [vmem:[%s3294 + $0x19] sm:$0xff]
      %v3482 = vld [vmem:[%s3294 + $0x21] sm:$0xff]
      %v3483 = vld [vmem:[%s3294 + $0x31] sm:$0xff]
      %v3484 = vld [vmem:[%s3294 + $0x39] sm:$0xff]
      %v3485 = vld [vmem:[%s3294 + $0x49] sm:$0xff]
      %v3486 = vld [vmem:[%s3294 + $0x51] sm:$0xff]
      %v3487 = vld [vmem:[%s3294 + $0x61] sm:$0xff]
      %v3488 = vld [vmem:[%s3294 + $0x69] sm:$0xff]
      %v3489 = vld [vmem:[%s3294 + $0x79] sm:$0xff]
      %v3490 = vld [vmem:[%s3294 + $0x81] sm:$0xff]
      %v3491 = vld [vmem:[%s3294 + $0x91] sm:$0xff]
      %v3492 = vld [vmem:[%s3294 + $0x99] sm:$0xff]
      %v3493 = vld [vmem:[%s3294 + $0xa9] sm:$0xff]
      %v3494 = vld [vmem:[%s3294 + $0xb1] sm:$0xff]
      %v3495 = vpack.c.bf16 %v3480, %v3479
      %v3496 = vpack.c.bf16 %v3482, %v3481
      %v3497 = vpack.c.bf16 %v3484, %v3483
      %v3498 = vpack.c.bf16 %v3486, %v3485
      %v3499 = vpack.c.bf16 %v3488, %v3487
      %v3500 = vpack.c.bf16 %v3490, %v3489
      %v3501 = vpack.c.bf16 %v3492, %v3491
      %v3502 = vpack.c.bf16 %v3494, %v3493
      %v3503 = vld [vmem:[%s1798] sm:$0xf]
      %v3504 = vld [vmem:[%s1798 + $0x4] sm:$0xf]
      %v3505 = vld [vmem:[%s1798 + $0x8] sm:$0xf]
      %v3506 = vld [vmem:[%s1798 + $0xc] sm:$0xf]
      %v3507 = vld [vmem:[%s1798 + $0x10] sm:$0x3]
      %v3513 = vunpack.c.l.b16 %v3503
      %v3514 = vunpack.c.l.b16 %v3504
      %v3515 = vunpack.c.l.b16 %v3505
      %v3516 = vunpack.c.l.b16 %v3506
      %v3517 = vunpack.c.l.b16 %v3507
      %v3518 = vpack.c.b16 %v3514, %v3513
      %v3519 = vpack.c.b16 %v3516, %v3515
      %v3520 = vpack.c.b16 %v3517, %v3517
      %v3524 = vsel %vm583, %v3495, 0
      %v3527 = vsel %vm583, %v3496, 0
      %v3530 = vsel %vm583, %v3497, 0
      %v3533 = vsel %vm583, %v3498, 0
      %v3536 = vsel %vm583, %v3499, 0
      %v3539 = vsel %vm583, %v3500, 0
      %v3542 = vsel %vm583, %v3501, 0
      %v3545 = vsel %vm583, %v3502, 0
      %v3548 = vsel %vm608, %v3520, 0
      %3550 = vmatprep.subr.bf16.mxu0 0
      %3551 = vmatpush1.bf16.msra.mxu0 0
      %3552 = vmatprep.subr.bf16.mxu0 0
      %3553 = vmatpush1.bf16.msra.mxu0 0
      %3554 = vmatprep.subr.bf16.mxu0 0
      %3555 = vmatpush1.bf16.msra.mxu0 0
      %3556 = vmatprep.subr.bf16.mxu0 0
      %3557 = vmatpush1.bf16.msra.mxu0 0
      %3558 = vmatprep.subr.bf16.mxu0 0
      %3559 = vmatpush1.bf16.msra.mxu0 0
      %3560 = vmatprep.subr.bf16.mxu0 0
      %3561 = vmatpush1.bf16.msra.mxu0 %v3548
      %3562 = vmatprep.subr.bf16.mxu0 0
      %3563 = vmatpush1.bf16.msra.mxu0 %v3519
      %3564 = vmatprep.subr.bf16.mxu0 0
      %3565 = vmatpush1.bf16.msra.mxu0 %v3518
      %3566 = vmatprep.subr.bf16.mxu0 0
      %3567 = vmatpush2.bf16.msra.mxu0 0
      %3568 = vmatprep.subr.bf16.mxu0 0
      %3569 = vmatpush2.bf16.msra.mxu0 0
      %3570 = vmatprep.subr.bf16.mxu0 0
      %3571 = vmatpush2.bf16.msra.mxu0 0
      %3572 = vmatprep.subr.bf16.mxu0 0
      %3573 = vmatpush2.bf16.msra.mxu0 0
      %3574 = vmatprep.subr.bf16.mxu0 0
      %3575 = vmatpush2.bf16.msra.mxu0 0
      %3576 = vmatprep.subr.bf16.mxu0 0
      %3577 = vmatpush2.bf16.msra.mxu0 0
      %3578 = vmatprep.subr.bf16.mxu0 0
      %3579 = vmatpush2.bf16.msra.mxu0 0
      %3580 = vmatprep.subr.bf16.mxu0 0
      %3581 = vmatpush2.bf16.msra.mxu0 0
      %3582 = vmatprep.mubr.bf16.mxu0 0
      %3583 = vmatmul.mubr.bf16.gmra.mxu0 %v3524
      %v3584 = vpop.f32.mrf.mxu0
      %v3585 = vadd.f32 0.0, %v3584
      %v3586 = vpop.f32.mrf.mxu0
      %v3587 = vpop.f32.mrf.mxu0
      %v3588 = vadd.f32 0.0, %v3587
      %v3589 = vpop.f32.mrf.mxu0
      %3590 = vmatprep.mubr.bf16.mxu0 0
      %3591 = vmatmul.mubr.bf16.gmra.mxu0 %v3527
      %v3592 = vpop.f32.mrf.mxu0
      %v3593 = vadd.f32 0.0, %v3592
      %v3594 = vpop.f32.mrf.mxu0
      %v3595 = vpop.f32.mrf.mxu0
      %v3596 = vadd.f32 0.0, %v3595
      %v3597 = vpop.f32.mrf.mxu0
      %3598 = vmatprep.mubr.bf16.mxu0 0
      %3599 = vmatmul.mubr.bf16.gmra.mxu0 %v3530
      %v3600 = vpop.f32.mrf.mxu0
      %v3601 = vadd.f32 0.0, %v3600
      %v3602 = vpop.f32.mrf.mxu0
      %v3603 = vpop.f32.mrf.mxu0
      %v3604 = vadd.f32 0.0, %v3603
      %v3605 = vpop.f32.mrf.mxu0
      %3606 = vmatprep.mubr.bf16.mxu0 0
      %3607 = vmatmul.mubr.bf16.gmra.mxu0 %v3533
      %v3608 = vpop.f32.mrf.mxu0
      %v3609 = vadd.f32 0.0, %v3608
      %v3610 = vpop.f32.mrf.mxu0
      %v3611 = vpop.f32.mrf.mxu0
      %v3612 = vadd.f32 0.0, %v3611
      %v3613 = vpop.f32.mrf.mxu0
      %3614 = vmatprep.mubr.bf16.mxu0 0
      %3615 = vmatmul.mubr.bf16.gmra.mxu0 %v3536
      %v3616 = vpop.f32.mrf.mxu0
      %v3617 = vadd.f32 0.0, %v3616
      %v3618 = vpop.f32.mrf.mxu0
      %v3619 = vpop.f32.mrf.mxu0
      %v3620 = vadd.f32 0.0, %v3619
      %v3621 = vpop.f32.mrf.mxu0
      %3622 = vmatprep.mubr.bf16.mxu0 0
      %3623 = vmatmul.mubr.bf16.gmra.mxu0 %v3539
      %v3624 = vpop.f32.mrf.mxu0
      %v3625 = vadd.f32 0.0, %v3624
      %v3626 = vpop.f32.mrf.mxu0
      %v3627 = vpop.f32.mrf.mxu0
      %v3628 = vadd.f32 0.0, %v3627
      %v3629 = vpop.f32.mrf.mxu0
      %3630 = vmatprep.mubr.bf16.mxu0 0
      %3631 = vmatmul.mubr.bf16.gmra.mxu0 %v3542
      %v3632 = vpop.f32.mrf.mxu0
      %v3633 = vadd.f32 0.0, %v3632
      %v3634 = vpop.f32.mrf.mxu0
      %v3635 = vpop.f32.mrf.mxu0
      %v3636 = vadd.f32 0.0, %v3635
      %v3637 = vpop.f32.mrf.mxu0
      %3638 = vmatprep.mubr.bf16.mxu0 0
      %3639 = vmatmul.mubr.bf16.gmra.mxu0 %v3545
      %v3640 = vpop.f32.mrf.mxu0
      %v3641 = vadd.f32 0.0, %v3640
      %v3642 = vpop.f32.mrf.mxu0
      %v3643 = vpop.f32.mrf.mxu0
      %v3644 = vadd.f32 0.0, %v3643
      %v3645 = vpop.f32.mrf.mxu0
      %3646 = vdwg.mxu0
      %v3647 = vadd.f32 %v3463, %v3585
      %v3648 = vadd.f32 %v3464, %v3588
      %v3649 = vadd.f32 %v3465, %v3593
      %v3650 = vadd.f32 %v3466, %v3596
      %v3651 = vadd.f32 %v3467, %v3601
      %v3652 = vadd.f32 %v3468, %v3604
      %v3653 = vadd.f32 %v3469, %v3609
      %v3654 = vadd.f32 %v3470, %v3612
      %v3655 = vadd.f32 %v3471, %v3617
      %v3656 = vadd.f32 %v3472, %v3620
      %v3657 = vadd.f32 %v3473, %v3625
      %v3658 = vadd.f32 %v3474, %v3628
      %v3659 = vadd.f32 %v3475, %v3633
      %v3660 = vadd.f32 %v3476, %v3636
      %v3661 = vadd.f32 %v3477, %v3641
      %v3662 = vadd.f32 %v3478, %v3644
      %v3663 = vld [vmem:[%s3294 + $0x2] sm:$0xff]
      %v3664 = vld [vmem:[%s3294 + $0xa] sm:$0xff]
      %v3665 = vld [vmem:[%s3294 + $0x1a] sm:$0xff]
      %v3666 = vld [vmem:[%s3294 + $0x22] sm:$0xff]
      %v3667 = vld [vmem:[%s3294 + $0x32] sm:$0xff]
      %v3668 = vld [vmem:[%s3294 + $0x3a] sm:$0xff]
      %v3669 = vld [vmem:[%s3294 + $0x4a] sm:$0xff]
      %v3670 = vld [vmem:[%s3294 + $0x52] sm:$0xff]
      %v3671 = vld [vmem:[%s3294 + $0x62] sm:$0xff]
      %v3672 = vld [vmem:[%s3294 + $0x6a] sm:$0xff]
      %v3673 = vld [vmem:[%s3294 + $0x7a] sm:$0xff]
      %v3674 = vld [vmem:[%s3294 + $0x82] sm:$0xff]
      %v3675 = vld [vmem:[%s3294 + $0x92] sm:$0xff]
      %v3676 = vld [vmem:[%s3294 + $0x9a] sm:$0xff]
      %v3677 = vld [vmem:[%s3294 + $0xaa] sm:$0xff]
      %v3678 = vld [vmem:[%s3294 + $0xb2] sm:$0xff]
      %v3679 = vpack.c.bf16 %v3664, %v3663
      %v3680 = vpack.c.bf16 %v3666, %v3665
      %v3681 = vpack.c.bf16 %v3668, %v3667
      %v3682 = vpack.c.bf16 %v3670, %v3669
      %v3683 = vpack.c.bf16 %v3672, %v3671
      %v3684 = vpack.c.bf16 %v3674, %v3673
      %v3685 = vpack.c.bf16 %v3676, %v3675
      %v3686 = vpack.c.bf16 %v3678, %v3677
      %v3687 = vld [vmem:[%s1983] sm:$0xf]
      %v3688 = vld [vmem:[%s1983 + $0x4] sm:$0xf]
      %v3689 = vld [vmem:[%s1983 + $0x8] sm:$0xf]
      %v3690 = vld [vmem:[%s1983 + $0xc] sm:$0xf]
      %v3691 = vld [vmem:[%s1983 + $0x10] sm:$0x3]
      %v3697 = vunpack.c.l.b16 %v3687
      %v3698 = vunpack.c.l.b16 %v3688
      %v3699 = vunpack.c.l.b16 %v3689
      %v3700 = vunpack.c.l.b16 %v3690
      %v3701 = vunpack.c.l.b16 %v3691
      %v3702 = vpack.c.b16 %v3698, %v3697
      %v3703 = vpack.c.b16 %v3700, %v3699
      %v3704 = vpack.c.b16 %v3701, %v3701
      %v3708 = vsel %vm583, %v3679, 0
      %v3711 = vsel %vm583, %v3680, 0
      %v3714 = vsel %vm583, %v3681, 0
      %v3717 = vsel %vm583, %v3682, 0
      %v3720 = vsel %vm583, %v3683, 0
      %v3723 = vsel %vm583, %v3684, 0
      %v3726 = vsel %vm583, %v3685, 0
      %v3729 = vsel %vm583, %v3686, 0
      %v3732 = vsel %vm608, %v3704, 0
      %3734 = vmatprep.subr.bf16.mxu0 0
      %3735 = vmatpush1.bf16.msra.mxu0 0
      %3736 = vmatprep.subr.bf16.mxu0 0
      %3737 = vmatpush1.bf16.msra.mxu0 0
      %3738 = vmatprep.subr.bf16.mxu0 0
      %3739 = vmatpush1.bf16.msra.mxu0 0
      %3740 = vmatprep.subr.bf16.mxu0 0
      %3741 = vmatpush1.bf16.msra.mxu0 0
      %3742 = vmatprep.subr.bf16.mxu0 0
      %3743 = vmatpush1.bf16.msra.mxu0 0
      %3744 = vmatprep.subr.bf16.mxu0 0
      %3745 = vmatpush1.bf16.msra.mxu0 %v3732
      %3746 = vmatprep.subr.bf16.mxu0 0
      %3747 = vmatpush1.bf16.msra.mxu0 %v3703
      %3748 = vmatprep.subr.bf16.mxu0 0
      %3749 = vmatpush1.bf16.msra.mxu0 %v3702
      %3750 = vmatprep.subr.bf16.mxu0 0
      %3751 = vmatpush2.bf16.msra.mxu0 0
      %3752 = vmatprep.subr.bf16.mxu0 0
      %3753 = vmatpush2.bf16.msra.mxu0 0
      %3754 = vmatprep.subr.bf16.mxu0 0
      %3755 = vmatpush2.bf16.msra.mxu0 0
      %3756 = vmatprep.subr.bf16.mxu0 0
      %3757 = vmatpush2.bf16.msra.mxu0 0
      %3758 = vmatprep.subr.bf16.mxu0 0
      %3759 = vmatpush2.bf16.msra.mxu0 0
      %3760 = vmatprep.subr.bf16.mxu0 0
      %3761 = vmatpush2.bf16.msra.mxu0 0
      %3762 = vmatprep.subr.bf16.mxu0 0
      %3763 = vmatpush2.bf16.msra.mxu0 0
      %3764 = vmatprep.subr.bf16.mxu0 0
      %3765 = vmatpush2.bf16.msra.mxu0 0
      %3766 = vmatprep.mubr.bf16.mxu0 0
      %3767 = vmatmul.mubr.bf16.gmra.mxu0 %v3708
      %v3768 = vpop.f32.mrf.mxu0
      %v3769 = vadd.f32 0.0, %v3768
      %v3770 = vpop.f32.mrf.mxu0
      %v3771 = vpop.f32.mrf.mxu0
      %v3772 = vadd.f32 0.0, %v3771
      %v3773 = vpop.f32.mrf.mxu0
      %3774 = vmatprep.mubr.bf16.mxu0 0
      %3775 = vmatmul.mubr.bf16.gmra.mxu0 %v3711
      %v3776 = vpop.f32.mrf.mxu0
      %v3777 = vadd.f32 0.0, %v3776
      %v3778 = vpop.f32.mrf.mxu0
      %v3779 = vpop.f32.mrf.mxu0
      %v3780 = vadd.f32 0.0, %v3779
      %v3781 = vpop.f32.mrf.mxu0
      %3782 = vmatprep.mubr.bf16.mxu0 0
      %3783 = vmatmul.mubr.bf16.gmra.mxu0 %v3714
      %v3784 = vpop.f32.mrf.mxu0
      %v3785 = vadd.f32 0.0, %v3784
      %v3786 = vpop.f32.mrf.mxu0
      %v3787 = vpop.f32.mrf.mxu0
      %v3788 = vadd.f32 0.0, %v3787
      %v3789 = vpop.f32.mrf.mxu0
      %3790 = vmatprep.mubr.bf16.mxu0 0
      %3791 = vmatmul.mubr.bf16.gmra.mxu0 %v3717
      %v3792 = vpop.f32.mrf.mxu0
      %v3793 = vadd.f32 0.0, %v3792
      %v3794 = vpop.f32.mrf.mxu0
      %v3795 = vpop.f32.mrf.mxu0
      %v3796 = vadd.f32 0.0, %v3795
      %v3797 = vpop.f32.mrf.mxu0
      %3798 = vmatprep.mubr.bf16.mxu0 0
      %3799 = vmatmul.mubr.bf16.gmra.mxu0 %v3720
      %v3800 = vpop.f32.mrf.mxu0
      %v3801 = vadd.f32 0.0, %v3800
      %v3802 = vpop.f32.mrf.mxu0
      %v3803 = vpop.f32.mrf.mxu0
      %v3804 = vadd.f32 0.0, %v3803
      %v3805 = vpop.f32.mrf.mxu0
      %3806 = vmatprep.mubr.bf16.mxu0 0
      %3807 = vmatmul.mubr.bf16.gmra.mxu0 %v3723
      %v3808 = vpop.f32.mrf.mxu0
      %v3809 = vadd.f32 0.0, %v3808
      %v3810 = vpop.f32.mrf.mxu0
      %v3811 = vpop.f32.mrf.mxu0
      %v3812 = vadd.f32 0.0, %v3811
      %v3813 = vpop.f32.mrf.mxu0
      %3814 = vmatprep.mubr.bf16.mxu0 0
      %3815 = vmatmul.mubr.bf16.gmra.mxu0 %v3726
      %v3816 = vpop.f32.mrf.mxu0
      %v3817 = vadd.f32 0.0, %v3816
      %v3818 = vpop.f32.mrf.mxu0
      %v3819 = vpop.f32.mrf.mxu0
      %v3820 = vadd.f32 0.0, %v3819
      %v3821 = vpop.f32.mrf.mxu0
      %3822 = vmatprep.mubr.bf16.mxu0 0
      %3823 = vmatmul.mubr.bf16.gmra.mxu0 %v3729
      %v3824 = vpop.f32.mrf.mxu0
      %v3825 = vadd.f32 0.0, %v3824
      %v3826 = vpop.f32.mrf.mxu0
      %v3827 = vpop.f32.mrf.mxu0
      %v3828 = vadd.f32 0.0, %v3827
      %v3829 = vpop.f32.mrf.mxu0
      %3830 = vdwg.mxu0
      %v3831 = vadd.f32 %v3647, %v3769
      %v3832 = vadd.f32 %v3648, %v3772
      %v3833 = vadd.f32 %v3649, %v3777
      %v3834 = vadd.f32 %v3650, %v3780
      %v3835 = vadd.f32 %v3651, %v3785
      %v3836 = vadd.f32 %v3652, %v3788
      %v3837 = vadd.f32 %v3653, %v3793
      %v3838 = vadd.f32 %v3654, %v3796
      %v3839 = vadd.f32 %v3655, %v3801
      %v3840 = vadd.f32 %v3656, %v3804
      %v3841 = vadd.f32 %v3657, %v3809
      %v3842 = vadd.f32 %v3658, %v3812
      %v3843 = vadd.f32 %v3659, %v3817
      %v3844 = vadd.f32 %v3660, %v3820
      %v3845 = vadd.f32 %v3661, %v3825
      %v3846 = vadd.f32 %v3662, %v3828
      %3847 = vst [vmem:[#allocation3 + $0x80] sm:$0xff] %v3831
      %3848 = vst [vmem:[#allocation3 + $0x88] sm:$0xff] %v3832
      %3849 = vst [vmem:[#allocation3 + $0x90] sm:$0xff] %v3833
      %3850 = vst [vmem:[#allocation3 + $0x98] sm:$0xff] %v3834
      %3851 = vst [vmem:[#allocation3 + $0xa0] sm:$0xff] %v3835
      %3852 = vst [vmem:[#allocation3 + $0xa8] sm:$0xff] %v3836
      %3853 = vst [vmem:[#allocation3 + $0xb0] sm:$0xff] %v3837
      %3854 = vst [vmem:[#allocation3 + $0xb8] sm:$0xff] %v3838
      %3855 = vst [vmem:[#allocation3 + $0xc0] sm:$0xff] %v3839
      %3856 = vst [vmem:[#allocation3 + $0xc8] sm:$0xff] %v3840
      %3857 = vst [vmem:[#allocation3 + $0xd0] sm:$0xff] %v3841
      %3858 = vst [vmem:[#allocation3 + $0xd8] sm:$0xff] %v3842
      %3859 = vst [vmem:[#allocation3 + $0xe0] sm:$0xff] %v3843
      %3860 = vst [vmem:[#allocation3 + $0xe8] sm:$0xff] %v3844
      %3861 = vst [vmem:[#allocation3 + $0xf0] sm:$0xff] %v3845
      %3862 = vst [vmem:[#allocation3 + $0xf8] sm:$0xff] %v3846
      %v3863 = vadd.f32 %v3831, %v3832
      %v3864 = vadd.f32 %v3863, %v3833
      %v3865 = vadd.f32 %v3864, %v3834
      %v3866 = vadd.f32 %v3865, %v3835
      %v3867 = vadd.f32 %v3866, %v3836
      %v3868 = vadd.f32 %v3867, %v3837
      %v3869 = vadd.f32 %v3868, %v3838
      %v3870 = vadd.f32 %v3869, %v3839
      %v3871 = vadd.f32 %v3870, %v3840
      %v3872 = vadd.f32 %v3871, %v3841
      %v3873 = vadd.f32 %v3872, %v3842
      %v3874 = vadd.f32 %v3873, %v3843
      %v3875 = vadd.f32 %v3874, %v3844
      %v3876 = vadd.f32 %v3875, %v3845
      %v3877 = vadd.f32 %v3876, %v3846
      %v3878 = vrot.slane %v3877, 4
      %v3879 = vadd.f32 %v3877, %v3878
      %v3880 = vrot.slane %v3879, 2
      %v3881 = vadd.f32 %v3879, %v3880
      %v3882 = vrot.slane %v3881, 1
      %v3883 = vadd.f32 %v3881, %v3882
      %v3884 = vadd.f32 %v2181, %v3883
      %v3885 = vmul.f32 %v3831, %v3831
      %v3886 = vmul.f32 %v3832, %v3832
      %v3887 = vmul.f32 %v3833, %v3833
      %v3888 = vmul.f32 %v3834, %v3834
      %v3889 = vmul.f32 %v3835, %v3835
      %v3890 = vmul.f32 %v3836, %v3836
      %v3891 = vmul.f32 %v3837, %v3837
      %v3892 = vmul.f32 %v3838, %v3838
      %v3893 = vmul.f32 %v3839, %v3839
      %v3894 = vmul.f32 %v3840, %v3840
      %v3895 = vmul.f32 %v3841, %v3841
      %v3896 = vmul.f32 %v3842, %v3842
      %v3897 = vmul.f32 %v3843, %v3843
      %v3898 = vmul.f32 %v3844, %v3844
      %v3899 = vmul.f32 %v3845, %v3845
      %v3900 = vmul.f32 %v3846, %v3846
      %v3901 = vadd.f32 %v3885, %v3886
      %v3902 = vadd.f32 %v3901, %v3887
      %v3903 = vadd.f32 %v3902, %v3888
      %v3904 = vadd.f32 %v3903, %v3889
      %v3905 = vadd.f32 %v3904, %v3890
      %v3906 = vadd.f32 %v3905, %v3891
      %v3907 = vadd.f32 %v3906, %v3892
      %v3908 = vadd.f32 %v3907, %v3893
      %v3909 = vadd.f32 %v3908, %v3894
      %v3910 = vadd.f32 %v3909, %v3895
      %v3911 = vadd.f32 %v3910, %v3896
      %v3912 = vadd.f32 %v3911, %v3897
      %v3913 = vadd.f32 %v3912, %v3898
      %v3914 = vadd.f32 %v3913, %v3899
      %v3915 = vadd.f32 %v3914, %v3900
      %v3916 = vrot.slane %v3915, 4
      %v3917 = vadd.f32 %v3915, %v3916
      %v3918 = vrot.slane %v3917, 2
      %v3919 = vadd.f32 %v3917, %v3918
      %v3920 = vrot.slane %v3919, 1
      %v3921 = vadd.f32 %v3919, %v3920
      %v3922 = vadd.f32 %v2219, %v3921
      %s3923 = scalar_lea.vmem [#allocation2], 432
      %v3924 = vld [vmem:[%s3923] sm:$0xff]
      %v3925 = vld [vmem:[%s3923 + $0x8] sm:$0xff]
      %v3926 = vld [vmem:[%s3923 + $0x18] sm:$0xff]
      %v3927 = vld [vmem:[%s3923 + $0x20] sm:$0xff]
      %v3928 = vld [vmem:[%s3923 + $0x30] sm:$0xff]
      %v3929 = vld [vmem:[%s3923 + $0x38] sm:$0xff]
      %v3930 = vld [vmem:[%s3923 + $0x48] sm:$0xff]
      %v3931 = vld [vmem:[%s3923 + $0x50] sm:$0xff]
      %v3932 = vld [vmem:[%s3923 + $0x60] sm:$0xff]
      %v3933 = vld [vmem:[%s3923 + $0x68] sm:$0xff]
      %v3934 = vld [vmem:[%s3923 + $0x78] sm:$0xff]
      %v3935 = vld [vmem:[%s3923 + $0x80] sm:$0xff]
      %v3936 = vld [vmem:[%s3923 + $0x90] sm:$0xff]
      %v3937 = vld [vmem:[%s3923 + $0x98] sm:$0xff]
      %v3938 = vld [vmem:[%s3923 + $0xa8] sm:$0xff]
      %v3939 = vld [vmem:[%s3923 + $0xb0] sm:$0xff]
      %v3940 = vpack.c.bf16 %v3925, %v3924
      %v3941 = vpack.c.bf16 %v3927, %v3926
      %v3942 = vpack.c.bf16 %v3929, %v3928
      %v3943 = vpack.c.bf16 %v3931, %v3930
      %v3944 = vpack.c.bf16 %v3933, %v3932
      %v3945 = vpack.c.bf16 %v3935, %v3934
      %v3946 = vpack.c.bf16 %v3937, %v3936
      %v3947 = vpack.c.bf16 %v3939, %v3938
      %v3948 = vld [vmem:[%s1] sm:$0xf]
      %v3949 = vld [vmem:[%s1 + $0x4] sm:$0xf]
      %v3950 = vld [vmem:[%s1 + $0x8] sm:$0xf]
      %v3951 = vld [vmem:[%s1 + $0xc] sm:$0xf]
      %v3952 = vld [vmem:[%s1 + $0x10] sm:$0x3]
      %v3953 = vld [vmem:[%s3923 + $0x1] sm:$0xff]
      %v3954 = vld [vmem:[%s3923 + $0x9] sm:$0xff]
      %v3955 = vld [vmem:[%s3923 + $0x19] sm:$0xff]
      %v3956 = vld [vmem:[%s3923 + $0x21] sm:$0xff]
      %v3957 = vld [vmem:[%s3923 + $0x31] sm:$0xff]
      %v3958 = vld [vmem:[%s3923 + $0x39] sm:$0xff]
      %v3959 = vld [vmem:[%s3923 + $0x49] sm:$0xff]
      %v3960 = vld [vmem:[%s3923 + $0x51] sm:$0xff]
      %v3961 = vld [vmem:[%s3923 + $0x61] sm:$0xff]
      %v3962 = vld [vmem:[%s3923 + $0x69] sm:$0xff]
      %v3963 = vld [vmem:[%s3923 + $0x79] sm:$0xff]
      %v3964 = vld [vmem:[%s3923 + $0x81] sm:$0xff]
      %v3965 = vld [vmem:[%s3923 + $0x91] sm:$0xff]
      %v3966 = vld [vmem:[%s3923 + $0x99] sm:$0xff]
      %v3967 = vld [vmem:[%s3923 + $0xa9] sm:$0xff]
      %v3968 = vld [vmem:[%s3923 + $0xb1] sm:$0xff]
      %v3969 = vpack.c.bf16 %v3954, %v3953
      %v3970 = vpack.c.bf16 %v3956, %v3955
      %v3971 = vpack.c.bf16 %v3958, %v3957
      %v3972 = vpack.c.bf16 %v3960, %v3959
      %v3973 = vpack.c.bf16 %v3962, %v3961
      %v3974 = vpack.c.bf16 %v3964, %v3963
      %v3975 = vpack.c.bf16 %v3966, %v3965
      %v3976 = vpack.c.bf16 %v3968, %v3967
      %v3977 = vld [vmem:[%s562] sm:$0xf]
      %v3978 = vld [vmem:[%s562 + $0x4] sm:$0xf]
      %v3979 = vld [vmem:[%s562 + $0x8] sm:$0xf]
      %v3980 = vld [vmem:[%s562 + $0xc] sm:$0xf]
      %v3981 = vld [vmem:[%s562 + $0x10] sm:$0x3]
      %v3987 = vunpack.c.l.b16 %v3977
      %v3988 = vunpack.c.l.b16 %v3978
      %v3989 = vunpack.c.l.b16 %v3979
      %v3990 = vunpack.c.l.b16 %v3980
      %v3991 = vunpack.c.l.b16 %v3981
      %v3992 = vpack.c.b16 %v3988, %v3987
      %v3993 = vpack.c.b16 %v3990, %v3989
      %v3994 = vpack.c.b16 %v3991, %v3991
      %v3998 = vsel %vm583, %v3969, 0
      %v4001 = vsel %vm583, %v3970, 0
      %v4004 = vsel %vm583, %v3971, 0
      %v4007 = vsel %vm583, %v3972, 0
      %v4010 = vsel %vm583, %v3973, 0
      %v4013 = vsel %vm583, %v3974, 0
      %v4016 = vsel %vm583, %v3975, 0
      %v4019 = vsel %vm583, %v3976, 0
      %v4022 = vsel %vm608, %v3994, 0
      %4024 = vmatprep.subr.bf16.mxu0 0
      %4025 = vmatpush1.bf16.msra.mxu0 0
      %4026 = vmatprep.subr.bf16.mxu0 0
      %4027 = vmatpush1.bf16.msra.mxu0 0
      %4028 = vmatprep.subr.bf16.mxu0 0
      %4029 = vmatpush1.bf16.msra.mxu0 0
      %4030 = vmatprep.subr.bf16.mxu0 0
      %4031 = vmatpush1.bf16.msra.mxu0 0
      %4032 = vmatprep.subr.bf16.mxu0 0
      %4033 = vmatpush1.bf16.msra.mxu0 0
      %4034 = vmatprep.subr.bf16.mxu0 0
      %4035 = vmatpush1.bf16.msra.mxu0 %v4022
      %4036 = vmatprep.subr.bf16.mxu0 0
      %4037 = vmatpush1.bf16.msra.mxu0 %v3993
      %4038 = vmatprep.subr.bf16.mxu0 0
      %4039 = vmatpush1.bf16.msra.mxu0 %v3992
      %4040 = vmatprep.subr.bf16.mxu0 0
      %4041 = vmatpush2.bf16.msra.mxu0 0
      %4042 = vmatprep.subr.bf16.mxu0 0
      %4043 = vmatpush2.bf16.msra.mxu0 0
      %4044 = vmatprep.subr.bf16.mxu0 0
      %4045 = vmatpush2.bf16.msra.mxu0 0
      %4046 = vmatprep.subr.bf16.mxu0 0
      %4047 = vmatpush2.bf16.msra.mxu0 0
      %4048 = vmatprep.subr.bf16.mxu0 0
      %4049 = vmatpush2.bf16.msra.mxu0 0
      %4050 = vmatprep.subr.bf16.mxu0 0
      %4051 = vmatpush2.bf16.msra.mxu0 0
      %4052 = vmatprep.subr.bf16.mxu0 0
      %4053 = vmatpush2.bf16.msra.mxu0 0
      %4054 = vmatprep.subr.bf16.mxu0 0
      %4055 = vmatpush2.bf16.msra.mxu0 0
      %4056 = vmatprep.mubr.bf16.mxu0 0
      %4057 = vmatmul.mubr.bf16.gmra.mxu0 %v3998
      %v4058 = vpop.f32.mrf.mxu0
      %v4059 = vadd.f32 0.0, %v4058
      %v4060 = vpop.f32.mrf.mxu0
      %v4061 = vpop.f32.mrf.mxu0
      %v4062 = vadd.f32 0.0, %v4061
      %v4063 = vpop.f32.mrf.mxu0
      %4064 = vmatprep.mubr.bf16.mxu0 0
      %4065 = vmatmul.mubr.bf16.gmra.mxu0 %v4001
      %v4066 = vpop.f32.mrf.mxu0
      %v4067 = vadd.f32 0.0, %v4066
      %v4068 = vpop.f32.mrf.mxu0
      %v4069 = vpop.f32.mrf.mxu0
      %v4070 = vadd.f32 0.0, %v4069
      %v4071 = vpop.f32.mrf.mxu0
      %4072 = vmatprep.mubr.bf16.mxu0 0
      %4073 = vmatmul.mubr.bf16.gmra.mxu0 %v4004
      %v4074 = vpop.f32.mrf.mxu0
      %v4075 = vadd.f32 0.0, %v4074
      %v4076 = vpop.f32.mrf.mxu0
      %v4077 = vpop.f32.mrf.mxu0
      %v4078 = vadd.f32 0.0, %v4077
      %v4079 = vpop.f32.mrf.mxu0
      %4080 = vmatprep.mubr.bf16.mxu0 0
      %4081 = vmatmul.mubr.bf16.gmra.mxu0 %v4007
      %v4082 = vpop.f32.mrf.mxu0
      %v4083 = vadd.f32 0.0, %v4082
      %v4084 = vpop.f32.mrf.mxu0
      %v4085 = vpop.f32.mrf.mxu0
      %v4086 = vadd.f32 0.0, %v4085
      %v4087 = vpop.f32.mrf.mxu0
      %4088 = vmatprep.mubr.bf16.mxu0 0
      %4089 = vmatmul.mubr.bf16.gmra.mxu0 %v4010
      %v4090 = vpop.f32.mrf.mxu0
      %v4091 = vadd.f32 0.0, %v4090
      %v4092 = vpop.f32.mrf.mxu0
      %v4093 = vpop.f32.mrf.mxu0
      %v4094 = vadd.f32 0.0, %v4093
      %v4095 = vpop.f32.mrf.mxu0
      %4096 = vmatprep.mubr.bf16.mxu0 0
      %4097 = vmatmul.mubr.bf16.gmra.mxu0 %v4013
      %v4098 = vpop.f32.mrf.mxu0
      %v4099 = vadd.f32 0.0, %v4098
      %v4100 = vpop.f32.mrf.mxu0
      %v4101 = vpop.f32.mrf.mxu0
      %v4102 = vadd.f32 0.0, %v4101
      %v4103 = vpop.f32.mrf.mxu0
      %4104 = vmatprep.mubr.bf16.mxu0 0
      %4105 = vmatmul.mubr.bf16.gmra.mxu0 %v4016
      %v4106 = vpop.f32.mrf.mxu0
      %v4107 = vadd.f32 0.0, %v4106
      %v4108 = vpop.f32.mrf.mxu0
      %v4109 = vpop.f32.mrf.mxu0
      %v4110 = vadd.f32 0.0, %v4109
      %v4111 = vpop.f32.mrf.mxu0
      %4112 = vmatprep.mubr.bf16.mxu0 0
      %4113 = vmatmul.mubr.bf16.gmra.mxu0 %v4019
      %v4114 = vpop.f32.mrf.mxu0
      %v4115 = vadd.f32 0.0, %v4114
      %v4116 = vpop.f32.mrf.mxu0
      %v4117 = vpop.f32.mrf.mxu0
      %v4118 = vadd.f32 0.0, %v4117
      %v4119 = vpop.f32.mrf.mxu0
      %4120 = vdwg.mxu0
      %v4126 = vunpack.c.l.b16 %v3948
      %v4127 = vunpack.c.l.b16 %v3949
      %v4128 = vunpack.c.l.b16 %v3950
      %v4129 = vunpack.c.l.b16 %v3951
      %v4130 = vunpack.c.l.b16 %v3952
      %v4131 = vpack.c.b16 %v4127, %v4126
      %v4132 = vpack.c.b16 %v4129, %v4128
      %v4133 = vpack.c.b16 %v4130, %v4130
      %v4137 = vsel %vm583, %v3940, 0
      %v4140 = vsel %vm583, %v3941, 0
      %v4143 = vsel %vm583, %v3942, 0
      %v4146 = vsel %vm583, %v3943, 0
      %v4149 = vsel %vm583, %v3944, 0
      %v4152 = vsel %vm583, %v3945, 0
      %v4155 = vsel %vm583, %v3946, 0
      %v4158 = vsel %vm583, %v3947, 0
      %v4161 = vsel %vm608, %v4133, 0
      %4163 = vmatprep.subr.bf16.mxu0 0
      %4164 = vmatpush1.bf16.msra.mxu0 0
      %4165 = vmatprep.subr.bf16.mxu0 0
      %4166 = vmatpush1.bf16.msra.mxu0 0
      %4167 = vmatprep.subr.bf16.mxu0 0
      %4168 = vmatpush1.bf16.msra.mxu0 0
      %4169 = vmatprep.subr.bf16.mxu0 0
      %4170 = vmatpush1.bf16.msra.mxu0 0
      %4171 = vmatprep.subr.bf16.mxu0 0
      %4172 = vmatpush1.bf16.msra.mxu0 0
      %4173 = vmatprep.subr.bf16.mxu0 0
      %4174 = vmatpush1.bf16.msra.mxu0 %v4161
      %4175 = vmatprep.subr.bf16.mxu0 0
      %4176 = vmatpush1.bf16.msra.mxu0 %v4132
      %4177 = vmatprep.subr.bf16.mxu0 0
      %4178 = vmatpush1.bf16.msra.mxu0 %v4131
      %4179 = vmatprep.subr.bf16.mxu0 0
      %4180 = vmatpush2.bf16.msra.mxu0 0
      %4181 = vmatprep.subr.bf16.mxu0 0
      %4182 = vmatpush2.bf16.msra.mxu0 0
      %4183 = vmatprep.subr.bf16.mxu0 0
      %4184 = vmatpush2.bf16.msra.mxu0 0
      %4185 = vmatprep.subr.bf16.mxu0 0
      %4186 = vmatpush2.bf16.msra.mxu0 0
      %4187 = vmatprep.subr.bf16.mxu0 0
      %4188 = vmatpush2.bf16.msra.mxu0 0
      %4189 = vmatprep.subr.bf16.mxu0 0
      %4190 = vmatpush2.bf16.msra.mxu0 0
      %4191 = vmatprep.subr.bf16.mxu0 0
      %4192 = vmatpush2.bf16.msra.mxu0 0
      %4193 = vmatprep.subr.bf16.mxu0 0
      %4194 = vmatpush2.bf16.msra.mxu0 0
      %4195 = vmatprep.mubr.bf16.mxu0 0
      %4196 = vmatmul.mubr.bf16.gmra.mxu0 %v4137
      %v4197 = vpop.f32.mrf.mxu0
      %v4198 = vadd.f32 %v4059, %v4197
      %v4199 = vpop.f32.mrf.mxu0
      %v4200 = vpop.f32.mrf.mxu0
      %v4201 = vadd.f32 %v4062, %v4200
      %v4202 = vpop.f32.mrf.mxu0
      %4203 = vmatprep.mubr.bf16.mxu0 0
      %4204 = vmatmul.mubr.bf16.gmra.mxu0 %v4140
      %v4205 = vpop.f32.mrf.mxu0
      %v4206 = vadd.f32 %v4067, %v4205
      %v4207 = vpop.f32.mrf.mxu0
      %v4208 = vpop.f32.mrf.mxu0
      %v4209 = vadd.f32 %v4070, %v4208
      %v4210 = vpop.f32.mrf.mxu0
      %4211 = vmatprep.mubr.bf16.mxu0 0
      %4212 = vmatmul.mubr.bf16.gmra.mxu0 %v4143
      %v4213 = vpop.f32.mrf.mxu0
      %v4214 = vadd.f32 %v4075, %v4213
      %v4215 = vpop.f32.mrf.mxu0
      %v4216 = vpop.f32.mrf.mxu0
      %v4217 = vadd.f32 %v4078, %v4216
      %v4218 = vpop.f32.mrf.mxu0
      %4219 = vmatprep.mubr.bf16.mxu0 0
      %4220 = vmatmul.mubr.bf16.gmra.mxu0 %v4146
      %v4221 = vpop.f32.mrf.mxu0
      %v4222 = vadd.f32 %v4083, %v4221
      %v4223 = vpop.f32.mrf.mxu0
      %v4224 = vpop.f32.mrf.mxu0
      %v4225 = vadd.f32 %v4086, %v4224
      %v4226 = vpop.f32.mrf.mxu0
      %4227 = vmatprep.mubr.bf16.mxu0 0
      %4228 = vmatmul.mubr.bf16.gmra.mxu0 %v4149
      %v4229 = vpop.f32.mrf.mxu0
      %v4230 = vadd.f32 %v4091, %v4229
      %v4231 = vpop.f32.mrf.mxu0
      %v4232 = vpop.f32.mrf.mxu0
      %v4233 = vadd.f32 %v4094, %v4232
      %v4234 = vpop.f32.mrf.mxu0
      %4235 = vmatprep.mubr.bf16.mxu0 0
      %4236 = vmatmul.mubr.bf16.gmra.mxu0 %v4152
      %v4237 = vpop.f32.mrf.mxu0
      %v4238 = vadd.f32 %v4099, %v4237
      %v4239 = vpop.f32.mrf.mxu0
      %v4240 = vpop.f32.mrf.mxu0
      %v4241 = vadd.f32 %v4102, %v4240
      %v4242 = vpop.f32.mrf.mxu0
      %4243 = vmatprep.mubr.bf16.mxu0 0
      %4244 = vmatmul.mubr.bf16.gmra.mxu0 %v4155
      %v4245 = vpop.f32.mrf.mxu0
      %v4246 = vadd.f32 %v4107, %v4245
      %v4247 = vpop.f32.mrf.mxu0
      %v4248 = vpop.f32.mrf.mxu0
      %v4249 = vadd.f32 %v4110, %v4248
      %v4250 = vpop.f32.mrf.mxu0
      %4251 = vmatprep.mubr.bf16.mxu0 0
      %4252 = vmatmul.mubr.bf16.gmra.mxu0 %v4158
      %v4253 = vpop.f32.mrf.mxu0
      %v4254 = vadd.f32 %v4115, %v4253
      %v4255 = vpop.f32.mrf.mxu0
      %v4256 = vpop.f32.mrf.mxu0
      %v4257 = vadd.f32 %v4118, %v4256
      %v4258 = vpop.f32.mrf.mxu0
      %4259 = vdwg.mxu0
      %v4260 = vld [vmem:[%s3923 + $0x2] sm:$0xff]
      %v4261 = vld [vmem:[%s3923 + $0xa] sm:$0xff]
      %v4262 = vld [vmem:[%s3923 + $0x1a] sm:$0xff]
      %v4263 = vld [vmem:[%s3923 + $0x22] sm:$0xff]
      %v4264 = vld [vmem:[%s3923 + $0x32] sm:$0xff]
      %v4265 = vld [vmem:[%s3923 + $0x3a] sm:$0xff]
      %v4266 = vld [vmem:[%s3923 + $0x4a] sm:$0xff]
      %v4267 = vld [vmem:[%s3923 + $0x52] sm:$0xff]
      %v4268 = vld [vmem:[%s3923 + $0x62] sm:$0xff]
      %v4269 = vld [vmem:[%s3923 + $0x6a] sm:$0xff]
      %v4270 = vld [vmem:[%s3923 + $0x7a] sm:$0xff]
      %v4271 = vld [vmem:[%s3923 + $0x82] sm:$0xff]
      %v4272 = vld [vmem:[%s3923 + $0x92] sm:$0xff]
      %v4273 = vld [vmem:[%s3923 + $0x9a] sm:$0xff]
      %v4274 = vld [vmem:[%s3923 + $0xaa] sm:$0xff]
      %v4275 = vld [vmem:[%s3923 + $0xb2] sm:$0xff]
      %v4276 = vpack.c.bf16 %v4261, %v4260
      %v4277 = vpack.c.bf16 %v4263, %v4262
      %v4278 = vpack.c.bf16 %v4265, %v4264
      %v4279 = vpack.c.bf16 %v4267, %v4266
      %v4280 = vpack.c.bf16 %v4269, %v4268
      %v4281 = vpack.c.bf16 %v4271, %v4270
      %v4282 = vpack.c.bf16 %v4273, %v4272
      %v4283 = vpack.c.bf16 %v4275, %v4274
      %v4284 = vld [vmem:[%s872] sm:$0xf]
      %v4285 = vld [vmem:[%s872 + $0x4] sm:$0xf]
      %v4286 = vld [vmem:[%s872 + $0x8] sm:$0xf]
      %v4287 = vld [vmem:[%s872 + $0xc] sm:$0xf]
      %v4288 = vld [vmem:[%s872 + $0x10] sm:$0x3]
      %v4294 = vunpack.c.l.b16 %v4284
      %v4295 = vunpack.c.l.b16 %v4285
      %v4296 = vunpack.c.l.b16 %v4286
      %v4297 = vunpack.c.l.b16 %v4287
      %v4298 = vunpack.c.l.b16 %v4288
      %v4299 = vpack.c.b16 %v4295, %v4294
      %v4300 = vpack.c.b16 %v4297, %v4296
      %v4301 = vpack.c.b16 %v4298, %v4298
      %v4305 = vsel %vm583, %v4276, 0
      %v4308 = vsel %vm583, %v4277, 0
      %v4311 = vsel %vm583, %v4278, 0
      %v4314 = vsel %vm583, %v4279, 0
      %v4317 = vsel %vm583, %v4280, 0
      %v4320 = vsel %vm583, %v4281, 0
      %v4323 = vsel %vm583, %v4282, 0
      %v4326 = vsel %vm583, %v4283, 0
      %v4329 = vsel %vm608, %v4301, 0
      %4331 = vmatprep.subr.bf16.mxu0 0
      %4332 = vmatpush1.bf16.msra.mxu0 0
      %4333 = vmatprep.subr.bf16.mxu0 0
      %4334 = vmatpush1.bf16.msra.mxu0 0
      %4335 = vmatprep.subr.bf16.mxu0 0
      %4336 = vmatpush1.bf16.msra.mxu0 0
      %4337 = vmatprep.subr.bf16.mxu0 0
      %4338 = vmatpush1.bf16.msra.mxu0 0
      %4339 = vmatprep.subr.bf16.mxu0 0
      %4340 = vmatpush1.bf16.msra.mxu0 0
      %4341 = vmatprep.subr.bf16.mxu0 0
      %4342 = vmatpush1.bf16.msra.mxu0 %v4329
      %4343 = vmatprep.subr.bf16.mxu0 0
      %4344 = vmatpush1.bf16.msra.mxu0 %v4300
      %4345 = vmatprep.subr.bf16.mxu0 0
      %4346 = vmatpush1.bf16.msra.mxu0 %v4299
      %4347 = vmatprep.subr.bf16.mxu0 0
      %4348 = vmatpush2.bf16.msra.mxu0 0
      %4349 = vmatprep.subr.bf16.mxu0 0
      %4350 = vmatpush2.bf16.msra.mxu0 0
      %4351 = vmatprep.subr.bf16.mxu0 0
      %4352 = vmatpush2.bf16.msra.mxu0 0
      %4353 = vmatprep.subr.bf16.mxu0 0
      %4354 = vmatpush2.bf16.msra.mxu0 0
      %4355 = vmatprep.subr.bf16.mxu0 0
      %4356 = vmatpush2.bf16.msra.mxu0 0
      %4357 = vmatprep.subr.bf16.mxu0 0
      %4358 = vmatpush2.bf16.msra.mxu0 0
      %4359 = vmatprep.subr.bf16.mxu0 0
      %4360 = vmatpush2.bf16.msra.mxu0 0
      %4361 = vmatprep.subr.bf16.mxu0 0
      %4362 = vmatpush2.bf16.msra.mxu0 0
      %4363 = vmatprep.mubr.bf16.mxu0 0
      %4364 = vmatmul.mubr.bf16.gmra.mxu0 %v4305
      %v4365 = vpop.f32.mrf.mxu0
      %v4366 = vadd.f32 0.0, %v4365
      %v4367 = vpop.f32.mrf.mxu0
      %v4368 = vpop.f32.mrf.mxu0
      %v4369 = vadd.f32 0.0, %v4368
      %v4370 = vpop.f32.mrf.mxu0
      %4371 = vmatprep.mubr.bf16.mxu0 0
      %4372 = vmatmul.mubr.bf16.gmra.mxu0 %v4308
      %v4373 = vpop.f32.mrf.mxu0
      %v4374 = vadd.f32 0.0, %v4373
      %v4375 = vpop.f32.mrf.mxu0
      %v4376 = vpop.f32.mrf.mxu0
      %v4377 = vadd.f32 0.0, %v4376
      %v4378 = vpop.f32.mrf.mxu0
      %4379 = vmatprep.mubr.bf16.mxu0 0
      %4380 = vmatmul.mubr.bf16.gmra.mxu0 %v4311
      %v4381 = vpop.f32.mrf.mxu0
      %v4382 = vadd.f32 0.0, %v4381
      %v4383 = vpop.f32.mrf.mxu0
      %v4384 = vpop.f32.mrf.mxu0
      %v4385 = vadd.f32 0.0, %v4384
      %v4386 = vpop.f32.mrf.mxu0
      %4387 = vmatprep.mubr.bf16.mxu0 0
      %4388 = vmatmul.mubr.bf16.gmra.mxu0 %v4314
      %v4389 = vpop.f32.mrf.mxu0
      %v4390 = vadd.f32 0.0, %v4389
      %v4391 = vpop.f32.mrf.mxu0
      %v4392 = vpop.f32.mrf.mxu0
      %v4393 = vadd.f32 0.0, %v4392
      %v4394 = vpop.f32.mrf.mxu0
      %4395 = vmatprep.mubr.bf16.mxu0 0
      %4396 = vmatmul.mubr.bf16.gmra.mxu0 %v4317
      %v4397 = vpop.f32.mrf.mxu0
      %v4398 = vadd.f32 0.0, %v4397
      %v4399 = vpop.f32.mrf.mxu0
      %v4400 = vpop.f32.mrf.mxu0
      %v4401 = vadd.f32 0.0, %v4400
      %v4402 = vpop.f32.mrf.mxu0
      %4403 = vmatprep.mubr.bf16.mxu0 0
      %4404 = vmatmul.mubr.bf16.gmra.mxu0 %v4320
      %v4405 = vpop.f32.mrf.mxu0
      %v4406 = vadd.f32 0.0, %v4405
      %v4407 = vpop.f32.mrf.mxu0
      %v4408 = vpop.f32.mrf.mxu0
      %v4409 = vadd.f32 0.0, %v4408
      %v4410 = vpop.f32.mrf.mxu0
      %4411 = vmatprep.mubr.bf16.mxu0 0
      %4412 = vmatmul.mubr.bf16.gmra.mxu0 %v4323
      %v4413 = vpop.f32.mrf.mxu0
      %v4414 = vadd.f32 0.0, %v4413
      %v4415 = vpop.f32.mrf.mxu0
      %v4416 = vpop.f32.mrf.mxu0
      %v4417 = vadd.f32 0.0, %v4416
      %v4418 = vpop.f32.mrf.mxu0
      %4419 = vmatprep.mubr.bf16.mxu0 0
      %4420 = vmatmul.mubr.bf16.gmra.mxu0 %v4326
      %v4421 = vpop.f32.mrf.mxu0
      %v4422 = vadd.f32 0.0, %v4421
      %v4423 = vpop.f32.mrf.mxu0
      %v4424 = vpop.f32.mrf.mxu0
      %v4425 = vadd.f32 0.0, %v4424
      %v4426 = vpop.f32.mrf.mxu0
      %4427 = vdwg.mxu0
      %v4428 = vadd.f32 %v4198, %v4366
      %v4429 = vadd.f32 %v4201, %v4369
      %v4430 = vadd.f32 %v4206, %v4374
      %v4431 = vadd.f32 %v4209, %v4377
      %v4432 = vadd.f32 %v4214, %v4382
      %v4433 = vadd.f32 %v4217, %v4385
      %v4434 = vadd.f32 %v4222, %v4390
      %v4435 = vadd.f32 %v4225, %v4393
      %v4436 = vadd.f32 %v4230, %v4398
      %v4437 = vadd.f32 %v4233, %v4401
      %v4438 = vadd.f32 %v4238, %v4406
      %v4439 = vadd.f32 %v4241, %v4409
      %v4440 = vadd.f32 %v4246, %v4414
      %v4441 = vadd.f32 %v4249, %v4417
      %v4442 = vadd.f32 %v4254, %v4422
      %v4443 = vadd.f32 %v4257, %v4425
      %v4444 = vld [vmem:[%s476] sm:$0xff]
      %v4445 = vld [vmem:[%s476 + $0x8] sm:$0xff]
      %v4446 = vld [vmem:[%s476 + $0x18] sm:$0xff]
      %v4447 = vld [vmem:[%s476 + $0x20] sm:$0xff]
      %v4448 = vld [vmem:[%s476 + $0x30] sm:$0xff]
      %v4449 = vld [vmem:[%s476 + $0x38] sm:$0xff]
      %v4450 = vld [vmem:[%s476 + $0x48] sm:$0xff]
      %v4451 = vld [vmem:[%s476 + $0x50] sm:$0xff]
      %v4452 = vld [vmem:[%s476 + $0x60] sm:$0xff]
      %v4453 = vld [vmem:[%s476 + $0x68] sm:$0xff]
      %v4454 = vld [vmem:[%s476 + $0x78] sm:$0xff]
      %v4455 = vld [vmem:[%s476 + $0x80] sm:$0xff]
      %v4456 = vld [vmem:[%s476 + $0x90] sm:$0xff]
      %v4457 = vld [vmem:[%s476 + $0x98] sm:$0xff]
      %v4458 = vld [vmem:[%s476 + $0xa8] sm:$0xff]
      %v4459 = vld [vmem:[%s476 + $0xb0] sm:$0xff]
      %v4460 = vpack.c.bf16 %v4445, %v4444
      %v4461 = vpack.c.bf16 %v4447, %v4446
      %v4462 = vpack.c.bf16 %v4449, %v4448
      %v4463 = vpack.c.bf16 %v4451, %v4450
      %v4464 = vpack.c.bf16 %v4453, %v4452
      %v4465 = vpack.c.bf16 %v4455, %v4454
      %v4466 = vpack.c.bf16 %v4457, %v4456
      %v4467 = vpack.c.bf16 %v4459, %v4458
      %v4468 = vld [vmem:[%s1057] sm:$0xf]
      %v4469 = vld [vmem:[%s1057 + $0x4] sm:$0xf]
      %v4470 = vld [vmem:[%s1057 + $0x8] sm:$0xf]
      %v4471 = vld [vmem:[%s1057 + $0xc] sm:$0xf]
      %v4472 = vld [vmem:[%s1057 + $0x10] sm:$0x3]
      %v4478 = vunpack.c.l.b16 %v4468
      %v4479 = vunpack.c.l.b16 %v4469
      %v4480 = vunpack.c.l.b16 %v4470
      %v4481 = vunpack.c.l.b16 %v4471
      %v4482 = vunpack.c.l.b16 %v4472
      %v4483 = vpack.c.b16 %v4479, %v4478
      %v4484 = vpack.c.b16 %v4481, %v4480
      %v4485 = vpack.c.b16 %v4482, %v4482
      %v4489 = vsel %vm583, %v4460, 0
      %v4492 = vsel %vm583, %v4461, 0
      %v4495 = vsel %vm583, %v4462, 0
      %v4498 = vsel %vm583, %v4463, 0
      %v4501 = vsel %vm583, %v4464, 0
      %v4504 = vsel %vm583, %v4465, 0
      %v4507 = vsel %vm583, %v4466, 0
      %v4510 = vsel %vm583, %v4467, 0
      %v4513 = vsel %vm608, %v4485, 0
      %4515 = vmatprep.subr.bf16.mxu0 0
      %4516 = vmatpush1.bf16.msra.mxu0 0
      %4517 = vmatprep.subr.bf16.mxu0 0
      %4518 = vmatpush1.bf16.msra.mxu0 0
      %4519 = vmatprep.subr.bf16.mxu0 0
      %4520 = vmatpush1.bf16.msra.mxu0 0
      %4521 = vmatprep.subr.bf16.mxu0 0
      %4522 = vmatpush1.bf16.msra.mxu0 0
      %4523 = vmatprep.subr.bf16.mxu0 0
      %4524 = vmatpush1.bf16.msra.mxu0 0
      %4525 = vmatprep.subr.bf16.mxu0 0
      %4526 = vmatpush1.bf16.msra.mxu0 %v4513
      %4527 = vmatprep.subr.bf16.mxu0 0
      %4528 = vmatpush1.bf16.msra.mxu0 %v4484
      %4529 = vmatprep.subr.bf16.mxu0 0
      %4530 = vmatpush1.bf16.msra.mxu0 %v4483
      %4531 = vmatprep.subr.bf16.mxu0 0
      %4532 = vmatpush2.bf16.msra.mxu0 0
      %4533 = vmatprep.subr.bf16.mxu0 0
      %4534 = vmatpush2.bf16.msra.mxu0 0
      %4535 = vmatprep.subr.bf16.mxu0 0
      %4536 = vmatpush2.bf16.msra.mxu0 0
      %4537 = vmatprep.subr.bf16.mxu0 0
      %4538 = vmatpush2.bf16.msra.mxu0 0
      %4539 = vmatprep.subr.bf16.mxu0 0
      %4540 = vmatpush2.bf16.msra.mxu0 0
      %4541 = vmatprep.subr.bf16.mxu0 0
      %4542 = vmatpush2.bf16.msra.mxu0 0
      %4543 = vmatprep.subr.bf16.mxu0 0
      %4544 = vmatpush2.bf16.msra.mxu0 0
      %4545 = vmatprep.subr.bf16.mxu0 0
      %4546 = vmatpush2.bf16.msra.mxu0 0
      %4547 = vmatprep.mubr.bf16.mxu0 0
      %4548 = vmatmul.mubr.bf16.gmra.mxu0 %v4489
      %v4549 = vpop.f32.mrf.mxu0
      %v4550 = vadd.f32 0.0, %v4549
      %v4551 = vpop.f32.mrf.mxu0
      %v4552 = vpop.f32.mrf.mxu0
      %v4553 = vadd.f32 0.0, %v4552
      %v4554 = vpop.f32.mrf.mxu0
      %4555 = vmatprep.mubr.bf16.mxu0 0
      %4556 = vmatmul.mubr.bf16.gmra.mxu0 %v4492
      %v4557 = vpop.f32.mrf.mxu0
      %v4558 = vadd.f32 0.0, %v4557
      %v4559 = vpop.f32.mrf.mxu0
      %v4560 = vpop.f32.mrf.mxu0
      %v4561 = vadd.f32 0.0, %v4560
      %v4562 = vpop.f32.mrf.mxu0
      %4563 = vmatprep.mubr.bf16.mxu0 0
      %4564 = vmatmul.mubr.bf16.gmra.mxu0 %v4495
      %v4565 = vpop.f32.mrf.mxu0
      %v4566 = vadd.f32 0.0, %v4565
      %v4567 = vpop.f32.mrf.mxu0
      %v4568 = vpop.f32.mrf.mxu0
      %v4569 = vadd.f32 0.0, %v4568
      %v4570 = vpop.f32.mrf.mxu0
      %4571 = vmatprep.mubr.bf16.mxu0 0
      %4572 = vmatmul.mubr.bf16.gmra.mxu0 %v4498
      %v4573 = vpop.f32.mrf.mxu0
      %v4574 = vadd.f32 0.0, %v4573
      %v4575 = vpop.f32.mrf.mxu0
      %v4576 = vpop.f32.mrf.mxu0
      %v4577 = vadd.f32 0.0, %v4576
      %v4578 = vpop.f32.mrf.mxu0
      %4579 = vmatprep.mubr.bf16.mxu0 0
      %4580 = vmatmul.mubr.bf16.gmra.mxu0 %v4501
      %v4581 = vpop.f32.mrf.mxu0
      %v4582 = vadd.f32 0.0, %v4581
      %v4583 = vpop.f32.mrf.mxu0
      %v4584 = vpop.f32.mrf.mxu0
      %v4585 = vadd.f32 0.0, %v4584
      %v4586 = vpop.f32.mrf.mxu0
      %4587 = vmatprep.mubr.bf16.mxu0 0
      %4588 = vmatmul.mubr.bf16.gmra.mxu0 %v4504
      %v4589 = vpop.f32.mrf.mxu0
      %v4590 = vadd.f32 0.0, %v4589
      %v4591 = vpop.f32.mrf.mxu0
      %v4592 = vpop.f32.mrf.mxu0
      %v4593 = vadd.f32 0.0, %v4592
      %v4594 = vpop.f32.mrf.mxu0
      %4595 = vmatprep.mubr.bf16.mxu0 0
      %4596 = vmatmul.mubr.bf16.gmra.mxu0 %v4507
      %v4597 = vpop.f32.mrf.mxu0
      %v4598 = vadd.f32 0.0, %v4597
      %v4599 = vpop.f32.mrf.mxu0
      %v4600 = vpop.f32.mrf.mxu0
      %v4601 = vadd.f32 0.0, %v4600
      %v4602 = vpop.f32.mrf.mxu0
      %4603 = vmatprep.mubr.bf16.mxu0 0
      %4604 = vmatmul.mubr.bf16.gmra.mxu0 %v4510
      %v4605 = vpop.f32.mrf.mxu0
      %v4606 = vadd.f32 0.0, %v4605
      %v4607 = vpop.f32.mrf.mxu0
      %v4608 = vpop.f32.mrf.mxu0
      %v4609 = vadd.f32 0.0, %v4608
      %v4610 = vpop.f32.mrf.mxu0
      %4611 = vdwg.mxu0
      %v4612 = vadd.f32 %v4428, %v4550
      %v4613 = vadd.f32 %v4429, %v4553
      %v4614 = vadd.f32 %v4430, %v4558
      %v4615 = vadd.f32 %v4431, %v4561
      %v4616 = vadd.f32 %v4432, %v4566
      %v4617 = vadd.f32 %v4433, %v4569
      %v4618 = vadd.f32 %v4434, %v4574
      %v4619 = vadd.f32 %v4435, %v4577
      %v4620 = vadd.f32 %v4436, %v4582
      %v4621 = vadd.f32 %v4437, %v4585
      %v4622 = vadd.f32 %v4438, %v4590
      %v4623 = vadd.f32 %v4439, %v4593
      %v4624 = vadd.f32 %v4440, %v4598
      %v4625 = vadd.f32 %v4441, %v4601
      %v4626 = vadd.f32 %v4442, %v4606
      %v4627 = vadd.f32 %v4443, %v4609
      %v4628 = vld [vmem:[%s476 + $0x1] sm:$0xff]
      %v4629 = vld [vmem:[%s476 + $0x9] sm:$0xff]
      %v4630 = vld [vmem:[%s476 + $0x19] sm:$0xff]
      %v4631 = vld [vmem:[%s476 + $0x21] sm:$0xff]
      %v4632 = vld [vmem:[%s476 + $0x31] sm:$0xff]
      %v4633 = vld [vmem:[%s476 + $0x39] sm:$0xff]
      %v4634 = vld [vmem:[%s476 + $0x49] sm:$0xff]
      %v4635 = vld [vmem:[%s476 + $0x51] sm:$0xff]
      %v4636 = vld [vmem:[%s476 + $0x61] sm:$0xff]
      %v4637 = vld [vmem:[%s476 + $0x69] sm:$0xff]
      %v4638 = vld [vmem:[%s476 + $0x79] sm:$0xff]
      %v4639 = vld [vmem:[%s476 + $0x81] sm:$0xff]
      %v4640 = vld [vmem:[%s476 + $0x91] sm:$0xff]
      %v4641 = vld [vmem:[%s476 + $0x99] sm:$0xff]
      %v4642 = vld [vmem:[%s476 + $0xa9] sm:$0xff]
      %v4643 = vld [vmem:[%s476 + $0xb1] sm:$0xff]
      %v4644 = vpack.c.bf16 %v4629, %v4628
      %v4645 = vpack.c.bf16 %v4631, %v4630
      %v4646 = vpack.c.bf16 %v4633, %v4632
      %v4647 = vpack.c.bf16 %v4635, %v4634
      %v4648 = vpack.c.bf16 %v4637, %v4636
      %v4649 = vpack.c.bf16 %v4639, %v4638
      %v4650 = vpack.c.bf16 %v4641, %v4640
      %v4651 = vpack.c.bf16 %v4643, %v4642
      %v4652 = vld [vmem:[%s1242] sm:$0xf]
      %v4653 = vld [vmem:[%s1242 + $0x4] sm:$0xf]
      %v4654 = vld [vmem:[%s1242 + $0x8] sm:$0xf]
      %v4655 = vld [vmem:[%s1242 + $0xc] sm:$0xf]
      %v4656 = vld [vmem:[%s1242 + $0x10] sm:$0x3]
      %v4662 = vunpack.c.l.b16 %v4652
      %v4663 = vunpack.c.l.b16 %v4653
      %v4664 = vunpack.c.l.b16 %v4654
      %v4665 = vunpack.c.l.b16 %v4655
      %v4666 = vunpack.c.l.b16 %v4656
      %v4667 = vpack.c.b16 %v4663, %v4662
      %v4668 = vpack.c.b16 %v4665, %v4664
      %v4669 = vpack.c.b16 %v4666, %v4666
      %v4673 = vsel %vm583, %v4644, 0
      %v4676 = vsel %vm583, %v4645, 0
      %v4679 = vsel %vm583, %v4646, 0
      %v4682 = vsel %vm583, %v4647, 0
      %v4685 = vsel %vm583, %v4648, 0
      %v4688 = vsel %vm583, %v4649, 0
      %v4691 = vsel %vm583, %v4650, 0
      %v4694 = vsel %vm583, %v4651, 0
      %v4697 = vsel %vm608, %v4669, 0
      %4699 = vmatprep.subr.bf16.mxu0 0
      %4700 = vmatpush1.bf16.msra.mxu0 0
      %4701 = vmatprep.subr.bf16.mxu0 0
      %4702 = vmatpush1.bf16.msra.mxu0 0
      %4703 = vmatprep.subr.bf16.mxu0 0
      %4704 = vmatpush1.bf16.msra.mxu0 0
      %4705 = vmatprep.subr.bf16.mxu0 0
      %4706 = vmatpush1.bf16.msra.mxu0 0
      %4707 = vmatprep.subr.bf16.mxu0 0
      %4708 = vmatpush1.bf16.msra.mxu0 0
      %4709 = vmatprep.subr.bf16.mxu0 0
      %4710 = vmatpush1.bf16.msra.mxu0 %v4697
      %4711 = vmatprep.subr.bf16.mxu0 0
      %4712 = vmatpush1.bf16.msra.mxu0 %v4668
      %4713 = vmatprep.subr.bf16.mxu0 0
      %4714 = vmatpush1.bf16.msra.mxu0 %v4667
      %4715 = vmatprep.subr.bf16.mxu0 0
      %4716 = vmatpush2.bf16.msra.mxu0 0
      %4717 = vmatprep.subr.bf16.mxu0 0
      %4718 = vmatpush2.bf16.msra.mxu0 0
      %4719 = vmatprep.subr.bf16.mxu0 0
      %4720 = vmatpush2.bf16.msra.mxu0 0
      %4721 = vmatprep.subr.bf16.mxu0 0
      %4722 = vmatpush2.bf16.msra.mxu0 0
      %4723 = vmatprep.subr.bf16.mxu0 0
      %4724 = vmatpush2.bf16.msra.mxu0 0
      %4725 = vmatprep.subr.bf16.mxu0 0
      %4726 = vmatpush2.bf16.msra.mxu0 0
      %4727 = vmatprep.subr.bf16.mxu0 0
      %4728 = vmatpush2.bf16.msra.mxu0 0
      %4729 = vmatprep.subr.bf16.mxu0 0
      %4730 = vmatpush2.bf16.msra.mxu0 0
      %4731 = vmatprep.mubr.bf16.mxu0 0
      %4732 = vmatmul.mubr.bf16.gmra.mxu0 %v4673
      %v4733 = vpop.f32.mrf.mxu0
      %v4734 = vadd.f32 0.0, %v4733
      %v4735 = vpop.f32.mrf.mxu0
      %v4736 = vpop.f32.mrf.mxu0
      %v4737 = vadd.f32 0.0, %v4736
      %v4738 = vpop.f32.mrf.mxu0
      %4739 = vmatprep.mubr.bf16.mxu0 0
      %4740 = vmatmul.mubr.bf16.gmra.mxu0 %v4676
      %v4741 = vpop.f32.mrf.mxu0
      %v4742 = vadd.f32 0.0, %v4741
      %v4743 = vpop.f32.mrf.mxu0
      %v4744 = vpop.f32.mrf.mxu0
      %v4745 = vadd.f32 0.0, %v4744
      %v4746 = vpop.f32.mrf.mxu0
      %4747 = vmatprep.mubr.bf16.mxu0 0
      %4748 = vmatmul.mubr.bf16.gmra.mxu0 %v4679
      %v4749 = vpop.f32.mrf.mxu0
      %v4750 = vadd.f32 0.0, %v4749
      %v4751 = vpop.f32.mrf.mxu0
      %v4752 = vpop.f32.mrf.mxu0
      %v4753 = vadd.f32 0.0, %v4752
      %v4754 = vpop.f32.mrf.mxu0
      %4755 = vmatprep.mubr.bf16.mxu0 0
      %4756 = vmatmul.mubr.bf16.gmra.mxu0 %v4682
      %v4757 = vpop.f32.mrf.mxu0
      %v4758 = vadd.f32 0.0, %v4757
      %v4759 = vpop.f32.mrf.mxu0
      %v4760 = vpop.f32.mrf.mxu0
      %v4761 = vadd.f32 0.0, %v4760
      %v4762 = vpop.f32.mrf.mxu0
      %4763 = vmatprep.mubr.bf16.mxu0 0
      %4764 = vmatmul.mubr.bf16.gmra.mxu0 %v4685
      %v4765 = vpop.f32.mrf.mxu0
      %v4766 = vadd.f32 0.0, %v4765
      %v4767 = vpop.f32.mrf.mxu0
      %v4768 = vpop.f32.mrf.mxu0
      %v4769 = vadd.f32 0.0, %v4768
      %v4770 = vpop.f32.mrf.mxu0
      %4771 = vmatprep.mubr.bf16.mxu0 0
      %4772 = vmatmul.mubr.bf16.gmra.mxu0 %v4688
      %v4773 = vpop.f32.mrf.mxu0
      %v4774 = vadd.f32 0.0, %v4773
      %v4775 = vpop.f32.mrf.mxu0
      %v4776 = vpop.f32.mrf.mxu0
      %v4777 = vadd.f32 0.0, %v4776
      %v4778 = vpop.f32.mrf.mxu0
      %4779 = vmatprep.mubr.bf16.mxu0 0
      %4780 = vmatmul.mubr.bf16.gmra.mxu0 %v4691
      %v4781 = vpop.f32.mrf.mxu0
      %v4782 = vadd.f32 0.0, %v4781
      %v4783 = vpop.f32.mrf.mxu0
      %v4784 = vpop.f32.mrf.mxu0
      %v4785 = vadd.f32 0.0, %v4784
      %v4786 = vpop.f32.mrf.mxu0
      %4787 = vmatprep.mubr.bf16.mxu0 0
      %4788 = vmatmul.mubr.bf16.gmra.mxu0 %v4694
      %v4789 = vpop.f32.mrf.mxu0
      %v4790 = vadd.f32 0.0, %v4789
      %v4791 = vpop.f32.mrf.mxu0
      %v4792 = vpop.f32.mrf.mxu0
      %v4793 = vadd.f32 0.0, %v4792
      %v4794 = vpop.f32.mrf.mxu0
      %4795 = vdwg.mxu0
      %v4796 = vadd.f32 %v4612, %v4734
      %v4797 = vadd.f32 %v4613, %v4737
      %v4798 = vadd.f32 %v4614, %v4742
      %v4799 = vadd.f32 %v4615, %v4745
      %v4800 = vadd.f32 %v4616, %v4750
      %v4801 = vadd.f32 %v4617, %v4753
      %v4802 = vadd.f32 %v4618, %v4758
      %v4803 = vadd.f32 %v4619, %v4761
      %v4804 = vadd.f32 %v4620, %v4766
      %v4805 = vadd.f32 %v4621, %v4769
      %v4806 = vadd.f32 %v4622, %v4774
      %v4807 = vadd.f32 %v4623, %v4777
      %v4808 = vadd.f32 %v4624, %v4782
      %v4809 = vadd.f32 %v4625, %v4785
      %v4810 = vadd.f32 %v4626, %v4790
      %v4811 = vadd.f32 %v4627, %v4793
      %v4812 = vld [vmem:[%s476 + $0x2] sm:$0xff]
      %v4813 = vld [vmem:[%s476 + $0xa] sm:$0xff]
      %v4814 = vld [vmem:[%s476 + $0x1a] sm:$0xff]
      %v4815 = vld [vmem:[%s476 + $0x22] sm:$0xff]
      %v4816 = vld [vmem:[%s476 + $0x32] sm:$0xff]
      %v4817 = vld [vmem:[%s476 + $0x3a] sm:$0xff]
      %v4818 = vld [vmem:[%s476 + $0x4a] sm:$0xff]
      %v4819 = vld [vmem:[%s476 + $0x52] sm:$0xff]
      %v4820 = vld [vmem:[%s476 + $0x62] sm:$0xff]
      %v4821 = vld [vmem:[%s476 + $0x6a] sm:$0xff]
      %v4822 = vld [vmem:[%s476 + $0x7a] sm:$0xff]
      %v4823 = vld [vmem:[%s476 + $0x82] sm:$0xff]
      %v4824 = vld [vmem:[%s476 + $0x92] sm:$0xff]
      %v4825 = vld [vmem:[%s476 + $0x9a] sm:$0xff]
      %v4826 = vld [vmem:[%s476 + $0xaa] sm:$0xff]
      %v4827 = vld [vmem:[%s476 + $0xb2] sm:$0xff]
      %v4828 = vpack.c.bf16 %v4813, %v4812
      %v4829 = vpack.c.bf16 %v4815, %v4814
      %v4830 = vpack.c.bf16 %v4817, %v4816
      %v4831 = vpack.c.bf16 %v4819, %v4818
      %v4832 = vpack.c.bf16 %v4821, %v4820
      %v4833 = vpack.c.bf16 %v4823, %v4822
      %v4834 = vpack.c.bf16 %v4825, %v4824
      %v4835 = vpack.c.bf16 %v4827, %v4826
      %v4836 = vld [vmem:[%s1427] sm:$0xf]
      %v4837 = vld [vmem:[%s1427 + $0x4] sm:$0xf]
      %v4838 = vld [vmem:[%s1427 + $0x8] sm:$0xf]
      %v4839 = vld [vmem:[%s1427 + $0xc] sm:$0xf]
      %v4840 = vld [vmem:[%s1427 + $0x10] sm:$0x3]
      %v4846 = vunpack.c.l.b16 %v4836
      %v4847 = vunpack.c.l.b16 %v4837
      %v4848 = vunpack.c.l.b16 %v4838
      %v4849 = vunpack.c.l.b16 %v4839
      %v4850 = vunpack.c.l.b16 %v4840
      %v4851 = vpack.c.b16 %v4847, %v4846
      %v4852 = vpack.c.b16 %v4849, %v4848
      %v4853 = vpack.c.b16 %v4850, %v4850
      %v4857 = vsel %vm583, %v4828, 0
      %v4860 = vsel %vm583, %v4829, 0
      %v4863 = vsel %vm583, %v4830, 0
      %v4866 = vsel %vm583, %v4831, 0
      %v4869 = vsel %vm583, %v4832, 0
      %v4872 = vsel %vm583, %v4833, 0
      %v4875 = vsel %vm583, %v4834, 0
      %v4878 = vsel %vm583, %v4835, 0
      %v4881 = vsel %vm608, %v4853, 0
      %4883 = vmatprep.subr.bf16.mxu0 0
      %4884 = vmatpush1.bf16.msra.mxu0 0
      %4885 = vmatprep.subr.bf16.mxu0 0
      %4886 = vmatpush1.bf16.msra.mxu0 0
      %4887 = vmatprep.subr.bf16.mxu0 0
      %4888 = vmatpush1.bf16.msra.mxu0 0
      %4889 = vmatprep.subr.bf16.mxu0 0
      %4890 = vmatpush1.bf16.msra.mxu0 0
      %4891 = vmatprep.subr.bf16.mxu0 0
      %4892 = vmatpush1.bf16.msra.mxu0 0
      %4893 = vmatprep.subr.bf16.mxu0 0
      %4894 = vmatpush1.bf16.msra.mxu0 %v4881
      %4895 = vmatprep.subr.bf16.mxu0 0
      %4896 = vmatpush1.bf16.msra.mxu0 %v4852
      %4897 = vmatprep.subr.bf16.mxu0 0
      %4898 = vmatpush1.bf16.msra.mxu0 %v4851
      %4899 = vmatprep.subr.bf16.mxu0 0
      %4900 = vmatpush2.bf16.msra.mxu0 0
      %4901 = vmatprep.subr.bf16.mxu0 0
      %4902 = vmatpush2.bf16.msra.mxu0 0
      %4903 = vmatprep.subr.bf16.mxu0 0
      %4904 = vmatpush2.bf16.msra.mxu0 0
      %4905 = vmatprep.subr.bf16.mxu0 0
      %4906 = vmatpush2.bf16.msra.mxu0 0
      %4907 = vmatprep.subr.bf16.mxu0 0
      %4908 = vmatpush2.bf16.msra.mxu0 0
      %4909 = vmatprep.subr.bf16.mxu0 0
      %4910 = vmatpush2.bf16.msra.mxu0 0
      %4911 = vmatprep.subr.bf16.mxu0 0
      %4912 = vmatpush2.bf16.msra.mxu0 0
      %4913 = vmatprep.subr.bf16.mxu0 0
      %4914 = vmatpush2.bf16.msra.mxu0 0
      %4915 = vmatprep.mubr.bf16.mxu0 0
      %4916 = vmatmul.mubr.bf16.gmra.mxu0 %v4857
      %v4917 = vpop.f32.mrf.mxu0
      %v4918 = vadd.f32 0.0, %v4917
      %v4919 = vpop.f32.mrf.mxu0
      %v4920 = vpop.f32.mrf.mxu0
      %v4921 = vadd.f32 0.0, %v4920
      %v4922 = vpop.f32.mrf.mxu0
      %4923 = vmatprep.mubr.bf16.mxu0 0
      %4924 = vmatmul.mubr.bf16.gmra.mxu0 %v4860
      %v4925 = vpop.f32.mrf.mxu0
      %v4926 = vadd.f32 0.0, %v4925
      %v4927 = vpop.f32.mrf.mxu0
      %v4928 = vpop.f32.mrf.mxu0
      %v4929 = vadd.f32 0.0, %v4928
      %v4930 = vpop.f32.mrf.mxu0
      %4931 = vmatprep.mubr.bf16.mxu0 0
      %4932 = vmatmul.mubr.bf16.gmra.mxu0 %v4863
      %v4933 = vpop.f32.mrf.mxu0
      %v4934 = vadd.f32 0.0, %v4933
      %v4935 = vpop.f32.mrf.mxu0
      %v4936 = vpop.f32.mrf.mxu0
      %v4937 = vadd.f32 0.0, %v4936
      %v4938 = vpop.f32.mrf.mxu0
      %4939 = vmatprep.mubr.bf16.mxu0 0
      %4940 = vmatmul.mubr.bf16.gmra.mxu0 %v4866
      %v4941 = vpop.f32.mrf.mxu0
      %v4942 = vadd.f32 0.0, %v4941
      %v4943 = vpop.f32.mrf.mxu0
      %v4944 = vpop.f32.mrf.mxu0
      %v4945 = vadd.f32 0.0, %v4944
      %v4946 = vpop.f32.mrf.mxu0
      %4947 = vmatprep.mubr.bf16.mxu0 0
      %4948 = vmatmul.mubr.bf16.gmra.mxu0 %v4869
      %v4949 = vpop.f32.mrf.mxu0
      %v4950 = vadd.f32 0.0, %v4949
      %v4951 = vpop.f32.mrf.mxu0
      %v4952 = vpop.f32.mrf.mxu0
      %v4953 = vadd.f32 0.0, %v4952
      %v4954 = vpop.f32.mrf.mxu0
      %4955 = vmatprep.mubr.bf16.mxu0 0
      %4956 = vmatmul.mubr.bf16.gmra.mxu0 %v4872
      %v4957 = vpop.f32.mrf.mxu0
      %v4958 = vadd.f32 0.0, %v4957
      %v4959 = vpop.f32.mrf.mxu0
      %v4960 = vpop.f32.mrf.mxu0
      %v4961 = vadd.f32 0.0, %v4960
      %v4962 = vpop.f32.mrf.mxu0
      %4963 = vmatprep.mubr.bf16.mxu0 0
      %4964 = vmatmul.mubr.bf16.gmra.mxu0 %v4875
      %v4965 = vpop.f32.mrf.mxu0
      %v4966 = vadd.f32 0.0, %v4965
      %v4967 = vpop.f32.mrf.mxu0
      %v4968 = vpop.f32.mrf.mxu0
      %v4969 = vadd.f32 0.0, %v4968
      %v4970 = vpop.f32.mrf.mxu0
      %4971 = vmatprep.mubr.bf16.mxu0 0
      %4972 = vmatmul.mubr.bf16.gmra.mxu0 %v4878
      %v4973 = vpop.f32.mrf.mxu0
      %v4974 = vadd.f32 0.0, %v4973
      %v4975 = vpop.f32.mrf.mxu0
      %v4976 = vpop.f32.mrf.mxu0
      %v4977 = vadd.f32 0.0, %v4976
      %v4978 = vpop.f32.mrf.mxu0
      %4979 = vdwg.mxu0
      %v4980 = vadd.f32 %v4796, %v4918
      %v4981 = vadd.f32 %v4797, %v4921
      %v4982 = vadd.f32 %v4798, %v4926
      %v4983 = vadd.f32 %v4799, %v4929
      %v4984 = vadd.f32 %v4800, %v4934
      %v4985 = vadd.f32 %v4801, %v4937
      %v4986 = vadd.f32 %v4802, %v4942
      %v4987 = vadd.f32 %v4803, %v4945
      %v4988 = vadd.f32 %v4804, %v4950
      %v4989 = vadd.f32 %v4805, %v4953
      %v4990 = vadd.f32 %v4806, %v4958
      %v4991 = vadd.f32 %v4807, %v4961
      %v4992 = vadd.f32 %v4808, %v4966
      %v4993 = vadd.f32 %v4809, %v4969
      %v4994 = vadd.f32 %v4810, %v4974
      %v4995 = vadd.f32 %v4811, %v4977
      %s4996 = scalar_lea.vmem [#allocation2], 480
      %v4997 = vld [vmem:[%s4996] sm:$0xff]
      %v4998 = vld [vmem:[%s4996 + $0x8] sm:$0xff]
      %v4999 = vld [vmem:[%s4996 + $0x18] sm:$0xff]
      %v5000 = vld [vmem:[%s4996 + $0x20] sm:$0xff]
      %v5001 = vld [vmem:[%s4996 + $0x30] sm:$0xff]
      %v5002 = vld [vmem:[%s4996 + $0x38] sm:$0xff]
      %v5003 = vld [vmem:[%s4996 + $0x48] sm:$0xff]
      %v5004 = vld [vmem:[%s4996 + $0x50] sm:$0xff]
      %v5005 = vld [vmem:[%s4996 + $0x60] sm:$0xff]
      %v5006 = vld [vmem:[%s4996 + $0x68] sm:$0xff]
      %v5007 = vld [vmem:[%s4996 + $0x78] sm:$0xff]
      %v5008 = vld [vmem:[%s4996 + $0x80] sm:$0xff]
      %v5009 = vld [vmem:[%s4996 + $0x90] sm:$0xff]
      %v5010 = vld [vmem:[%s4996 + $0x98] sm:$0xff]
      %v5011 = vld [vmem:[%s4996 + $0xa8] sm:$0xff]
      %v5012 = vld [vmem:[%s4996 + $0xb0] sm:$0xff]
      %v5013 = vpack.c.bf16 %v4998, %v4997
      %v5014 = vpack.c.bf16 %v5000, %v4999
      %v5015 = vpack.c.bf16 %v5002, %v5001
      %v5016 = vpack.c.bf16 %v5004, %v5003
      %v5017 = vpack.c.bf16 %v5006, %v5005
      %v5018 = vpack.c.bf16 %v5008, %v5007
      %v5019 = vpack.c.bf16 %v5010, %v5009
      %v5020 = vpack.c.bf16 %v5012, %v5011
      %v5021 = vld [vmem:[%s1613] sm:$0xf]
      %v5022 = vld [vmem:[%s1613 + $0x4] sm:$0xf]
      %v5023 = vld [vmem:[%s1613 + $0x8] sm:$0xf]
      %v5024 = vld [vmem:[%s1613 + $0xc] sm:$0xf]
      %v5025 = vld [vmem:[%s1613 + $0x10] sm:$0x3]
      %v5031 = vunpack.c.l.b16 %v5021
      %v5032 = vunpack.c.l.b16 %v5022
      %v5033 = vunpack.c.l.b16 %v5023
      %v5034 = vunpack.c.l.b16 %v5024
      %v5035 = vunpack.c.l.b16 %v5025
      %v5036 = vpack.c.b16 %v5032, %v5031
      %v5037 = vpack.c.b16 %v5034, %v5033
      %v5038 = vpack.c.b16 %v5035, %v5035
      %v5042 = vsel %vm583, %v5013, 0
      %v5045 = vsel %vm583, %v5014, 0
      %v5048 = vsel %vm583, %v5015, 0
      %v5051 = vsel %vm583, %v5016, 0
      %v5054 = vsel %vm583, %v5017, 0
      %v5057 = vsel %vm583, %v5018, 0
      %v5060 = vsel %vm583, %v5019, 0
      %v5063 = vsel %vm583, %v5020, 0
      %v5066 = vsel %vm608, %v5038, 0
      %5068 = vmatprep.subr.bf16.mxu0 0
      %5069 = vmatpush1.bf16.msra.mxu0 0
      %5070 = vmatprep.subr.bf16.mxu0 0
      %5071 = vmatpush1.bf16.msra.mxu0 0
      %5072 = vmatprep.subr.bf16.mxu0 0
      %5073 = vmatpush1.bf16.msra.mxu0 0
      %5074 = vmatprep.subr.bf16.mxu0 0
      %5075 = vmatpush1.bf16.msra.mxu0 0
      %5076 = vmatprep.subr.bf16.mxu0 0
      %5077 = vmatpush1.bf16.msra.mxu0 0
      %5078 = vmatprep.subr.bf16.mxu0 0
      %5079 = vmatpush1.bf16.msra.mxu0 %v5066
      %5080 = vmatprep.subr.bf16.mxu0 0
      %5081 = vmatpush1.bf16.msra.mxu0 %v5037
      %5082 = vmatprep.subr.bf16.mxu0 0
      %5083 = vmatpush1.bf16.msra.mxu0 %v5036
      %5084 = vmatprep.subr.bf16.mxu0 0
      %5085 = vmatpush2.bf16.msra.mxu0 0
      %5086 = vmatprep.subr.bf16.mxu0 0
      %5087 = vmatpush2.bf16.msra.mxu0 0
      %5088 = vmatprep.subr.bf16.mxu0 0
      %5089 = vmatpush2.bf16.msra.mxu0 0
      %5090 = vmatprep.subr.bf16.mxu0 0
      %5091 = vmatpush2.bf16.msra.mxu0 0
      %5092 = vmatprep.subr.bf16.mxu0 0
      %5093 = vmatpush2.bf16.msra.mxu0 0
      %5094 = vmatprep.subr.bf16.mxu0 0
      %5095 = vmatpush2.bf16.msra.mxu0 0
      %5096 = vmatprep.subr.bf16.mxu0 0
      %5097 = vmatpush2.bf16.msra.mxu0 0
      %5098 = vmatprep.subr.bf16.mxu0 0
      %5099 = vmatpush2.bf16.msra.mxu0 0
      %5100 = vmatprep.mubr.bf16.mxu0 0
      %5101 = vmatmul.mubr.bf16.gmra.mxu0 %v5042
      %v5102 = vpop.f32.mrf.mxu0
      %v5103 = vadd.f32 0.0, %v5102
      %v5104 = vpop.f32.mrf.mxu0
      %v5105 = vpop.f32.mrf.mxu0
      %v5106 = vadd.f32 0.0, %v5105
      %v5107 = vpop.f32.mrf.mxu0
      %5108 = vmatprep.mubr.bf16.mxu0 0
      %5109 = vmatmul.mubr.bf16.gmra.mxu0 %v5045
      %v5110 = vpop.f32.mrf.mxu0
      %v5111 = vadd.f32 0.0, %v5110
      %v5112 = vpop.f32.mrf.mxu0
      %v5113 = vpop.f32.mrf.mxu0
      %v5114 = vadd.f32 0.0, %v5113
      %v5115 = vpop.f32.mrf.mxu0
      %5116 = vmatprep.mubr.bf16.mxu0 0
      %5117 = vmatmul.mubr.bf16.gmra.mxu0 %v5048
      %v5118 = vpop.f32.mrf.mxu0
      %v5119 = vadd.f32 0.0, %v5118
      %v5120 = vpop.f32.mrf.mxu0
      %v5121 = vpop.f32.mrf.mxu0
      %v5122 = vadd.f32 0.0, %v5121
      %v5123 = vpop.f32.mrf.mxu0
      %5124 = vmatprep.mubr.bf16.mxu0 0
      %5125 = vmatmul.mubr.bf16.gmra.mxu0 %v5051
      %v5126 = vpop.f32.mrf.mxu0
      %v5127 = vadd.f32 0.0, %v5126
      %v5128 = vpop.f32.mrf.mxu0
      %v5129 = vpop.f32.mrf.mxu0
      %v5130 = vadd.f32 0.0, %v5129
      %v5131 = vpop.f32.mrf.mxu0
      %5132 = vmatprep.mubr.bf16.mxu0 0
      %5133 = vmatmul.mubr.bf16.gmra.mxu0 %v5054
      %v5134 = vpop.f32.mrf.mxu0
      %v5135 = vadd.f32 0.0, %v5134
      %v5136 = vpop.f32.mrf.mxu0
      %v5137 = vpop.f32.mrf.mxu0
      %v5138 = vadd.f32 0.0, %v5137
      %v5139 = vpop.f32.mrf.mxu0
      %5140 = vmatprep.mubr.bf16.mxu0 0
      %5141 = vmatmul.mubr.bf16.gmra.mxu0 %v5057
      %v5142 = vpop.f32.mrf.mxu0
      %v5143 = vadd.f32 0.0, %v5142
      %v5144 = vpop.f32.mrf.mxu0
      %v5145 = vpop.f32.mrf.mxu0
      %v5146 = vadd.f32 0.0, %v5145
      %v5147 = vpop.f32.mrf.mxu0
      %5148 = vmatprep.mubr.bf16.mxu0 0
      %5149 = vmatmul.mubr.bf16.gmra.mxu0 %v5060
      %v5150 = vpop.f32.mrf.mxu0
      %v5151 = vadd.f32 0.0, %v5150
      %v5152 = vpop.f32.mrf.mxu0
      %v5153 = vpop.f32.mrf.mxu0
      %v5154 = vadd.f32 0.0, %v5153
      %v5155 = vpop.f32.mrf.mxu0
      %5156 = vmatprep.mubr.bf16.mxu0 0
      %5157 = vmatmul.mubr.bf16.gmra.mxu0 %v5063
      %v5158 = vpop.f32.mrf.mxu0
      %v5159 = vadd.f32 0.0, %v5158
      %v5160 = vpop.f32.mrf.mxu0
      %v5161 = vpop.f32.mrf.mxu0
      %v5162 = vadd.f32 0.0, %v5161
      %v5163 = vpop.f32.mrf.mxu0
      %5164 = vdwg.mxu0
      %v5165 = vadd.f32 %v4980, %v5103
      %v5166 = vadd.f32 %v4981, %v5106
      %v5167 = vadd.f32 %v4982, %v5111
      %v5168 = vadd.f32 %v4983, %v5114
      %v5169 = vadd.f32 %v4984, %v5119
      %v5170 = vadd.f32 %v4985, %v5122
      %v5171 = vadd.f32 %v4986, %v5127
      %v5172 = vadd.f32 %v4987, %v5130
      %v5173 = vadd.f32 %v4988, %v5135
      %v5174 = vadd.f32 %v4989, %v5138
      %v5175 = vadd.f32 %v4990, %v5143
      %v5176 = vadd.f32 %v4991, %v5146
      %v5177 = vadd.f32 %v4992, %v5151
      %v5178 = vadd.f32 %v4993, %v5154
      %v5179 = vadd.f32 %v4994, %v5159
      %v5180 = vadd.f32 %v4995, %v5162
      %v5181 = vld [vmem:[%s4996 + $0x1] sm:$0xff]
      %v5182 = vld [vmem:[%s4996 + $0x9] sm:$0xff]
      %v5183 = vld [vmem:[%s4996 + $0x19] sm:$0xff]
      %v5184 = vld [vmem:[%s4996 + $0x21] sm:$0xff]
      %v5185 = vld [vmem:[%s4996 + $0x31] sm:$0xff]
      %v5186 = vld [vmem:[%s4996 + $0x39] sm:$0xff]
      %v5187 = vld [vmem:[%s4996 + $0x49] sm:$0xff]
      %v5188 = vld [vmem:[%s4996 + $0x51] sm:$0xff]
      %v5189 = vld [vmem:[%s4996 + $0x61] sm:$0xff]
      %v5190 = vld [vmem:[%s4996 + $0x69] sm:$0xff]
      %v5191 = vld [vmem:[%s4996 + $0x79] sm:$0xff]
      %v5192 = vld [vmem:[%s4996 + $0x81] sm:$0xff]
      %v5193 = vld [vmem:[%s4996 + $0x91] sm:$0xff]
      %v5194 = vld [vmem:[%s4996 + $0x99] sm:$0xff]
      %v5195 = vld [vmem:[%s4996 + $0xa9] sm:$0xff]
      %v5196 = vld [vmem:[%s4996 + $0xb1] sm:$0xff]
      %v5197 = vpack.c.bf16 %v5182, %v5181
      %v5198 = vpack.c.bf16 %v5184, %v5183
      %v5199 = vpack.c.bf16 %v5186, %v5185
      %v5200 = vpack.c.bf16 %v5188, %v5187
      %v5201 = vpack.c.bf16 %v5190, %v5189
      %v5202 = vpack.c.bf16 %v5192, %v5191
      %v5203 = vpack.c.bf16 %v5194, %v5193
      %v5204 = vpack.c.bf16 %v5196, %v5195
      %v5205 = vld [vmem:[%s1798] sm:$0xf]
      %v5206 = vld [vmem:[%s1798 + $0x4] sm:$0xf]
      %v5207 = vld [vmem:[%s1798 + $0x8] sm:$0xf]
      %v5208 = vld [vmem:[%s1798 + $0xc] sm:$0xf]
      %v5209 = vld [vmem:[%s1798 + $0x10] sm:$0x3]
      %v5215 = vunpack.c.l.b16 %v5205
      %v5216 = vunpack.c.l.b16 %v5206
      %v5217 = vunpack.c.l.b16 %v5207
      %v5218 = vunpack.c.l.b16 %v5208
      %v5219 = vunpack.c.l.b16 %v5209
      %v5220 = vpack.c.b16 %v5216, %v5215
      %v5221 = vpack.c.b16 %v5218, %v5217
      %v5222 = vpack.c.b16 %v5219, %v5219
      %v5226 = vsel %vm583, %v5197, 0
      %v5229 = vsel %vm583, %v5198, 0
      %v5232 = vsel %vm583, %v5199, 0
      %v5235 = vsel %vm583, %v5200, 0
      %v5238 = vsel %vm583, %v5201, 0
      %v5241 = vsel %vm583, %v5202, 0
      %v5244 = vsel %vm583, %v5203, 0
      %v5247 = vsel %vm583, %v5204, 0
      %v5250 = vsel %vm608, %v5222, 0
      %5252 = vmatprep.subr.bf16.mxu0 0
      %5253 = vmatpush1.bf16.msra.mxu0 0
      %5254 = vmatprep.subr.bf16.mxu0 0
      %5255 = vmatpush1.bf16.msra.mxu0 0
      %5256 = vmatprep.subr.bf16.mxu0 0
      %5257 = vmatpush1.bf16.msra.mxu0 0
      %5258 = vmatprep.subr.bf16.mxu0 0
      %5259 = vmatpush1.bf16.msra.mxu0 0
      %5260 = vmatprep.subr.bf16.mxu0 0
      %5261 = vmatpush1.bf16.msra.mxu0 0
      %5262 = vmatprep.subr.bf16.mxu0 0
      %5263 = vmatpush1.bf16.msra.mxu0 %v5250
      %5264 = vmatprep.subr.bf16.mxu0 0
      %5265 = vmatpush1.bf16.msra.mxu0 %v5221
      %5266 = vmatprep.subr.bf16.mxu0 0
      %5267 = vmatpush1.bf16.msra.mxu0 %v5220
      %5268 = vmatprep.subr.bf16.mxu0 0
      %5269 = vmatpush2.bf16.msra.mxu0 0
      %5270 = vmatprep.subr.bf16.mxu0 0
      %5271 = vmatpush2.bf16.msra.mxu0 0
      %5272 = vmatprep.subr.bf16.mxu0 0
      %5273 = vmatpush2.bf16.msra.mxu0 0
      %5274 = vmatprep.subr.bf16.mxu0 0
      %5275 = vmatpush2.bf16.msra.mxu0 0
      %5276 = vmatprep.subr.bf16.mxu0 0
      %5277 = vmatpush2.bf16.msra.mxu0 0
      %5278 = vmatprep.subr.bf16.mxu0 0
      %5279 = vmatpush2.bf16.msra.mxu0 0
      %5280 = vmatprep.subr.bf16.mxu0 0
      %5281 = vmatpush2.bf16.msra.mxu0 0
      %5282 = vmatprep.subr.bf16.mxu0 0
      %5283 = vmatpush2.bf16.msra.mxu0 0
      %5284 = vmatprep.mubr.bf16.mxu0 0
      %5285 = vmatmul.mubr.bf16.gmra.mxu0 %v5226
      %v5286 = vpop.f32.mrf.mxu0
      %v5287 = vadd.f32 0.0, %v5286
      %v5288 = vpop.f32.mrf.mxu0
      %v5289 = vpop.f32.mrf.mxu0
      %v5290 = vadd.f32 0.0, %v5289
      %v5291 = vpop.f32.mrf.mxu0
      %5292 = vmatprep.mubr.bf16.mxu0 0
      %5293 = vmatmul.mubr.bf16.gmra.mxu0 %v5229
      %v5294 = vpop.f32.mrf.mxu0
      %v5295 = vadd.f32 0.0, %v5294
      %v5296 = vpop.f32.mrf.mxu0
      %v5297 = vpop.f32.mrf.mxu0
      %v5298 = vadd.f32 0.0, %v5297
      %v5299 = vpop.f32.mrf.mxu0
      %5300 = vmatprep.mubr.bf16.mxu0 0
      %5301 = vmatmul.mubr.bf16.gmra.mxu0 %v5232
      %v5302 = vpop.f32.mrf.mxu0
      %v5303 = vadd.f32 0.0, %v5302
      %v5304 = vpop.f32.mrf.mxu0
      %v5305 = vpop.f32.mrf.mxu0
      %v5306 = vadd.f32 0.0, %v5305
      %v5307 = vpop.f32.mrf.mxu0
      %5308 = vmatprep.mubr.bf16.mxu0 0
      %5309 = vmatmul.mubr.bf16.gmra.mxu0 %v5235
      %v5310 = vpop.f32.mrf.mxu0
      %v5311 = vadd.f32 0.0, %v5310
      %v5312 = vpop.f32.mrf.mxu0
      %v5313 = vpop.f32.mrf.mxu0
      %v5314 = vadd.f32 0.0, %v5313
      %v5315 = vpop.f32.mrf.mxu0
      %5316 = vmatprep.mubr.bf16.mxu0 0
      %5317 = vmatmul.mubr.bf16.gmra.mxu0 %v5238
      %v5318 = vpop.f32.mrf.mxu0
      %v5319 = vadd.f32 0.0, %v5318
      %v5320 = vpop.f32.mrf.mxu0
      %v5321 = vpop.f32.mrf.mxu0
      %v5322 = vadd.f32 0.0, %v5321
      %v5323 = vpop.f32.mrf.mxu0
      %5324 = vmatprep.mubr.bf16.mxu0 0
      %5325 = vmatmul.mubr.bf16.gmra.mxu0 %v5241
      %v5326 = vpop.f32.mrf.mxu0
      %v5327 = vadd.f32 0.0, %v5326
      %v5328 = vpop.f32.mrf.mxu0
      %v5329 = vpop.f32.mrf.mxu0
      %v5330 = vadd.f32 0.0, %v5329
      %v5331 = vpop.f32.mrf.mxu0
      %5332 = vmatprep.mubr.bf16.mxu0 0
      %5333 = vmatmul.mubr.bf16.gmra.mxu0 %v5244
      %v5334 = vpop.f32.mrf.mxu0
      %v5335 = vadd.f32 0.0, %v5334
      %v5336 = vpop.f32.mrf.mxu0
      %v5337 = vpop.f32.mrf.mxu0
      %v5338 = vadd.f32 0.0, %v5337
      %v5339 = vpop.f32.mrf.mxu0
      %5340 = vmatprep.mubr.bf16.mxu0 0
      %5341 = vmatmul.mubr.bf16.gmra.mxu0 %v5247
      %v5342 = vpop.f32.mrf.mxu0
      %v5343 = vadd.f32 0.0, %v5342
      %v5344 = vpop.f32.mrf.mxu0
      %v5345 = vpop.f32.mrf.mxu0
      %v5346 = vadd.f32 0.0, %v5345
      %v5347 = vpop.f32.mrf.mxu0
      %5348 = vdwg.mxu0
      %v5349 = vadd.f32 %v5165, %v5287
      %v5350 = vadd.f32 %v5166, %v5290
      %v5351 = vadd.f32 %v5167, %v5295
      %v5352 = vadd.f32 %v5168, %v5298
      %v5353 = vadd.f32 %v5169, %v5303
      %v5354 = vadd.f32 %v5170, %v5306
      %v5355 = vadd.f32 %v5171, %v5311
      %v5356 = vadd.f32 %v5172, %v5314
      %v5357 = vadd.f32 %v5173, %v5319
      %v5358 = vadd.f32 %v5174, %v5322
      %v5359 = vadd.f32 %v5175, %v5327
      %v5360 = vadd.f32 %v5176, %v5330
      %v5361 = vadd.f32 %v5177, %v5335
      %v5362 = vadd.f32 %v5178, %v5338
      %v5363 = vadd.f32 %v5179, %v5343
      %v5364 = vadd.f32 %v5180, %v5346
      %v5365 = vld [vmem:[%s4996 + $0x2] sm:$0xff]
      %v5366 = vld [vmem:[%s4996 + $0xa] sm:$0xff]
      %v5367 = vld [vmem:[%s4996 + $0x1a] sm:$0xff]
      %v5368 = vld [vmem:[%s4996 + $0x22] sm:$0xff]
      %v5369 = vld [vmem:[%s4996 + $0x32] sm:$0xff]
      %v5370 = vld [vmem:[%s4996 + $0x3a] sm:$0xff]
      %v5371 = vld [vmem:[%s4996 + $0x4a] sm:$0xff]
      %v5372 = vld [vmem:[%s4996 + $0x52] sm:$0xff]
      %v5373 = vld [vmem:[%s4996 + $0x62] sm:$0xff]
      %v5374 = vld [vmem:[%s4996 + $0x6a] sm:$0xff]
      %v5375 = vld [vmem:[%s4996 + $0x7a] sm:$0xff]
      %v5376 = vld [vmem:[%s4996 + $0x82] sm:$0xff]
      %v5377 = vld [vmem:[%s4996 + $0x92] sm:$0xff]
      %v5378 = vld [vmem:[%s4996 + $0x9a] sm:$0xff]
      %v5379 = vld [vmem:[%s4996 + $0xaa] sm:$0xff]
      %v5380 = vld [vmem:[%s4996 + $0xb2] sm:$0xff]
      %v5381 = vpack.c.bf16 %v5366, %v5365
      %v5382 = vpack.c.bf16 %v5368, %v5367
      %v5383 = vpack.c.bf16 %v5370, %v5369
      %v5384 = vpack.c.bf16 %v5372, %v5371
      %v5385 = vpack.c.bf16 %v5374, %v5373
      %v5386 = vpack.c.bf16 %v5376, %v5375
      %v5387 = vpack.c.bf16 %v5378, %v5377
      %v5388 = vpack.c.bf16 %v5380, %v5379
      %v5389 = vld [vmem:[%s1983] sm:$0xf]
      %v5390 = vld [vmem:[%s1983 + $0x4] sm:$0xf]
      %v5391 = vld [vmem:[%s1983 + $0x8] sm:$0xf]
      %v5392 = vld [vmem:[%s1983 + $0xc] sm:$0xf]
      %v5393 = vld [vmem:[%s1983 + $0x10] sm:$0x3]
      %v5399 = vunpack.c.l.b16 %v5389
      %v5400 = vunpack.c.l.b16 %v5390
      %v5401 = vunpack.c.l.b16 %v5391
      %v5402 = vunpack.c.l.b16 %v5392
      %v5403 = vunpack.c.l.b16 %v5393
      %v5404 = vpack.c.b16 %v5400, %v5399
      %v5405 = vpack.c.b16 %v5402, %v5401
      %v5406 = vpack.c.b16 %v5403, %v5403
      %v5410 = vsel %vm583, %v5381, 0
      %v5413 = vsel %vm583, %v5382, 0
      %v5416 = vsel %vm583, %v5383, 0
      %v5419 = vsel %vm583, %v5384, 0
      %v5422 = vsel %vm583, %v5385, 0
      %v5425 = vsel %vm583, %v5386, 0
      %v5428 = vsel %vm583, %v5387, 0
      %v5431 = vsel %vm583, %v5388, 0
      %v5434 = vsel %vm608, %v5406, 0
      %5436 = vmatprep.subr.bf16.mxu0 0
      %5437 = vmatpush1.bf16.msra.mxu0 0
      %5438 = vmatprep.subr.bf16.mxu0 0
      %5439 = vmatpush1.bf16.msra.mxu0 0
      %5440 = vmatprep.subr.bf16.mxu0 0
      %5441 = vmatpush1.bf16.msra.mxu0 0
      %5442 = vmatprep.subr.bf16.mxu0 0
      %5443 = vmatpush1.bf16.msra.mxu0 0
      %5444 = vmatprep.subr.bf16.mxu0 0
      %5445 = vmatpush1.bf16.msra.mxu0 0
      %5446 = vmatprep.subr.bf16.mxu0 0
      %5447 = vmatpush1.bf16.msra.mxu0 %v5434
      %5448 = vmatprep.subr.bf16.mxu0 0
      %5449 = vmatpush1.bf16.msra.mxu0 %v5405
      %5450 = vmatprep.subr.bf16.mxu0 0
      %5451 = vmatpush1.bf16.msra.mxu0 %v5404
      %5452 = vmatprep.subr.bf16.mxu0 0
      %5453 = vmatpush2.bf16.msra.mxu0 0
      %5454 = vmatprep.subr.bf16.mxu0 0
      %5455 = vmatpush2.bf16.msra.mxu0 0
      %5456 = vmatprep.subr.bf16.mxu0 0
      %5457 = vmatpush2.bf16.msra.mxu0 0
      %5458 = vmatprep.subr.bf16.mxu0 0
      %5459 = vmatpush2.bf16.msra.mxu0 0
      %5460 = vmatprep.subr.bf16.mxu0 0
      %5461 = vmatpush2.bf16.msra.mxu0 0
      %5462 = vmatprep.subr.bf16.mxu0 0
      %5463 = vmatpush2.bf16.msra.mxu0 0
      %5464 = vmatprep.subr.bf16.mxu0 0
      %5465 = vmatpush2.bf16.msra.mxu0 0
      %5466 = vmatprep.subr.bf16.mxu0 0
      %5467 = vmatpush2.bf16.msra.mxu0 0
      %5468 = vmatprep.mubr.bf16.mxu0 0
      %5469 = vmatmul.mubr.bf16.gmra.mxu0 %v5410
      %v5470 = vpop.f32.mrf.mxu0
      %v5471 = vadd.f32 0.0, %v5470
      %v5472 = vpop.f32.mrf.mxu0
      %v5473 = vpop.f32.mrf.mxu0
      %v5474 = vadd.f32 0.0, %v5473
      %v5475 = vpop.f32.mrf.mxu0
      %5476 = vmatprep.mubr.bf16.mxu0 0
      %5477 = vmatmul.mubr.bf16.gmra.mxu0 %v5413
      %v5478 = vpop.f32.mrf.mxu0
      %v5479 = vadd.f32 0.0, %v5478
      %v5480 = vpop.f32.mrf.mxu0
      %v5481 = vpop.f32.mrf.mxu0
      %v5482 = vadd.f32 0.0, %v5481
      %v5483 = vpop.f32.mrf.mxu0
      %5484 = vmatprep.mubr.bf16.mxu0 0
      %5485 = vmatmul.mubr.bf16.gmra.mxu0 %v5416
      %v5486 = vpop.f32.mrf.mxu0
      %v5487 = vadd.f32 0.0, %v5486
      %v5488 = vpop.f32.mrf.mxu0
      %v5489 = vpop.f32.mrf.mxu0
      %v5490 = vadd.f32 0.0, %v5489
      %v5491 = vpop.f32.mrf.mxu0
      %5492 = vmatprep.mubr.bf16.mxu0 0
      %5493 = vmatmul.mubr.bf16.gmra.mxu0 %v5419
      %v5494 = vpop.f32.mrf.mxu0
      %v5495 = vadd.f32 0.0, %v5494
      %v5496 = vpop.f32.mrf.mxu0
      %v5497 = vpop.f32.mrf.mxu0
      %v5498 = vadd.f32 0.0, %v5497
      %v5499 = vpop.f32.mrf.mxu0
      %5500 = vmatprep.mubr.bf16.mxu0 0
      %5501 = vmatmul.mubr.bf16.gmra.mxu0 %v5422
      %v5502 = vpop.f32.mrf.mxu0
      %v5503 = vadd.f32 0.0, %v5502
      %v5504 = vpop.f32.mrf.mxu0
      %v5505 = vpop.f32.mrf.mxu0
      %v5506 = vadd.f32 0.0, %v5505
      %v5507 = vpop.f32.mrf.mxu0
      %5508 = vmatprep.mubr.bf16.mxu0 0
      %5509 = vmatmul.mubr.bf16.gmra.mxu0 %v5425
      %v5510 = vpop.f32.mrf.mxu0
      %v5511 = vadd.f32 0.0, %v5510
      %v5512 = vpop.f32.mrf.mxu0
      %v5513 = vpop.f32.mrf.mxu0
      %v5514 = vadd.f32 0.0, %v5513
      %v5515 = vpop.f32.mrf.mxu0
      %5516 = vmatprep.mubr.bf16.mxu0 0
      %5517 = vmatmul.mubr.bf16.gmra.mxu0 %v5428
      %v5518 = vpop.f32.mrf.mxu0
      %v5519 = vadd.f32 0.0, %v5518
      %v5520 = vpop.f32.mrf.mxu0
      %v5521 = vpop.f32.mrf.mxu0
      %v5522 = vadd.f32 0.0, %v5521
      %v5523 = vpop.f32.mrf.mxu0
      %5524 = vmatprep.mubr.bf16.mxu0 0
      %5525 = vmatmul.mubr.bf16.gmra.mxu0 %v5431
      %v5526 = vpop.f32.mrf.mxu0
      %v5527 = vadd.f32 0.0, %v5526
      %v5528 = vpop.f32.mrf.mxu0
      %v5529 = vpop.f32.mrf.mxu0
      %v5530 = vadd.f32 0.0, %v5529
      %v5531 = vpop.f32.mrf.mxu0
      %5532 = vdwg.mxu0
      %v5533 = vadd.f32 %v5349, %v5471
      %v5534 = vadd.f32 %v5350, %v5474
      %v5535 = vadd.f32 %v5351, %v5479
      %v5536 = vadd.f32 %v5352, %v5482
      %v5537 = vadd.f32 %v5353, %v5487
      %v5538 = vadd.f32 %v5354, %v5490
      %v5539 = vadd.f32 %v5355, %v5495
      %v5540 = vadd.f32 %v5356, %v5498
      %v5541 = vadd.f32 %v5357, %v5503
      %v5542 = vadd.f32 %v5358, %v5506
      %v5543 = vadd.f32 %v5359, %v5511
      %v5544 = vadd.f32 %v5360, %v5514
      %v5545 = vadd.f32 %v5361, %v5519
      %v5546 = vadd.f32 %v5362, %v5522
      %v5547 = vadd.f32 %v5363, %v5527
      %v5548 = vadd.f32 %v5364, %v5530
      %5549 = vst [vmem:[#allocation3 + $0x100] sm:$0xff] %v5533
      %5550 = vst [vmem:[#allocation3 + $0x108] sm:$0xff] %v5534
      %5551 = vst [vmem:[#allocation3 + $0x110] sm:$0xff] %v5535
      %5552 = vst [vmem:[#allocation3 + $0x118] sm:$0xff] %v5536
      %5553 = vst [vmem:[#allocation3 + $0x120] sm:$0xff] %v5537
      %5554 = vst [vmem:[#allocation3 + $0x128] sm:$0xff] %v5538
      %5555 = vst [vmem:[#allocation3 + $0x130] sm:$0xff] %v5539
      %5556 = vst [vmem:[#allocation3 + $0x138] sm:$0xff] %v5540
      %5557 = vst [vmem:[#allocation3 + $0x140] sm:$0xff] %v5541
      %5558 = vst [vmem:[#allocation3 + $0x148] sm:$0xff] %v5542
      %5559 = vst [vmem:[#allocation3 + $0x150] sm:$0xff] %v5543
      %5560 = vst [vmem:[#allocation3 + $0x158] sm:$0xff] %v5544
      %5561 = vst [vmem:[#allocation3 + $0x160] sm:$0xff] %v5545
      %5562 = vst [vmem:[#allocation3 + $0x168] sm:$0xff] %v5546
      %5563 = vst [vmem:[#allocation3 + $0x170] sm:$0xff] %v5547
      %5564 = vst [vmem:[#allocation3 + $0x178] sm:$0xff] %v5548
      %v5565 = vadd.f32 %v5533, %v5534
      %v5566 = vadd.f32 %v5565, %v5535
      %v5567 = vadd.f32 %v5566, %v5536
      %v5568 = vadd.f32 %v5567, %v5537
      %v5569 = vadd.f32 %v5568, %v5538
      %v5570 = vadd.f32 %v5569, %v5539
      %v5571 = vadd.f32 %v5570, %v5540
      %v5572 = vadd.f32 %v5571, %v5541
      %v5573 = vadd.f32 %v5572, %v5542
      %v5574 = vadd.f32 %v5573, %v5543
      %v5575 = vadd.f32 %v5574, %v5544
      %v5576 = vadd.f32 %v5575, %v5545
      %v5577 = vadd.f32 %v5576, %v5546
      %v5578 = vadd.f32 %v5577, %v5547
      %v5579 = vadd.f32 %v5578, %v5548
      %v5580 = vrot.slane %v5579, 4
      %v5581 = vadd.f32 %v5579, %v5580
      %v5582 = vrot.slane %v5581, 2
      %v5583 = vadd.f32 %v5581, %v5582
      %v5584 = vrot.slane %v5583, 1
      %v5585 = vadd.f32 %v5583, %v5584
      %v5586 = vadd.f32 %v3884, %v5585
      %v5587 = vmul.f32 %v5533, %v5533
      %v5588 = vmul.f32 %v5534, %v5534
      %v5589 = vmul.f32 %v5535, %v5535
      %v5590 = vmul.f32 %v5536, %v5536
      %v5591 = vmul.f32 %v5537, %v5537
      %v5592 = vmul.f32 %v5538, %v5538
      %v5593 = vmul.f32 %v5539, %v5539
      %v5594 = vmul.f32 %v5540, %v5540
      %v5595 = vmul.f32 %v5541, %v5541
      %v5596 = vmul.f32 %v5542, %v5542
      %v5597 = vmul.f32 %v5543, %v5543
      %v5598 = vmul.f32 %v5544, %v5544
      %v5599 = vmul.f32 %v5545, %v5545
      %v5600 = vmul.f32 %v5546, %v5546
      %v5601 = vmul.f32 %v5547, %v5547
      %v5602 = vmul.f32 %v5548, %v5548
      %v5603 = vadd.f32 %v5587, %v5588
      %v5604 = vadd.f32 %v5603, %v5589
      %v5605 = vadd.f32 %v5604, %v5590
      %v5606 = vadd.f32 %v5605, %v5591
      %v5607 = vadd.f32 %v5606, %v5592
      %v5608 = vadd.f32 %v5607, %v5593
      %v5609 = vadd.f32 %v5608, %v5594
      %v5610 = vadd.f32 %v5609, %v5595
      %v5611 = vadd.f32 %v5610, %v5596
      %v5612 = vadd.f32 %v5611, %v5597
      %v5613 = vadd.f32 %v5612, %v5598
      %v5614 = vadd.f32 %v5613, %v5599
      %v5615 = vadd.f32 %v5614, %v5600
      %v5616 = vadd.f32 %v5615, %v5601
      %v5617 = vadd.f32 %v5616, %v5602
      %v5618 = vrot.slane %v5617, 4
      %v5619 = vadd.f32 %v5617, %v5618
      %v5620 = vrot.slane %v5619, 2
      %v5621 = vadd.f32 %v5619, %v5620
      %v5622 = vrot.slane %v5621, 1
      %v5623 = vadd.f32 %v5621, %v5622
      %v5624 = vadd.f32 %v3922, %v5623
      %s5625 = scalar_lea.vmem [#allocation2], 624
      %v5626 = vld [vmem:[%s5625] sm:$0xff]
      %v5627 = vld [vmem:[%s5625 + $0x8] sm:$0xff]
      %v5628 = vld [vmem:[%s5625 + $0x18] sm:$0xff]
      %v5629 = vld [vmem:[%s5625 + $0x20] sm:$0xff]
      %v5630 = vld [vmem:[%s5625 + $0x30] sm:$0xff]
      %v5631 = vld [vmem:[%s5625 + $0x38] sm:$0xff]
      %v5632 = vld [vmem:[%s5625 + $0x48] sm:$0xff]
      %v5633 = vld [vmem:[%s5625 + $0x50] sm:$0xff]
      %v5634 = vld [vmem:[%s5625 + $0x60] sm:$0xff]
      %v5635 = vld [vmem:[%s5625 + $0x68] sm:$0xff]
      %v5636 = vld [vmem:[%s5625 + $0x78] sm:$0xff]
      %v5637 = vld [vmem:[%s5625 + $0x80] sm:$0xff]
      %v5638 = vld [vmem:[%s5625 + $0x90] sm:$0xff]
      %v5639 = vld [vmem:[%s5625 + $0x98] sm:$0xff]
      %v5640 = vld [vmem:[%s5625 + $0xa8] sm:$0xff]
      %v5641 = vld [vmem:[%s5625 + $0xb0] sm:$0xff]
      %v5642 = vpack.c.bf16 %v5627, %v5626
      %v5643 = vpack.c.bf16 %v5629, %v5628
      %v5644 = vpack.c.bf16 %v5631, %v5630
      %v5645 = vpack.c.bf16 %v5633, %v5632
      %v5646 = vpack.c.bf16 %v5635, %v5634
      %v5647 = vpack.c.bf16 %v5637, %v5636
      %v5648 = vpack.c.bf16 %v5639, %v5638
      %v5649 = vpack.c.bf16 %v5641, %v5640
      %v5650 = vld [vmem:[%s1] sm:$0xf]
      %v5651 = vld [vmem:[%s1 + $0x4] sm:$0xf]
      %v5652 = vld [vmem:[%s1 + $0x8] sm:$0xf]
      %v5653 = vld [vmem:[%s1 + $0xc] sm:$0xf]
      %v5654 = vld [vmem:[%s1 + $0x10] sm:$0x3]
      %v5655 = vld [vmem:[%s5625 + $0x1] sm:$0xff]
      %v5656 = vld [vmem:[%s5625 + $0x9] sm:$0xff]
      %v5657 = vld [vmem:[%s5625 + $0x19] sm:$0xff]
      %v5658 = vld [vmem:[%s5625 + $0x21] sm:$0xff]
      %v5659 = vld [vmem:[%s5625 + $0x31] sm:$0xff]
      %v5660 = vld [vmem:[%s5625 + $0x39] sm:$0xff]
      %v5661 = vld [vmem:[%s5625 + $0x49] sm:$0xff]
      %v5662 = vld [vmem:[%s5625 + $0x51] sm:$0xff]
      %v5663 = vld [vmem:[%s5625 + $0x61] sm:$0xff]
      %v5664 = vld [vmem:[%s5625 + $0x69] sm:$0xff]
      %v5665 = vld [vmem:[%s5625 + $0x79] sm:$0xff]
      %v5666 = vld [vmem:[%s5625 + $0x81] sm:$0xff]
      %v5667 = vld [vmem:[%s5625 + $0x91] sm:$0xff]
      %v5668 = vld [vmem:[%s5625 + $0x99] sm:$0xff]
      %v5669 = vld [vmem:[%s5625 + $0xa9] sm:$0xff]
      %v5670 = vld [vmem:[%s5625 + $0xb1] sm:$0xff]
      %v5671 = vpack.c.bf16 %v5656, %v5655
      %v5672 = vpack.c.bf16 %v5658, %v5657
      %v5673 = vpack.c.bf16 %v5660, %v5659
      %v5674 = vpack.c.bf16 %v5662, %v5661
      %v5675 = vpack.c.bf16 %v5664, %v5663
      %v5676 = vpack.c.bf16 %v5666, %v5665
      %v5677 = vpack.c.bf16 %v5668, %v5667
      %v5678 = vpack.c.bf16 %v5670, %v5669
      %v5679 = vld [vmem:[%s562] sm:$0xf]
      %v5680 = vld [vmem:[%s562 + $0x4] sm:$0xf]
      %v5681 = vld [vmem:[%s562 + $0x8] sm:$0xf]
      %v5682 = vld [vmem:[%s562 + $0xc] sm:$0xf]
      %v5683 = vld [vmem:[%s562 + $0x10] sm:$0x3]
      %v5689 = vunpack.c.l.b16 %v5679
      %v5690 = vunpack.c.l.b16 %v5680
      %v5691 = vunpack.c.l.b16 %v5681
      %v5692 = vunpack.c.l.b16 %v5682
      %v5693 = vunpack.c.l.b16 %v5683
      %v5694 = vpack.c.b16 %v5690, %v5689
      %v5695 = vpack.c.b16 %v5692, %v5691
      %v5696 = vpack.c.b16 %v5693, %v5693
      %v5700 = vsel %vm583, %v5671, 0
      %v5703 = vsel %vm583, %v5672, 0
      %v5706 = vsel %vm583, %v5673, 0
      %v5709 = vsel %vm583, %v5674, 0
      %v5712 = vsel %vm583, %v5675, 0
      %v5715 = vsel %vm583, %v5676, 0
      %v5718 = vsel %vm583, %v5677, 0
      %v5721 = vsel %vm583, %v5678, 0
      %v5724 = vsel %vm608, %v5696, 0
      %5726 = vmatprep.subr.bf16.mxu0 0
      %5727 = vmatpush1.bf16.msra.mxu0 0
      %5728 = vmatprep.subr.bf16.mxu0 0
      %5729 = vmatpush1.bf16.msra.mxu0 0
      %5730 = vmatprep.subr.bf16.mxu0 0
      %5731 = vmatpush1.bf16.msra.mxu0 0
      %5732 = vmatprep.subr.bf16.mxu0 0
      %5733 = vmatpush1.bf16.msra.mxu0 0
      %5734 = vmatprep.subr.bf16.mxu0 0
      %5735 = vmatpush1.bf16.msra.mxu0 0
      %5736 = vmatprep.subr.bf16.mxu0 0
      %5737 = vmatpush1.bf16.msra.mxu0 %v5724
      %5738 = vmatprep.subr.bf16.mxu0 0
      %5739 = vmatpush1.bf16.msra.mxu0 %v5695
      %5740 = vmatprep.subr.bf16.mxu0 0
      %5741 = vmatpush1.bf16.msra.mxu0 %v5694
      %5742 = vmatprep.subr.bf16.mxu0 0
      %5743 = vmatpush2.bf16.msra.mxu0 0
      %5744 = vmatprep.subr.bf16.mxu0 0
      %5745 = vmatpush2.bf16.msra.mxu0 0
      %5746 = vmatprep.subr.bf16.mxu0 0
      %5747 = vmatpush2.bf16.msra.mxu0 0
      %5748 = vmatprep.subr.bf16.mxu0 0
      %5749 = vmatpush2.bf16.msra.mxu0 0
      %5750 = vmatprep.subr.bf16.mxu0 0
      %5751 = vmatpush2.bf16.msra.mxu0 0
      %5752 = vmatprep.subr.bf16.mxu0 0
      %5753 = vmatpush2.bf16.msra.mxu0 0
      %5754 = vmatprep.subr.bf16.mxu0 0
      %5755 = vmatpush2.bf16.msra.mxu0 0
      %5756 = vmatprep.subr.bf16.mxu0 0
      %5757 = vmatpush2.bf16.msra.mxu0 0
      %5758 = vmatprep.mubr.bf16.mxu0 0
      %5759 = vmatmul.mubr.bf16.gmra.mxu0 %v5700
      %v5760 = vpop.f32.mrf.mxu0
      %v5761 = vadd.f32 0.0, %v5760
      %v5762 = vpop.f32.mrf.mxu0
      %v5763 = vpop.f32.mrf.mxu0
      %v5764 = vadd.f32 0.0, %v5763
      %v5765 = vpop.f32.mrf.mxu0
      %5766 = vmatprep.mubr.bf16.mxu0 0
      %5767 = vmatmul.mubr.bf16.gmra.mxu0 %v5703
      %v5768 = vpop.f32.mrf.mxu0
      %v5769 = vadd.f32 0.0, %v5768
      %v5770 = vpop.f32.mrf.mxu0
      %v5771 = vpop.f32.mrf.mxu0
      %v5772 = vadd.f32 0.0, %v5771
      %v5773 = vpop.f32.mrf.mxu0
      %5774 = vmatprep.mubr.bf16.mxu0 0
      %5775 = vmatmul.mubr.bf16.gmra.mxu0 %v5706
      %v5776 = vpop.f32.mrf.mxu0
      %v5777 = vadd.f32 0.0, %v5776
      %v5778 = vpop.f32.mrf.mxu0
      %v5779 = vpop.f32.mrf.mxu0
      %v5780 = vadd.f32 0.0, %v5779
      %v5781 = vpop.f32.mrf.mxu0
      %5782 = vmatprep.mubr.bf16.mxu0 0
      %5783 = vmatmul.mubr.bf16.gmra.mxu0 %v5709
      %v5784 = vpop.f32.mrf.mxu0
      %v5785 = vadd.f32 0.0, %v5784
      %v5786 = vpop.f32.mrf.mxu0
      %v5787 = vpop.f32.mrf.mxu0
      %v5788 = vadd.f32 0.0, %v5787
      %v5789 = vpop.f32.mrf.mxu0
      %5790 = vmatprep.mubr.bf16.mxu0 0
      %5791 = vmatmul.mubr.bf16.gmra.mxu0 %v5712
      %v5792 = vpop.f32.mrf.mxu0
      %v5793 = vadd.f32 0.0, %v5792
      %v5794 = vpop.f32.mrf.mxu0
      %v5795 = vpop.f32.mrf.mxu0
      %v5796 = vadd.f32 0.0, %v5795
      %v5797 = vpop.f32.mrf.mxu0
      %5798 = vmatprep.mubr.bf16.mxu0 0
      %5799 = vmatmul.mubr.bf16.gmra.mxu0 %v5715
      %v5800 = vpop.f32.mrf.mxu0
      %v5801 = vadd.f32 0.0, %v5800
      %v5802 = vpop.f32.mrf.mxu0
      %v5803 = vpop.f32.mrf.mxu0
      %v5804 = vadd.f32 0.0, %v5803
      %v5805 = vpop.f32.mrf.mxu0
      %5806 = vmatprep.mubr.bf16.mxu0 0
      %5807 = vmatmul.mubr.bf16.gmra.mxu0 %v5718
      %v5808 = vpop.f32.mrf.mxu0
      %v5809 = vadd.f32 0.0, %v5808
      %v5810 = vpop.f32.mrf.mxu0
      %v5811 = vpop.f32.mrf.mxu0
      %v5812 = vadd.f32 0.0, %v5811
      %v5813 = vpop.f32.mrf.mxu0
      %5814 = vmatprep.mubr.bf16.mxu0 0
      %5815 = vmatmul.mubr.bf16.gmra.mxu0 %v5721
      %v5816 = vpop.f32.mrf.mxu0
      %v5817 = vadd.f32 0.0, %v5816
      %v5818 = vpop.f32.mrf.mxu0
      %v5819 = vpop.f32.mrf.mxu0
      %v5820 = vadd.f32 0.0, %v5819
      %v5821 = vpop.f32.mrf.mxu0
      %5822 = vdwg.mxu0
      %v5828 = vunpack.c.l.b16 %v5650
      %v5829 = vunpack.c.l.b16 %v5651
      %v5830 = vunpack.c.l.b16 %v5652
      %v5831 = vunpack.c.l.b16 %v5653
      %v5832 = vunpack.c.l.b16 %v5654
      %v5833 = vpack.c.b16 %v5829, %v5828
      %v5834 = vpack.c.b16 %v5831, %v5830
      %v5835 = vpack.c.b16 %v5832, %v5832
      %v5839 = vsel %vm583, %v5642, 0
      %v5842 = vsel %vm583, %v5643, 0
      %v5845 = vsel %vm583, %v5644, 0
      %v5848 = vsel %vm583, %v5645, 0
      %v5851 = vsel %vm583, %v5646, 0
      %v5854 = vsel %vm583, %v5647, 0
      %v5857 = vsel %vm583, %v5648, 0
      %v5860 = vsel %vm583, %v5649, 0
      %v5863 = vsel %vm608, %v5835, 0
      %5865 = vmatprep.subr.bf16.mxu0 0
      %5866 = vmatpush1.bf16.msra.mxu0 0
      %5867 = vmatprep.subr.bf16.mxu0 0
      %5868 = vmatpush1.bf16.msra.mxu0 0
      %5869 = vmatprep.subr.bf16.mxu0 0
      %5870 = vmatpush1.bf16.msra.mxu0 0
      %5871 = vmatprep.subr.bf16.mxu0 0
      %5872 = vmatpush1.bf16.msra.mxu0 0
      %5873 = vmatprep.subr.bf16.mxu0 0
      %5874 = vmatpush1.bf16.msra.mxu0 0
      %5875 = vmatprep.subr.bf16.mxu0 0
      %5876 = vmatpush1.bf16.msra.mxu0 %v5863
      %5877 = vmatprep.subr.bf16.mxu0 0
      %5878 = vmatpush1.bf16.msra.mxu0 %v5834
      %5879 = vmatprep.subr.bf16.mxu0 0
      %5880 = vmatpush1.bf16.msra.mxu0 %v5833
      %5881 = vmatprep.subr.bf16.mxu0 0
      %5882 = vmatpush2.bf16.msra.mxu0 0
      %5883 = vmatprep.subr.bf16.mxu0 0
      %5884 = vmatpush2.bf16.msra.mxu0 0
      %5885 = vmatprep.subr.bf16.mxu0 0
      %5886 = vmatpush2.bf16.msra.mxu0 0
      %5887 = vmatprep.subr.bf16.mxu0 0
      %5888 = vmatpush2.bf16.msra.mxu0 0
      %5889 = vmatprep.subr.bf16.mxu0 0
      %5890 = vmatpush2.bf16.msra.mxu0 0
      %5891 = vmatprep.subr.bf16.mxu0 0
      %5892 = vmatpush2.bf16.msra.mxu0 0
      %5893 = vmatprep.subr.bf16.mxu0 0
      %5894 = vmatpush2.bf16.msra.mxu0 0
      %5895 = vmatprep.subr.bf16.mxu0 0
      %5896 = vmatpush2.bf16.msra.mxu0 0
      %5897 = vmatprep.mubr.bf16.mxu0 0
      %5898 = vmatmul.mubr.bf16.gmra.mxu0 %v5839
      %v5899 = vpop.f32.mrf.mxu0
      %v5900 = vadd.f32 %v5761, %v5899
      %v5901 = vpop.f32.mrf.mxu0
      %v5902 = vpop.f32.mrf.mxu0
      %v5903 = vadd.f32 %v5764, %v5902
      %v5904 = vpop.f32.mrf.mxu0
      %5905 = vmatprep.mubr.bf16.mxu0 0
      %5906 = vmatmul.mubr.bf16.gmra.mxu0 %v5842
      %v5907 = vpop.f32.mrf.mxu0
      %v5908 = vadd.f32 %v5769, %v5907
      %v5909 = vpop.f32.mrf.mxu0
      %v5910 = vpop.f32.mrf.mxu0
      %v5911 = vadd.f32 %v5772, %v5910
      %v5912 = vpop.f32.mrf.mxu0
      %5913 = vmatprep.mubr.bf16.mxu0 0
      %5914 = vmatmul.mubr.bf16.gmra.mxu0 %v5845
      %v5915 = vpop.f32.mrf.mxu0
      %v5916 = vadd.f32 %v5777, %v5915
      %v5917 = vpop.f32.mrf.mxu0
      %v5918 = vpop.f32.mrf.mxu0
      %v5919 = vadd.f32 %v5780, %v5918
      %v5920 = vpop.f32.mrf.mxu0
      %5921 = vmatprep.mubr.bf16.mxu0 0
      %5922 = vmatmul.mubr.bf16.gmra.mxu0 %v5848
      %v5923 = vpop.f32.mrf.mxu0
      %v5924 = vadd.f32 %v5785, %v5923
      %v5925 = vpop.f32.mrf.mxu0
      %v5926 = vpop.f32.mrf.mxu0
      %v5927 = vadd.f32 %v5788, %v5926
      %v5928 = vpop.f32.mrf.mxu0
      %5929 = vmatprep.mubr.bf16.mxu0 0
      %5930 = vmatmul.mubr.bf16.gmra.mxu0 %v5851
      %v5931 = vpop.f32.mrf.mxu0
      %v5932 = vadd.f32 %v5793, %v5931
      %v5933 = vpop.f32.mrf.mxu0
      %v5934 = vpop.f32.mrf.mxu0
      %v5935 = vadd.f32 %v5796, %v5934
      %v5936 = vpop.f32.mrf.mxu0
      %5937 = vmatprep.mubr.bf16.mxu0 0
      %5938 = vmatmul.mubr.bf16.gmra.mxu0 %v5854
      %v5939 = vpop.f32.mrf.mxu0
      %v5940 = vadd.f32 %v5801, %v5939
      %v5941 = vpop.f32.mrf.mxu0
      %v5942 = vpop.f32.mrf.mxu0
      %v5943 = vadd.f32 %v5804, %v5942
      %v5944 = vpop.f32.mrf.mxu0
      %5945 = vmatprep.mubr.bf16.mxu0 0
      %5946 = vmatmul.mubr.bf16.gmra.mxu0 %v5857
      %v5947 = vpop.f32.mrf.mxu0
      %v5948 = vadd.f32 %v5809, %v5947
      %v5949 = vpop.f32.mrf.mxu0
      %v5950 = vpop.f32.mrf.mxu0
      %v5951 = vadd.f32 %v5812, %v5950
      %v5952 = vpop.f32.mrf.mxu0
      %5953 = vmatprep.mubr.bf16.mxu0 0
      %5954 = vmatmul.mubr.bf16.gmra.mxu0 %v5860
      %v5955 = vpop.f32.mrf.mxu0
      %v5956 = vadd.f32 %v5817, %v5955
      %v5957 = vpop.f32.mrf.mxu0
      %v5958 = vpop.f32.mrf.mxu0
      %v5959 = vadd.f32 %v5820, %v5958
      %v5960 = vpop.f32.mrf.mxu0
      %5961 = vdwg.mxu0
      %v5962 = vld [vmem:[%s5625 + $0x2] sm:$0xff]
      %v5963 = vld [vmem:[%s5625 + $0xa] sm:$0xff]
      %v5964 = vld [vmem:[%s5625 + $0x1a] sm:$0xff]
      %v5965 = vld [vmem:[%s5625 + $0x22] sm:$0xff]
      %v5966 = vld [vmem:[%s5625 + $0x32] sm:$0xff]
      %v5967 = vld [vmem:[%s5625 + $0x3a] sm:$0xff]
      %v5968 = vld [vmem:[%s5625 + $0x4a] sm:$0xff]
      %v5969 = vld [vmem:[%s5625 + $0x52] sm:$0xff]
      %v5970 = vld [vmem:[%s5625 + $0x62] sm:$0xff]
      %v5971 = vld [vmem:[%s5625 + $0x6a] sm:$0xff]
      %v5972 = vld [vmem:[%s5625 + $0x7a] sm:$0xff]
      %v5973 = vld [vmem:[%s5625 + $0x82] sm:$0xff]
      %v5974 = vld [vmem:[%s5625 + $0x92] sm:$0xff]
      %v5975 = vld [vmem:[%s5625 + $0x9a] sm:$0xff]
      %v5976 = vld [vmem:[%s5625 + $0xaa] sm:$0xff]
      %v5977 = vld [vmem:[%s5625 + $0xb2] sm:$0xff]
      %v5978 = vpack.c.bf16 %v5963, %v5962
      %v5979 = vpack.c.bf16 %v5965, %v5964
      %v5980 = vpack.c.bf16 %v5967, %v5966
      %v5981 = vpack.c.bf16 %v5969, %v5968
      %v5982 = vpack.c.bf16 %v5971, %v5970
      %v5983 = vpack.c.bf16 %v5973, %v5972
      %v5984 = vpack.c.bf16 %v5975, %v5974
      %v5985 = vpack.c.bf16 %v5977, %v5976
      %v5986 = vld [vmem:[%s872] sm:$0xf]
      %v5987 = vld [vmem:[%s872 + $0x4] sm:$0xf]
      %v5988 = vld [vmem:[%s872 + $0x8] sm:$0xf]
      %v5989 = vld [vmem:[%s872 + $0xc] sm:$0xf]
      %v5990 = vld [vmem:[%s872 + $0x10] sm:$0x3]
      %v5996 = vunpack.c.l.b16 %v5986
      %v5997 = vunpack.c.l.b16 %v5987
      %v5998 = vunpack.c.l.b16 %v5988
      %v5999 = vunpack.c.l.b16 %v5989
      %v6000 = vunpack.c.l.b16 %v5990
      %v6001 = vpack.c.b16 %v5997, %v5996
      %v6002 = vpack.c.b16 %v5999, %v5998
      %v6003 = vpack.c.b16 %v6000, %v6000
      %v6007 = vsel %vm583, %v5978, 0
      %v6010 = vsel %vm583, %v5979, 0
      %v6013 = vsel %vm583, %v5980, 0
      %v6016 = vsel %vm583, %v5981, 0
      %v6019 = vsel %vm583, %v5982, 0
      %v6022 = vsel %vm583, %v5983, 0
      %v6025 = vsel %vm583, %v5984, 0
      %v6028 = vsel %vm583, %v5985, 0
      %v6031 = vsel %vm608, %v6003, 0
      %6033 = vmatprep.subr.bf16.mxu0 0
      %6034 = vmatpush1.bf16.msra.mxu0 0
      %6035 = vmatprep.subr.bf16.mxu0 0
      %6036 = vmatpush1.bf16.msra.mxu0 0
      %6037 = vmatprep.subr.bf16.mxu0 0
      %6038 = vmatpush1.bf16.msra.mxu0 0
      %6039 = vmatprep.subr.bf16.mxu0 0
      %6040 = vmatpush1.bf16.msra.mxu0 0
      %6041 = vmatprep.subr.bf16.mxu0 0
      %6042 = vmatpush1.bf16.msra.mxu0 0
      %6043 = vmatprep.subr.bf16.mxu0 0
      %6044 = vmatpush1.bf16.msra.mxu0 %v6031
      %6045 = vmatprep.subr.bf16.mxu0 0
      %6046 = vmatpush1.bf16.msra.mxu0 %v6002
      %6047 = vmatprep.subr.bf16.mxu0 0
      %6048 = vmatpush1.bf16.msra.mxu0 %v6001
      %6049 = vmatprep.subr.bf16.mxu0 0
      %6050 = vmatpush2.bf16.msra.mxu0 0
      %6051 = vmatprep.subr.bf16.mxu0 0
      %6052 = vmatpush2.bf16.msra.mxu0 0
      %6053 = vmatprep.subr.bf16.mxu0 0
      %6054 = vmatpush2.bf16.msra.mxu0 0
      %6055 = vmatprep.subr.bf16.mxu0 0
      %6056 = vmatpush2.bf16.msra.mxu0 0
      %6057 = vmatprep.subr.bf16.mxu0 0
      %6058 = vmatpush2.bf16.msra.mxu0 0
      %6059 = vmatprep.subr.bf16.mxu0 0
      %6060 = vmatpush2.bf16.msra.mxu0 0
      %6061 = vmatprep.subr.bf16.mxu0 0
      %6062 = vmatpush2.bf16.msra.mxu0 0
      %6063 = vmatprep.subr.bf16.mxu0 0
      %6064 = vmatpush2.bf16.msra.mxu0 0
      %6065 = vmatprep.mubr.bf16.mxu0 0
      %6066 = vmatmul.mubr.bf16.gmra.mxu0 %v6007
      %v6067 = vpop.f32.mrf.mxu0
      %v6068 = vadd.f32 0.0, %v6067
      %v6069 = vpop.f32.mrf.mxu0
      %v6070 = vpop.f32.mrf.mxu0
      %v6071 = vadd.f32 0.0, %v6070
      %v6072 = vpop.f32.mrf.mxu0
      %6073 = vmatprep.mubr.bf16.mxu0 0
      %6074 = vmatmul.mubr.bf16.gmra.mxu0 %v6010
      %v6075 = vpop.f32.mrf.mxu0
      %v6076 = vadd.f32 0.0, %v6075
      %v6077 = vpop.f32.mrf.mxu0
      %v6078 = vpop.f32.mrf.mxu0
      %v6079 = vadd.f32 0.0, %v6078
      %v6080 = vpop.f32.mrf.mxu0
      %6081 = vmatprep.mubr.bf16.mxu0 0
      %6082 = vmatmul.mubr.bf16.gmra.mxu0 %v6013
      %v6083 = vpop.f32.mrf.mxu0
      %v6084 = vadd.f32 0.0, %v6083
      %v6085 = vpop.f32.mrf.mxu0
      %v6086 = vpop.f32.mrf.mxu0
      %v6087 = vadd.f32 0.0, %v6086
      %v6088 = vpop.f32.mrf.mxu0
      %6089 = vmatprep.mubr.bf16.mxu0 0
      %6090 = vmatmul.mubr.bf16.gmra.mxu0 %v6016
      %v6091 = vpop.f32.mrf.mxu0
      %v6092 = vadd.f32 0.0, %v6091
      %v6093 = vpop.f32.mrf.mxu0
      %v6094 = vpop.f32.mrf.mxu0
      %v6095 = vadd.f32 0.0, %v6094
      %v6096 = vpop.f32.mrf.mxu0
      %6097 = vmatprep.mubr.bf16.mxu0 0
      %6098 = vmatmul.mubr.bf16.gmra.mxu0 %v6019
      %v6099 = vpop.f32.mrf.mxu0
      %v6100 = vadd.f32 0.0, %v6099
      %v6101 = vpop.f32.mrf.mxu0
      %v6102 = vpop.f32.mrf.mxu0
      %v6103 = vadd.f32 0.0, %v6102
      %v6104 = vpop.f32.mrf.mxu0
      %6105 = vmatprep.mubr.bf16.mxu0 0
      %6106 = vmatmul.mubr.bf16.gmra.mxu0 %v6022
      %v6107 = vpop.f32.mrf.mxu0
      %v6108 = vadd.f32 0.0, %v6107
      %v6109 = vpop.f32.mrf.mxu0
      %v6110 = vpop.f32.mrf.mxu0
      %v6111 = vadd.f32 0.0, %v6110
      %v6112 = vpop.f32.mrf.mxu0
      %6113 = vmatprep.mubr.bf16.mxu0 0
      %6114 = vmatmul.mubr.bf16.gmra.mxu0 %v6025
      %v6115 = vpop.f32.mrf.mxu0
      %v6116 = vadd.f32 0.0, %v6115
      %v6117 = vpop.f32.mrf.mxu0
      %v6118 = vpop.f32.mrf.mxu0
      %v6119 = vadd.f32 0.0, %v6118
      %v6120 = vpop.f32.mrf.mxu0
      %6121 = vmatprep.mubr.bf16.mxu0 0
      %6122 = vmatmul.mubr.bf16.gmra.mxu0 %v6028
      %v6123 = vpop.f32.mrf.mxu0
      %v6124 = vadd.f32 0.0, %v6123
      %v6125 = vpop.f32.mrf.mxu0
      %v6126 = vpop.f32.mrf.mxu0
      %v6127 = vadd.f32 0.0, %v6126
      %v6128 = vpop.f32.mrf.mxu0
      %6129 = vdwg.mxu0
      %v6130 = vadd.f32 %v5900, %v6068
      %v6131 = vadd.f32 %v5903, %v6071
      %v6132 = vadd.f32 %v5908, %v6076
      %v6133 = vadd.f32 %v5911, %v6079
      %v6134 = vadd.f32 %v5916, %v6084
      %v6135 = vadd.f32 %v5919, %v6087
      %v6136 = vadd.f32 %v5924, %v6092
      %v6137 = vadd.f32 %v5927, %v6095
      %v6138 = vadd.f32 %v5932, %v6100
      %v6139 = vadd.f32 %v5935, %v6103
      %v6140 = vadd.f32 %v5940, %v6108
      %v6141 = vadd.f32 %v5943, %v6111
      %v6142 = vadd.f32 %v5948, %v6116
      %v6143 = vadd.f32 %v5951, %v6119
      %v6144 = vadd.f32 %v5956, %v6124
      %v6145 = vadd.f32 %v5959, %v6127
      %s6146 = scalar_lea.vmem [#allocation2], 648
      %v6147 = vld [vmem:[%s6146] sm:$0xff]
      %v6148 = vld [vmem:[%s6146 + $0x8] sm:$0xff]
      %v6149 = vld [vmem:[%s6146 + $0x18] sm:$0xff]
      %v6150 = vld [vmem:[%s6146 + $0x20] sm:$0xff]
      %v6151 = vld [vmem:[%s6146 + $0x30] sm:$0xff]
      %v6152 = vld [vmem:[%s6146 + $0x38] sm:$0xff]
      %v6153 = vld [vmem:[%s6146 + $0x48] sm:$0xff]
      %v6154 = vld [vmem:[%s6146 + $0x50] sm:$0xff]
      %v6155 = vld [vmem:[%s6146 + $0x60] sm:$0xff]
      %v6156 = vld [vmem:[%s6146 + $0x68] sm:$0xff]
      %v6157 = vld [vmem:[%s6146 + $0x78] sm:$0xff]
      %v6158 = vld [vmem:[%s6146 + $0x80] sm:$0xff]
      %v6159 = vld [vmem:[%s6146 + $0x90] sm:$0xff]
      %v6160 = vld [vmem:[%s6146 + $0x98] sm:$0xff]
      %v6161 = vld [vmem:[%s6146 + $0xa8] sm:$0xff]
      %v6162 = vld [vmem:[%s6146 + $0xb0] sm:$0xff]
      %v6163 = vpack.c.bf16 %v6148, %v6147
      %v6164 = vpack.c.bf16 %v6150, %v6149
      %v6165 = vpack.c.bf16 %v6152, %v6151
      %v6166 = vpack.c.bf16 %v6154, %v6153
      %v6167 = vpack.c.bf16 %v6156, %v6155
      %v6168 = vpack.c.bf16 %v6158, %v6157
      %v6169 = vpack.c.bf16 %v6160, %v6159
      %v6170 = vpack.c.bf16 %v6162, %v6161
      %v6171 = vld [vmem:[%s1057] sm:$0xf]
      %v6172 = vld [vmem:[%s1057 + $0x4] sm:$0xf]
      %v6173 = vld [vmem:[%s1057 + $0x8] sm:$0xf]
      %v6174 = vld [vmem:[%s1057 + $0xc] sm:$0xf]
      %v6175 = vld [vmem:[%s1057 + $0x10] sm:$0x3]
      %v6181 = vunpack.c.l.b16 %v6171
      %v6182 = vunpack.c.l.b16 %v6172
      %v6183 = vunpack.c.l.b16 %v6173
      %v6184 = vunpack.c.l.b16 %v6174
      %v6185 = vunpack.c.l.b16 %v6175
      %v6186 = vpack.c.b16 %v6182, %v6181
      %v6187 = vpack.c.b16 %v6184, %v6183
      %v6188 = vpack.c.b16 %v6185, %v6185
      %v6192 = vsel %vm583, %v6163, 0
      %v6195 = vsel %vm583, %v6164, 0
      %v6198 = vsel %vm583, %v6165, 0
      %v6201 = vsel %vm583, %v6166, 0
      %v6204 = vsel %vm583, %v6167, 0
      %v6207 = vsel %vm583, %v6168, 0
      %v6210 = vsel %vm583, %v6169, 0
      %v6213 = vsel %vm583, %v6170, 0
      %v6216 = vsel %vm608, %v6188, 0
      %6218 = vmatprep.subr.bf16.mxu0 0
      %6219 = vmatpush1.bf16.msra.mxu0 0
      %6220 = vmatprep.subr.bf16.mxu0 0
      %6221 = vmatpush1.bf16.msra.mxu0 0
      %6222 = vmatprep.subr.bf16.mxu0 0
      %6223 = vmatpush1.bf16.msra.mxu0 0
      %6224 = vmatprep.subr.bf16.mxu0 0
      %6225 = vmatpush1.bf16.msra.mxu0 0
      %6226 = vmatprep.subr.bf16.mxu0 0
      %6227 = vmatpush1.bf16.msra.mxu0 0
      %6228 = vmatprep.subr.bf16.mxu0 0
      %6229 = vmatpush1.bf16.msra.mxu0 %v6216
      %6230 = vmatprep.subr.bf16.mxu0 0
      %6231 = vmatpush1.bf16.msra.mxu0 %v6187
      %6232 = vmatprep.subr.bf16.mxu0 0
      %6233 = vmatpush1.bf16.msra.mxu0 %v6186
      %6234 = vmatprep.subr.bf16.mxu0 0
      %6235 = vmatpush2.bf16.msra.mxu0 0
      %6236 = vmatprep.subr.bf16.mxu0 0
      %6237 = vmatpush2.bf16.msra.mxu0 0
      %6238 = vmatprep.subr.bf16.mxu0 0
      %6239 = vmatpush2.bf16.msra.mxu0 0
      %6240 = vmatprep.subr.bf16.mxu0 0
      %6241 = vmatpush2.bf16.msra.mxu0 0
      %6242 = vmatprep.subr.bf16.mxu0 0
      %6243 = vmatpush2.bf16.msra.mxu0 0
      %6244 = vmatprep.subr.bf16.mxu0 0
      %6245 = vmatpush2.bf16.msra.mxu0 0
      %6246 = vmatprep.subr.bf16.mxu0 0
      %6247 = vmatpush2.bf16.msra.mxu0 0
      %6248 = vmatprep.subr.bf16.mxu0 0
      %6249 = vmatpush2.bf16.msra.mxu0 0
      %6250 = vmatprep.mubr.bf16.mxu0 0
      %6251 = vmatmul.mubr.bf16.gmra.mxu0 %v6192
      %v6252 = vpop.f32.mrf.mxu0
      %v6253 = vadd.f32 0.0, %v6252
      %v6254 = vpop.f32.mrf.mxu0
      %v6255 = vpop.f32.mrf.mxu0
      %v6256 = vadd.f32 0.0, %v6255
      %v6257 = vpop.f32.mrf.mxu0
      %6258 = vmatprep.mubr.bf16.mxu0 0
      %6259 = vmatmul.mubr.bf16.gmra.mxu0 %v6195
      %v6260 = vpop.f32.mrf.mxu0
      %v6261 = vadd.f32 0.0, %v6260
      %v6262 = vpop.f32.mrf.mxu0
      %v6263 = vpop.f32.mrf.mxu0
      %v6264 = vadd.f32 0.0, %v6263
      %v6265 = vpop.f32.mrf.mxu0
      %6266 = vmatprep.mubr.bf16.mxu0 0
      %6267 = vmatmul.mubr.bf16.gmra.mxu0 %v6198
      %v6268 = vpop.f32.mrf.mxu0
      %v6269 = vadd.f32 0.0, %v6268
      %v6270 = vpop.f32.mrf.mxu0
      %v6271 = vpop.f32.mrf.mxu0
      %v6272 = vadd.f32 0.0, %v6271
      %v6273 = vpop.f32.mrf.mxu0
      %6274 = vmatprep.mubr.bf16.mxu0 0
      %6275 = vmatmul.mubr.bf16.gmra.mxu0 %v6201
      %v6276 = vpop.f32.mrf.mxu0
      %v6277 = vadd.f32 0.0, %v6276
      %v6278 = vpop.f32.mrf.mxu0
      %v6279 = vpop.f32.mrf.mxu0
      %v6280 = vadd.f32 0.0, %v6279
      %v6281 = vpop.f32.mrf.mxu0
      %6282 = vmatprep.mubr.bf16.mxu0 0
      %6283 = vmatmul.mubr.bf16.gmra.mxu0 %v6204
      %v6284 = vpop.f32.mrf.mxu0
      %v6285 = vadd.f32 0.0, %v6284
      %v6286 = vpop.f32.mrf.mxu0
      %v6287 = vpop.f32.mrf.mxu0
      %v6288 = vadd.f32 0.0, %v6287
      %v6289 = vpop.f32.mrf.mxu0
      %6290 = vmatprep.mubr.bf16.mxu0 0
      %6291 = vmatmul.mubr.bf16.gmra.mxu0 %v6207
      %v6292 = vpop.f32.mrf.mxu0
      %v6293 = vadd.f32 0.0, %v6292
      %v6294 = vpop.f32.mrf.mxu0
      %v6295 = vpop.f32.mrf.mxu0
      %v6296 = vadd.f32 0.0, %v6295
      %v6297 = vpop.f32.mrf.mxu0
      %6298 = vmatprep.mubr.bf16.mxu0 0
      %6299 = vmatmul.mubr.bf16.gmra.mxu0 %v6210
      %v6300 = vpop.f32.mrf.mxu0
      %v6301 = vadd.f32 0.0, %v6300
      %v6302 = vpop.f32.mrf.mxu0
      %v6303 = vpop.f32.mrf.mxu0
      %v6304 = vadd.f32 0.0, %v6303
      %v6305 = vpop.f32.mrf.mxu0
      %6306 = vmatprep.mubr.bf16.mxu0 0
      %6307 = vmatmul.mubr.bf16.gmra.mxu0 %v6213
      %v6308 = vpop.f32.mrf.mxu0
      %v6309 = vadd.f32 0.0, %v6308
      %v6310 = vpop.f32.mrf.mxu0
      %v6311 = vpop.f32.mrf.mxu0
      %v6312 = vadd.f32 0.0, %v6311
      %v6313 = vpop.f32.mrf.mxu0
      %6314 = vdwg.mxu0
      %v6315 = vadd.f32 %v6130, %v6253
      %v6316 = vadd.f32 %v6131, %v6256
      %v6317 = vadd.f32 %v6132, %v6261
      %v6318 = vadd.f32 %v6133, %v6264
      %v6319 = vadd.f32 %v6134, %v6269
      %v6320 = vadd.f32 %v6135, %v6272
      %v6321 = vadd.f32 %v6136, %v6277
      %v6322 = vadd.f32 %v6137, %v6280
      %v6323 = vadd.f32 %v6138, %v6285
      %v6324 = vadd.f32 %v6139, %v6288
      %v6325 = vadd.f32 %v6140, %v6293
      %v6326 = vadd.f32 %v6141, %v6296
      %v6327 = vadd.f32 %v6142, %v6301
      %v6328 = vadd.f32 %v6143, %v6304
      %v6329 = vadd.f32 %v6144, %v6309
      %v6330 = vadd.f32 %v6145, %v6312
      %v6331 = vld [vmem:[%s6146 + $0x1] sm:$0xff]
      %v6332 = vld [vmem:[%s6146 + $0x9] sm:$0xff]
      %v6333 = vld [vmem:[%s6146 + $0x19] sm:$0xff]
      %v6334 = vld [vmem:[%s6146 + $0x21] sm:$0xff]
      %v6335 = vld [vmem:[%s6146 + $0x31] sm:$0xff]
      %v6336 = vld [vmem:[%s6146 + $0x39] sm:$0xff]
      %v6337 = vld [vmem:[%s6146 + $0x49] sm:$0xff]
      %v6338 = vld [vmem:[%s6146 + $0x51] sm:$0xff]
      %v6339 = vld [vmem:[%s6146 + $0x61] sm:$0xff]
      %v6340 = vld [vmem:[%s6146 + $0x69] sm:$0xff]
      %v6341 = vld [vmem:[%s6146 + $0x79] sm:$0xff]
      %v6342 = vld [vmem:[%s6146 + $0x81] sm:$0xff]
      %v6343 = vld [vmem:[%s6146 + $0x91] sm:$0xff]
      %v6344 = vld [vmem:[%s6146 + $0x99] sm:$0xff]
      %v6345 = vld [vmem:[%s6146 + $0xa9] sm:$0xff]
      %v6346 = vld [vmem:[%s6146 + $0xb1] sm:$0xff]
      %v6347 = vpack.c.bf16 %v6332, %v6331
      %v6348 = vpack.c.bf16 %v6334, %v6333
      %v6349 = vpack.c.bf16 %v6336, %v6335
      %v6350 = vpack.c.bf16 %v6338, %v6337
      %v6351 = vpack.c.bf16 %v6340, %v6339
      %v6352 = vpack.c.bf16 %v6342, %v6341
      %v6353 = vpack.c.bf16 %v6344, %v6343
      %v6354 = vpack.c.bf16 %v6346, %v6345
      %v6355 = vld [vmem:[%s1242] sm:$0xf]
      %v6356 = vld [vmem:[%s1242 + $0x4] sm:$0xf]
      %v6357 = vld [vmem:[%s1242 + $0x8] sm:$0xf]
      %v6358 = vld [vmem:[%s1242 + $0xc] sm:$0xf]
      %v6359 = vld [vmem:[%s1242 + $0x10] sm:$0x3]
      %v6365 = vunpack.c.l.b16 %v6355
      %v6366 = vunpack.c.l.b16 %v6356
      %v6367 = vunpack.c.l.b16 %v6357
      %v6368 = vunpack.c.l.b16 %v6358
      %v6369 = vunpack.c.l.b16 %v6359
      %v6370 = vpack.c.b16 %v6366, %v6365
      %v6371 = vpack.c.b16 %v6368, %v6367
      %v6372 = vpack.c.b16 %v6369, %v6369
      %v6376 = vsel %vm583, %v6347, 0
      %v6379 = vsel %vm583, %v6348, 0
      %v6382 = vsel %vm583, %v6349, 0
      %v6385 = vsel %vm583, %v6350, 0
      %v6388 = vsel %vm583, %v6351, 0
      %v6391 = vsel %vm583, %v6352, 0
      %v6394 = vsel %vm583, %v6353, 0
      %v6397 = vsel %vm583, %v6354, 0
      %v6400 = vsel %vm608, %v6372, 0
      %6402 = vmatprep.subr.bf16.mxu0 0
      %6403 = vmatpush1.bf16.msra.mxu0 0
      %6404 = vmatprep.subr.bf16.mxu0 0
      %6405 = vmatpush1.bf16.msra.mxu0 0
      %6406 = vmatprep.subr.bf16.mxu0 0
      %6407 = vmatpush1.bf16.msra.mxu0 0
      %6408 = vmatprep.subr.bf16.mxu0 0
      %6409 = vmatpush1.bf16.msra.mxu0 0
      %6410 = vmatprep.subr.bf16.mxu0 0
      %6411 = vmatpush1.bf16.msra.mxu0 0
      %6412 = vmatprep.subr.bf16.mxu0 0
      %6413 = vmatpush1.bf16.msra.mxu0 %v6400
      %6414 = vmatprep.subr.bf16.mxu0 0
      %6415 = vmatpush1.bf16.msra.mxu0 %v6371
      %6416 = vmatprep.subr.bf16.mxu0 0
      %6417 = vmatpush1.bf16.msra.mxu0 %v6370
      %6418 = vmatprep.subr.bf16.mxu0 0
      %6419 = vmatpush2.bf16.msra.mxu0 0
      %6420 = vmatprep.subr.bf16.mxu0 0
      %6421 = vmatpush2.bf16.msra.mxu0 0
      %6422 = vmatprep.subr.bf16.mxu0 0
      %6423 = vmatpush2.bf16.msra.mxu0 0
      %6424 = vmatprep.subr.bf16.mxu0 0
      %6425 = vmatpush2.bf16.msra.mxu0 0
      %6426 = vmatprep.subr.bf16.mxu0 0
      %6427 = vmatpush2.bf16.msra.mxu0 0
      %6428 = vmatprep.subr.bf16.mxu0 0
      %6429 = vmatpush2.bf16.msra.mxu0 0
      %6430 = vmatprep.subr.bf16.mxu0 0
      %6431 = vmatpush2.bf16.msra.mxu0 0
      %6432 = vmatprep.subr.bf16.mxu0 0
      %6433 = vmatpush2.bf16.msra.mxu0 0
      %6434 = vmatprep.mubr.bf16.mxu0 0
      %6435 = vmatmul.mubr.bf16.gmra.mxu0 %v6376
      %v6436 = vpop.f32.mrf.mxu0
      %v6437 = vadd.f32 0.0, %v6436
      %v6438 = vpop.f32.mrf.mxu0
      %v6439 = vpop.f32.mrf.mxu0
      %v6440 = vadd.f32 0.0, %v6439
      %v6441 = vpop.f32.mrf.mxu0
      %6442 = vmatprep.mubr.bf16.mxu0 0
      %6443 = vmatmul.mubr.bf16.gmra.mxu0 %v6379
      %v6444 = vpop.f32.mrf.mxu0
      %v6445 = vadd.f32 0.0, %v6444
      %v6446 = vpop.f32.mrf.mxu0
      %v6447 = vpop.f32.mrf.mxu0
      %v6448 = vadd.f32 0.0, %v6447
      %v6449 = vpop.f32.mrf.mxu0
      %6450 = vmatprep.mubr.bf16.mxu0 0
      %6451 = vmatmul.mubr.bf16.gmra.mxu0 %v6382
      %v6452 = vpop.f32.mrf.mxu0
      %v6453 = vadd.f32 0.0, %v6452
      %v6454 = vpop.f32.mrf.mxu0
      %v6455 = vpop.f32.mrf.mxu0
      %v6456 = vadd.f32 0.0, %v6455
      %v6457 = vpop.f32.mrf.mxu0
      %6458 = vmatprep.mubr.bf16.mxu0 0
      %6459 = vmatmul.mubr.bf16.gmra.mxu0 %v6385
      %v6460 = vpop.f32.mrf.mxu0
      %v6461 = vadd.f32 0.0, %v6460
      %v6462 = vpop.f32.mrf.mxu0
      %v6463 = vpop.f32.mrf.mxu0
      %v6464 = vadd.f32 0.0, %v6463
      %v6465 = vpop.f32.mrf.mxu0
      %6466 = vmatprep.mubr.bf16.mxu0 0
      %6467 = vmatmul.mubr.bf16.gmra.mxu0 %v6388
      %v6468 = vpop.f32.mrf.mxu0
      %v6469 = vadd.f32 0.0, %v6468
      %v6470 = vpop.f32.mrf.mxu0
      %v6471 = vpop.f32.mrf.mxu0
      %v6472 = vadd.f32 0.0, %v6471
      %v6473 = vpop.f32.mrf.mxu0
      %6474 = vmatprep.mubr.bf16.mxu0 0
      %6475 = vmatmul.mubr.bf16.gmra.mxu0 %v6391
      %v6476 = vpop.f32.mrf.mxu0
      %v6477 = vadd.f32 0.0, %v6476
      %v6478 = vpop.f32.mrf.mxu0
      %v6479 = vpop.f32.mrf.mxu0
      %v6480 = vadd.f32 0.0, %v6479
      %v6481 = vpop.f32.mrf.mxu0
      %6482 = vmatprep.mubr.bf16.mxu0 0
      %6483 = vmatmul.mubr.bf16.gmra.mxu0 %v6394
      %v6484 = vpop.f32.mrf.mxu0
      %v6485 = vadd.f32 0.0, %v6484
      %v6486 = vpop.f32.mrf.mxu0
      %v6487 = vpop.f32.mrf.mxu0
      %v6488 = vadd.f32 0.0, %v6487
      %v6489 = vpop.f32.mrf.mxu0
      %6490 = vmatprep.mubr.bf16.mxu0 0
      %6491 = vmatmul.mubr.bf16.gmra.mxu0 %v6397
      %v6492 = vpop.f32.mrf.mxu0
      %v6493 = vadd.f32 0.0, %v6492
      %v6494 = vpop.f32.mrf.mxu0
      %v6495 = vpop.f32.mrf.mxu0
      %v6496 = vadd.f32 0.0, %v6495
      %v6497 = vpop.f32.mrf.mxu0
      %6498 = vdwg.mxu0
      %v6499 = vadd.f32 %v6315, %v6437
      %v6500 = vadd.f32 %v6316, %v6440
      %v6501 = vadd.f32 %v6317, %v6445
      %v6502 = vadd.f32 %v6318, %v6448
      %v6503 = vadd.f32 %v6319, %v6453
      %v6504 = vadd.f32 %v6320, %v6456
      %v6505 = vadd.f32 %v6321, %v6461
      %v6506 = vadd.f32 %v6322, %v6464
      %v6507 = vadd.f32 %v6323, %v6469
      %v6508 = vadd.f32 %v6324, %v6472
      %v6509 = vadd.f32 %v6325, %v6477
      %v6510 = vadd.f32 %v6326, %v6480
      %v6511 = vadd.f32 %v6327, %v6485
      %v6512 = vadd.f32 %v6328, %v6488
      %v6513 = vadd.f32 %v6329, %v6493
      %v6514 = vadd.f32 %v6330, %v6496
      %v6515 = vld [vmem:[%s6146 + $0x2] sm:$0xff]
      %v6516 = vld [vmem:[%s6146 + $0xa] sm:$0xff]
      %v6517 = vld [vmem:[%s6146 + $0x1a] sm:$0xff]
      %v6518 = vld [vmem:[%s6146 + $0x22] sm:$0xff]
      %v6519 = vld [vmem:[%s6146 + $0x32] sm:$0xff]
      %v6520 = vld [vmem:[%s6146 + $0x3a] sm:$0xff]
      %v6521 = vld [vmem:[%s6146 + $0x4a] sm:$0xff]
      %v6522 = vld [vmem:[%s6146 + $0x52] sm:$0xff]
      %v6523 = vld [vmem:[%s6146 + $0x62] sm:$0xff]
      %v6524 = vld [vmem:[%s6146 + $0x6a] sm:$0xff]
      %v6525 = vld [vmem:[%s6146 + $0x7a] sm:$0xff]
      %v6526 = vld [vmem:[%s6146 + $0x82] sm:$0xff]
      %v6527 = vld [vmem:[%s6146 + $0x92] sm:$0xff]
      %v6528 = vld [vmem:[%s6146 + $0x9a] sm:$0xff]
      %v6529 = vld [vmem:[%s6146 + $0xaa] sm:$0xff]
      %v6530 = vld [vmem:[%s6146 + $0xb2] sm:$0xff]
      %v6531 = vpack.c.bf16 %v6516, %v6515
      %v6532 = vpack.c.bf16 %v6518, %v6517
      %v6533 = vpack.c.bf16 %v6520, %v6519
      %v6534 = vpack.c.bf16 %v6522, %v6521
      %v6535 = vpack.c.bf16 %v6524, %v6523
      %v6536 = vpack.c.bf16 %v6526, %v6525
      %v6537 = vpack.c.bf16 %v6528, %v6527
      %v6538 = vpack.c.bf16 %v6530, %v6529
      %v6539 = vld [vmem:[%s1427] sm:$0xf]
      %v6540 = vld [vmem:[%s1427 + $0x4] sm:$0xf]
      %v6541 = vld [vmem:[%s1427 + $0x8] sm:$0xf]
      %v6542 = vld [vmem:[%s1427 + $0xc] sm:$0xf]
      %v6543 = vld [vmem:[%s1427 + $0x10] sm:$0x3]
      %v6549 = vunpack.c.l.b16 %v6539
      %v6550 = vunpack.c.l.b16 %v6540
      %v6551 = vunpack.c.l.b16 %v6541
      %v6552 = vunpack.c.l.b16 %v6542
      %v6553 = vunpack.c.l.b16 %v6543
      %v6554 = vpack.c.b16 %v6550, %v6549
      %v6555 = vpack.c.b16 %v6552, %v6551
      %v6556 = vpack.c.b16 %v6553, %v6553
      %v6560 = vsel %vm583, %v6531, 0
      %v6563 = vsel %vm583, %v6532, 0
      %v6566 = vsel %vm583, %v6533, 0
      %v6569 = vsel %vm583, %v6534, 0
      %v6572 = vsel %vm583, %v6535, 0
      %v6575 = vsel %vm583, %v6536, 0
      %v6578 = vsel %vm583, %v6537, 0
      %v6581 = vsel %vm583, %v6538, 0
      %v6584 = vsel %vm608, %v6556, 0
      %6586 = vmatprep.subr.bf16.mxu0 0
      %6587 = vmatpush1.bf16.msra.mxu0 0
      %6588 = vmatprep.subr.bf16.mxu0 0
      %6589 = vmatpush1.bf16.msra.mxu0 0
      %6590 = vmatprep.subr.bf16.mxu0 0
      %6591 = vmatpush1.bf16.msra.mxu0 0
      %6592 = vmatprep.subr.bf16.mxu0 0
      %6593 = vmatpush1.bf16.msra.mxu0 0
      %6594 = vmatprep.subr.bf16.mxu0 0
      %6595 = vmatpush1.bf16.msra.mxu0 0
      %6596 = vmatprep.subr.bf16.mxu0 0
      %6597 = vmatpush1.bf16.msra.mxu0 %v6584
      %6598 = vmatprep.subr.bf16.mxu0 0
      %6599 = vmatpush1.bf16.msra.mxu0 %v6555
      %6600 = vmatprep.subr.bf16.mxu0 0
      %6601 = vmatpush1.bf16.msra.mxu0 %v6554
      %6602 = vmatprep.subr.bf16.mxu0 0
      %6603 = vmatpush2.bf16.msra.mxu0 0
      %6604 = vmatprep.subr.bf16.mxu0 0
      %6605 = vmatpush2.bf16.msra.mxu0 0
      %6606 = vmatprep.subr.bf16.mxu0 0
      %6607 = vmatpush2.bf16.msra.mxu0 0
      %6608 = vmatprep.subr.bf16.mxu0 0
      %6609 = vmatpush2.bf16.msra.mxu0 0
      %6610 = vmatprep.subr.bf16.mxu0 0
      %6611 = vmatpush2.bf16.msra.mxu0 0
      %6612 = vmatprep.subr.bf16.mxu0 0
      %6613 = vmatpush2.bf16.msra.mxu0 0
      %6614 = vmatprep.subr.bf16.mxu0 0
      %6615 = vmatpush2.bf16.msra.mxu0 0
      %6616 = vmatprep.subr.bf16.mxu0 0
      %6617 = vmatpush2.bf16.msra.mxu0 0
      %6618 = vmatprep.mubr.bf16.mxu0 0
      %6619 = vmatmul.mubr.bf16.gmra.mxu0 %v6560
      %v6620 = vpop.f32.mrf.mxu0
      %v6621 = vadd.f32 0.0, %v6620
      %v6622 = vpop.f32.mrf.mxu0
      %v6623 = vpop.f32.mrf.mxu0
      %v6624 = vadd.f32 0.0, %v6623
      %v6625 = vpop.f32.mrf.mxu0
      %6626 = vmatprep.mubr.bf16.mxu0 0
      %6627 = vmatmul.mubr.bf16.gmra.mxu0 %v6563
      %v6628 = vpop.f32.mrf.mxu0
      %v6629 = vadd.f32 0.0, %v6628
      %v6630 = vpop.f32.mrf.mxu0
      %v6631 = vpop.f32.mrf.mxu0
      %v6632 = vadd.f32 0.0, %v6631
      %v6633 = vpop.f32.mrf.mxu0
      %6634 = vmatprep.mubr.bf16.mxu0 0
      %6635 = vmatmul.mubr.bf16.gmra.mxu0 %v6566
      %v6636 = vpop.f32.mrf.mxu0
      %v6637 = vadd.f32 0.0, %v6636
      %v6638 = vpop.f32.mrf.mxu0
      %v6639 = vpop.f32.mrf.mxu0
      %v6640 = vadd.f32 0.0, %v6639
      %v6641 = vpop.f32.mrf.mxu0
      %6642 = vmatprep.mubr.bf16.mxu0 0
      %6643 = vmatmul.mubr.bf16.gmra.mxu0 %v6569
      %v6644 = vpop.f32.mrf.mxu0
      %v6645 = vadd.f32 0.0, %v6644
      %v6646 = vpop.f32.mrf.mxu0
      %v6647 = vpop.f32.mrf.mxu0
      %v6648 = vadd.f32 0.0, %v6647
      %v6649 = vpop.f32.mrf.mxu0
      %6650 = vmatprep.mubr.bf16.mxu0 0
      %6651 = vmatmul.mubr.bf16.gmra.mxu0 %v6572
      %v6652 = vpop.f32.mrf.mxu0
      %v6653 = vadd.f32 0.0, %v6652
      %v6654 = vpop.f32.mrf.mxu0
      %v6655 = vpop.f32.mrf.mxu0
      %v6656 = vadd.f32 0.0, %v6655
      %v6657 = vpop.f32.mrf.mxu0
      %6658 = vmatprep.mubr.bf16.mxu0 0
      %6659 = vmatmul.mubr.bf16.gmra.mxu0 %v6575
      %v6660 = vpop.f32.mrf.mxu0
      %v6661 = vadd.f32 0.0, %v6660
      %v6662 = vpop.f32.mrf.mxu0
      %v6663 = vpop.f32.mrf.mxu0
      %v6664 = vadd.f32 0.0, %v6663
      %v6665 = vpop.f32.mrf.mxu0
      %6666 = vmatprep.mubr.bf16.mxu0 0
      %6667 = vmatmul.mubr.bf16.gmra.mxu0 %v6578
      %v6668 = vpop.f32.mrf.mxu0
      %v6669 = vadd.f32 0.0, %v6668
      %v6670 = vpop.f32.mrf.mxu0
      %v6671 = vpop.f32.mrf.mxu0
      %v6672 = vadd.f32 0.0, %v6671
      %v6673 = vpop.f32.mrf.mxu0
      %6674 = vmatprep.mubr.bf16.mxu0 0
      %6675 = vmatmul.mubr.bf16.gmra.mxu0 %v6581
      %v6676 = vpop.f32.mrf.mxu0
      %v6677 = vadd.f32 0.0, %v6676
      %v6678 = vpop.f32.mrf.mxu0
      %v6679 = vpop.f32.mrf.mxu0
      %v6680 = vadd.f32 0.0, %v6679
      %v6681 = vpop.f32.mrf.mxu0
      %6682 = vdwg.mxu0
      %v6683 = vadd.f32 %v6499, %v6621
      %v6684 = vadd.f32 %v6500, %v6624
      %v6685 = vadd.f32 %v6501, %v6629
      %v6686 = vadd.f32 %v6502, %v6632
      %v6687 = vadd.f32 %v6503, %v6637
      %v6688 = vadd.f32 %v6504, %v6640
      %v6689 = vadd.f32 %v6505, %v6645
      %v6690 = vadd.f32 %v6506, %v6648
      %v6691 = vadd.f32 %v6507, %v6653
      %v6692 = vadd.f32 %v6508, %v6656
      %v6693 = vadd.f32 %v6509, %v6661
      %v6694 = vadd.f32 %v6510, %v6664
      %v6695 = vadd.f32 %v6511, %v6669
      %v6696 = vadd.f32 %v6512, %v6672
      %v6697 = vadd.f32 %v6513, %v6677
      %v6698 = vadd.f32 %v6514, %v6680
      %s6699 = scalar_lea.vmem [#allocation2], 672
      %v6700 = vld [vmem:[%s6699] sm:$0xff]
      %v6701 = vld [vmem:[%s6699 + $0x8] sm:$0xff]
      %v6702 = vld [vmem:[%s6699 + $0x18] sm:$0xff]
      %v6703 = vld [vmem:[%s6699 + $0x20] sm:$0xff]
      %v6704 = vld [vmem:[%s6699 + $0x30] sm:$0xff]
      %v6705 = vld [vmem:[%s6699 + $0x38] sm:$0xff]
      %v6706 = vld [vmem:[%s6699 + $0x48] sm:$0xff]
      %v6707 = vld [vmem:[%s6699 + $0x50] sm:$0xff]
      %v6708 = vld [vmem:[%s6699 + $0x60] sm:$0xff]
      %v6709 = vld [vmem:[%s6699 + $0x68] sm:$0xff]
      %v6710 = vld [vmem:[%s6699 + $0x78] sm:$0xff]
      %v6711 = vld [vmem:[%s6699 + $0x80] sm:$0xff]
      %v6712 = vld [vmem:[%s6699 + $0x90] sm:$0xff]
      %v6713 = vld [vmem:[%s6699 + $0x98] sm:$0xff]
      %v6714 = vld [vmem:[%s6699 + $0xa8] sm:$0xff]
      %v6715 = vld [vmem:[%s6699 + $0xb0] sm:$0xff]
      %v6716 = vpack.c.bf16 %v6701, %v6700
      %v6717 = vpack.c.bf16 %v6703, %v6702
      %v6718 = vpack.c.bf16 %v6705, %v6704
      %v6719 = vpack.c.bf16 %v6707, %v6706
      %v6720 = vpack.c.bf16 %v6709, %v6708
      %v6721 = vpack.c.bf16 %v6711, %v6710
      %v6722 = vpack.c.bf16 %v6713, %v6712
      %v6723 = vpack.c.bf16 %v6715, %v6714
      %v6724 = vld [vmem:[%s1613] sm:$0xf]
      %v6725 = vld [vmem:[%s1613 + $0x4] sm:$0xf]
      %v6726 = vld [vmem:[%s1613 + $0x8] sm:$0xf]
      %v6727 = vld [vmem:[%s1613 + $0xc] sm:$0xf]
      %v6728 = vld [vmem:[%s1613 + $0x10] sm:$0x3]
      %v6734 = vunpack.c.l.b16 %v6724
      %v6735 = vunpack.c.l.b16 %v6725
      %v6736 = vunpack.c.l.b16 %v6726
      %v6737 = vunpack.c.l.b16 %v6727
      %v6738 = vunpack.c.l.b16 %v6728
      %v6739 = vpack.c.b16 %v6735, %v6734
      %v6740 = vpack.c.b16 %v6737, %v6736
      %v6741 = vpack.c.b16 %v6738, %v6738
      %v6745 = vsel %vm583, %v6716, 0
      %v6748 = vsel %vm583, %v6717, 0
      %v6751 = vsel %vm583, %v6718, 0
      %v6754 = vsel %vm583, %v6719, 0
      %v6757 = vsel %vm583, %v6720, 0
      %v6760 = vsel %vm583, %v6721, 0
      %v6763 = vsel %vm583, %v6722, 0
      %v6766 = vsel %vm583, %v6723, 0
      %v6769 = vsel %vm608, %v6741, 0
      %6771 = vmatprep.subr.bf16.mxu0 0
      %6772 = vmatpush1.bf16.msra.mxu0 0
      %6773 = vmatprep.subr.bf16.mxu0 0
      %6774 = vmatpush1.bf16.msra.mxu0 0
      %6775 = vmatprep.subr.bf16.mxu0 0
      %6776 = vmatpush1.bf16.msra.mxu0 0
      %6777 = vmatprep.subr.bf16.mxu0 0
      %6778 = vmatpush1.bf16.msra.mxu0 0
      %6779 = vmatprep.subr.bf16.mxu0 0
      %6780 = vmatpush1.bf16.msra.mxu0 0
      %6781 = vmatprep.subr.bf16.mxu0 0
      %6782 = vmatpush1.bf16.msra.mxu0 %v6769
      %6783 = vmatprep.subr.bf16.mxu0 0
      %6784 = vmatpush1.bf16.msra.mxu0 %v6740
      %6785 = vmatprep.subr.bf16.mxu0 0
      %6786 = vmatpush1.bf16.msra.mxu0 %v6739
      %6787 = vmatprep.subr.bf16.mxu0 0
      %6788 = vmatpush2.bf16.msra.mxu0 0
      %6789 = vmatprep.subr.bf16.mxu0 0
      %6790 = vmatpush2.bf16.msra.mxu0 0
      %6791 = vmatprep.subr.bf16.mxu0 0
      %6792 = vmatpush2.bf16.msra.mxu0 0
      %6793 = vmatprep.subr.bf16.mxu0 0
      %6794 = vmatpush2.bf16.msra.mxu0 0
      %6795 = vmatprep.subr.bf16.mxu0 0
      %6796 = vmatpush2.bf16.msra.mxu0 0
      %6797 = vmatprep.subr.bf16.mxu0 0
      %6798 = vmatpush2.bf16.msra.mxu0 0
      %6799 = vmatprep.subr.bf16.mxu0 0
      %6800 = vmatpush2.bf16.msra.mxu0 0
      %6801 = vmatprep.subr.bf16.mxu0 0
      %6802 = vmatpush2.bf16.msra.mxu0 0
      %6803 = vmatprep.mubr.bf16.mxu0 0
      %6804 = vmatmul.mubr.bf16.gmra.mxu0 %v6745
      %v6805 = vpop.f32.mrf.mxu0
      %v6806 = vadd.f32 0.0, %v6805
      %v6807 = vpop.f32.mrf.mxu0
      %v6808 = vpop.f32.mrf.mxu0
      %v6809 = vadd.f32 0.0, %v6808
      %v6810 = vpop.f32.mrf.mxu0
      %6811 = vmatprep.mubr.bf16.mxu0 0
      %6812 = vmatmul.mubr.bf16.gmra.mxu0 %v6748
      %v6813 = vpop.f32.mrf.mxu0
      %v6814 = vadd.f32 0.0, %v6813
      %v6815 = vpop.f32.mrf.mxu0
      %v6816 = vpop.f32.mrf.mxu0
      %v6817 = vadd.f32 0.0, %v6816
      %v6818 = vpop.f32.mrf.mxu0
      %6819 = vmatprep.mubr.bf16.mxu0 0
      %6820 = vmatmul.mubr.bf16.gmra.mxu0 %v6751
      %v6821 = vpop.f32.mrf.mxu0
      %v6822 = vadd.f32 0.0, %v6821
      %v6823 = vpop.f32.mrf.mxu0
      %v6824 = vpop.f32.mrf.mxu0
      %v6825 = vadd.f32 0.0, %v6824
      %v6826 = vpop.f32.mrf.mxu0
      %6827 = vmatprep.mubr.bf16.mxu0 0
      %6828 = vmatmul.mubr.bf16.gmra.mxu0 %v6754
      %v6829 = vpop.f32.mrf.mxu0
      %v6830 = vadd.f32 0.0, %v6829
      %v6831 = vpop.f32.mrf.mxu0
      %v6832 = vpop.f32.mrf.mxu0
      %v6833 = vadd.f32 0.0, %v6832
      %v6834 = vpop.f32.mrf.mxu0
      %6835 = vmatprep.mubr.bf16.mxu0 0
      %6836 = vmatmul.mubr.bf16.gmra.mxu0 %v6757
      %v6837 = vpop.f32.mrf.mxu0
      %v6838 = vadd.f32 0.0, %v6837
      %v6839 = vpop.f32.mrf.mxu0
      %v6840 = vpop.f32.mrf.mxu0
      %v6841 = vadd.f32 0.0, %v6840
      %v6842 = vpop.f32.mrf.mxu0
      %6843 = vmatprep.mubr.bf16.mxu0 0
      %6844 = vmatmul.mubr.bf16.gmra.mxu0 %v6760
      %v6845 = vpop.f32.mrf.mxu0
      %v6846 = vadd.f32 0.0, %v6845
      %v6847 = vpop.f32.mrf.mxu0
      %v6848 = vpop.f32.mrf.mxu0
      %v6849 = vadd.f32 0.0, %v6848
      %v6850 = vpop.f32.mrf.mxu0
      %6851 = vmatprep.mubr.bf16.mxu0 0
      %6852 = vmatmul.mubr.bf16.gmra.mxu0 %v6763
      %v6853 = vpop.f32.mrf.mxu0
      %v6854 = vadd.f32 0.0, %v6853
      %v6855 = vpop.f32.mrf.mxu0
      %v6856 = vpop.f32.mrf.mxu0
      %v6857 = vadd.f32 0.0, %v6856
      %v6858 = vpop.f32.mrf.mxu0
      %6859 = vmatprep.mubr.bf16.mxu0 0
      %6860 = vmatmul.mubr.bf16.gmra.mxu0 %v6766
      %v6861 = vpop.f32.mrf.mxu0
      %v6862 = vadd.f32 0.0, %v6861
      %v6863 = vpop.f32.mrf.mxu0
      %v6864 = vpop.f32.mrf.mxu0
      %v6865 = vadd.f32 0.0, %v6864
      %v6866 = vpop.f32.mrf.mxu0
      %6867 = vdwg.mxu0
      %v6868 = vadd.f32 %v6683, %v6806
      %v6869 = vadd.f32 %v6684, %v6809
      %v6870 = vadd.f32 %v6685, %v6814
      %v6871 = vadd.f32 %v6686, %v6817
      %v6872 = vadd.f32 %v6687, %v6822
      %v6873 = vadd.f32 %v6688, %v6825
      %v6874 = vadd.f32 %v6689, %v6830
      %v6875 = vadd.f32 %v6690, %v6833
      %v6876 = vadd.f32 %v6691, %v6838
      %v6877 = vadd.f32 %v6692, %v6841
      %v6878 = vadd.f32 %v6693, %v6846
      %v6879 = vadd.f32 %v6694, %v6849
      %v6880 = vadd.f32 %v6695, %v6854
      %v6881 = vadd.f32 %v6696, %v6857
      %v6882 = vadd.f32 %v6697, %v6862
      %v6883 = vadd.f32 %v6698, %v6865
      %v6884 = vld [vmem:[%s6699 + $0x1] sm:$0xff]
      %v6885 = vld [vmem:[%s6699 + $0x9] sm:$0xff]
      %v6886 = vld [vmem:[%s6699 + $0x19] sm:$0xff]
      %v6887 = vld [vmem:[%s6699 + $0x21] sm:$0xff]
      %v6888 = vld [vmem:[%s6699 + $0x31] sm:$0xff]
      %v6889 = vld [vmem:[%s6699 + $0x39] sm:$0xff]
      %v6890 = vld [vmem:[%s6699 + $0x49] sm:$0xff]
      %v6891 = vld [vmem:[%s6699 + $0x51] sm:$0xff]
      %v6892 = vld [vmem:[%s6699 + $0x61] sm:$0xff]
      %v6893 = vld [vmem:[%s6699 + $0x69] sm:$0xff]
      %v6894 = vld [vmem:[%s6699 + $0x79] sm:$0xff]
      %v6895 = vld [vmem:[%s6699 + $0x81] sm:$0xff]
      %v6896 = vld [vmem:[%s6699 + $0x91] sm:$0xff]
      %v6897 = vld [vmem:[%s6699 + $0x99] sm:$0xff]
      %v6898 = vld [vmem:[%s6699 + $0xa9] sm:$0xff]
      %v6899 = vld [vmem:[%s6699 + $0xb1] sm:$0xff]
      %v6900 = vpack.c.bf16 %v6885, %v6884
      %v6901 = vpack.c.bf16 %v6887, %v6886
      %v6902 = vpack.c.bf16 %v6889, %v6888
      %v6903 = vpack.c.bf16 %v6891, %v6890
      %v6904 = vpack.c.bf16 %v6893, %v6892
      %v6905 = vpack.c.bf16 %v6895, %v6894
      %v6906 = vpack.c.bf16 %v6897, %v6896
      %v6907 = vpack.c.bf16 %v6899, %v6898
      %v6908 = vld [vmem:[%s1798] sm:$0xf]
      %v6909 = vld [vmem:[%s1798 + $0x4] sm:$0xf]
      %v6910 = vld [vmem:[%s1798 + $0x8] sm:$0xf]
      %v6911 = vld [vmem:[%s1798 + $0xc] sm:$0xf]
      %v6912 = vld [vmem:[%s1798 + $0x10] sm:$0x3]
      %v6918 = vunpack.c.l.b16 %v6908
      %v6919 = vunpack.c.l.b16 %v6909
      %v6920 = vunpack.c.l.b16 %v6910
      %v6921 = vunpack.c.l.b16 %v6911
      %v6922 = vunpack.c.l.b16 %v6912
      %v6923 = vpack.c.b16 %v6919, %v6918
      %v6924 = vpack.c.b16 %v6921, %v6920
      %v6925 = vpack.c.b16 %v6922, %v6922
      %v6929 = vsel %vm583, %v6900, 0
      %v6932 = vsel %vm583, %v6901, 0
      %v6935 = vsel %vm583, %v6902, 0
      %v6938 = vsel %vm583, %v6903, 0
      %v6941 = vsel %vm583, %v6904, 0
      %v6944 = vsel %vm583, %v6905, 0
      %v6947 = vsel %vm583, %v6906, 0
      %v6950 = vsel %vm583, %v6907, 0
      %v6953 = vsel %vm608, %v6925, 0
      %6955 = vmatprep.subr.bf16.mxu0 0
      %6956 = vmatpush1.bf16.msra.mxu0 0
      %6957 = vmatprep.subr.bf16.mxu0 0
      %6958 = vmatpush1.bf16.msra.mxu0 0
      %6959 = vmatprep.subr.bf16.mxu0 0
      %6960 = vmatpush1.bf16.msra.mxu0 0
      %6961 = vmatprep.subr.bf16.mxu0 0
      %6962 = vmatpush1.bf16.msra.mxu0 0
      %6963 = vmatprep.subr.bf16.mxu0 0
      %6964 = vmatpush1.bf16.msra.mxu0 0
      %6965 = vmatprep.subr.bf16.mxu0 0
      %6966 = vmatpush1.bf16.msra.mxu0 %v6953
      %6967 = vmatprep.subr.bf16.mxu0 0
      %6968 = vmatpush1.bf16.msra.mxu0 %v6924
      %6969 = vmatprep.subr.bf16.mxu0 0
      %6970 = vmatpush1.bf16.msra.mxu0 %v6923
      %6971 = vmatprep.subr.bf16.mxu0 0
      %6972 = vmatpush2.bf16.msra.mxu0 0
      %6973 = vmatprep.subr.bf16.mxu0 0
      %6974 = vmatpush2.bf16.msra.mxu0 0
      %6975 = vmatprep.subr.bf16.mxu0 0
      %6976 = vmatpush2.bf16.msra.mxu0 0
      %6977 = vmatprep.subr.bf16.mxu0 0
      %6978 = vmatpush2.bf16.msra.mxu0 0
      %6979 = vmatprep.subr.bf16.mxu0 0
      %6980 = vmatpush2.bf16.msra.mxu0 0
      %6981 = vmatprep.subr.bf16.mxu0 0
      %6982 = vmatpush2.bf16.msra.mxu0 0
      %6983 = vmatprep.subr.bf16.mxu0 0
      %6984 = vmatpush2.bf16.msra.mxu0 0
      %6985 = vmatprep.subr.bf16.mxu0 0
      %6986 = vmatpush2.bf16.msra.mxu0 0
      %6987 = vmatprep.mubr.bf16.mxu0 0
      %6988 = vmatmul.mubr.bf16.gmra.mxu0 %v6929
      %v6989 = vpop.f32.mrf.mxu0
      %v6990 = vadd.f32 0.0, %v6989
      %v6991 = vpop.f32.mrf.mxu0
      %v6992 = vpop.f32.mrf.mxu0
      %v6993 = vadd.f32 0.0, %v6992
      %v6994 = vpop.f32.mrf.mxu0
      %6995 = vmatprep.mubr.bf16.mxu0 0
      %6996 = vmatmul.mubr.bf16.gmra.mxu0 %v6932
      %v6997 = vpop.f32.mrf.mxu0
      %v6998 = vadd.f32 0.0, %v6997
      %v6999 = vpop.f32.mrf.mxu0
      %v7000 = vpop.f32.mrf.mxu0
      %v7001 = vadd.f32 0.0, %v7000
      %v7002 = vpop.f32.mrf.mxu0
      %7003 = vmatprep.mubr.bf16.mxu0 0
      %7004 = vmatmul.mubr.bf16.gmra.mxu0 %v6935
      %v7005 = vpop.f32.mrf.mxu0
      %v7006 = vadd.f32 0.0, %v7005
      %v7007 = vpop.f32.mrf.mxu0
      %v7008 = vpop.f32.mrf.mxu0
      %v7009 = vadd.f32 0.0, %v7008
      %v7010 = vpop.f32.mrf.mxu0
      %7011 = vmatprep.mubr.bf16.mxu0 0
      %7012 = vmatmul.mubr.bf16.gmra.mxu0 %v6938
      %v7013 = vpop.f32.mrf.mxu0
      %v7014 = vadd.f32 0.0, %v7013
      %v7015 = vpop.f32.mrf.mxu0
      %v7016 = vpop.f32.mrf.mxu0
      %v7017 = vadd.f32 0.0, %v7016
      %v7018 = vpop.f32.mrf.mxu0
      %7019 = vmatprep.mubr.bf16.mxu0 0
      %7020 = vmatmul.mubr.bf16.gmra.mxu0 %v6941
      %v7021 = vpop.f32.mrf.mxu0
      %v7022 = vadd.f32 0.0, %v7021
      %v7023 = vpop.f32.mrf.mxu0
      %v7024 = vpop.f32.mrf.mxu0
      %v7025 = vadd.f32 0.0, %v7024
      %v7026 = vpop.f32.mrf.mxu0
      %7027 = vmatprep.mubr.bf16.mxu0 0
      %7028 = vmatmul.mubr.bf16.gmra.mxu0 %v6944
      %v7029 = vpop.f32.mrf.mxu0
      %v7030 = vadd.f32 0.0, %v7029
      %v7031 = vpop.f32.mrf.mxu0
      %v7032 = vpop.f32.mrf.mxu0
      %v7033 = vadd.f32 0.0, %v7032
      %v7034 = vpop.f32.mrf.mxu0
      %7035 = vmatprep.mubr.bf16.mxu0 0
      %7036 = vmatmul.mubr.bf16.gmra.mxu0 %v6947
      %v7037 = vpop.f32.mrf.mxu0
      %v7038 = vadd.f32 0.0, %v7037
      %v7039 = vpop.f32.mrf.mxu0
      %v7040 = vpop.f32.mrf.mxu0
      %v7041 = vadd.f32 0.0, %v7040
      %v7042 = vpop.f32.mrf.mxu0
      %7043 = vmatprep.mubr.bf16.mxu0 0
      %7044 = vmatmul.mubr.bf16.gmra.mxu0 %v6950
      %v7045 = vpop.f32.mrf.mxu0
      %v7046 = vadd.f32 0.0, %v7045
      %v7047 = vpop.f32.mrf.mxu0
      %v7048 = vpop.f32.mrf.mxu0
      %v7049 = vadd.f32 0.0, %v7048
      %v7050 = vpop.f32.mrf.mxu0
      %7051 = vdwg.mxu0
      %v7052 = vadd.f32 %v6868, %v6990
      %v7053 = vadd.f32 %v6869, %v6993
      %v7054 = vadd.f32 %v6870, %v6998
      %v7055 = vadd.f32 %v6871, %v7001
      %v7056 = vadd.f32 %v6872, %v7006
      %v7057 = vadd.f32 %v6873, %v7009
      %v7058 = vadd.f32 %v6874, %v7014
      %v7059 = vadd.f32 %v6875, %v7017
      %v7060 = vadd.f32 %v6876, %v7022
      %v7061 = vadd.f32 %v6877, %v7025
      %v7062 = vadd.f32 %v6878, %v7030
      %v7063 = vadd.f32 %v6879, %v7033
      %v7064 = vadd.f32 %v6880, %v7038
      %v7065 = vadd.f32 %v6881, %v7041
      %v7066 = vadd.f32 %v6882, %v7046
      %v7067 = vadd.f32 %v6883, %v7049
      %v7068 = vld [vmem:[%s6699 + $0x2] sm:$0xff]
      %v7069 = vld [vmem:[%s6699 + $0xa] sm:$0xff]
      %v7070 = vld [vmem:[%s6699 + $0x1a] sm:$0xff]
      %v7071 = vld [vmem:[%s6699 + $0x22] sm:$0xff]
      %v7072 = vld [vmem:[%s6699 + $0x32] sm:$0xff]
      %v7073 = vld [vmem:[%s6699 + $0x3a] sm:$0xff]
      %v7074 = vld [vmem:[%s6699 + $0x4a] sm:$0xff]
      %v7075 = vld [vmem:[%s6699 + $0x52] sm:$0xff]
      %v7076 = vld [vmem:[%s6699 + $0x62] sm:$0xff]
      %v7077 = vld [vmem:[%s6699 + $0x6a] sm:$0xff]
      %v7078 = vld [vmem:[%s6699 + $0x7a] sm:$0xff]
      %v7079 = vld [vmem:[%s6699 + $0x82] sm:$0xff]
      %v7080 = vld [vmem:[%s6699 + $0x92] sm:$0xff]
      %v7081 = vld [vmem:[%s6699 + $0x9a] sm:$0xff]
      %v7082 = vld [vmem:[%s6699 + $0xaa] sm:$0xff]
      %v7083 = vld [vmem:[%s6699 + $0xb2] sm:$0xff]
      %v7084 = vpack.c.bf16 %v7069, %v7068
      %v7085 = vpack.c.bf16 %v7071, %v7070
      %v7086 = vpack.c.bf16 %v7073, %v7072
      %v7087 = vpack.c.bf16 %v7075, %v7074
      %v7088 = vpack.c.bf16 %v7077, %v7076
      %v7089 = vpack.c.bf16 %v7079, %v7078
      %v7090 = vpack.c.bf16 %v7081, %v7080
      %v7091 = vpack.c.bf16 %v7083, %v7082
      %v7092 = vld [vmem:[%s1983] sm:$0xf]
      %v7093 = vld [vmem:[%s1983 + $0x4] sm:$0xf]
      %v7094 = vld [vmem:[%s1983 + $0x8] sm:$0xf]
      %v7095 = vld [vmem:[%s1983 + $0xc] sm:$0xf]
      %v7096 = vld [vmem:[%s1983 + $0x10] sm:$0x3]
      %v7102 = vunpack.c.l.b16 %v7092
      %v7103 = vunpack.c.l.b16 %v7093
      %v7104 = vunpack.c.l.b16 %v7094
      %v7105 = vunpack.c.l.b16 %v7095
      %v7106 = vunpack.c.l.b16 %v7096
      %v7107 = vpack.c.b16 %v7103, %v7102
      %v7108 = vpack.c.b16 %v7105, %v7104
      %v7109 = vpack.c.b16 %v7106, %v7106
      %v7113 = vsel %vm583, %v7084, 0
      %v7116 = vsel %vm583, %v7085, 0
      %v7119 = vsel %vm583, %v7086, 0
      %v7122 = vsel %vm583, %v7087, 0
      %v7125 = vsel %vm583, %v7088, 0
      %v7128 = vsel %vm583, %v7089, 0
      %v7131 = vsel %vm583, %v7090, 0
      %v7134 = vsel %vm583, %v7091, 0
      %v7137 = vsel %vm608, %v7109, 0
      %7139 = vmatprep.subr.bf16.mxu0 0
      %7140 = vmatpush1.bf16.msra.mxu0 0
      %7141 = vmatprep.subr.bf16.mxu0 0
      %7142 = vmatpush1.bf16.msra.mxu0 0
      %7143 = vmatprep.subr.bf16.mxu0 0
      %7144 = vmatpush1.bf16.msra.mxu0 0
      %7145 = vmatprep.subr.bf16.mxu0 0
      %7146 = vmatpush1.bf16.msra.mxu0 0
      %7147 = vmatprep.subr.bf16.mxu0 0
      %7148 = vmatpush1.bf16.msra.mxu0 0
      %7149 = vmatprep.subr.bf16.mxu0 0
      %7150 = vmatpush1.bf16.msra.mxu0 %v7137
      %7151 = vmatprep.subr.bf16.mxu0 0
      %7152 = vmatpush1.bf16.msra.mxu0 %v7108
      %7153 = vmatprep.subr.bf16.mxu0 0
      %7154 = vmatpush1.bf16.msra.mxu0 %v7107
      %7155 = vmatprep.subr.bf16.mxu0 0
      %7156 = vmatpush2.bf16.msra.mxu0 0
      %7157 = vmatprep.subr.bf16.mxu0 0
      %7158 = vmatpush2.bf16.msra.mxu0 0
      %7159 = vmatprep.subr.bf16.mxu0 0
      %7160 = vmatpush2.bf16.msra.mxu0 0
      %7161 = vmatprep.subr.bf16.mxu0 0
      %7162 = vmatpush2.bf16.msra.mxu0 0
      %7163 = vmatprep.subr.bf16.mxu0 0
      %7164 = vmatpush2.bf16.msra.mxu0 0
      %7165 = vmatprep.subr.bf16.mxu0 0
      %7166 = vmatpush2.bf16.msra.mxu0 0
      %7167 = vmatprep.subr.bf16.mxu0 0
      %7168 = vmatpush2.bf16.msra.mxu0 0
      %7169 = vmatprep.subr.bf16.mxu0 0
      %7170 = vmatpush2.bf16.msra.mxu0 0
      %7171 = vmatprep.mubr.bf16.mxu0 0
      %7172 = vmatmul.mubr.bf16.gmra.mxu0 %v7113
      %v7173 = vpop.f32.mrf.mxu0
      %v7174 = vadd.f32 0.0, %v7173
      %v7175 = vpop.f32.mrf.mxu0
      %v7176 = vpop.f32.mrf.mxu0
      %v7177 = vadd.f32 0.0, %v7176
      %v7178 = vpop.f32.mrf.mxu0
      %7179 = vmatprep.mubr.bf16.mxu0 0
      %7180 = vmatmul.mubr.bf16.gmra.mxu0 %v7116
      %v7181 = vpop.f32.mrf.mxu0
      %v7182 = vadd.f32 0.0, %v7181
      %v7183 = vpop.f32.mrf.mxu0
      %v7184 = vpop.f32.mrf.mxu0
      %v7185 = vadd.f32 0.0, %v7184
      %v7186 = vpop.f32.mrf.mxu0
      %7187 = vmatprep.mubr.bf16.mxu0 0
      %7188 = vmatmul.mubr.bf16.gmra.mxu0 %v7119
      %v7189 = vpop.f32.mrf.mxu0
      %v7190 = vadd.f32 0.0, %v7189
      %v7191 = vpop.f32.mrf.mxu0
      %v7192 = vpop.f32.mrf.mxu0
      %v7193 = vadd.f32 0.0, %v7192
      %v7194 = vpop.f32.mrf.mxu0
      %7195 = vmatprep.mubr.bf16.mxu0 0
      %7196 = vmatmul.mubr.bf16.gmra.mxu0 %v7122
      %v7197 = vpop.f32.mrf.mxu0
      %v7198 = vadd.f32 0.0, %v7197
      %v7199 = vpop.f32.mrf.mxu0
      %v7200 = vpop.f32.mrf.mxu0
      %v7201 = vadd.f32 0.0, %v7200
      %v7202 = vpop.f32.mrf.mxu0
      %7203 = vmatprep.mubr.bf16.mxu0 0
      %7204 = vmatmul.mubr.bf16.gmra.mxu0 %v7125
      %v7205 = vpop.f32.mrf.mxu0
      %v7206 = vadd.f32 0.0, %v7205
      %v7207 = vpop.f32.mrf.mxu0
      %v7208 = vpop.f32.mrf.mxu0
      %v7209 = vadd.f32 0.0, %v7208
      %v7210 = vpop.f32.mrf.mxu0
      %7211 = vmatprep.mubr.bf16.mxu0 0
      %7212 = vmatmul.mubr.bf16.gmra.mxu0 %v7128
      %v7213 = vpop.f32.mrf.mxu0
      %v7214 = vadd.f32 0.0, %v7213
      %v7215 = vpop.f32.mrf.mxu0
      %v7216 = vpop.f32.mrf.mxu0
      %v7217 = vadd.f32 0.0, %v7216
      %v7218 = vpop.f32.mrf.mxu0
      %7219 = vmatprep.mubr.bf16.mxu0 0
      %7220 = vmatmul.mubr.bf16.gmra.mxu0 %v7131
      %v7221 = vpop.f32.mrf.mxu0
      %v7222 = vadd.f32 0.0, %v7221
      %v7223 = vpop.f32.mrf.mxu0
      %v7224 = vpop.f32.mrf.mxu0
      %v7225 = vadd.f32 0.0, %v7224
      %v7226 = vpop.f32.mrf.mxu0
      %7227 = vmatprep.mubr.bf16.mxu0 0
      %7228 = vmatmul.mubr.bf16.gmra.mxu0 %v7134
      %v7229 = vpop.f32.mrf.mxu0
      %v7230 = vadd.f32 0.0, %v7229
      %v7231 = vpop.f32.mrf.mxu0
      %v7232 = vpop.f32.mrf.mxu0
      %v7233 = vadd.f32 0.0, %v7232
      %v7234 = vpop.f32.mrf.mxu0
      %7235 = vdwg.mxu0
      %v7236 = vadd.f32 %v7052, %v7174
      %v7237 = vadd.f32 %v7053, %v7177
      %v7238 = vadd.f32 %v7054, %v7182
      %v7239 = vadd.f32 %v7055, %v7185
      %v7240 = vadd.f32 %v7056, %v7190
      %v7241 = vadd.f32 %v7057, %v7193
      %v7242 = vadd.f32 %v7058, %v7198
      %v7243 = vadd.f32 %v7059, %v7201
      %v7244 = vadd.f32 %v7060, %v7206
      %v7245 = vadd.f32 %v7061, %v7209
      %v7246 = vadd.f32 %v7062, %v7214
      %v7247 = vadd.f32 %v7063, %v7217
      %v7248 = vadd.f32 %v7064, %v7222
      %v7249 = vadd.f32 %v7065, %v7225
      %v7250 = vadd.f32 %v7066, %v7230
      %v7251 = vadd.f32 %v7067, %v7233
      %7252 = vst [vmem:[#allocation3 + $0x180] sm:$0xff] %v7236
      %7253 = vst [vmem:[#allocation3 + $0x188] sm:$0xff] %v7237
      %7254 = vst [vmem:[#allocation3 + $0x190] sm:$0xff] %v7238
      %7255 = vst [vmem:[#allocation3 + $0x198] sm:$0xff] %v7239
      %7256 = vst [vmem:[#allocation3 + $0x1a0] sm:$0xff] %v7240
      %7257 = vst [vmem:[#allocation3 + $0x1a8] sm:$0xff] %v7241
      %7258 = vst [vmem:[#allocation3 + $0x1b0] sm:$0xff] %v7242
      %7259 = vst [vmem:[#allocation3 + $0x1b8] sm:$0xff] %v7243
      %7260 = vst [vmem:[#allocation3 + $0x1c0] sm:$0xff] %v7244
      %7261 = vst [vmem:[#allocation3 + $0x1c8] sm:$0xff] %v7245
      %7262 = vst [vmem:[#allocation3 + $0x1d0] sm:$0xff] %v7246
      %7263 = vst [vmem:[#allocation3 + $0x1d8] sm:$0xff] %v7247
      %7264 = vst [vmem:[#allocation3 + $0x1e0] sm:$0xff] %v7248
      %7265 = vst [vmem:[#allocation3 + $0x1e8] sm:$0xff] %v7249
      %7266 = vst [vmem:[#allocation3 + $0x1f0] sm:$0xff] %v7250
      %7267 = vst [vmem:[#allocation3 + $0x1f8] sm:$0xff] %v7251
      %v7268 = vadd.f32 %v7236, %v7237
      %v7269 = vadd.f32 %v7268, %v7238
      %v7270 = vadd.f32 %v7269, %v7239
      %v7271 = vadd.f32 %v7270, %v7240
      %v7272 = vadd.f32 %v7271, %v7241
      %v7273 = vadd.f32 %v7272, %v7242
      %v7274 = vadd.f32 %v7273, %v7243
      %v7275 = vadd.f32 %v7274, %v7244
      %v7276 = vadd.f32 %v7275, %v7245
      %v7277 = vadd.f32 %v7276, %v7246
      %v7278 = vadd.f32 %v7277, %v7247
      %v7279 = vadd.f32 %v7278, %v7248
      %v7280 = vadd.f32 %v7279, %v7249
      %v7281 = vadd.f32 %v7280, %v7250
      %v7282 = vadd.f32 %v7281, %v7251
      %v7283 = vrot.slane %v7282, 4
      %v7284 = vadd.f32 %v7282, %v7283
      %v7285 = vrot.slane %v7284, 2
      %v7286 = vadd.f32 %v7284, %v7285
      %v7287 = vrot.slane %v7286, 1
      %v7288 = vadd.f32 %v7286, %v7287
      %v7289 = vadd.f32 %v5586, %v7288
      %v7290 = vmul.f32 %v7236, %v7236
      %v7291 = vmul.f32 %v7237, %v7237
      %v7292 = vmul.f32 %v7238, %v7238
      %v7293 = vmul.f32 %v7239, %v7239
      %v7294 = vmul.f32 %v7240, %v7240
      %v7295 = vmul.f32 %v7241, %v7241
      %v7296 = vmul.f32 %v7242, %v7242
      %v7297 = vmul.f32 %v7243, %v7243
      %v7298 = vmul.f32 %v7244, %v7244
      %v7299 = vmul.f32 %v7245, %v7245
      %v7300 = vmul.f32 %v7246, %v7246
      %v7301 = vmul.f32 %v7247, %v7247
      %v7302 = vmul.f32 %v7248, %v7248
      %v7303 = vmul.f32 %v7249, %v7249
      %v7304 = vmul.f32 %v7250, %v7250
      %v7305 = vmul.f32 %v7251, %v7251
      %v7306 = vadd.f32 %v7290, %v7291
      %v7307 = vadd.f32 %v7306, %v7292
      %v7308 = vadd.f32 %v7307, %v7293
      %v7309 = vadd.f32 %v7308, %v7294
      %v7310 = vadd.f32 %v7309, %v7295
      %v7311 = vadd.f32 %v7310, %v7296
      %v7312 = vadd.f32 %v7311, %v7297
      %v7313 = vadd.f32 %v7312, %v7298
      %v7314 = vadd.f32 %v7313, %v7299
      %v7315 = vadd.f32 %v7314, %v7300
      %v7316 = vadd.f32 %v7315, %v7301
      %v7317 = vadd.f32 %v7316, %v7302
      %v7318 = vadd.f32 %v7317, %v7303
      %v7319 = vadd.f32 %v7318, %v7304
      %v7320 = vadd.f32 %v7319, %v7305
      %v7321 = vrot.slane %v7320, 4
      %v7322 = vadd.f32 %v7320, %v7321
      %v7323 = vrot.slane %v7322, 2
      %v7324 = vadd.f32 %v7322, %v7323
      %v7325 = vrot.slane %v7324, 1
      %v7326 = vadd.f32 %v7324, %v7325
      %v7327 = vadd.f32 %v5624, %v7326
      %v7328 = vmul.f32 %v7289, 0.001953125
      %v7329 = vmul.f32 %v7327, 0.001953125
      %v7330 = vmul.f32 %v7328, %v7328
      %v7331 = vsub.f32 %v7329, %v7330
      %v7332 = vmax.f32 %v7331, 0.0
      %v7333 = vld [vmem:[%s2] sm:$0x1]
      %v7334 = vadd.f32 %v7332, 1e-05
      %v7335 = vrsqrt.pop %v7334
      %v7336 = vmul.f32 %v7333, %v7335
      %v7337 = vld [vmem:[%s3] sm:$0x1]
      %v7338 = vmul.f32 %v7328, %v7336
      %v7339 = vsub.f32 %v7337, %v7338
      %v7340 = vld [vmem:[#allocation3] sm:$0xff]
      %v7341 = vld [vmem:[#allocation3 + $0x8] sm:$0xff]
      %v7342 = vld [vmem:[#allocation3 + $0x10] sm:$0xff]
      %v7343 = vld [vmem:[#allocation3 + $0x18] sm:$0xff]
      %v7344 = vld [vmem:[#allocation3 + $0x20] sm:$0xff]
      %v7345 = vld [vmem:[#allocation3 + $0x28] sm:$0xff]
      %v7346 = vld [vmem:[#allocation3 + $0x30] sm:$0xff]
      %v7347 = vld [vmem:[#allocation3 + $0x38] sm:$0xff]
      %v7348 = vld [vmem:[#allocation3 + $0x40] sm:$0xff]
      %v7349 = vld [vmem:[#allocation3 + $0x48] sm:$0xff]
      %v7350 = vld [vmem:[#allocation3 + $0x50] sm:$0xff]
      %v7351 = vld [vmem:[#allocation3 + $0x58] sm:$0xff]
      %v7352 = vld [vmem:[#allocation3 + $0x60] sm:$0xff]
      %v7353 = vld [vmem:[#allocation3 + $0x68] sm:$0xff]
      %v7354 = vld [vmem:[#allocation3 + $0x70] sm:$0xff]
      %v7355 = vld [vmem:[#allocation3 + $0x78] sm:$0xff]
      %v7357 = vlaneseq
      %v7358 = vshrl.u32 %v7357, 7
      %v7359 = vsub.s32 0, %v7358
      %v7360 = vrot.slane %v7336, %v7359
      %v7362 = vmul.f32 %v7340, %v7360
      %v7363 = vmul.f32 %v7341, %v7360
      %v7364 = vmul.f32 %v7342, %v7360
      %v7365 = vmul.f32 %v7343, %v7360
      %v7366 = vmul.f32 %v7344, %v7360
      %v7367 = vmul.f32 %v7345, %v7360
      %v7368 = vmul.f32 %v7346, %v7360
      %v7369 = vmul.f32 %v7347, %v7360
      %v7370 = vmul.f32 %v7348, %v7360
      %v7371 = vmul.f32 %v7349, %v7360
      %v7372 = vmul.f32 %v7350, %v7360
      %v7373 = vmul.f32 %v7351, %v7360
      %v7374 = vmul.f32 %v7352, %v7360
      %v7375 = vmul.f32 %v7353, %v7360
      %v7376 = vmul.f32 %v7354, %v7360
      %v7377 = vmul.f32 %v7355, %v7360
      %v7379 = vlaneseq
      %v7380 = vshrl.u32 %v7379, 7
      %v7381 = vsub.s32 0, %v7380
      %v7382 = vrot.slane %v7339, %v7381
      %v7384 = vadd.f32 %v7362, %v7382
      %v7385 = vadd.f32 %v7363, %v7382
      %v7386 = vadd.f32 %v7364, %v7382
      %v7387 = vadd.f32 %v7365, %v7382
      %v7388 = vadd.f32 %v7366, %v7382
      %v7389 = vadd.f32 %v7367, %v7382
      %v7390 = vadd.f32 %v7368, %v7382
      %v7391 = vadd.f32 %v7369, %v7382
      %v7392 = vadd.f32 %v7370, %v7382
      %v7393 = vadd.f32 %v7371, %v7382
      %v7394 = vadd.f32 %v7372, %v7382
      %v7395 = vadd.f32 %v7373, %v7382
      %v7396 = vadd.f32 %v7374, %v7382
      %v7397 = vadd.f32 %v7375, %v7382
      %v7398 = vadd.f32 %v7376, %v7382
      %v7399 = vadd.f32 %v7377, %v7382
      %v7400 = vxor.u32 %v7384, 2147483648
      %v7401 = vxor.u32 %v7385, 2147483648
      %v7402 = vxor.u32 %v7386, 2147483648
      %v7403 = vxor.u32 %v7387, 2147483648
      %v7404 = vxor.u32 %v7388, 2147483648
      %v7405 = vxor.u32 %v7389, 2147483648
      %v7406 = vxor.u32 %v7390, 2147483648
      %v7407 = vxor.u32 %v7391, 2147483648
      %v7408 = vxor.u32 %v7392, 2147483648
      %v7409 = vxor.u32 %v7393, 2147483648
      %v7410 = vxor.u32 %v7394, 2147483648
      %v7411 = vxor.u32 %v7395, 2147483648
      %v7412 = vxor.u32 %v7396, 2147483648
      %v7413 = vxor.u32 %v7397, 2147483648
      %v7414 = vxor.u32 %v7398, 2147483648
      %v7415 = vxor.u32 %v7399, 2147483648
      %v7416 = vmul.f32 %v7400, 1.442695
      %v7417 = vpow.pop %v7416
      %v7418 = vmul.f32 %v7401, 1.442695
      %v7419 = vpow.pop %v7418
      %v7420 = vmul.f32 %v7402, 1.442695
      %v7421 = vpow.pop %v7420
      %v7422 = vmul.f32 %v7403, 1.442695
      %v7423 = vpow.pop %v7422
      %v7424 = vmul.f32 %v7404, 1.442695
      %v7425 = vpow.pop %v7424
      %v7426 = vmul.f32 %v7405, 1.442695
      %v7427 = vpow.pop %v7426
      %v7428 = vmul.f32 %v7406, 1.442695
      %v7429 = vpow.pop %v7428
      %v7430 = vmul.f32 %v7407, 1.442695
      %v7431 = vpow.pop %v7430
      %v7432 = vmul.f32 %v7408, 1.442695
      %v7433 = vpow.pop %v7432
      %v7434 = vmul.f32 %v7409, 1.442695
      %v7435 = vpow.pop %v7434
      %v7436 = vmul.f32 %v7410, 1.442695
      %v7437 = vpow.pop %v7436
      %v7438 = vmul.f32 %v7411, 1.442695
      %v7439 = vpow.pop %v7438
      %v7440 = vmul.f32 %v7412, 1.442695
      %v7441 = vpow.pop %v7440
      %v7442 = vmul.f32 %v7413, 1.442695
      %v7443 = vpow.pop %v7442
      %v7444 = vmul.f32 %v7414, 1.442695
      %v7445 = vpow.pop %v7444
      %v7446 = vmul.f32 %v7415, 1.442695
      %v7447 = vpow.pop %v7446
      %v7448 = vadd.f32 %v7417, 1.0
      %v7449 = vadd.f32 %v7419, 1.0
      %v7450 = vadd.f32 %v7421, 1.0
      %v7451 = vadd.f32 %v7423, 1.0
      %v7452 = vadd.f32 %v7425, 1.0
      %v7453 = vadd.f32 %v7427, 1.0
      %v7454 = vadd.f32 %v7429, 1.0
      %v7455 = vadd.f32 %v7431, 1.0
      %v7456 = vadd.f32 %v7433, 1.0
      %v7457 = vadd.f32 %v7435, 1.0
      %v7458 = vadd.f32 %v7437, 1.0
      %v7459 = vadd.f32 %v7439, 1.0
      %v7460 = vadd.f32 %v7441, 1.0
      %v7461 = vadd.f32 %v7443, 1.0
      %v7462 = vadd.f32 %v7445, 1.0
      %v7463 = vadd.f32 %v7447, 1.0
      %v7464 = vrcp.pop %v7448
      %v7465 = vmul.f32 1.0, %v7464
      %v7466 = vrcp.pop %v7449
      %v7467 = vmul.f32 1.0, %v7466
      %v7468 = vrcp.pop %v7450
      %v7469 = vmul.f32 1.0, %v7468
      %v7470 = vrcp.pop %v7451
      %v7471 = vmul.f32 1.0, %v7470
      %v7472 = vrcp.pop %v7452
      %v7473 = vmul.f32 1.0, %v7472
      %v7474 = vrcp.pop %v7453
      %v7475 = vmul.f32 1.0, %v7474
      %v7476 = vrcp.pop %v7454
      %v7477 = vmul.f32 1.0, %v7476
      %v7478 = vrcp.pop %v7455
      %v7479 = vmul.f32 1.0, %v7478
      %v7480 = vrcp.pop %v7456
      %v7481 = vmul.f32 1.0, %v7480
      %v7482 = vrcp.pop %v7457
      %v7483 = vmul.f32 1.0, %v7482
      %v7484 = vrcp.pop %v7458
      %v7485 = vmul.f32 1.0, %v7484
      %v7486 = vrcp.pop %v7459
      %v7487 = vmul.f32 1.0, %v7486
      %v7488 = vrcp.pop %v7460
      %v7489 = vmul.f32 1.0, %v7488
      %v7490 = vrcp.pop %v7461
      %v7491 = vmul.f32 1.0, %v7490
      %v7492 = vrcp.pop %v7462
      %v7493 = vmul.f32 1.0, %v7492
      %v7494 = vrcp.pop %v7463
      %v7495 = vmul.f32 1.0, %v7494
      %v7496 = vld [vmem:[#allocation4] sm:$0xff]
      %v7497 = vld [vmem:[#allocation4 + $0x8] sm:$0xff]
      %v7498 = vld [vmem:[#allocation4 + $0x10] sm:$0xff]
      %v7499 = vld [vmem:[#allocation4 + $0x18] sm:$0xff]
      %v7500 = vld [vmem:[#allocation4 + $0x20] sm:$0xff]
      %v7501 = vld [vmem:[#allocation4 + $0x28] sm:$0xff]
      %v7502 = vld [vmem:[#allocation4 + $0x30] sm:$0xff]
      %v7503 = vld [vmem:[#allocation4 + $0x38] sm:$0xff]
      %v7504 = vld [vmem:[#allocation4 + $0x40] sm:$0xff]
      %v7505 = vld [vmem:[#allocation4 + $0x48] sm:$0xff]
      %v7506 = vld [vmem:[#allocation4 + $0x50] sm:$0xff]
      %v7507 = vld [vmem:[#allocation4 + $0x58] sm:$0xff]
      %v7508 = vld [vmem:[#allocation4 + $0x60] sm:$0xff]
      %v7509 = vld [vmem:[#allocation4 + $0x68] sm:$0xff]
      %v7510 = vld [vmem:[#allocation4 + $0x70] sm:$0xff]
      %v7511 = vld [vmem:[#allocation4 + $0x78] sm:$0xff]
      %7528 = vrot.lane.b32.xlu0 %v7496, 32
      %v7529 = vpop.permute.xlu0 %7528
      %7530 = vrot.lane.b32.xlu0 %v7497, 32
      %v7531 = vpop.permute.xlu0 %7530
      %7532 = vrot.lane.b32.xlu0 %v7498, 32
      %v7533 = vpop.permute.xlu0 %7532
      %7534 = vrot.lane.b32.xlu0 %v7499, 32
      %v7535 = vpop.permute.xlu0 %7534
      %7536 = vrot.lane.b32.xlu0 %v7500, 32
      %v7537 = vpop.permute.xlu0 %7536
      %7538 = vrot.lane.b32.xlu0 %v7501, 32
      %v7539 = vpop.permute.xlu0 %7538
      %7540 = vrot.lane.b32.xlu0 %v7502, 32
      %v7541 = vpop.permute.xlu0 %7540
      %7542 = vrot.lane.b32.xlu0 %v7503, 32
      %v7543 = vpop.permute.xlu0 %7542
      %7544 = vrot.lane.b32.xlu0 %v7504, 32
      %v7545 = vpop.permute.xlu0 %7544
      %7546 = vrot.lane.b32.xlu0 %v7505, 32
      %v7547 = vpop.permute.xlu0 %7546
      %7548 = vrot.lane.b32.xlu0 %v7506, 32
      %v7549 = vpop.permute.xlu0 %7548
      %7550 = vrot.lane.b32.xlu0 %v7507, 32
      %v7551 = vpop.permute.xlu0 %7550
      %7552 = vrot.lane.b32.xlu0 %v7508, 32
      %v7553 = vpop.permute.xlu0 %7552
      %7554 = vrot.lane.b32.xlu0 %v7509, 32
      %v7555 = vpop.permute.xlu0 %7554
      %7556 = vrot.lane.b32.xlu0 %v7510, 32
      %v7557 = vpop.permute.xlu0 %7556
      %7558 = vrot.lane.b32.xlu0 %v7511, 32
      %v7559 = vpop.permute.xlu0 %7558
      %v7576 = vmul.f32 %v7465, %v7529
      %v7577 = vmul.f32 %v7467, %v7531
      %v7578 = vmul.f32 %v7469, %v7533
      %v7579 = vmul.f32 %v7471, %v7535
      %v7580 = vmul.f32 %v7473, %v7537
      %v7581 = vmul.f32 %v7475, %v7539
      %v7582 = vmul.f32 %v7477, %v7541
      %v7583 = vmul.f32 %v7479, %v7543
      %v7584 = vmul.f32 %v7481, %v7545
      %v7585 = vmul.f32 %v7483, %v7547
      %v7586 = vmul.f32 %v7485, %v7549
      %v7587 = vmul.f32 %v7487, %v7551
      %v7588 = vmul.f32 %v7489, %v7553
      %v7589 = vmul.f32 %v7491, %v7555
      %v7590 = vmul.f32 %v7493, %v7557
      %v7591 = vmul.f32 %v7495, %v7559
      %7608 = vrot.lane.b32.xlu0 %v7384, 64
      %v7609 = vpop.permute.xlu0 %7608
      %7610 = vrot.lane.b32.xlu0 %v7385, 64
      %v7611 = vpop.permute.xlu0 %7610
      %7612 = vrot.lane.b32.xlu0 %v7386, 64
      %v7613 = vpop.permute.xlu0 %7612
      %7614 = vrot.lane.b32.xlu0 %v7387, 64
      %v7615 = vpop.permute.xlu0 %7614
      %7616 = vrot.lane.b32.xlu0 %v7388, 64
      %v7617 = vpop.permute.xlu0 %7616
      %7618 = vrot.lane.b32.xlu0 %v7389, 64
      %v7619 = vpop.permute.xlu0 %7618
      %7620 = vrot.lane.b32.xlu0 %v7390, 64
      %v7621 = vpop.permute.xlu0 %7620
      %7622 = vrot.lane.b32.xlu0 %v7391, 64
      %v7623 = vpop.permute.xlu0 %7622
      %7624 = vrot.lane.b32.xlu0 %v7392, 64
      %v7625 = vpop.permute.xlu0 %7624
      %7626 = vrot.lane.b32.xlu0 %v7393, 64
      %v7627 = vpop.permute.xlu0 %7626
      %7628 = vrot.lane.b32.xlu0 %v7394, 64
      %v7629 = vpop.permute.xlu0 %7628
      %7630 = vrot.lane.b32.xlu0 %v7395, 64
      %v7631 = vpop.permute.xlu0 %7630
      %7632 = vrot.lane.b32.xlu0 %v7396, 64
      %v7633 = vpop.permute.xlu0 %7632
      %7634 = vrot.lane.b32.xlu0 %v7397, 64
      %v7635 = vpop.permute.xlu0 %7634
      %7636 = vrot.lane.b32.xlu0 %v7398, 64
      %v7637 = vpop.permute.xlu0 %7636
      %7638 = vrot.lane.b32.xlu0 %v7399, 64
      %v7639 = vpop.permute.xlu0 %7638
      %v7656 = vmul.f32 %v7465, %v7609
      %v7657 = vmul.f32 %v7467, %v7611
      %v7658 = vmul.f32 %v7469, %v7613
      %v7659 = vmul.f32 %v7471, %v7615
      %v7660 = vmul.f32 %v7473, %v7617
      %v7661 = vmul.f32 %v7475, %v7619
      %v7662 = vmul.f32 %v7477, %v7621
      %v7663 = vmul.f32 %v7479, %v7623
      %v7664 = vmul.f32 %v7481, %v7625
      %v7665 = vmul.f32 %v7483, %v7627
      %v7666 = vmul.f32 %v7485, %v7629
      %v7667 = vmul.f32 %v7487, %v7631
      %v7668 = vmul.f32 %v7489, %v7633
      %v7669 = vmul.f32 %v7491, %v7635
      %v7670 = vmul.f32 %v7493, %v7637
      %v7671 = vmul.f32 %v7495, %v7639
      %7688 = vrot.lane.b32.xlu0 %v7656, 32
      %v7689 = vpop.permute.xlu0 %7688
      %7690 = vrot.lane.b32.xlu0 %v7657, 32
      %v7691 = vpop.permute.xlu0 %7690
      %7692 = vrot.lane.b32.xlu0 %v7658, 32
      %v7693 = vpop.permute.xlu0 %7692
      %7694 = vrot.lane.b32.xlu0 %v7659, 32
      %v7695 = vpop.permute.xlu0 %7694
      %7696 = vrot.lane.b32.xlu0 %v7660, 32
      %v7697 = vpop.permute.xlu0 %7696
      %7698 = vrot.lane.b32.xlu0 %v7661, 32
      %v7699 = vpop.permute.xlu0 %7698
      %7700 = vrot.lane.b32.xlu0 %v7662, 32
      %v7701 = vpop.permute.xlu0 %7700
      %7702 = vrot.lane.b32.xlu0 %v7663, 32
      %v7703 = vpop.permute.xlu0 %7702
      %7704 = vrot.lane.b32.xlu0 %v7664, 32
      %v7705 = vpop.permute.xlu0 %7704
      %7706 = vrot.lane.b32.xlu0 %v7665, 32
      %v7707 = vpop.permute.xlu0 %7706
      %7708 = vrot.lane.b32.xlu0 %v7666, 32
      %v7709 = vpop.permute.xlu0 %7708
      %7710 = vrot.lane.b32.xlu0 %v7667, 32
      %v7711 = vpop.permute.xlu0 %7710
      %7712 = vrot.lane.b32.xlu0 %v7668, 32
      %v7713 = vpop.permute.xlu0 %7712
      %7714 = vrot.lane.b32.xlu0 %v7669, 32
      %v7715 = vpop.permute.xlu0 %7714
      %7716 = vrot.lane.b32.xlu0 %v7670, 32
      %v7717 = vpop.permute.xlu0 %7716
      %7718 = vrot.lane.b32.xlu0 %v7671, 32
      %v7719 = vpop.permute.xlu0 %7718
      %v7736 = vadd.f32 %v7576, %v7689
      %v7737 = vadd.f32 %v7577, %v7691
      %v7738 = vadd.f32 %v7578, %v7693
      %v7739 = vadd.f32 %v7579, %v7695
      %v7740 = vadd.f32 %v7580, %v7697
      %v7741 = vadd.f32 %v7581, %v7699
      %v7742 = vadd.f32 %v7582, %v7701
      %v7743 = vadd.f32 %v7583, %v7703
      %v7744 = vadd.f32 %v7584, %v7705
      %v7745 = vadd.f32 %v7585, %v7707
      %v7746 = vadd.f32 %v7586, %v7709
      %v7747 = vadd.f32 %v7587, %v7711
      %v7748 = vadd.f32 %v7588, %v7713
      %v7749 = vadd.f32 %v7589, %v7715
      %v7750 = vadd.f32 %v7590, %v7717
      %v7751 = vadd.f32 %v7591, %v7719
      %v7752 = vtanh.pop %v7736
      %v7753 = vtanh.pop %v7737
      %v7754 = vtanh.pop %v7738
      %v7755 = vtanh.pop %v7739
      %v7756 = vtanh.pop %v7740
      %v7757 = vtanh.pop %v7741
      %v7758 = vtanh.pop %v7742
      %v7759 = vtanh.pop %v7743
      %v7760 = vtanh.pop %v7744
      %v7761 = vtanh.pop %v7745
      %v7762 = vtanh.pop %v7746
      %v7763 = vtanh.pop %v7747
      %v7764 = vtanh.pop %v7748
      %v7765 = vtanh.pop %v7749
      %v7766 = vtanh.pop %v7750
      %v7767 = vtanh.pop %v7751
      %7784 = vrot.lane.b32.xlu0 %v7752, 64
      %v7785 = vpop.permute.xlu0 %7784
      %7786 = vrot.lane.b32.xlu0 %v7753, 64
      %v7787 = vpop.permute.xlu0 %7786
      %7788 = vrot.lane.b32.xlu0 %v7754, 64
      %v7789 = vpop.permute.xlu0 %7788
      %7790 = vrot.lane.b32.xlu0 %v7755, 64
      %v7791 = vpop.permute.xlu0 %7790
      %7792 = vrot.lane.b32.xlu0 %v7756, 64
      %v7793 = vpop.permute.xlu0 %7792
      %7794 = vrot.lane.b32.xlu0 %v7757, 64
      %v7795 = vpop.permute.xlu0 %7794
      %7796 = vrot.lane.b32.xlu0 %v7758, 64
      %v7797 = vpop.permute.xlu0 %7796
      %7798 = vrot.lane.b32.xlu0 %v7759, 64
      %v7799 = vpop.permute.xlu0 %7798
      %7800 = vrot.lane.b32.xlu0 %v7760, 64
      %v7801 = vpop.permute.xlu0 %7800
      %7802 = vrot.lane.b32.xlu0 %v7761, 64
      %v7803 = vpop.permute.xlu0 %7802
      %7804 = vrot.lane.b32.xlu0 %v7762, 64
      %v7805 = vpop.permute.xlu0 %7804
      %7806 = vrot.lane.b32.xlu0 %v7763, 64
      %v7807 = vpop.permute.xlu0 %7806
      %7808 = vrot.lane.b32.xlu0 %v7764, 64
      %v7809 = vpop.permute.xlu0 %7808
      %7810 = vrot.lane.b32.xlu0 %v7765, 64
      %v7811 = vpop.permute.xlu0 %7810
      %7812 = vrot.lane.b32.xlu0 %v7766, 64
      %v7813 = vpop.permute.xlu0 %7812
      %7814 = vrot.lane.b32.xlu0 %v7767, 64
      %v7815 = vpop.permute.xlu0 %7814
      %v7832 = vmul.f32 %v7465, %v7785
      %v7833 = vmul.f32 %v7467, %v7787
      %v7834 = vmul.f32 %v7469, %v7789
      %v7835 = vmul.f32 %v7471, %v7791
      %v7836 = vmul.f32 %v7473, %v7793
      %v7837 = vmul.f32 %v7475, %v7795
      %v7838 = vmul.f32 %v7477, %v7797
      %v7839 = vmul.f32 %v7479, %v7799
      %v7840 = vmul.f32 %v7481, %v7801
      %v7841 = vmul.f32 %v7483, %v7803
      %v7842 = vmul.f32 %v7485, %v7805
      %v7843 = vmul.f32 %v7487, %v7807
      %v7844 = vmul.f32 %v7489, %v7809
      %v7845 = vmul.f32 %v7491, %v7811
      %v7846 = vmul.f32 %v7493, %v7813
      %v7847 = vmul.f32 %v7495, %v7815
      %7864 = vrot.lane.b32.xlu0 %v7736, 96
      %v7865 = vpop.permute.xlu0 %7864
      %7866 = vrot.lane.b32.xlu0 %v7737, 96
      %v7867 = vpop.permute.xlu0 %7866
      %7868 = vrot.lane.b32.xlu0 %v7738, 96
      %v7869 = vpop.permute.xlu0 %7868
      %7870 = vrot.lane.b32.xlu0 %v7739, 96
      %v7871 = vpop.permute.xlu0 %7870
      %7872 = vrot.lane.b32.xlu0 %v7740, 96
      %v7873 = vpop.permute.xlu0 %7872
      %7874 = vrot.lane.b32.xlu0 %v7741, 96
      %v7875 = vpop.permute.xlu0 %7874
      %7876 = vrot.lane.b32.xlu0 %v7742, 96
      %v7877 = vpop.permute.xlu0 %7876
      %7878 = vrot.lane.b32.xlu0 %v7743, 96
      %v7879 = vpop.permute.xlu0 %7878
      %7880 = vrot.lane.b32.xlu0 %v7744, 96
      %v7881 = vpop.permute.xlu0 %7880
      %7882 = vrot.lane.b32.xlu0 %v7745, 96
      %v7883 = vpop.permute.xlu0 %7882
      %7884 = vrot.lane.b32.xlu0 %v7746, 96
      %v7885 = vpop.permute.xlu0 %7884
      %7886 = vrot.lane.b32.xlu0 %v7747, 96
      %v7887 = vpop.permute.xlu0 %7886
      %7888 = vrot.lane.b32.xlu0 %v7748, 96
      %v7889 = vpop.permute.xlu0 %7888
      %7890 = vrot.lane.b32.xlu0 %v7749, 96
      %v7891 = vpop.permute.xlu0 %7890
      %7892 = vrot.lane.b32.xlu0 %v7750, 96
      %v7893 = vpop.permute.xlu0 %7892
      %7894 = vrot.lane.b32.xlu0 %v7751, 96
      %v7895 = vpop.permute.xlu0 %7894
      %vm7912 = vcmask 261120
      %7913 = vst.msk [vmem:[#allocation4] sm:$0xff] %vm7912, %v7865
      %7914 = vst.msk [vmem:[#allocation4 + $0x8] sm:$0xff] %vm7912, %v7867
      %7915 = vst.msk [vmem:[#allocation4 + $0x10] sm:$0xff] %vm7912, %v7869
      %7916 = vst.msk [vmem:[#allocation4 + $0x18] sm:$0xff] %vm7912, %v7871
      %7917 = vst.msk [vmem:[#allocation4 + $0x20] sm:$0xff] %vm7912, %v7873
      %7918 = vst.msk [vmem:[#allocation4 + $0x28] sm:$0xff] %vm7912, %v7875
      %7919 = vst.msk [vmem:[#allocation4 + $0x30] sm:$0xff] %vm7912, %v7877
      %7920 = vst.msk [vmem:[#allocation4 + $0x38] sm:$0xff] %vm7912, %v7879
      %7921 = vst.msk [vmem:[#allocation4 + $0x40] sm:$0xff] %vm7912, %v7881
      %7922 = vst.msk [vmem:[#allocation4 + $0x48] sm:$0xff] %vm7912, %v7883
      %7923 = vst.msk [vmem:[#allocation4 + $0x50] sm:$0xff] %vm7912, %v7885
      %7924 = vst.msk [vmem:[#allocation4 + $0x58] sm:$0xff] %vm7912, %v7887
      %7925 = vst.msk [vmem:[#allocation4 + $0x60] sm:$0xff] %vm7912, %v7889
      %7926 = vst.msk [vmem:[#allocation4 + $0x68] sm:$0xff] %vm7912, %v7891
      %7927 = vst.msk [vmem:[#allocation4 + $0x70] sm:$0xff] %vm7912, %v7893
      %7928 = vst.msk [vmem:[#allocation4 + $0x78] sm:$0xff] %vm7912, %v7895
      %7945 = vrot.lane.b32.xlu0 %v7832, 32
      %v7946 = vpop.permute.xlu0 %7945
      %7947 = vrot.lane.b32.xlu0 %v7833, 32
      %v7948 = vpop.permute.xlu0 %7947
      %7949 = vrot.lane.b32.xlu0 %v7834, 32
      %v7950 = vpop.permute.xlu0 %7949
      %7951 = vrot.lane.b32.xlu0 %v7835, 32
      %v7952 = vpop.permute.xlu0 %7951
      %7953 = vrot.lane.b32.xlu0 %v7836, 32
      %v7954 = vpop.permute.xlu0 %7953
      %7955 = vrot.lane.b32.xlu0 %v7837, 32
      %v7956 = vpop.permute.xlu0 %7955
      %7957 = vrot.lane.b32.xlu0 %v7838, 32
      %v7958 = vpop.permute.xlu0 %7957
      %7959 = vrot.lane.b32.xlu0 %v7839, 32
      %v7960 = vpop.permute.xlu0 %7959
      %7961 = vrot.lane.b32.xlu0 %v7840, 32
      %v7962 = vpop.permute.xlu0 %7961
      %7963 = vrot.lane.b32.xlu0 %v7841, 32
      %v7964 = vpop.permute.xlu0 %7963
      %7965 = vrot.lane.b32.xlu0 %v7842, 32
      %v7966 = vpop.permute.xlu0 %7965
      %7967 = vrot.lane.b32.xlu0 %v7843, 32
      %v7968 = vpop.permute.xlu0 %7967
      %7969 = vrot.lane.b32.xlu0 %v7844, 32
      %v7970 = vpop.permute.xlu0 %7969
      %7971 = vrot.lane.b32.xlu0 %v7845, 32
      %v7972 = vpop.permute.xlu0 %7971
      %7973 = vrot.lane.b32.xlu0 %v7846, 32
      %v7974 = vpop.permute.xlu0 %7973
      %7975 = vrot.lane.b32.xlu0 %v7847, 32
      %v7976 = vpop.permute.xlu0 %7975
      %7993 = vst.msk [vmem:[%s197] sm:$0xff] %vm7912, %v7946
      %7994 = vst.msk [vmem:[%s197 + $0x8] sm:$0xff] %vm7912, %v7948
      %7995 = vst.msk [vmem:[%s197 + $0x10] sm:$0xff] %vm7912, %v7950
      %7996 = vst.msk [vmem:[%s197 + $0x18] sm:$0xff] %vm7912, %v7952
      %7997 = vst.msk [vmem:[%s197 + $0x20] sm:$0xff] %vm7912, %v7954
      %7998 = vst.msk [vmem:[%s197 + $0x28] sm:$0xff] %vm7912, %v7956
      %7999 = vst.msk [vmem:[%s197 + $0x30] sm:$0xff] %vm7912, %v7958
      %8000 = vst.msk [vmem:[%s197 + $0x38] sm:$0xff] %vm7912, %v7960
      %8001 = vst.msk [vmem:[%s197 + $0x40] sm:$0xff] %vm7912, %v7962
      %8002 = vst.msk [vmem:[%s197 + $0x48] sm:$0xff] %vm7912, %v7964
      %8003 = vst.msk [vmem:[%s197 + $0x50] sm:$0xff] %vm7912, %v7966
      %8004 = vst.msk [vmem:[%s197 + $0x58] sm:$0xff] %vm7912, %v7968
      %8005 = vst.msk [vmem:[%s197 + $0x60] sm:$0xff] %vm7912, %v7970
      %8006 = vst.msk [vmem:[%s197 + $0x68] sm:$0xff] %vm7912, %v7972
      %8007 = vst.msk [vmem:[%s197 + $0x70] sm:$0xff] %vm7912, %v7974
      %8008 = vst.msk [vmem:[%s197 + $0x78] sm:$0xff] %vm7912, %v7976
      %8009 = vrot.lane.b32.xlu0 %v7832, 36
      %v8010 = vpop.permute.xlu0 %8009
      %8011 = vrot.lane.b32.xlu0 %v7833, 36
      %v8012 = vpop.permute.xlu0 %8011
      %8013 = vrot.lane.b32.xlu0 %v7834, 36
      %v8014 = vpop.permute.xlu0 %8013
      %8015 = vrot.lane.b32.xlu0 %v7835, 36
      %v8016 = vpop.permute.xlu0 %8015
      %8017 = vrot.lane.b32.xlu0 %v7836, 36
      %v8018 = vpop.permute.xlu0 %8017
      %8019 = vrot.lane.b32.xlu0 %v7837, 36
      %v8020 = vpop.permute.xlu0 %8019
      %8021 = vrot.lane.b32.xlu0 %v7838, 36
      %v8022 = vpop.permute.xlu0 %8021
      %8023 = vrot.lane.b32.xlu0 %v7839, 36
      %v8024 = vpop.permute.xlu0 %8023
      %8025 = vrot.lane.b32.xlu0 %v7840, 36
      %v8026 = vpop.permute.xlu0 %8025
      %8027 = vrot.lane.b32.xlu0 %v7841, 36
      %v8028 = vpop.permute.xlu0 %8027
      %8029 = vrot.lane.b32.xlu0 %v7842, 36
      %v8030 = vpop.permute.xlu0 %8029
      %8031 = vrot.lane.b32.xlu0 %v7843, 36
      %v8032 = vpop.permute.xlu0 %8031
      %8033 = vrot.lane.b32.xlu0 %v7844, 36
      %v8034 = vpop.permute.xlu0 %8033
      %8035 = vrot.lane.b32.xlu0 %v7845, 36
      %v8036 = vpop.permute.xlu0 %8035
      %8037 = vrot.lane.b32.xlu0 %v7846, 36
      %v8038 = vpop.permute.xlu0 %8037
      %8039 = vrot.lane.b32.xlu0 %v7847, 36
      %v8040 = vpop.permute.xlu0 %8039
      %vm8057 = vcmask 293920
      %8058 = vst.msk [vmem:[%s442 + $0x1] sm:$0xff] %vm8057, %v8010
      %8059 = vst.msk [vmem:[%s442 + $0x9] sm:$0xff] %vm8057, %v8012
      %8060 = vst.msk [vmem:[%s442 + $0x19] sm:$0xff] %vm8057, %v8014
      %8061 = vst.msk [vmem:[%s442 + $0x21] sm:$0xff] %vm8057, %v8016
      %8062 = vst.msk [vmem:[%s442 + $0x31] sm:$0xff] %vm8057, %v8018
      %8063 = vst.msk [vmem:[%s442 + $0x39] sm:$0xff] %vm8057, %v8020
      %8064 = vst.msk [vmem:[%s442 + $0x49] sm:$0xff] %vm8057, %v8022
      %8065 = vst.msk [vmem:[%s442 + $0x51] sm:$0xff] %vm8057, %v8024
      %8066 = vst.msk [vmem:[%s442 + $0x61] sm:$0xff] %vm8057, %v8026
      %8067 = vst.msk [vmem:[%s442 + $0x69] sm:$0xff] %vm8057, %v8028
      %8068 = vst.msk [vmem:[%s442 + $0x79] sm:$0xff] %vm8057, %v8030
      %8069 = vst.msk [vmem:[%s442 + $0x81] sm:$0xff] %vm8057, %v8032
      %8070 = vst.msk [vmem:[%s442 + $0x91] sm:$0xff] %vm8057, %v8034
      %8071 = vst.msk [vmem:[%s442 + $0x99] sm:$0xff] %vm8057, %v8036
      %8072 = vst.msk [vmem:[%s442 + $0xa9] sm:$0xff] %vm8057, %v8038
      %8073 = vst.msk [vmem:[%s442 + $0xb1] sm:$0xff] %vm8057, %v8040
      %v8074 = vld [vmem:[#allocation3 + $0x80] sm:$0xff]
      %v8075 = vld [vmem:[#allocation3 + $0x88] sm:$0xff]
      %v8076 = vld [vmem:[#allocation3 + $0x90] sm:$0xff]
      %v8077 = vld [vmem:[#allocation3 + $0x98] sm:$0xff]
      %v8078 = vld [vmem:[#allocation3 + $0xa0] sm:$0xff]
      %v8079 = vld [vmem:[#allocation3 + $0xa8] sm:$0xff]
      %v8080 = vld [vmem:[#allocation3 + $0xb0] sm:$0xff]
      %v8081 = vld [vmem:[#allocation3 + $0xb8] sm:$0xff]
      %v8082 = vld [vmem:[#allocation3 + $0xc0] sm:$0xff]
      %v8083 = vld [vmem:[#allocation3 + $0xc8] sm:$0xff]
      %v8084 = vld [vmem:[#allocation3 + $0xd0] sm:$0xff]
      %v8085 = vld [vmem:[#allocation3 + $0xd8] sm:$0xff]
      %v8086 = vld [vmem:[#allocation3 + $0xe0] sm:$0xff]
      %v8087 = vld [vmem:[#allocation3 + $0xe8] sm:$0xff]
      %v8088 = vld [vmem:[#allocation3 + $0xf0] sm:$0xff]
      %v8089 = vld [vmem:[#allocation3 + $0xf8] sm:$0xff]
      %v8090 = vmul.f32 %v8074, %v7360
      %v8091 = vmul.f32 %v8075, %v7360
      %v8092 = vmul.f32 %v8076, %v7360
      %v8093 = vmul.f32 %v8077, %v7360
      %v8094 = vmul.f32 %v8078, %v7360
      %v8095 = vmul.f32 %v8079, %v7360
      %v8096 = vmul.f32 %v8080, %v7360
      %v8097 = vmul.f32 %v8081, %v7360
      %v8098 = vmul.f32 %v8082, %v7360
      %v8099 = vmul.f32 %v8083, %v7360
      %v8100 = vmul.f32 %v8084, %v7360
      %v8101 = vmul.f32 %v8085, %v7360
      %v8102 = vmul.f32 %v8086, %v7360
      %v8103 = vmul.f32 %v8087, %v7360
      %v8104 = vmul.f32 %v8088, %v7360
      %v8105 = vmul.f32 %v8089, %v7360
      %v8106 = vadd.f32 %v8090, %v7382
      %v8107 = vadd.f32 %v8091, %v7382
      %v8108 = vadd.f32 %v8092, %v7382
      %v8109 = vadd.f32 %v8093, %v7382
      %v8110 = vadd.f32 %v8094, %v7382
      %v8111 = vadd.f32 %v8095, %v7382
      %v8112 = vadd.f32 %v8096, %v7382
      %v8113 = vadd.f32 %v8097, %v7382
      %v8114 = vadd.f32 %v8098, %v7382
      %v8115 = vadd.f32 %v8099, %v7382
      %v8116 = vadd.f32 %v8100, %v7382
      %v8117 = vadd.f32 %v8101, %v7382
      %v8118 = vadd.f32 %v8102, %v7382
      %v8119 = vadd.f32 %v8103, %v7382
      %v8120 = vadd.f32 %v8104, %v7382
      %v8121 = vadd.f32 %v8105, %v7382
      %v8122 = vxor.u32 %v8106, 2147483648
      %v8123 = vxor.u32 %v8107, 2147483648
      %v8124 = vxor.u32 %v8108, 2147483648
      %v8125 = vxor.u32 %v8109, 2147483648
      %v8126 = vxor.u32 %v8110, 2147483648
      %v8127 = vxor.u32 %v8111, 2147483648
      %v8128 = vxor.u32 %v8112, 2147483648
      %v8129 = vxor.u32 %v8113, 2147483648
      %v8130 = vxor.u32 %v8114, 2147483648
      %v8131 = vxor.u32 %v8115, 2147483648
      %v8132 = vxor.u32 %v8116, 2147483648
      %v8133 = vxor.u32 %v8117, 2147483648
      %v8134 = vxor.u32 %v8118, 2147483648
      %v8135 = vxor.u32 %v8119, 2147483648
      %v8136 = vxor.u32 %v8120, 2147483648
      %v8137 = vxor.u32 %v8121, 2147483648
      %v8138 = vmul.f32 %v8122, 1.442695
      %v8139 = vpow.pop %v8138
      %v8140 = vmul.f32 %v8123, 1.442695
      %v8141 = vpow.pop %v8140
      %v8142 = vmul.f32 %v8124, 1.442695
      %v8143 = vpow.pop %v8142
      %v8144 = vmul.f32 %v8125, 1.442695
      %v8145 = vpow.pop %v8144
      %v8146 = vmul.f32 %v8126, 1.442695
      %v8147 = vpow.pop %v8146
      %v8148 = vmul.f32 %v8127, 1.442695
      %v8149 = vpow.pop %v8148
      %v8150 = vmul.f32 %v8128, 1.442695
      %v8151 = vpow.pop %v8150
      %v8152 = vmul.f32 %v8129, 1.442695
      %v8153 = vpow.pop %v8152
      %v8154 = vmul.f32 %v8130, 1.442695
      %v8155 = vpow.pop %v8154
      %v8156 = vmul.f32 %v8131, 1.442695
      %v8157 = vpow.pop %v8156
      %v8158 = vmul.f32 %v8132, 1.442695
      %v8159 = vpow.pop %v8158
      %v8160 = vmul.f32 %v8133, 1.442695
      %v8161 = vpow.pop %v8160
      %v8162 = vmul.f32 %v8134, 1.442695
      %v8163 = vpow.pop %v8162
      %v8164 = vmul.f32 %v8135, 1.442695
      %v8165 = vpow.pop %v8164
      %v8166 = vmul.f32 %v8136, 1.442695
      %v8167 = vpow.pop %v8166
      %v8168 = vmul.f32 %v8137, 1.442695
      %v8169 = vpow.pop %v8168
      %v8170 = vadd.f32 %v8139, 1.0
      %v8171 = vadd.f32 %v8141, 1.0
      %v8172 = vadd.f32 %v8143, 1.0
      %v8173 = vadd.f32 %v8145, 1.0
      %v8174 = vadd.f32 %v8147, 1.0
      %v8175 = vadd.f32 %v8149, 1.0
      %v8176 = vadd.f32 %v8151, 1.0
      %v8177 = vadd.f32 %v8153, 1.0
      %v8178 = vadd.f32 %v8155, 1.0
      %v8179 = vadd.f32 %v8157, 1.0
      %v8180 = vadd.f32 %v8159, 1.0
      %v8181 = vadd.f32 %v8161, 1.0
      %v8182 = vadd.f32 %v8163, 1.0
      %v8183 = vadd.f32 %v8165, 1.0
      %v8184 = vadd.f32 %v8167, 1.0
      %v8185 = vadd.f32 %v8169, 1.0
      %v8186 = vrcp.pop %v8170
      %v8187 = vmul.f32 1.0, %v8186
      %v8188 = vrcp.pop %v8171
      %v8189 = vmul.f32 1.0, %v8188
      %v8190 = vrcp.pop %v8172
      %v8191 = vmul.f32 1.0, %v8190
      %v8192 = vrcp.pop %v8173
      %v8193 = vmul.f32 1.0, %v8192
      %v8194 = vrcp.pop %v8174
      %v8195 = vmul.f32 1.0, %v8194
      %v8196 = vrcp.pop %v8175
      %v8197 = vmul.f32 1.0, %v8196
      %v8198 = vrcp.pop %v8176
      %v8199 = vmul.f32 1.0, %v8198
      %v8200 = vrcp.pop %v8177
      %v8201 = vmul.f32 1.0, %v8200
      %v8202 = vrcp.pop %v8178
      %v8203 = vmul.f32 1.0, %v8202
      %v8204 = vrcp.pop %v8179
      %v8205 = vmul.f32 1.0, %v8204
      %v8206 = vrcp.pop %v8180
      %v8207 = vmul.f32 1.0, %v8206
      %v8208 = vrcp.pop %v8181
      %v8209 = vmul.f32 1.0, %v8208
      %v8210 = vrcp.pop %v8182
      %v8211 = vmul.f32 1.0, %v8210
      %v8212 = vrcp.pop %v8183
      %v8213 = vmul.f32 1.0, %v8212
      %v8214 = vrcp.pop %v8184
      %v8215 = vmul.f32 1.0, %v8214
      %v8216 = vrcp.pop %v8185
      %v8217 = vmul.f32 1.0, %v8216
      %v8218 = vld [vmem:[#allocation4 + $0x80] sm:$0xff]
      %v8219 = vld [vmem:[#allocation4 + $0x88] sm:$0xff]
      %v8220 = vld [vmem:[#allocation4 + $0x90] sm:$0xff]
      %v8221 = vld [vmem:[#allocation4 + $0x98] sm:$0xff]
      %v8222 = vld [vmem:[#allocation4 + $0xa0] sm:$0xff]
      %v8223 = vld [vmem:[#allocation4 + $0xa8] sm:$0xff]
      %v8224 = vld [vmem:[#allocation4 + $0xb0] sm:$0xff]
      %v8225 = vld [vmem:[#allocation4 + $0xb8] sm:$0xff]
      %v8226 = vld [vmem:[#allocation4 + $0xc0] sm:$0xff]
      %v8227 = vld [vmem:[#allocation4 + $0xc8] sm:$0xff]
      %v8228 = vld [vmem:[#allocation4 + $0xd0] sm:$0xff]
      %v8229 = vld [vmem:[#allocation4 + $0xd8] sm:$0xff]
      %v8230 = vld [vmem:[#allocation4 + $0xe0] sm:$0xff]
      %v8231 = vld [vmem:[#allocation4 + $0xe8] sm:$0xff]
      %v8232 = vld [vmem:[#allocation4 + $0xf0] sm:$0xff]
      %v8233 = vld [vmem:[#allocation4 + $0xf8] sm:$0xff]
      %8250 = vrot.lane.b32.xlu0 %v8218, 32
      %v8251 = vpop.permute.xlu0 %8250
      %8252 = vrot.lane.b32.xlu0 %v8219, 32
      %v8253 = vpop.permute.xlu0 %8252
      %8254 = vrot.lane.b32.xlu0 %v8220, 32
      %v8255 = vpop.permute.xlu0 %8254
      %8256 = vrot.lane.b32.xlu0 %v8221, 32
      %v8257 = vpop.permute.xlu0 %8256
      %8258 = vrot.lane.b32.xlu0 %v8222, 32
      %v8259 = vpop.permute.xlu0 %8258
      %8260 = vrot.lane.b32.xlu0 %v8223, 32
      %v8261 = vpop.permute.xlu0 %8260
      %8262 = vrot.lane.b32.xlu0 %v8224, 32
      %v8263 = vpop.permute.xlu0 %8262
      %8264 = vrot.lane.b32.xlu0 %v8225, 32
      %v8265 = vpop.permute.xlu0 %8264
      %8266 = vrot.lane.b32.xlu0 %v8226, 32
      %v8267 = vpop.permute.xlu0 %8266
      %8268 = vrot.lane.b32.xlu0 %v8227, 32
      %v8269 = vpop.permute.xlu0 %8268
      %8270 = vrot.lane.b32.xlu0 %v8228, 32
      %v8271 = vpop.permute.xlu0 %8270
      %8272 = vrot.lane.b32.xlu0 %v8229, 32
      %v8273 = vpop.permute.xlu0 %8272
      %8274 = vrot.lane.b32.xlu0 %v8230, 32
      %v8275 = vpop.permute.xlu0 %8274
      %8276 = vrot.lane.b32.xlu0 %v8231, 32
      %v8277 = vpop.permute.xlu0 %8276
      %8278 = vrot.lane.b32.xlu0 %v8232, 32
      %v8279 = vpop.permute.xlu0 %8278
      %8280 = vrot.lane.b32.xlu0 %v8233, 32
      %v8281 = vpop.permute.xlu0 %8280
      %v8298 = vmul.f32 %v8187, %v8251
      %v8299 = vmul.f32 %v8189, %v8253
      %v8300 = vmul.f32 %v8191, %v8255
      %v8301 = vmul.f32 %v8193, %v8257
      %v8302 = vmul.f32 %v8195, %v8259
      %v8303 = vmul.f32 %v8197, %v8261
      %v8304 = vmul.f32 %v8199, %v8263
      %v8305 = vmul.f32 %v8201, %v8265
      %v8306 = vmul.f32 %v8203, %v8267
      %v8307 = vmul.f32 %v8205, %v8269
      %v8308 = vmul.f32 %v8207, %v8271
      %v8309 = vmul.f32 %v8209, %v8273
      %v8310 = vmul.f32 %v8211, %v8275
      %v8311 = vmul.f32 %v8213, %v8277
      %v8312 = vmul.f32 %v8215, %v8279
      %v8313 = vmul.f32 %v8217, %v8281
      %8330 = vrot.lane.b32.xlu0 %v8106, 64
      %v8331 = vpop.permute.xlu0 %8330
      %8332 = vrot.lane.b32.xlu0 %v8107, 64
      %v8333 = vpop.permute.xlu0 %8332
      %8334 = vrot.lane.b32.xlu0 %v8108, 64
      %v8335 = vpop.permute.xlu0 %8334
      %8336 = vrot.lane.b32.xlu0 %v8109, 64
      %v8337 = vpop.permute.xlu0 %8336
      %8338 = vrot.lane.b32.xlu0 %v8110, 64
      %v8339 = vpop.permute.xlu0 %8338
      %8340 = vrot.lane.b32.xlu0 %v8111, 64
      %v8341 = vpop.permute.xlu0 %8340
      %8342 = vrot.lane.b32.xlu0 %v8112, 64
      %v8343 = vpop.permute.xlu0 %8342
      %8344 = vrot.lane.b32.xlu0 %v8113, 64
      %v8345 = vpop.permute.xlu0 %8344
      %8346 = vrot.lane.b32.xlu0 %v8114, 64
      %v8347 = vpop.permute.xlu0 %8346
      %8348 = vrot.lane.b32.xlu0 %v8115, 64
      %v8349 = vpop.permute.xlu0 %8348
      %8350 = vrot.lane.b32.xlu0 %v8116, 64
      %v8351 = vpop.permute.xlu0 %8350
      %8352 = vrot.lane.b32.xlu0 %v8117, 64
      %v8353 = vpop.permute.xlu0 %8352
      %8354 = vrot.lane.b32.xlu0 %v8118, 64
      %v8355 = vpop.permute.xlu0 %8354
      %8356 = vrot.lane.b32.xlu0 %v8119, 64
      %v8357 = vpop.permute.xlu0 %8356
      %8358 = vrot.lane.b32.xlu0 %v8120, 64
      %v8359 = vpop.permute.xlu0 %8358
      %8360 = vrot.lane.b32.xlu0 %v8121, 64
      %v8361 = vpop.permute.xlu0 %8360
      %v8378 = vmul.f32 %v8187, %v8331
      %v8379 = vmul.f32 %v8189, %v8333
      %v8380 = vmul.f32 %v8191, %v8335
      %v8381 = vmul.f32 %v8193, %v8337
      %v8382 = vmul.f32 %v8195, %v8339
      %v8383 = vmul.f32 %v8197, %v8341
      %v8384 = vmul.f32 %v8199, %v8343
      %v8385 = vmul.f32 %v8201, %v8345
      %v8386 = vmul.f32 %v8203, %v8347
      %v8387 = vmul.f32 %v8205, %v8349
      %v8388 = vmul.f32 %v8207, %v8351
      %v8389 = vmul.f32 %v8209, %v8353
      %v8390 = vmul.f32 %v8211, %v8355
      %v8391 = vmul.f32 %v8213, %v8357
      %v8392 = vmul.f32 %v8215, %v8359
      %v8393 = vmul.f32 %v8217, %v8361
      %8410 = vrot.lane.b32.xlu0 %v8378, 32
      %v8411 = vpop.permute.xlu0 %8410
      %8412 = vrot.lane.b32.xlu0 %v8379, 32
      %v8413 = vpop.permute.xlu0 %8412
      %8414 = vrot.lane.b32.xlu0 %v8380, 32
      %v8415 = vpop.permute.xlu0 %8414
      %8416 = vrot.lane.b32.xlu0 %v8381, 32
      %v8417 = vpop.permute.xlu0 %8416
      %8418 = vrot.lane.b32.xlu0 %v8382, 32
      %v8419 = vpop.permute.xlu0 %8418
      %8420 = vrot.lane.b32.xlu0 %v8383, 32
      %v8421 = vpop.permute.xlu0 %8420
      %8422 = vrot.lane.b32.xlu0 %v8384, 32
      %v8423 = vpop.permute.xlu0 %8422
      %8424 = vrot.lane.b32.xlu0 %v8385, 32
      %v8425 = vpop.permute.xlu0 %8424
      %8426 = vrot.lane.b32.xlu0 %v8386, 32
      %v8427 = vpop.permute.xlu0 %8426
      %8428 = vrot.lane.b32.xlu0 %v8387, 32
      %v8429 = vpop.permute.xlu0 %8428
      %8430 = vrot.lane.b32.xlu0 %v8388, 32
      %v8431 = vpop.permute.xlu0 %8430
      %8432 = vrot.lane.b32.xlu0 %v8389, 32
      %v8433 = vpop.permute.xlu0 %8432
      %8434 = vrot.lane.b32.xlu0 %v8390, 32
      %v8435 = vpop.permute.xlu0 %8434
      %8436 = vrot.lane.b32.xlu0 %v8391, 32
      %v8437 = vpop.permute.xlu0 %8436
      %8438 = vrot.lane.b32.xlu0 %v8392, 32
      %v8439 = vpop.permute.xlu0 %8438
      %8440 = vrot.lane.b32.xlu0 %v8393, 32
      %v8441 = vpop.permute.xlu0 %8440
      %v8458 = vadd.f32 %v8298, %v8411
      %v8459 = vadd.f32 %v8299, %v8413
      %v8460 = vadd.f32 %v8300, %v8415
      %v8461 = vadd.f32 %v8301, %v8417
      %v8462 = vadd.f32 %v8302, %v8419
      %v8463 = vadd.f32 %v8303, %v8421
      %v8464 = vadd.f32 %v8304, %v8423
      %v8465 = vadd.f32 %v8305, %v8425
      %v8466 = vadd.f32 %v8306, %v8427
      %v8467 = vadd.f32 %v8307, %v8429
      %v8468 = vadd.f32 %v8308, %v8431
      %v8469 = vadd.f32 %v8309, %v8433
      %v8470 = vadd.f32 %v8310, %v8435
      %v8471 = vadd.f32 %v8311, %v8437
      %v8472 = vadd.f32 %v8312, %v8439
      %v8473 = vadd.f32 %v8313, %v8441
      %v8474 = vtanh.pop %v8458
      %v8475 = vtanh.pop %v8459
      %v8476 = vtanh.pop %v8460
      %v8477 = vtanh.pop %v8461
      %v8478 = vtanh.pop %v8462
      %v8479 = vtanh.pop %v8463
      %v8480 = vtanh.pop %v8464
      %v8481 = vtanh.pop %v8465
      %v8482 = vtanh.pop %v8466
      %v8483 = vtanh.pop %v8467
      %v8484 = vtanh.pop %v8468
      %v8485 = vtanh.pop %v8469
      %v8486 = vtanh.pop %v8470
      %v8487 = vtanh.pop %v8471
      %v8488 = vtanh.pop %v8472
      %v8489 = vtanh.pop %v8473
      %8506 = vrot.lane.b32.xlu0 %v8474, 64
      %v8507 = vpop.permute.xlu0 %8506
      %8508 = vrot.lane.b32.xlu0 %v8475, 64
      %v8509 = vpop.permute.xlu0 %8508
      %8510 = vrot.lane.b32.xlu0 %v8476, 64
      %v8511 = vpop.permute.xlu0 %8510
      %8512 = vrot.lane.b32.xlu0 %v8477, 64
      %v8513 = vpop.permute.xlu0 %8512
      %8514 = vrot.lane.b32.xlu0 %v8478, 64
      %v8515 = vpop.permute.xlu0 %8514
      %8516 = vrot.lane.b32.xlu0 %v8479, 64
      %v8517 = vpop.permute.xlu0 %8516
      %8518 = vrot.lane.b32.xlu0 %v8480, 64
      %v8519 = vpop.permute.xlu0 %8518
      %8520 = vrot.lane.b32.xlu0 %v8481, 64
      %v8521 = vpop.permute.xlu0 %8520
      %8522 = vrot.lane.b32.xlu0 %v8482, 64
      %v8523 = vpop.permute.xlu0 %8522
      %8524 = vrot.lane.b32.xlu0 %v8483, 64
      %v8525 = vpop.permute.xlu0 %8524
      %8526 = vrot.lane.b32.xlu0 %v8484, 64
      %v8527 = vpop.permute.xlu0 %8526
      %8528 = vrot.lane.b32.xlu0 %v8485, 64
      %v8529 = vpop.permute.xlu0 %8528
      %8530 = vrot.lane.b32.xlu0 %v8486, 64
      %v8531 = vpop.permute.xlu0 %8530
      %8532 = vrot.lane.b32.xlu0 %v8487, 64
      %v8533 = vpop.permute.xlu0 %8532
      %8534 = vrot.lane.b32.xlu0 %v8488, 64
      %v8535 = vpop.permute.xlu0 %8534
      %8536 = vrot.lane.b32.xlu0 %v8489, 64
      %v8537 = vpop.permute.xlu0 %8536
      %v8554 = vmul.f32 %v8187, %v8507
      %v8555 = vmul.f32 %v8189, %v8509
      %v8556 = vmul.f32 %v8191, %v8511
      %v8557 = vmul.f32 %v8193, %v8513
      %v8558 = vmul.f32 %v8195, %v8515
      %v8559 = vmul.f32 %v8197, %v8517
      %v8560 = vmul.f32 %v8199, %v8519
      %v8561 = vmul.f32 %v8201, %v8521
      %v8562 = vmul.f32 %v8203, %v8523
      %v8563 = vmul.f32 %v8205, %v8525
      %v8564 = vmul.f32 %v8207, %v8527
      %v8565 = vmul.f32 %v8209, %v8529
      %v8566 = vmul.f32 %v8211, %v8531
      %v8567 = vmul.f32 %v8213, %v8533
      %v8568 = vmul.f32 %v8215, %v8535
      %v8569 = vmul.f32 %v8217, %v8537
      %8586 = vrot.lane.b32.xlu0 %v8458, 96
      %v8587 = vpop.permute.xlu0 %8586
      %8588 = vrot.lane.b32.xlu0 %v8459, 96
      %v8589 = vpop.permute.xlu0 %8588
      %8590 = vrot.lane.b32.xlu0 %v8460, 96
      %v8591 = vpop.permute.xlu0 %8590
      %8592 = vrot.lane.b32.xlu0 %v8461, 96
      %v8593 = vpop.permute.xlu0 %8592
      %8594 = vrot.lane.b32.xlu0 %v8462, 96
      %v8595 = vpop.permute.xlu0 %8594
      %8596 = vrot.lane.b32.xlu0 %v8463, 96
      %v8597 = vpop.permute.xlu0 %8596
      %8598 = vrot.lane.b32.xlu0 %v8464, 96
      %v8599 = vpop.permute.xlu0 %8598
      %8600 = vrot.lane.b32.xlu0 %v8465, 96
      %v8601 = vpop.permute.xlu0 %8600
      %8602 = vrot.lane.b32.xlu0 %v8466, 96
      %v8603 = vpop.permute.xlu0 %8602
      %8604 = vrot.lane.b32.xlu0 %v8467, 96
      %v8605 = vpop.permute.xlu0 %8604
      %8606 = vrot.lane.b32.xlu0 %v8468, 96
      %v8607 = vpop.permute.xlu0 %8606
      %8608 = vrot.lane.b32.xlu0 %v8469, 96
      %v8609 = vpop.permute.xlu0 %8608
      %8610 = vrot.lane.b32.xlu0 %v8470, 96
      %v8611 = vpop.permute.xlu0 %8610
      %8612 = vrot.lane.b32.xlu0 %v8471, 96
      %v8613 = vpop.permute.xlu0 %8612
      %8614 = vrot.lane.b32.xlu0 %v8472, 96
      %v8615 = vpop.permute.xlu0 %8614
      %8616 = vrot.lane.b32.xlu0 %v8473, 96
      %v8617 = vpop.permute.xlu0 %8616
      %8634 = vst.msk [vmem:[#allocation4 + $0x80] sm:$0xff] %vm7912, %v8587
      %8635 = vst.msk [vmem:[#allocation4 + $0x88] sm:$0xff] %vm7912, %v8589
      %8636 = vst.msk [vmem:[#allocation4 + $0x90] sm:$0xff] %vm7912, %v8591
      %8637 = vst.msk [vmem:[#allocation4 + $0x98] sm:$0xff] %vm7912, %v8593
      %8638 = vst.msk [vmem:[#allocation4 + $0xa0] sm:$0xff] %vm7912, %v8595
      %8639 = vst.msk [vmem:[#allocation4 + $0xa8] sm:$0xff] %vm7912, %v8597
      %8640 = vst.msk [vmem:[#allocation4 + $0xb0] sm:$0xff] %vm7912, %v8599
      %8641 = vst.msk [vmem:[#allocation4 + $0xb8] sm:$0xff] %vm7912, %v8601
      %8642 = vst.msk [vmem:[#allocation4 + $0xc0] sm:$0xff] %vm7912, %v8603
      %8643 = vst.msk [vmem:[#allocation4 + $0xc8] sm:$0xff] %vm7912, %v8605
      %8644 = vst.msk [vmem:[#allocation4 + $0xd0] sm:$0xff] %vm7912, %v8607
      %8645 = vst.msk [vmem:[#allocation4 + $0xd8] sm:$0xff] %vm7912, %v8609
      %8646 = vst.msk [vmem:[#allocation4 + $0xe0] sm:$0xff] %vm7912, %v8611
      %8647 = vst.msk [vmem:[#allocation4 + $0xe8] sm:$0xff] %vm7912, %v8613
      %8648 = vst.msk [vmem:[#allocation4 + $0xf0] sm:$0xff] %vm7912, %v8615
      %8649 = vst.msk [vmem:[#allocation4 + $0xf8] sm:$0xff] %vm7912, %v8617
      %8666 = vrot.lane.b32.xlu0 %v8554, 32
      %v8667 = vpop.permute.xlu0 %8666
      %8668 = vrot.lane.b32.xlu0 %v8555, 32
      %v8669 = vpop.permute.xlu0 %8668
      %8670 = vrot.lane.b32.xlu0 %v8556, 32
      %v8671 = vpop.permute.xlu0 %8670
      %8672 = vrot.lane.b32.xlu0 %v8557, 32
      %v8673 = vpop.permute.xlu0 %8672
      %8674 = vrot.lane.b32.xlu0 %v8558, 32
      %v8675 = vpop.permute.xlu0 %8674
      %8676 = vrot.lane.b32.xlu0 %v8559, 32
      %v8677 = vpop.permute.xlu0 %8676
      %8678 = vrot.lane.b32.xlu0 %v8560, 32
      %v8679 = vpop.permute.xlu0 %8678
      %8680 = vrot.lane.b32.xlu0 %v8561, 32
      %v8681 = vpop.permute.xlu0 %8680
      %8682 = vrot.lane.b32.xlu0 %v8562, 32
      %v8683 = vpop.permute.xlu0 %8682
      %8684 = vrot.lane.b32.xlu0 %v8563, 32
      %v8685 = vpop.permute.xlu0 %8684
      %8686 = vrot.lane.b32.xlu0 %v8564, 32
      %v8687 = vpop.permute.xlu0 %8686
      %8688 = vrot.lane.b32.xlu0 %v8565, 32
      %v8689 = vpop.permute.xlu0 %8688
      %8690 = vrot.lane.b32.xlu0 %v8566, 32
      %v8691 = vpop.permute.xlu0 %8690
      %8692 = vrot.lane.b32.xlu0 %v8567, 32
      %v8693 = vpop.permute.xlu0 %8692
      %8694 = vrot.lane.b32.xlu0 %v8568, 32
      %v8695 = vpop.permute.xlu0 %8694
      %8696 = vrot.lane.b32.xlu0 %v8569, 32
      %v8697 = vpop.permute.xlu0 %8696
      %8714 = vst.msk [vmem:[%s197 + $0x80] sm:$0xff] %vm7912, %v8667
      %8715 = vst.msk [vmem:[%s197 + $0x88] sm:$0xff] %vm7912, %v8669
      %8716 = vst.msk [vmem:[%s197 + $0x90] sm:$0xff] %vm7912, %v8671
      %8717 = vst.msk [vmem:[%s197 + $0x98] sm:$0xff] %vm7912, %v8673
      %8718 = vst.msk [vmem:[%s197 + $0xa0] sm:$0xff] %vm7912, %v8675
      %8719 = vst.msk [vmem:[%s197 + $0xa8] sm:$0xff] %vm7912, %v8677
      %8720 = vst.msk [vmem:[%s197 + $0xb0] sm:$0xff] %vm7912, %v8679
      %8721 = vst.msk [vmem:[%s197 + $0xb8] sm:$0xff] %vm7912, %v8681
      %8722 = vst.msk [vmem:[%s197 + $0xc0] sm:$0xff] %vm7912, %v8683
      %8723 = vst.msk [vmem:[%s197 + $0xc8] sm:$0xff] %vm7912, %v8685
      %8724 = vst.msk [vmem:[%s197 + $0xd0] sm:$0xff] %vm7912, %v8687
      %8725 = vst.msk [vmem:[%s197 + $0xd8] sm:$0xff] %vm7912, %v8689
      %8726 = vst.msk [vmem:[%s197 + $0xe0] sm:$0xff] %vm7912, %v8691
      %8727 = vst.msk [vmem:[%s197 + $0xe8] sm:$0xff] %vm7912, %v8693
      %8728 = vst.msk [vmem:[%s197 + $0xf0] sm:$0xff] %vm7912, %v8695
      %8729 = vst.msk [vmem:[%s197 + $0xf8] sm:$0xff] %vm7912, %v8697
      %8730 = vrot.lane.b32.xlu0 %v8554, 36
      %v8731 = vpop.permute.xlu0 %8730
      %8732 = vrot.lane.b32.xlu0 %v8555, 36
      %v8733 = vpop.permute.xlu0 %8732
      %8734 = vrot.lane.b32.xlu0 %v8556, 36
      %v8735 = vpop.permute.xlu0 %8734
      %8736 = vrot.lane.b32.xlu0 %v8557, 36
      %v8737 = vpop.permute.xlu0 %8736
      %8738 = vrot.lane.b32.xlu0 %v8558, 36
      %v8739 = vpop.permute.xlu0 %8738
      %8740 = vrot.lane.b32.xlu0 %v8559, 36
      %v8741 = vpop.permute.xlu0 %8740
      %8742 = vrot.lane.b32.xlu0 %v8560, 36
      %v8743 = vpop.permute.xlu0 %8742
      %8744 = vrot.lane.b32.xlu0 %v8561, 36
      %v8745 = vpop.permute.xlu0 %8744
      %8746 = vrot.lane.b32.xlu0 %v8562, 36
      %v8747 = vpop.permute.xlu0 %8746
      %8748 = vrot.lane.b32.xlu0 %v8563, 36
      %v8749 = vpop.permute.xlu0 %8748
      %8750 = vrot.lane.b32.xlu0 %v8564, 36
      %v8751 = vpop.permute.xlu0 %8750
      %8752 = vrot.lane.b32.xlu0 %v8565, 36
      %v8753 = vpop.permute.xlu0 %8752
      %8754 = vrot.lane.b32.xlu0 %v8566, 36
      %v8755 = vpop.permute.xlu0 %8754
      %8756 = vrot.lane.b32.xlu0 %v8567, 36
      %v8757 = vpop.permute.xlu0 %8756
      %8758 = vrot.lane.b32.xlu0 %v8568, 36
      %v8759 = vpop.permute.xlu0 %8758
      %8760 = vrot.lane.b32.xlu0 %v8569, 36
      %v8761 = vpop.permute.xlu0 %8760
      %8778 = vst.msk [vmem:[%s2741 + $0x1] sm:$0xff] %vm8057, %v8731
      %8779 = vst.msk [vmem:[%s2741 + $0x9] sm:$0xff] %vm8057, %v8733
      %8780 = vst.msk [vmem:[%s2741 + $0x19] sm:$0xff] %vm8057, %v8735
      %8781 = vst.msk [vmem:[%s2741 + $0x21] sm:$0xff] %vm8057, %v8737
      %8782 = vst.msk [vmem:[%s2741 + $0x31] sm:$0xff] %vm8057, %v8739
      %8783 = vst.msk [vmem:[%s2741 + $0x39] sm:$0xff] %vm8057, %v8741
      %8784 = vst.msk [vmem:[%s2741 + $0x49] sm:$0xff] %vm8057, %v8743
      %8785 = vst.msk [vmem:[%s2741 + $0x51] sm:$0xff] %vm8057, %v8745
      %8786 = vst.msk [vmem:[%s2741 + $0x61] sm:$0xff] %vm8057, %v8747
      %8787 = vst.msk [vmem:[%s2741 + $0x69] sm:$0xff] %vm8057, %v8749
      %8788 = vst.msk [vmem:[%s2741 + $0x79] sm:$0xff] %vm8057, %v8751
      %8789 = vst.msk [vmem:[%s2741 + $0x81] sm:$0xff] %vm8057, %v8753
      %8790 = vst.msk [vmem:[%s2741 + $0x91] sm:$0xff] %vm8057, %v8755
      %8791 = vst.msk [vmem:[%s2741 + $0x99] sm:$0xff] %vm8057, %v8757
      %8792 = vst.msk [vmem:[%s2741 + $0xa9] sm:$0xff] %vm8057, %v8759
      %8793 = vst.msk [vmem:[%s2741 + $0xb1] sm:$0xff] %vm8057, %v8761
      %v8794 = vld [vmem:[#allocation3 + $0x100] sm:$0xff]
      %v8795 = vld [vmem:[#allocation3 + $0x108] sm:$0xff]
      %v8796 = vld [vmem:[#allocation3 + $0x110] sm:$0xff]
      %v8797 = vld [vmem:[#allocation3 + $0x118] sm:$0xff]
      %v8798 = vld [vmem:[#allocation3 + $0x120] sm:$0xff]
      %v8799 = vld [vmem:[#allocation3 + $0x128] sm:$0xff]
      %v8800 = vld [vmem:[#allocation3 + $0x130] sm:$0xff]
      %v8801 = vld [vmem:[#allocation3 + $0x138] sm:$0xff]
      %v8802 = vld [vmem:[#allocation3 + $0x140] sm:$0xff]
      %v8803 = vld [vmem:[#allocation3 + $0x148] sm:$0xff]
      %v8804 = vld [vmem:[#allocation3 + $0x150] sm:$0xff]
      %v8805 = vld [vmem:[#allocation3 + $0x158] sm:$0xff]
      %v8806 = vld [vmem:[#allocation3 + $0x160] sm:$0xff]
      %v8807 = vld [vmem:[#allocation3 + $0x168] sm:$0xff]
      %v8808 = vld [vmem:[#allocation3 + $0x170] sm:$0xff]
      %v8809 = vld [vmem:[#allocation3 + $0x178] sm:$0xff]
      %v8810 = vmul.f32 %v8794, %v7360
      %v8811 = vmul.f32 %v8795, %v7360
      %v8812 = vmul.f32 %v8796, %v7360
      %v8813 = vmul.f32 %v8797, %v7360
      %v8814 = vmul.f32 %v8798, %v7360
      %v8815 = vmul.f32 %v8799, %v7360
      %v8816 = vmul.f32 %v8800, %v7360
      %v8817 = vmul.f32 %v8801, %v7360
      %v8818 = vmul.f32 %v8802, %v7360
      %v8819 = vmul.f32 %v8803, %v7360
      %v8820 = vmul.f32 %v8804, %v7360
      %v8821 = vmul.f32 %v8805, %v7360
      %v8822 = vmul.f32 %v8806, %v7360
      %v8823 = vmul.f32 %v8807, %v7360
      %v8824 = vmul.f32 %v8808, %v7360
      %v8825 = vmul.f32 %v8809, %v7360
      %v8826 = vadd.f32 %v8810, %v7382
      %v8827 = vadd.f32 %v8811, %v7382
      %v8828 = vadd.f32 %v8812, %v7382
      %v8829 = vadd.f32 %v8813, %v7382
      %v8830 = vadd.f32 %v8814, %v7382
      %v8831 = vadd.f32 %v8815, %v7382
      %v8832 = vadd.f32 %v8816, %v7382
      %v8833 = vadd.f32 %v8817, %v7382
      %v8834 = vadd.f32 %v8818, %v7382
      %v8835 = vadd.f32 %v8819, %v7382
      %v8836 = vadd.f32 %v8820, %v7382
      %v8837 = vadd.f32 %v8821, %v7382
      %v8838 = vadd.f32 %v8822, %v7382
      %v8839 = vadd.f32 %v8823, %v7382
      %v8840 = vadd.f32 %v8824, %v7382
      %v8841 = vadd.f32 %v8825, %v7382
      %v8842 = vxor.u32 %v8826, 2147483648
      %v8843 = vxor.u32 %v8827, 2147483648
      %v8844 = vxor.u32 %v8828, 2147483648
      %v8845 = vxor.u32 %v8829, 2147483648
      %v8846 = vxor.u32 %v8830, 2147483648
      %v8847 = vxor.u32 %v8831, 2147483648
      %v8848 = vxor.u32 %v8832, 2147483648
      %v8849 = vxor.u32 %v8833, 2147483648
      %v8850 = vxor.u32 %v8834, 2147483648
      %v8851 = vxor.u32 %v8835, 2147483648
      %v8852 = vxor.u32 %v8836, 2147483648
      %v8853 = vxor.u32 %v8837, 2147483648
      %v8854 = vxor.u32 %v8838, 2147483648
      %v8855 = vxor.u32 %v8839, 2147483648
      %v8856 = vxor.u32 %v8840, 2147483648
      %v8857 = vxor.u32 %v8841, 2147483648
      %v8858 = vmul.f32 %v8842, 1.442695
      %v8859 = vpow.pop %v8858
      %v8860 = vmul.f32 %v8843, 1.442695
      %v8861 = vpow.pop %v8860
      %v8862 = vmul.f32 %v8844, 1.442695
      %v8863 = vpow.pop %v8862
      %v8864 = vmul.f32 %v8845, 1.442695
      %v8865 = vpow.pop %v8864
      %v8866 = vmul.f32 %v8846, 1.442695
      %v8867 = vpow.pop %v8866
      %v8868 = vmul.f32 %v8847, 1.442695
      %v8869 = vpow.pop %v8868
      %v8870 = vmul.f32 %v8848, 1.442695
      %v8871 = vpow.pop %v8870
      %v8872 = vmul.f32 %v8849, 1.442695
      %v8873 = vpow.pop %v8872
      %v8874 = vmul.f32 %v8850, 1.442695
      %v8875 = vpow.pop %v8874
      %v8876 = vmul.f32 %v8851, 1.442695
      %v8877 = vpow.pop %v8876
      %v8878 = vmul.f32 %v8852, 1.442695
      %v8879 = vpow.pop %v8878
      %v8880 = vmul.f32 %v8853, 1.442695
      %v8881 = vpow.pop %v8880
      %v8882 = vmul.f32 %v8854, 1.442695
      %v8883 = vpow.pop %v8882
      %v8884 = vmul.f32 %v8855, 1.442695
      %v8885 = vpow.pop %v8884
      %v8886 = vmul.f32 %v8856, 1.442695
      %v8887 = vpow.pop %v8886
      %v8888 = vmul.f32 %v8857, 1.442695
      %v8889 = vpow.pop %v8888
      %v8890 = vadd.f32 %v8859, 1.0
      %v8891 = vadd.f32 %v8861, 1.0
      %v8892 = vadd.f32 %v8863, 1.0
      %v8893 = vadd.f32 %v8865, 1.0
      %v8894 = vadd.f32 %v8867, 1.0
      %v8895 = vadd.f32 %v8869, 1.0
      %v8896 = vadd.f32 %v8871, 1.0
      %v8897 = vadd.f32 %v8873, 1.0
      %v8898 = vadd.f32 %v8875, 1.0
      %v8899 = vadd.f32 %v8877, 1.0
      %v8900 = vadd.f32 %v8879, 1.0
      %v8901 = vadd.f32 %v8881, 1.0
      %v8902 = vadd.f32 %v8883, 1.0
      %v8903 = vadd.f32 %v8885, 1.0
      %v8904 = vadd.f32 %v8887, 1.0
      %v8905 = vadd.f32 %v8889, 1.0
      %v8906 = vrcp.pop %v8890
      %v8907 = vmul.f32 1.0, %v8906
      %v8908 = vrcp.pop %v8891
      %v8909 = vmul.f32 1.0, %v8908
      %v8910 = vrcp.pop %v8892
      %v8911 = vmul.f32 1.0, %v8910
      %v8912 = vrcp.pop %v8893
      %v8913 = vmul.f32 1.0, %v8912
      %v8914 = vrcp.pop %v8894
      %v8915 = vmul.f32 1.0, %v8914
      %v8916 = vrcp.pop %v8895
      %v8917 = vmul.f32 1.0, %v8916
      %v8918 = vrcp.pop %v8896
      %v8919 = vmul.f32 1.0, %v8918
      %v8920 = vrcp.pop %v8897
      %v8921 = vmul.f32 1.0, %v8920
      %v8922 = vrcp.pop %v8898
      %v8923 = vmul.f32 1.0, %v8922
      %v8924 = vrcp.pop %v8899
      %v8925 = vmul.f32 1.0, %v8924
      %v8926 = vrcp.pop %v8900
      %v8927 = vmul.f32 1.0, %v8926
      %v8928 = vrcp.pop %v8901
      %v8929 = vmul.f32 1.0, %v8928
      %v8930 = vrcp.pop %v8902
      %v8931 = vmul.f32 1.0, %v8930
      %v8932 = vrcp.pop %v8903
      %v8933 = vmul.f32 1.0, %v8932
      %v8934 = vrcp.pop %v8904
      %v8935 = vmul.f32 1.0, %v8934
      %v8936 = vrcp.pop %v8905
      %v8937 = vmul.f32 1.0, %v8936
      %v8938 = vld [vmem:[#allocation4 + $0x100] sm:$0xff]
      %v8939 = vld [vmem:[#allocation4 + $0x108] sm:$0xff]
      %v8940 = vld [vmem:[#allocation4 + $0x110] sm:$0xff]
      %v8941 = vld [vmem:[#allocation4 + $0x118] sm:$0xff]
      %v8942 = vld [vmem:[#allocation4 + $0x120] sm:$0xff]
      %v8943 = vld [vmem:[#allocation4 + $0x128] sm:$0xff]
      %v8944 = vld [vmem:[#allocation4 + $0x130] sm:$0xff]
      %v8945 = vld [vmem:[#allocation4 + $0x138] sm:$0xff]
      %v8946 = vld [vmem:[#allocation4 + $0x140] sm:$0xff]
      %v8947 = vld [vmem:[#allocation4 + $0x148] sm:$0xff]
      %v8948 = vld [vmem:[#allocation4 + $0x150] sm:$0xff]
      %v8949 = vld [vmem:[#allocation4 + $0x158] sm:$0xff]
      %v8950 = vld [vmem:[#allocation4 + $0x160] sm:$0xff]
      %v8951 = vld [vmem:[#allocation4 + $0x168] sm:$0xff]
      %v8952 = vld [vmem:[#allocation4 + $0x170] sm:$0xff]
      %v8953 = vld [vmem:[#allocation4 + $0x178] sm:$0xff]
      %8970 = vrot.lane.b32.xlu0 %v8938, 32
      %v8971 = vpop.permute.xlu0 %8970
      %8972 = vrot.lane.b32.xlu0 %v8939, 32
      %v8973 = vpop.permute.xlu0 %8972
      %8974 = vrot.lane.b32.xlu0 %v8940, 32
      %v8975 = vpop.permute.xlu0 %8974
      %8976 = vrot.lane.b32.xlu0 %v8941, 32
      %v8977 = vpop.permute.xlu0 %8976
      %8978 = vrot.lane.b32.xlu0 %v8942, 32
      %v8979 = vpop.permute.xlu0 %8978
      %8980 = vrot.lane.b32.xlu0 %v8943, 32
      %v8981 = vpop.permute.xlu0 %8980
      %8982 = vrot.lane.b32.xlu0 %v8944, 32
      %v8983 = vpop.permute.xlu0 %8982
      %8984 = vrot.lane.b32.xlu0 %v8945, 32
      %v8985 = vpop.permute.xlu0 %8984
      %8986 = vrot.lane.b32.xlu0 %v8946, 32
      %v8987 = vpop.permute.xlu0 %8986
      %8988 = vrot.lane.b32.xlu0 %v8947, 32
      %v8989 = vpop.permute.xlu0 %8988
      %8990 = vrot.lane.b32.xlu0 %v8948, 32
      %v8991 = vpop.permute.xlu0 %8990
      %8992 = vrot.lane.b32.xlu0 %v8949, 32
      %v8993 = vpop.permute.xlu0 %8992
      %8994 = vrot.lane.b32.xlu0 %v8950, 32
      %v8995 = vpop.permute.xlu0 %8994
      %8996 = vrot.lane.b32.xlu0 %v8951, 32
      %v8997 = vpop.permute.xlu0 %8996
      %8998 = vrot.lane.b32.xlu0 %v8952, 32
      %v8999 = vpop.permute.xlu0 %8998
      %9000 = vrot.lane.b32.xlu0 %v8953, 32
      %v9001 = vpop.permute.xlu0 %9000
      %v9018 = vmul.f32 %v8907, %v8971
      %v9019 = vmul.f32 %v8909, %v8973
      %v9020 = vmul.f32 %v8911, %v8975
      %v9021 = vmul.f32 %v8913, %v8977
      %v9022 = vmul.f32 %v8915, %v8979
      %v9023 = vmul.f32 %v8917, %v8981
      %v9024 = vmul.f32 %v8919, %v8983
      %v9025 = vmul.f32 %v8921, %v8985
      %v9026 = vmul.f32 %v8923, %v8987
      %v9027 = vmul.f32 %v8925, %v8989
      %v9028 = vmul.f32 %v8927, %v8991
      %v9029 = vmul.f32 %v8929, %v8993
      %v9030 = vmul.f32 %v8931, %v8995
      %v9031 = vmul.f32 %v8933, %v8997
      %v9032 = vmul.f32 %v8935, %v8999
      %v9033 = vmul.f32 %v8937, %v9001
      %9050 = vrot.lane.b32.xlu0 %v8826, 64
      %v9051 = vpop.permute.xlu0 %9050
      %9052 = vrot.lane.b32.xlu0 %v8827, 64
      %v9053 = vpop.permute.xlu0 %9052
      %9054 = vrot.lane.b32.xlu0 %v8828, 64
      %v9055 = vpop.permute.xlu0 %9054
      %9056 = vrot.lane.b32.xlu0 %v8829, 64
      %v9057 = vpop.permute.xlu0 %9056
      %9058 = vrot.lane.b32.xlu0 %v8830, 64
      %v9059 = vpop.permute.xlu0 %9058
      %9060 = vrot.lane.b32.xlu0 %v8831, 64
      %v9061 = vpop.permute.xlu0 %9060
      %9062 = vrot.lane.b32.xlu0 %v8832, 64
      %v9063 = vpop.permute.xlu0 %9062
      %9064 = vrot.lane.b32.xlu0 %v8833, 64
      %v9065 = vpop.permute.xlu0 %9064
      %9066 = vrot.lane.b32.xlu0 %v8834, 64
      %v9067 = vpop.permute.xlu0 %9066
      %9068 = vrot.lane.b32.xlu0 %v8835, 64
      %v9069 = vpop.permute.xlu0 %9068
      %9070 = vrot.lane.b32.xlu0 %v8836, 64
      %v9071 = vpop.permute.xlu0 %9070
      %9072 = vrot.lane.b32.xlu0 %v8837, 64
      %v9073 = vpop.permute.xlu0 %9072
      %9074 = vrot.lane.b32.xlu0 %v8838, 64
      %v9075 = vpop.permute.xlu0 %9074
      %9076 = vrot.lane.b32.xlu0 %v8839, 64
      %v9077 = vpop.permute.xlu0 %9076
      %9078 = vrot.lane.b32.xlu0 %v8840, 64
      %v9079 = vpop.permute.xlu0 %9078
      %9080 = vrot.lane.b32.xlu0 %v8841, 64
      %v9081 = vpop.permute.xlu0 %9080
      %v9098 = vmul.f32 %v8907, %v9051
      %v9099 = vmul.f32 %v8909, %v9053
      %v9100 = vmul.f32 %v8911, %v9055
      %v9101 = vmul.f32 %v8913, %v9057
      %v9102 = vmul.f32 %v8915, %v9059
      %v9103 = vmul.f32 %v8917, %v9061
      %v9104 = vmul.f32 %v8919, %v9063
      %v9105 = vmul.f32 %v8921, %v9065
      %v9106 = vmul.f32 %v8923, %v9067
      %v9107 = vmul.f32 %v8925, %v9069
      %v9108 = vmul.f32 %v8927, %v9071
      %v9109 = vmul.f32 %v8929, %v9073
      %v9110 = vmul.f32 %v8931, %v9075
      %v9111 = vmul.f32 %v8933, %v9077
      %v9112 = vmul.f32 %v8935, %v9079
      %v9113 = vmul.f32 %v8937, %v9081
      %9130 = vrot.lane.b32.xlu0 %v9098, 32
      %v9131 = vpop.permute.xlu0 %9130
      %9132 = vrot.lane.b32.xlu0 %v9099, 32
      %v9133 = vpop.permute.xlu0 %9132
      %9134 = vrot.lane.b32.xlu0 %v9100, 32
      %v9135 = vpop.permute.xlu0 %9134
      %9136 = vrot.lane.b32.xlu0 %v9101, 32
      %v9137 = vpop.permute.xlu0 %9136
      %9138 = vrot.lane.b32.xlu0 %v9102, 32
      %v9139 = vpop.permute.xlu0 %9138
      %9140 = vrot.lane.b32.xlu0 %v9103, 32
      %v9141 = vpop.permute.xlu0 %9140
      %9142 = vrot.lane.b32.xlu0 %v9104, 32
      %v9143 = vpop.permute.xlu0 %9142
      %9144 = vrot.lane.b32.xlu0 %v9105, 32
      %v9145 = vpop.permute.xlu0 %9144
      %9146 = vrot.lane.b32.xlu0 %v9106, 32
      %v9147 = vpop.permute.xlu0 %9146
      %9148 = vrot.lane.b32.xlu0 %v9107, 32
      %v9149 = vpop.permute.xlu0 %9148
      %9150 = vrot.lane.b32.xlu0 %v9108, 32
      %v9151 = vpop.permute.xlu0 %9150
      %9152 = vrot.lane.b32.xlu0 %v9109, 32
      %v9153 = vpop.permute.xlu0 %9152
      %9154 = vrot.lane.b32.xlu0 %v9110, 32
      %v9155 = vpop.permute.xlu0 %9154
      %9156 = vrot.lane.b32.xlu0 %v9111, 32
      %v9157 = vpop.permute.xlu0 %9156
      %9158 = vrot.lane.b32.xlu0 %v9112, 32
      %v9159 = vpop.permute.xlu0 %9158
      %9160 = vrot.lane.b32.xlu0 %v9113, 32
      %v9161 = vpop.permute.xlu0 %9160
      %v9178 = vadd.f32 %v9018, %v9131
      %v9179 = vadd.f32 %v9019, %v9133
      %v9180 = vadd.f32 %v9020, %v9135
      %v9181 = vadd.f32 %v9021, %v9137
      %v9182 = vadd.f32 %v9022, %v9139
      %v9183 = vadd.f32 %v9023, %v9141
      %v9184 = vadd.f32 %v9024, %v9143
      %v9185 = vadd.f32 %v9025, %v9145
      %v9186 = vadd.f32 %v9026, %v9147
      %v9187 = vadd.f32 %v9027, %v9149
      %v9188 = vadd.f32 %v9028, %v9151
      %v9189 = vadd.f32 %v9029, %v9153
      %v9190 = vadd.f32 %v9030, %v9155
      %v9191 = vadd.f32 %v9031, %v9157
      %v9192 = vadd.f32 %v9032, %v9159
      %v9193 = vadd.f32 %v9033, %v9161
      %v9194 = vtanh.pop %v9178
      %v9195 = vtanh.pop %v9179
      %v9196 = vtanh.pop %v9180
      %v9197 = vtanh.pop %v9181
      %v9198 = vtanh.pop %v9182
      %v9199 = vtanh.pop %v9183
      %v9200 = vtanh.pop %v9184
      %v9201 = vtanh.pop %v9185
      %v9202 = vtanh.pop %v9186
      %v9203 = vtanh.pop %v9187
      %v9204 = vtanh.pop %v9188
      %v9205 = vtanh.pop %v9189
      %v9206 = vtanh.pop %v9190
      %v9207 = vtanh.pop %v9191
      %v9208 = vtanh.pop %v9192
      %v9209 = vtanh.pop %v9193
      %9226 = vrot.lane.b32.xlu0 %v9194, 64
      %v9227 = vpop.permute.xlu0 %9226
      %9228 = vrot.lane.b32.xlu0 %v9195, 64
      %v9229 = vpop.permute.xlu0 %9228
      %9230 = vrot.lane.b32.xlu0 %v9196, 64
      %v9231 = vpop.permute.xlu0 %9230
      %9232 = vrot.lane.b32.xlu0 %v9197, 64
      %v9233 = vpop.permute.xlu0 %9232
      %9234 = vrot.lane.b32.xlu0 %v9198, 64
      %v9235 = vpop.permute.xlu0 %9234
      %9236 = vrot.lane.b32.xlu0 %v9199, 64
      %v9237 = vpop.permute.xlu0 %9236
      %9238 = vrot.lane.b32.xlu0 %v9200, 64
      %v9239 = vpop.permute.xlu0 %9238
      %9240 = vrot.lane.b32.xlu0 %v9201, 64
      %v9241 = vpop.permute.xlu0 %9240
      %9242 = vrot.lane.b32.xlu0 %v9202, 64
      %v9243 = vpop.permute.xlu0 %9242
      %9244 = vrot.lane.b32.xlu0 %v9203, 64
      %v9245 = vpop.permute.xlu0 %9244
      %9246 = vrot.lane.b32.xlu0 %v9204, 64
      %v9247 = vpop.permute.xlu0 %9246
      %9248 = vrot.lane.b32.xlu0 %v9205, 64
      %v9249 = vpop.permute.xlu0 %9248
      %9250 = vrot.lane.b32.xlu0 %v9206, 64
      %v9251 = vpop.permute.xlu0 %9250
      %9252 = vrot.lane.b32.xlu0 %v9207, 64
      %v9253 = vpop.permute.xlu0 %9252
      %9254 = vrot.lane.b32.xlu0 %v9208, 64
      %v9255 = vpop.permute.xlu0 %9254
      %9256 = vrot.lane.b32.xlu0 %v9209, 64
      %v9257 = vpop.permute.xlu0 %9256
      %v9274 = vmul.f32 %v8907, %v9227
      %v9275 = vmul.f32 %v8909, %v9229
      %v9276 = vmul.f32 %v8911, %v9231
      %v9277 = vmul.f32 %v8913, %v9233
      %v9278 = vmul.f32 %v8915, %v9235
      %v9279 = vmul.f32 %v8917, %v9237
      %v9280 = vmul.f32 %v8919, %v9239
      %v9281 = vmul.f32 %v8921, %v9241
      %v9282 = vmul.f32 %v8923, %v9243
      %v9283 = vmul.f32 %v8925, %v9245
      %v9284 = vmul.f32 %v8927, %v9247
      %v9285 = vmul.f32 %v8929, %v9249
      %v9286 = vmul.f32 %v8931, %v9251
      %v9287 = vmul.f32 %v8933, %v9253
      %v9288 = vmul.f32 %v8935, %v9255
      %v9289 = vmul.f32 %v8937, %v9257
      %9306 = vrot.lane.b32.xlu0 %v9178, 96
      %v9307 = vpop.permute.xlu0 %9306
      %9308 = vrot.lane.b32.xlu0 %v9179, 96
      %v9309 = vpop.permute.xlu0 %9308
      %9310 = vrot.lane.b32.xlu0 %v9180, 96
      %v9311 = vpop.permute.xlu0 %9310
      %9312 = vrot.lane.b32.xlu0 %v9181, 96
      %v9313 = vpop.permute.xlu0 %9312
      %9314 = vrot.lane.b32.xlu0 %v9182, 96
      %v9315 = vpop.permute.xlu0 %9314
      %9316 = vrot.lane.b32.xlu0 %v9183, 96
      %v9317 = vpop.permute.xlu0 %9316
      %9318 = vrot.lane.b32.xlu0 %v9184, 96
      %v9319 = vpop.permute.xlu0 %9318
      %9320 = vrot.lane.b32.xlu0 %v9185, 96
      %v9321 = vpop.permute.xlu0 %9320
      %9322 = vrot.lane.b32.xlu0 %v9186, 96
      %v9323 = vpop.permute.xlu0 %9322
      %9324 = vrot.lane.b32.xlu0 %v9187, 96
      %v9325 = vpop.permute.xlu0 %9324
      %9326 = vrot.lane.b32.xlu0 %v9188, 96
      %v9327 = vpop.permute.xlu0 %9326
      %9328 = vrot.lane.b32.xlu0 %v9189, 96
      %v9329 = vpop.permute.xlu0 %9328
      %9330 = vrot.lane.b32.xlu0 %v9190, 96
      %v9331 = vpop.permute.xlu0 %9330
      %9332 = vrot.lane.b32.xlu0 %v9191, 96
      %v9333 = vpop.permute.xlu0 %9332
      %9334 = vrot.lane.b32.xlu0 %v9192, 96
      %v9335 = vpop.permute.xlu0 %9334
      %9336 = vrot.lane.b32.xlu0 %v9193, 96
      %v9337 = vpop.permute.xlu0 %9336
      %9354 = vst.msk [vmem:[#allocation4 + $0x100] sm:$0xff] %vm7912, %v9307
      %9355 = vst.msk [vmem:[#allocation4 + $0x108] sm:$0xff] %vm7912, %v9309
      %9356 = vst.msk [vmem:[#allocation4 + $0x110] sm:$0xff] %vm7912, %v9311
      %9357 = vst.msk [vmem:[#allocation4 + $0x118] sm:$0xff] %vm7912, %v9313
      %9358 = vst.msk [vmem:[#allocation4 + $0x120] sm:$0xff] %vm7912, %v9315
      %9359 = vst.msk [vmem:[#allocation4 + $0x128] sm:$0xff] %vm7912, %v9317
      %9360 = vst.msk [vmem:[#allocation4 + $0x130] sm:$0xff] %vm7912, %v9319
      %9361 = vst.msk [vmem:[#allocation4 + $0x138] sm:$0xff] %vm7912, %v9321
      %9362 = vst.msk [vmem:[#allocation4 + $0x140] sm:$0xff] %vm7912, %v9323
      %9363 = vst.msk [vmem:[#allocation4 + $0x148] sm:$0xff] %vm7912, %v9325
      %9364 = vst.msk [vmem:[#allocation4 + $0x150] sm:$0xff] %vm7912, %v9327
      %9365 = vst.msk [vmem:[#allocation4 + $0x158] sm:$0xff] %vm7912, %v9329
      %9366 = vst.msk [vmem:[#allocation4 + $0x160] sm:$0xff] %vm7912, %v9331
      %9367 = vst.msk [vmem:[#allocation4 + $0x168] sm:$0xff] %vm7912, %v9333
      %9368 = vst.msk [vmem:[#allocation4 + $0x170] sm:$0xff] %vm7912, %v9335
      %9369 = vst.msk [vmem:[#allocation4 + $0x178] sm:$0xff] %vm7912, %v9337
      %9386 = vrot.lane.b32.xlu0 %v9274, 32
      %v9387 = vpop.permute.xlu0 %9386
      %9388 = vrot.lane.b32.xlu0 %v9275, 32
      %v9389 = vpop.permute.xlu0 %9388
      %9390 = vrot.lane.b32.xlu0 %v9276, 32
      %v9391 = vpop.permute.xlu0 %9390
      %9392 = vrot.lane.b32.xlu0 %v9277, 32
      %v9393 = vpop.permute.xlu0 %9392
      %9394 = vrot.lane.b32.xlu0 %v9278, 32
      %v9395 = vpop.permute.xlu0 %9394
      %9396 = vrot.lane.b32.xlu0 %v9279, 32
      %v9397 = vpop.permute.xlu0 %9396
      %9398 = vrot.lane.b32.xlu0 %v9280, 32
      %v9399 = vpop.permute.xlu0 %9398
      %9400 = vrot.lane.b32.xlu0 %v9281, 32
      %v9401 = vpop.permute.xlu0 %9400
      %9402 = vrot.lane.b32.xlu0 %v9282, 32
      %v9403 = vpop.permute.xlu0 %9402
      %9404 = vrot.lane.b32.xlu0 %v9283, 32
      %v9405 = vpop.permute.xlu0 %9404
      %9406 = vrot.lane.b32.xlu0 %v9284, 32
      %v9407 = vpop.permute.xlu0 %9406
      %9408 = vrot.lane.b32.xlu0 %v9285, 32
      %v9409 = vpop.permute.xlu0 %9408
      %9410 = vrot.lane.b32.xlu0 %v9286, 32
      %v9411 = vpop.permute.xlu0 %9410
      %9412 = vrot.lane.b32.xlu0 %v9287, 32
      %v9413 = vpop.permute.xlu0 %9412
      %9414 = vrot.lane.b32.xlu0 %v9288, 32
      %v9415 = vpop.permute.xlu0 %9414
      %9416 = vrot.lane.b32.xlu0 %v9289, 32
      %v9417 = vpop.permute.xlu0 %9416
      %9434 = vst.msk [vmem:[%s197 + $0x100] sm:$0xff] %vm7912, %v9387
      %9435 = vst.msk [vmem:[%s197 + $0x108] sm:$0xff] %vm7912, %v9389
      %9436 = vst.msk [vmem:[%s197 + $0x110] sm:$0xff] %vm7912, %v9391
      %9437 = vst.msk [vmem:[%s197 + $0x118] sm:$0xff] %vm7912, %v9393
      %9438 = vst.msk [vmem:[%s197 + $0x120] sm:$0xff] %vm7912, %v9395
      %9439 = vst.msk [vmem:[%s197 + $0x128] sm:$0xff] %vm7912, %v9397
      %9440 = vst.msk [vmem:[%s197 + $0x130] sm:$0xff] %vm7912, %v9399
      %9441 = vst.msk [vmem:[%s197 + $0x138] sm:$0xff] %vm7912, %v9401
      %9442 = vst.msk [vmem:[%s197 + $0x140] sm:$0xff] %vm7912, %v9403
      %9443 = vst.msk [vmem:[%s197 + $0x148] sm:$0xff] %vm7912, %v9405
      %9444 = vst.msk [vmem:[%s197 + $0x150] sm:$0xff] %vm7912, %v9407
      %9445 = vst.msk [vmem:[%s197 + $0x158] sm:$0xff] %vm7912, %v9409
      %9446 = vst.msk [vmem:[%s197 + $0x160] sm:$0xff] %vm7912, %v9411
      %9447 = vst.msk [vmem:[%s197 + $0x168] sm:$0xff] %vm7912, %v9413
      %9448 = vst.msk [vmem:[%s197 + $0x170] sm:$0xff] %vm7912, %v9415
      %9449 = vst.msk [vmem:[%s197 + $0x178] sm:$0xff] %vm7912, %v9417
      %9450 = vrot.lane.b32.xlu0 %v9274, 36
      %v9451 = vpop.permute.xlu0 %9450
      %9452 = vrot.lane.b32.xlu0 %v9275, 36
      %v9453 = vpop.permute.xlu0 %9452
      %9454 = vrot.lane.b32.xlu0 %v9276, 36
      %v9455 = vpop.permute.xlu0 %9454
      %9456 = vrot.lane.b32.xlu0 %v9277, 36
      %v9457 = vpop.permute.xlu0 %9456
      %9458 = vrot.lane.b32.xlu0 %v9278, 36
      %v9459 = vpop.permute.xlu0 %9458
      %9460 = vrot.lane.b32.xlu0 %v9279, 36
      %v9461 = vpop.permute.xlu0 %9460
      %9462 = vrot.lane.b32.xlu0 %v9280, 36
      %v9463 = vpop.permute.xlu0 %9462
      %9464 = vrot.lane.b32.xlu0 %v9281, 36
      %v9465 = vpop.permute.xlu0 %9464
      %9466 = vrot.lane.b32.xlu0 %v9282, 36
      %v9467 = vpop.permute.xlu0 %9466
      %9468 = vrot.lane.b32.xlu0 %v9283, 36
      %v9469 = vpop.permute.xlu0 %9468
      %9470 = vrot.lane.b32.xlu0 %v9284, 36
      %v9471 = vpop.permute.xlu0 %9470
      %9472 = vrot.lane.b32.xlu0 %v9285, 36
      %v9473 = vpop.permute.xlu0 %9472
      %9474 = vrot.lane.b32.xlu0 %v9286, 36
      %v9475 = vpop.permute.xlu0 %9474
      %9476 = vrot.lane.b32.xlu0 %v9287, 36
      %v9477 = vpop.permute.xlu0 %9476
      %9478 = vrot.lane.b32.xlu0 %v9288, 36
      %v9479 = vpop.permute.xlu0 %9478
      %9480 = vrot.lane.b32.xlu0 %v9289, 36
      %v9481 = vpop.permute.xlu0 %9480
      %9498 = vst.msk [vmem:[%s476 + $0x1] sm:$0xff] %vm8057, %v9451
      %9499 = vst.msk [vmem:[%s476 + $0x9] sm:$0xff] %vm8057, %v9453
      %9500 = vst.msk [vmem:[%s476 + $0x19] sm:$0xff] %vm8057, %v9455
      %9501 = vst.msk [vmem:[%s476 + $0x21] sm:$0xff] %vm8057, %v9457
      %9502 = vst.msk [vmem:[%s476 + $0x31] sm:$0xff] %vm8057, %v9459
      %9503 = vst.msk [vmem:[%s476 + $0x39] sm:$0xff] %vm8057, %v9461
      %9504 = vst.msk [vmem:[%s476 + $0x49] sm:$0xff] %vm8057, %v9463
      %9505 = vst.msk [vmem:[%s476 + $0x51] sm:$0xff] %vm8057, %v9465
      %9506 = vst.msk [vmem:[%s476 + $0x61] sm:$0xff] %vm8057, %v9467
      %9507 = vst.msk [vmem:[%s476 + $0x69] sm:$0xff] %vm8057, %v9469
      %9508 = vst.msk [vmem:[%s476 + $0x79] sm:$0xff] %vm8057, %v9471
      %9509 = vst.msk [vmem:[%s476 + $0x81] sm:$0xff] %vm8057, %v9473
      %9510 = vst.msk [vmem:[%s476 + $0x91] sm:$0xff] %vm8057, %v9475
      %9511 = vst.msk [vmem:[%s476 + $0x99] sm:$0xff] %vm8057, %v9477
      %9512 = vst.msk [vmem:[%s476 + $0xa9] sm:$0xff] %vm8057, %v9479
      %9513 = vst.msk [vmem:[%s476 + $0xb1] sm:$0xff] %vm8057, %v9481
      %v9514 = vld [vmem:[#allocation3 + $0x180] sm:$0xff]
      %v9515 = vld [vmem:[#allocation3 + $0x188] sm:$0xff]
      %v9516 = vld [vmem:[#allocation3 + $0x190] sm:$0xff]
      %v9517 = vld [vmem:[#allocation3 + $0x198] sm:$0xff]
      %v9518 = vld [vmem:[#allocation3 + $0x1a0] sm:$0xff]
      %v9519 = vld [vmem:[#allocation3 + $0x1a8] sm:$0xff]
      %v9520 = vld [vmem:[#allocation3 + $0x1b0] sm:$0xff]
      %v9521 = vld [vmem:[#allocation3 + $0x1b8] sm:$0xff]
      %v9522 = vld [vmem:[#allocation3 + $0x1c0] sm:$0xff]
      %v9523 = vld [vmem:[#allocation3 + $0x1c8] sm:$0xff]
      %v9524 = vld [vmem:[#allocation3 + $0x1d0] sm:$0xff]
      %v9525 = vld [vmem:[#allocation3 + $0x1d8] sm:$0xff]
      %v9526 = vld [vmem:[#allocation3 + $0x1e0] sm:$0xff]
      %v9527 = vld [vmem:[#allocation3 + $0x1e8] sm:$0xff]
      %v9528 = vld [vmem:[#allocation3 + $0x1f0] sm:$0xff]
      %v9529 = vld [vmem:[#allocation3 + $0x1f8] sm:$0xff]
      %v9530 = vmul.f32 %v9514, %v7360
      %v9531 = vmul.f32 %v9515, %v7360
      %v9532 = vmul.f32 %v9516, %v7360
      %v9533 = vmul.f32 %v9517, %v7360
      %v9534 = vmul.f32 %v9518, %v7360
      %v9535 = vmul.f32 %v9519, %v7360
      %v9536 = vmul.f32 %v9520, %v7360
      %v9537 = vmul.f32 %v9521, %v7360
      %v9538 = vmul.f32 %v9522, %v7360
      %v9539 = vmul.f32 %v9523, %v7360
      %v9540 = vmul.f32 %v9524, %v7360
      %v9541 = vmul.f32 %v9525, %v7360
      %v9542 = vmul.f32 %v9526, %v7360
      %v9543 = vmul.f32 %v9527, %v7360
      %v9544 = vmul.f32 %v9528, %v7360
      %v9545 = vmul.f32 %v9529, %v7360
      %v9546 = vadd.f32 %v9530, %v7382
      %v9547 = vadd.f32 %v9531, %v7382
      %v9548 = vadd.f32 %v9532, %v7382
      %v9549 = vadd.f32 %v9533, %v7382
      %v9550 = vadd.f32 %v9534, %v7382
      %v9551 = vadd.f32 %v9535, %v7382
      %v9552 = vadd.f32 %v9536, %v7382
      %v9553 = vadd.f32 %v9537, %v7382
      %v9554 = vadd.f32 %v9538, %v7382
      %v9555 = vadd.f32 %v9539, %v7382
      %v9556 = vadd.f32 %v9540, %v7382
      %v9557 = vadd.f32 %v9541, %v7382
      %v9558 = vadd.f32 %v9542, %v7382
      %v9559 = vadd.f32 %v9543, %v7382
      %v9560 = vadd.f32 %v9544, %v7382
      %v9561 = vadd.f32 %v9545, %v7382
      %v9562 = vxor.u32 %v9546, 2147483648
      %v9563 = vxor.u32 %v9547, 2147483648
      %v9564 = vxor.u32 %v9548, 2147483648
      %v9565 = vxor.u32 %v9549, 2147483648
      %v9566 = vxor.u32 %v9550, 2147483648
      %v9567 = vxor.u32 %v9551, 2147483648
      %v9568 = vxor.u32 %v9552, 2147483648
      %v9569 = vxor.u32 %v9553, 2147483648
      %v9570 = vxor.u32 %v9554, 2147483648
      %v9571 = vxor.u32 %v9555, 2147483648
      %v9572 = vxor.u32 %v9556, 2147483648
      %v9573 = vxor.u32 %v9557, 2147483648
      %v9574 = vxor.u32 %v9558, 2147483648
      %v9575 = vxor.u32 %v9559, 2147483648
      %v9576 = vxor.u32 %v9560, 2147483648
      %v9577 = vxor.u32 %v9561, 2147483648
      %v9578 = vmul.f32 %v9562, 1.442695
      %v9579 = vpow.pop %v9578
      %v9580 = vmul.f32 %v9563, 1.442695
      %v9581 = vpow.pop %v9580
      %v9582 = vmul.f32 %v9564, 1.442695
      %v9583 = vpow.pop %v9582
      %v9584 = vmul.f32 %v9565, 1.442695
      %v9585 = vpow.pop %v9584
      %v9586 = vmul.f32 %v9566, 1.442695
      %v9587 = vpow.pop %v9586
      %v9588 = vmul.f32 %v9567, 1.442695
      %v9589 = vpow.pop %v9588
      %v9590 = vmul.f32 %v9568, 1.442695
      %v9591 = vpow.pop %v9590
      %v9592 = vmul.f32 %v9569, 1.442695
      %v9593 = vpow.pop %v9592
      %v9594 = vmul.f32 %v9570, 1.442695
      %v9595 = vpow.pop %v9594
      %v9596 = vmul.f32 %v9571, 1.442695
      %v9597 = vpow.pop %v9596
      %v9598 = vmul.f32 %v9572, 1.442695
      %v9599 = vpow.pop %v9598
      %v9600 = vmul.f32 %v9573, 1.442695
      %v9601 = vpow.pop %v9600
      %v9602 = vmul.f32 %v9574, 1.442695
      %v9603 = vpow.pop %v9602
      %v9604 = vmul.f32 %v9575, 1.442695
      %v9605 = vpow.pop %v9604
      %v9606 = vmul.f32 %v9576, 1.442695
      %v9607 = vpow.pop %v9606
      %v9608 = vmul.f32 %v9577, 1.442695
      %v9609 = vpow.pop %v9608
      %v9610 = vadd.f32 %v9579, 1.0
      %v9611 = vadd.f32 %v9581, 1.0
      %v9612 = vadd.f32 %v9583, 1.0
      %v9613 = vadd.f32 %v9585, 1.0
      %v9614 = vadd.f32 %v9587, 1.0
      %v9615 = vadd.f32 %v9589, 1.0
      %v9616 = vadd.f32 %v9591, 1.0
      %v9617 = vadd.f32 %v9593, 1.0
      %v9618 = vadd.f32 %v9595, 1.0
      %v9619 = vadd.f32 %v9597, 1.0
      %v9620 = vadd.f32 %v9599, 1.0
      %v9621 = vadd.f32 %v9601, 1.0
      %v9622 = vadd.f32 %v9603, 1.0
      %v9623 = vadd.f32 %v9605, 1.0
      %v9624 = vadd.f32 %v9607, 1.0
      %v9625 = vadd.f32 %v9609, 1.0
      %v9626 = vrcp.pop %v9610
      %v9627 = vmul.f32 1.0, %v9626
      %v9628 = vrcp.pop %v9611
      %v9629 = vmul.f32 1.0, %v9628
      %v9630 = vrcp.pop %v9612
      %v9631 = vmul.f32 1.0, %v9630
      %v9632 = vrcp.pop %v9613
      %v9633 = vmul.f32 1.0, %v9632
      %v9634 = vrcp.pop %v9614
      %v9635 = vmul.f32 1.0, %v9634
      %v9636 = vrcp.pop %v9615
      %v9637 = vmul.f32 1.0, %v9636
      %v9638 = vrcp.pop %v9616
      %v9639 = vmul.f32 1.0, %v9638
      %v9640 = vrcp.pop %v9617
      %v9641 = vmul.f32 1.0, %v9640
      %v9642 = vrcp.pop %v9618
      %v9643 = vmul.f32 1.0, %v9642
      %v9644 = vrcp.pop %v9619
      %v9645 = vmul.f32 1.0, %v9644
      %v9646 = vrcp.pop %v9620
      %v9647 = vmul.f32 1.0, %v9646
      %v9648 = vrcp.pop %v9621
      %v9649 = vmul.f32 1.0, %v9648
      %v9650 = vrcp.pop %v9622
      %v9651 = vmul.f32 1.0, %v9650
      %v9652 = vrcp.pop %v9623
      %v9653 = vmul.f32 1.0, %v9652
      %v9654 = vrcp.pop %v9624
      %v9655 = vmul.f32 1.0, %v9654
      %v9656 = vrcp.pop %v9625
      %v9657 = vmul.f32 1.0, %v9656
      %v9658 = vld [vmem:[#allocation4 + $0x180] sm:$0xff]
      %v9659 = vld [vmem:[#allocation4 + $0x188] sm:$0xff]
      %v9660 = vld [vmem:[#allocation4 + $0x190] sm:$0xff]
      %v9661 = vld [vmem:[#allocation4 + $0x198] sm:$0xff]
      %v9662 = vld [vmem:[#allocation4 + $0x1a0] sm:$0xff]
      %v9663 = vld [vmem:[#allocation4 + $0x1a8] sm:$0xff]
      %v9664 = vld [vmem:[#allocation4 + $0x1b0] sm:$0xff]
      %v9665 = vld [vmem:[#allocation4 + $0x1b8] sm:$0xff]
      %v9666 = vld [vmem:[#allocation4 + $0x1c0] sm:$0xff]
      %v9667 = vld [vmem:[#allocation4 + $0x1c8] sm:$0xff]
      %v9668 = vld [vmem:[#allocation4 + $0x1d0] sm:$0xff]
      %v9669 = vld [vmem:[#allocation4 + $0x1d8] sm:$0xff]
      %v9670 = vld [vmem:[#allocation4 + $0x1e0] sm:$0xff]
      %v9671 = vld [vmem:[#allocation4 + $0x1e8] sm:$0xff]
      %v9672 = vld [vmem:[#allocation4 + $0x1f0] sm:$0xff]
      %v9673 = vld [vmem:[#allocation4 + $0x1f8] sm:$0xff]
      %9690 = vrot.lane.b32.xlu0 %v9658, 32
      %v9691 = vpop.permute.xlu0 %9690
      %9692 = vrot.lane.b32.xlu0 %v9659, 32
      %v9693 = vpop.permute.xlu0 %9692
      %9694 = vrot.lane.b32.xlu0 %v9660, 32
      %v9695 = vpop.permute.xlu0 %9694
      %9696 = vrot.lane.b32.xlu0 %v9661, 32
      %v9697 = vpop.permute.xlu0 %9696
      %9698 = vrot.lane.b32.xlu0 %v9662, 32
      %v9699 = vpop.permute.xlu0 %9698
      %9700 = vrot.lane.b32.xlu0 %v9663, 32
      %v9701 = vpop.permute.xlu0 %9700
      %9702 = vrot.lane.b32.xlu0 %v9664, 32
      %v9703 = vpop.permute.xlu0 %9702
      %9704 = vrot.lane.b32.xlu0 %v9665, 32
      %v9705 = vpop.permute.xlu0 %9704
      %9706 = vrot.lane.b32.xlu0 %v9666, 32
      %v9707 = vpop.permute.xlu0 %9706
      %9708 = vrot.lane.b32.xlu0 %v9667, 32
      %v9709 = vpop.permute.xlu0 %9708
      %9710 = vrot.lane.b32.xlu0 %v9668, 32
      %v9711 = vpop.permute.xlu0 %9710
      %9712 = vrot.lane.b32.xlu0 %v9669, 32
      %v9713 = vpop.permute.xlu0 %9712
      %9714 = vrot.lane.b32.xlu0 %v9670, 32
      %v9715 = vpop.permute.xlu0 %9714
      %9716 = vrot.lane.b32.xlu0 %v9671, 32
      %v9717 = vpop.permute.xlu0 %9716
      %9718 = vrot.lane.b32.xlu0 %v9672, 32
      %v9719 = vpop.permute.xlu0 %9718
      %9720 = vrot.lane.b32.xlu0 %v9673, 32
      %v9721 = vpop.permute.xlu0 %9720
      %v9738 = vmul.f32 %v9627, %v9691
      %v9739 = vmul.f32 %v9629, %v9693
      %v9740 = vmul.f32 %v9631, %v9695
      %v9741 = vmul.f32 %v9633, %v9697
      %v9742 = vmul.f32 %v9635, %v9699
      %v9743 = vmul.f32 %v9637, %v9701
      %v9744 = vmul.f32 %v9639, %v9703
      %v9745 = vmul.f32 %v9641, %v9705
      %v9746 = vmul.f32 %v9643, %v9707
      %v9747 = vmul.f32 %v9645, %v9709
      %v9748 = vmul.f32 %v9647, %v9711
      %v9749 = vmul.f32 %v9649, %v9713
      %v9750 = vmul.f32 %v9651, %v9715
      %v9751 = vmul.f32 %v9653, %v9717
      %v9752 = vmul.f32 %v9655, %v9719
      %v9753 = vmul.f32 %v9657, %v9721
      %9770 = vrot.lane.b32.xlu0 %v9546, 64
      %v9771 = vpop.permute.xlu0 %9770
      %9772 = vrot.lane.b32.xlu0 %v9547, 64
      %v9773 = vpop.permute.xlu0 %9772
      %9774 = vrot.lane.b32.xlu0 %v9548, 64
      %v9775 = vpop.permute.xlu0 %9774
      %9776 = vrot.lane.b32.xlu0 %v9549, 64
      %v9777 = vpop.permute.xlu0 %9776
      %9778 = vrot.lane.b32.xlu0 %v9550, 64
      %v9779 = vpop.permute.xlu0 %9778
      %9780 = vrot.lane.b32.xlu0 %v9551, 64
      %v9781 = vpop.permute.xlu0 %9780
      %9782 = vrot.lane.b32.xlu0 %v9552, 64
      %v9783 = vpop.permute.xlu0 %9782
      %9784 = vrot.lane.b32.xlu0 %v9553, 64
      %v9785 = vpop.permute.xlu0 %9784
      %9786 = vrot.lane.b32.xlu0 %v9554, 64
      %v9787 = vpop.permute.xlu0 %9786
      %9788 = vrot.lane.b32.xlu0 %v9555, 64
      %v9789 = vpop.permute.xlu0 %9788
      %9790 = vrot.lane.b32.xlu0 %v9556, 64
      %v9791 = vpop.permute.xlu0 %9790
      %9792 = vrot.lane.b32.xlu0 %v9557, 64
      %v9793 = vpop.permute.xlu0 %9792
      %9794 = vrot.lane.b32.xlu0 %v9558, 64
      %v9795 = vpop.permute.xlu0 %9794
      %9796 = vrot.lane.b32.xlu0 %v9559, 64
      %v9797 = vpop.permute.xlu0 %9796
      %9798 = vrot.lane.b32.xlu0 %v9560, 64
      %v9799 = vpop.permute.xlu0 %9798
      %9800 = vrot.lane.b32.xlu0 %v9561, 64
      %v9801 = vpop.permute.xlu0 %9800
      %v9818 = vmul.f32 %v9627, %v9771
      %v9819 = vmul.f32 %v9629, %v9773
      %v9820 = vmul.f32 %v9631, %v9775
      %v9821 = vmul.f32 %v9633, %v9777
      %v9822 = vmul.f32 %v9635, %v9779
      %v9823 = vmul.f32 %v9637, %v9781
      %v9824 = vmul.f32 %v9639, %v9783
      %v9825 = vmul.f32 %v9641, %v9785
      %v9826 = vmul.f32 %v9643, %v9787
      %v9827 = vmul.f32 %v9645, %v9789
      %v9828 = vmul.f32 %v9647, %v9791
      %v9829 = vmul.f32 %v9649, %v9793
      %v9830 = vmul.f32 %v9651, %v9795
      %v9831 = vmul.f32 %v9653, %v9797
      %v9832 = vmul.f32 %v9655, %v9799
      %v9833 = vmul.f32 %v9657, %v9801
      %9850 = vrot.lane.b32.xlu0 %v9818, 32
      %v9851 = vpop.permute.xlu0 %9850
      %9852 = vrot.lane.b32.xlu0 %v9819, 32
      %v9853 = vpop.permute.xlu0 %9852
      %9854 = vrot.lane.b32.xlu0 %v9820, 32
      %v9855 = vpop.permute.xlu0 %9854
      %9856 = vrot.lane.b32.xlu0 %v9821, 32
      %v9857 = vpop.permute.xlu0 %9856
      %9858 = vrot.lane.b32.xlu0 %v9822, 32
      %v9859 = vpop.permute.xlu0 %9858
      %9860 = vrot.lane.b32.xlu0 %v9823, 32
      %v9861 = vpop.permute.xlu0 %9860
      %9862 = vrot.lane.b32.xlu0 %v9824, 32
      %v9863 = vpop.permute.xlu0 %9862
      %9864 = vrot.lane.b32.xlu0 %v9825, 32
      %v9865 = vpop.permute.xlu0 %9864
      %9866 = vrot.lane.b32.xlu0 %v9826, 32
      %v9867 = vpop.permute.xlu0 %9866
      %9868 = vrot.lane.b32.xlu0 %v9827, 32
      %v9869 = vpop.permute.xlu0 %9868
      %9870 = vrot.lane.b32.xlu0 %v9828, 32
      %v9871 = vpop.permute.xlu0 %9870
      %9872 = vrot.lane.b32.xlu0 %v9829, 32
      %v9873 = vpop.permute.xlu0 %9872
      %9874 = vrot.lane.b32.xlu0 %v9830, 32
      %v9875 = vpop.permute.xlu0 %9874
      %9876 = vrot.lane.b32.xlu0 %v9831, 32
      %v9877 = vpop.permute.xlu0 %9876
      %9878 = vrot.lane.b32.xlu0 %v9832, 32
      %v9879 = vpop.permute.xlu0 %9878
      %9880 = vrot.lane.b32.xlu0 %v9833, 32
      %v9881 = vpop.permute.xlu0 %9880
      %v9898 = vadd.f32 %v9738, %v9851
      %v9899 = vadd.f32 %v9739, %v9853
      %v9900 = vadd.f32 %v9740, %v9855
      %v9901 = vadd.f32 %v9741, %v9857
      %v9902 = vadd.f32 %v9742, %v9859
      %v9903 = vadd.f32 %v9743, %v9861
      %v9904 = vadd.f32 %v9744, %v9863
      %v9905 = vadd.f32 %v9745, %v9865
      %v9906 = vadd.f32 %v9746, %v9867
      %v9907 = vadd.f32 %v9747, %v9869
      %v9908 = vadd.f32 %v9748, %v9871
      %v9909 = vadd.f32 %v9749, %v9873
      %v9910 = vadd.f32 %v9750, %v9875
      %v9911 = vadd.f32 %v9751, %v9877
      %v9912 = vadd.f32 %v9752, %v9879
      %v9913 = vadd.f32 %v9753, %v9881
      %v9914 = vtanh.pop %v9898
      %v9915 = vtanh.pop %v9899
      %v9916 = vtanh.pop %v9900
      %v9917 = vtanh.pop %v9901
      %v9918 = vtanh.pop %v9902
      %v9919 = vtanh.pop %v9903
      %v9920 = vtanh.pop %v9904
      %v9921 = vtanh.pop %v9905
      %v9922 = vtanh.pop %v9906
      %v9923 = vtanh.pop %v9907
      %v9924 = vtanh.pop %v9908
      %v9925 = vtanh.pop %v9909
      %v9926 = vtanh.pop %v9910
      %v9927 = vtanh.pop %v9911
      %v9928 = vtanh.pop %v9912
      %v9929 = vtanh.pop %v9913
      %9946 = vrot.lane.b32.xlu0 %v9914, 64
      %v9947 = vpop.permute.xlu0 %9946
      %9948 = vrot.lane.b32.xlu0 %v9915, 64
      %v9949 = vpop.permute.xlu0 %9948
      %9950 = vrot.lane.b32.xlu0 %v9916, 64
      %v9951 = vpop.permute.xlu0 %9950
      %9952 = vrot.lane.b32.xlu0 %v9917, 64
      %v9953 = vpop.permute.xlu0 %9952
      %9954 = vrot.lane.b32.xlu0 %v9918, 64
      %v9955 = vpop.permute.xlu0 %9954
      %9956 = vrot.lane.b32.xlu0 %v9919, 64
      %v9957 = vpop.permute.xlu0 %9956
      %9958 = vrot.lane.b32.xlu0 %v9920, 64
      %v9959 = vpop.permute.xlu0 %9958
      %9960 = vrot.lane.b32.xlu0 %v9921, 64
      %v9961 = vpop.permute.xlu0 %9960
      %9962 = vrot.lane.b32.xlu0 %v9922, 64
      %v9963 = vpop.permute.xlu0 %9962
      %9964 = vrot.lane.b32.xlu0 %v9923, 64
      %v9965 = vpop.permute.xlu0 %9964
      %9966 = vrot.lane.b32.xlu0 %v9924, 64
      %v9967 = vpop.permute.xlu0 %9966
      %9968 = vrot.lane.b32.xlu0 %v9925, 64
      %v9969 = vpop.permute.xlu0 %9968
      %9970 = vrot.lane.b32.xlu0 %v9926, 64
      %v9971 = vpop.permute.xlu0 %9970
      %9972 = vrot.lane.b32.xlu0 %v9927, 64
      %v9973 = vpop.permute.xlu0 %9972
      %9974 = vrot.lane.b32.xlu0 %v9928, 64
      %v9975 = vpop.permute.xlu0 %9974
      %9976 = vrot.lane.b32.xlu0 %v9929, 64
      %v9977 = vpop.permute.xlu0 %9976
      %v9994 = vmul.f32 %v9627, %v9947
      %v9995 = vmul.f32 %v9629, %v9949
      %v9996 = vmul.f32 %v9631, %v9951
      %v9997 = vmul.f32 %v9633, %v9953
      %v9998 = vmul.f32 %v9635, %v9955
      %v9999 = vmul.f32 %v9637, %v9957
      %v10000 = vmul.f32 %v9639, %v9959
      %v10001 = vmul.f32 %v9641, %v9961
      %v10002 = vmul.f32 %v9643, %v9963
      %v10003 = vmul.f32 %v9645, %v9965
      %v10004 = vmul.f32 %v9647, %v9967
      %v10005 = vmul.f32 %v9649, %v9969
      %v10006 = vmul.f32 %v9651, %v9971
      %v10007 = vmul.f32 %v9653, %v9973
      %v10008 = vmul.f32 %v9655, %v9975
      %v10009 = vmul.f32 %v9657, %v9977
      %10026 = vrot.lane.b32.xlu0 %v9898, 96
      %v10027 = vpop.permute.xlu0 %10026
      %10028 = vrot.lane.b32.xlu0 %v9899, 96
      %v10029 = vpop.permute.xlu0 %10028
      %10030 = vrot.lane.b32.xlu0 %v9900, 96
      %v10031 = vpop.permute.xlu0 %10030
      %10032 = vrot.lane.b32.xlu0 %v9901, 96
      %v10033 = vpop.permute.xlu0 %10032
      %10034 = vrot.lane.b32.xlu0 %v9902, 96
      %v10035 = vpop.permute.xlu0 %10034
      %10036 = vrot.lane.b32.xlu0 %v9903, 96
      %v10037 = vpop.permute.xlu0 %10036
      %10038 = vrot.lane.b32.xlu0 %v9904, 96
      %v10039 = vpop.permute.xlu0 %10038
      %10040 = vrot.lane.b32.xlu0 %v9905, 96
      %v10041 = vpop.permute.xlu0 %10040
      %10042 = vrot.lane.b32.xlu0 %v9906, 96
      %v10043 = vpop.permute.xlu0 %10042
      %10044 = vrot.lane.b32.xlu0 %v9907, 96
      %v10045 = vpop.permute.xlu0 %10044
      %10046 = vrot.lane.b32.xlu0 %v9908, 96
      %v10047 = vpop.permute.xlu0 %10046
      %10048 = vrot.lane.b32.xlu0 %v9909, 96
      %v10049 = vpop.permute.xlu0 %10048
      %10050 = vrot.lane.b32.xlu0 %v9910, 96
      %v10051 = vpop.permute.xlu0 %10050
      %10052 = vrot.lane.b32.xlu0 %v9911, 96
      %v10053 = vpop.permute.xlu0 %10052
      %10054 = vrot.lane.b32.xlu0 %v9912, 96
      %v10055 = vpop.permute.xlu0 %10054
      %10056 = vrot.lane.b32.xlu0 %v9913, 96
      %v10057 = vpop.permute.xlu0 %10056
      %10074 = vst.msk [vmem:[#allocation4 + $0x180] sm:$0xff] %vm7912, %v10027
      %10075 = vst.msk [vmem:[#allocation4 + $0x188] sm:$0xff] %vm7912, %v10029
      %10076 = vst.msk [vmem:[#allocation4 + $0x190] sm:$0xff] %vm7912, %v10031
      %10077 = vst.msk [vmem:[#allocation4 + $0x198] sm:$0xff] %vm7912, %v10033
      %10078 = vst.msk [vmem:[#allocation4 + $0x1a0] sm:$0xff] %vm7912, %v10035
      %10079 = vst.msk [vmem:[#allocation4 + $0x1a8] sm:$0xff] %vm7912, %v10037
      %10080 = vst.msk [vmem:[#allocation4 + $0x1b0] sm:$0xff] %vm7912, %v10039
      %10081 = vst.msk [vmem:[#allocation4 + $0x1b8] sm:$0xff] %vm7912, %v10041
      %10082 = vst.msk [vmem:[#allocation4 + $0x1c0] sm:$0xff] %vm7912, %v10043
      %10083 = vst.msk [vmem:[#allocation4 + $0x1c8] sm:$0xff] %vm7912, %v10045
      %10084 = vst.msk [vmem:[#allocation4 + $0x1d0] sm:$0xff] %vm7912, %v10047
      %10085 = vst.msk [vmem:[#allocation4 + $0x1d8] sm:$0xff] %vm7912, %v10049
      %10086 = vst.msk [vmem:[#allocation4 + $0x1e0] sm:$0xff] %vm7912, %v10051
      %10087 = vst.msk [vmem:[#allocation4 + $0x1e8] sm:$0xff] %vm7912, %v10053
      %10088 = vst.msk [vmem:[#allocation4 + $0x1f0] sm:$0xff] %vm7912, %v10055
      %10089 = vst.msk [vmem:[#allocation4 + $0x1f8] sm:$0xff] %vm7912, %v10057
      %10106 = vrot.lane.b32.xlu0 %v9994, 32
      %v10107 = vpop.permute.xlu0 %10106
      %10108 = vrot.lane.b32.xlu0 %v9995, 32
      %v10109 = vpop.permute.xlu0 %10108
      %10110 = vrot.lane.b32.xlu0 %v9996, 32
      %v10111 = vpop.permute.xlu0 %10110
      %10112 = vrot.lane.b32.xlu0 %v9997, 32
      %v10113 = vpop.permute.xlu0 %10112
      %10114 = vrot.lane.b32.xlu0 %v9998, 32
      %v10115 = vpop.permute.xlu0 %10114
      %10116 = vrot.lane.b32.xlu0 %v9999, 32
      %v10117 = vpop.permute.xlu0 %10116
      %10118 = vrot.lane.b32.xlu0 %v10000, 32
      %v10119 = vpop.permute.xlu0 %10118
      %10120 = vrot.lane.b32.xlu0 %v10001, 32
      %v10121 = vpop.permute.xlu0 %10120
      %10122 = vrot.lane.b32.xlu0 %v10002, 32
      %v10123 = vpop.permute.xlu0 %10122
      %10124 = vrot.lane.b32.xlu0 %v10003, 32
      %v10125 = vpop.permute.xlu0 %10124
      %10126 = vrot.lane.b32.xlu0 %v10004, 32
      %v10127 = vpop.permute.xlu0 %10126
      %10128 = vrot.lane.b32.xlu0 %v10005, 32
      %v10129 = vpop.permute.xlu0 %10128
      %10130 = vrot.lane.b32.xlu0 %v10006, 32
      %v10131 = vpop.permute.xlu0 %10130
      %10132 = vrot.lane.b32.xlu0 %v10007, 32
      %v10133 = vpop.permute.xlu0 %10132
      %10134 = vrot.lane.b32.xlu0 %v10008, 32
      %v10135 = vpop.permute.xlu0 %10134
      %10136 = vrot.lane.b32.xlu0 %v10009, 32
      %v10137 = vpop.permute.xlu0 %10136
      %10154 = vst.msk [vmem:[%s197 + $0x180] sm:$0xff] %vm7912, %v10107
      %10155 = vst.msk [vmem:[%s197 + $0x188] sm:$0xff] %vm7912, %v10109
      %10156 = vst.msk [vmem:[%s197 + $0x190] sm:$0xff] %vm7912, %v10111
      %10157 = vst.msk [vmem:[%s197 + $0x198] sm:$0xff] %vm7912, %v10113
      %10158 = vst.msk [vmem:[%s197 + $0x1a0] sm:$0xff] %vm7912, %v10115
      %10159 = vst.msk [vmem:[%s197 + $0x1a8] sm:$0xff] %vm7912, %v10117
      %10160 = vst.msk [vmem:[%s197 + $0x1b0] sm:$0xff] %vm7912, %v10119
      %10161 = vst.msk [vmem:[%s197 + $0x1b8] sm:$0xff] %vm7912, %v10121
      %10162 = vst.msk [vmem:[%s197 + $0x1c0] sm:$0xff] %vm7912, %v10123
      %10163 = vst.msk [vmem:[%s197 + $0x1c8] sm:$0xff] %vm7912, %v10125
      %10164 = vst.msk [vmem:[%s197 + $0x1d0] sm:$0xff] %vm7912, %v10127
      %10165 = vst.msk [vmem:[%s197 + $0x1d8] sm:$0xff] %vm7912, %v10129
      %10166 = vst.msk [vmem:[%s197 + $0x1e0] sm:$0xff] %vm7912, %v10131
      %10167 = vst.msk [vmem:[%s197 + $0x1e8] sm:$0xff] %vm7912, %v10133
      %10168 = vst.msk [vmem:[%s197 + $0x1f0] sm:$0xff] %vm7912, %v10135
      %10169 = vst.msk [vmem:[%s197 + $0x1f8] sm:$0xff] %vm7912, %v10137
      %10170 = vrot.lane.b32.xlu0 %v9994, 36
      %v10171 = vpop.permute.xlu0 %10170
      %10172 = vrot.lane.b32.xlu0 %v9995, 36
      %v10173 = vpop.permute.xlu0 %10172
      %10174 = vrot.lane.b32.xlu0 %v9996, 36
      %v10175 = vpop.permute.xlu0 %10174
      %10176 = vrot.lane.b32.xlu0 %v9997, 36
      %v10177 = vpop.permute.xlu0 %10176
      %10178 = vrot.lane.b32.xlu0 %v9998, 36
      %v10179 = vpop.permute.xlu0 %10178
      %10180 = vrot.lane.b32.xlu0 %v9999, 36
      %v10181 = vpop.permute.xlu0 %10180
      %10182 = vrot.lane.b32.xlu0 %v10000, 36
      %v10183 = vpop.permute.xlu0 %10182
      %10184 = vrot.lane.b32.xlu0 %v10001, 36
      %v10185 = vpop.permute.xlu0 %10184
      %10186 = vrot.lane.b32.xlu0 %v10002, 36
      %v10187 = vpop.permute.xlu0 %10186
      %10188 = vrot.lane.b32.xlu0 %v10003, 36
      %v10189 = vpop.permute.xlu0 %10188
      %10190 = vrot.lane.b32.xlu0 %v10004, 36
      %v10191 = vpop.permute.xlu0 %10190
      %10192 = vrot.lane.b32.xlu0 %v10005, 36
      %v10193 = vpop.permute.xlu0 %10192
      %10194 = vrot.lane.b32.xlu0 %v10006, 36
      %v10195 = vpop.permute.xlu0 %10194
      %10196 = vrot.lane.b32.xlu0 %v10007, 36
      %v10197 = vpop.permute.xlu0 %10196
      %10198 = vrot.lane.b32.xlu0 %v10008, 36
      %v10199 = vpop.permute.xlu0 %10198
      %10200 = vrot.lane.b32.xlu0 %v10009, 36
      %v10201 = vpop.permute.xlu0 %10200
      %10218 = vst.msk [vmem:[%s6146 + $0x1] sm:$0xff] %vm8057, %v10171
      %10219 = vst.msk [vmem:[%s6146 + $0x9] sm:$0xff] %vm8057, %v10173
      %10220 = vst.msk [vmem:[%s6146 + $0x19] sm:$0xff] %vm8057, %v10175
      %10221 = vst.msk [vmem:[%s6146 + $0x21] sm:$0xff] %vm8057, %v10177
      %10222 = vst.msk [vmem:[%s6146 + $0x31] sm:$0xff] %vm8057, %v10179
      %10223 = vst.msk [vmem:[%s6146 + $0x39] sm:$0xff] %vm8057, %v10181
      %10224 = vst.msk [vmem:[%s6146 + $0x49] sm:$0xff] %vm8057, %v10183
      %10225 = vst.msk [vmem:[%s6146 + $0x51] sm:$0xff] %vm8057, %v10185
      %10226 = vst.msk [vmem:[%s6146 + $0x61] sm:$0xff] %vm8057, %v10187
      %10227 = vst.msk [vmem:[%s6146 + $0x69] sm:$0xff] %vm8057, %v10189
      %10228 = vst.msk [vmem:[%s6146 + $0x79] sm:$0xff] %vm8057, %v10191
      %10229 = vst.msk [vmem:[%s6146 + $0x81] sm:$0xff] %vm8057, %v10193
      %10230 = vst.msk [vmem:[%s6146 + $0x91] sm:$0xff] %vm8057, %v10195
      %10231 = vst.msk [vmem:[%s6146 + $0x99] sm:$0xff] %vm8057, %v10197
      %10232 = vst.msk [vmem:[%s6146 + $0xa9] sm:$0xff] %vm8057, %v10199
      %10233 = vst.msk [vmem:[%s6146 + $0xb1] sm:$0xff] %vm8057, %v10201
      %p10234 = scmp.lt.s32.totalorder %s15, 7
      %s10235 = scalar_select %p10234, %s15, 7
      %s10236 = smul.addr %s10235, 64
      %s10237 = smul.addr %s10236, 8
      %s10238 = scalar_lea.vmem %s4, %s10237
      // Predicated region
      $region41: #{tpu_custom_call.1} parent=35 // pred_check
        %p10239 = pneg %p122
      $region42: #{tpu_custom_call.1} parent=35 // pred_check_branch
        %10241 = sbr.rel (%p10239) target = $region44
      $region43: #{tpu_custom_call.1} parent=35 // pred_region
        _
      $region44: #{tpu_custom_call.1} parent=35 // pred_fallthru
        _
    $region36: #{tpu_custom_call.1} parent=5 // pred_fallthru
      _
    %p10242 = scmp.le.s32.totalorder 2, %s10
    // Predicated region
    $region45: #{tpu_custom_call.1} parent=5 // pred_check
      %p10243 = pneg %p10242
    $region46: #{tpu_custom_call.1} parent=5 // pred_check_branch
      %10245 = sbr.rel (%p10243) target = $region48
    $region47: #{tpu_custom_call.1} parent=5 // pred_region
      %s10246 = ssub.s32 %s10, 2
      // Predicated region
      $region49: #{tpu_custom_call.1} parent=47 // pred_check
        %p10247 = pneg %p128
      $region50: #{tpu_custom_call.1} parent=47 // pred_check_branch
        %10249 = sbr.rel (%p10247) target = $region52
      $region51: #{tpu_custom_call.1} parent=47 // pred_region
        %p10250 = scmp.lt.s32.totalorder %s16, 7
        %s10251 = scalar_select %p10250, %s16, 7
        %s10252 = smul.addr %s10251, 64
        %s10253 = smul.addr %s10252, 8
        %s10254 = scalar_lea.vmem %s4, %s10253
      $region52: #{tpu_custom_call.1} parent=47 // pred_fallthru
        _
    $region48: #{tpu_custom_call.1} parent=5 // pred_fallthru
      _
  $region6: #{tpu_custom_call.1} parent=0 // loop_footer
    %s14 = sadd.s32 1, %s10
  $region7: #{tpu_custom_call.1} parent=0 // loop_footer_branch
    %9 = sbr.rel target = $region3
  $region8: #{tpu_custom_call.1} parent=0 // loop_exit
    _

</llo_original>
